<compile_context>
chip_gen: v7x
topology: tpu7x:2x2x1
jax: 0.10.0
libtpu: 0.0.40
codegen_flags: <defaults>
</compile_context>

<pallas_src>
import math

import jax
import jax.numpy as jnp
from jax.experimental import pallas as pl
from jax.experimental.pallas import tpu as pltpu


H0, W0 = 8, 4            # conv1 input / output spatial
C1, C2 = 8, 16           # conv1 / conv2 output channels
H1, W1 = 4, 2            # spatial after pool1 (= conv2 input/output spatial)
SEQ = 2                  # h*w after pool2
EMBED = 16
NUM_HEADS = 8
HEAD_DIM = EMBED // NUM_HEADS
D1, D2, D3 = 512, 1024, 1024


# ----------------------------------------------------------------------------
# Fused kernel
# ----------------------------------------------------------------------------
def _fused_forward_kernel(
    xp_ref, w1_ref, b1_ref, w2_ref, b2_ref,
    wq_ref, bq_ref, wk_ref, bk_ref, wv_ref, bv_ref,
    wo_ref, bo_ref, pair_ref,
    w1e_ref, w1o_ref, bd1_ref, bd2_ref, bd3_ref,
    wd2_hbm, wd3_hbm,                       # bf16 dense weights, left in HBM
    o_ref,
    wd2_vmem, wd3_vmem, dma_sem,            # scratch
):
    f32 = jnp.float32
    b = xp_ref.shape[1]                     # batch (sublane axis everywhere)

    # --- start the big dense-weight DMAs immediately: they overlap with the
    # conv / attention / dense1 compute (the only real HBM traffic here).
    cp2 = pltpu.make_async_copy(wd2_hbm, wd2_vmem, dma_sem.at[0])
    cp3 = pltpu.make_async_copy(wd3_hbm, wd3_vmem, dma_sem.at[1])
    cp2.start()
    cp3.start()

    # --- conv1 (1 -> 8, 3x3, pad 1) + ReLU : in-kernel im2col + one matmul ---
    # xp_ref is the zero-padded input, layout (padded_row=10, batch, padded_col=6).
    rows = [xp_ref[r] for r in range(H0 + 2)]            # each (b, 6)
    patches = []
    for i in range(H0):
        for j in range(W0):
            patches.append(jnp.concatenate(
                [rows[i + di][:, j:j + 3] for di in range(3)], axis=1))  # (b, 9)
    patch = jnp.concatenate(patches, axis=0)             # (32b, 9), row = p*b + batch
    a1 = jnp.dot(patch, w1_ref[...], preferred_element_type=f32)   # (32b, 8)
    a1 = jnp.maximum(a1 + b1_ref[...], 0.0)

    # --- pool1 (2x2): elementwise max over 4 statically sliced row blocks ----
    def blk1(p):                                         # conv1 rows of pixel p
        return a1[p * b:(p + 1) * b]                     # (b, 8)

    pv = []                                              # pooled pos p=I*2+J -> (b, 8)
    for I in range(H1):
        for J in range(W1):
            p00 = (2 * I) * W0 + 2 * J
            pv.append(jnp.maximum(
                jnp.maximum(blk1(p00), blk1(p00 + 1)),
                jnp.maximum(blk1(p00 + W0), blk1(p00 + W0 + 1))))

    # --- conv2 (8 -> 16, 3x3, pad 1) + ReLU : 9 accumulated MXU matmuls ------
    zero_tap = jnp.zeros((b, C1), f32)
    a2 = jnp.zeros((H1 * W1 * b, C2), f32)               # rows: p*b + batch
    for k in range(9):
        d, e = k // 3 - 1, k % 3 - 1
        taps = []
        for i in range(H1):
            for j in range(W1):
                ii, jj = i + d, j + e
                taps.append(pv[ii * W1 + jj]
                            if 0 <= ii < H1 and 0 <= jj < W1 else zero_tap)
        s_k = jnp.concatenate(taps, axis=0)              # (8b, 8)
        a2 = a2 + jnp.dot(s_k, w2_ref[k * C1:(k + 1) * C1, :],
                          preferred_element_type=f32)
    a2 = jnp.maximum(a2 + b2_ref[...], 0.0)              # (8b, 16)

    # --- pool2 (2x2) -> the two sequence positions, each (b, 16) -------------
    x0 = jnp.maximum(jnp.maximum(a2[0 * b:1 * b], a2[1 * b:2 * b]),
                     jnp.maximum(a2[2 * b:3 * b], a2[3 * b:4 * b]))
    x1 = jnp.maximum(jnp.maximum(a2[4 * b:5 * b], a2[5 * b:6 * b]),
                     jnp.maximum(a2[6 * b:7 * b], a2[7 * b:8 * b]))

    # --- self-attention (seq=2, 8 heads of dim 2), all heads on 16 lanes -----
    wq, wk, wv, wo = wq_ref[...], wk_ref[...], wv_ref[...], wo_ref[...]
    bq, bk, bv, bo = bq_ref[...], bk_ref[...], bv_ref[...], bo_ref[...]
    pair = pair_ref[...]          # (16,16) pair-sum matrix, 1/sqrt(head_dim) folded in

    q0 = jnp.dot(x0, wq, preferred_element_type=f32) + bq
    q1 = jnp.dot(x1, wq, preferred_element_type=f32) + bq
    k0 = jnp.dot(x0, wk, preferred_element_type=f32) + bk
    k1 = jnp.dot(x1, wk, preferred_element_type=f32) + bk
    v0 = jnp.dot(x0, wv, preferred_element_type=f32) + bv
    v1 = jnp.dot(x1, wv, preferred_element_type=f32) + bv

    def head_scores(q, k):
        # per-head dot over head_dim=2, result broadcast to both lanes of the head
        return jnp.dot(q * k, pair, preferred_element_type=f32)     # (b, 16)

    s00, s01 = head_scores(q0, k0), head_scores(q0, k1)
    s10, s11 = head_scores(q1, k0), head_scores(q1, k1)

    m0 = jnp.maximum(s00, s01)
    e00, e01 = jnp.exp(s00 - m0), jnp.exp(s01 - m0)
    r0 = 1.0 / (e00 + e01)
    m1 = jnp.maximum(s10, s11)
    e10, e11 = jnp.exp(s10 - m1), jnp.exp(s11 - m1)
    r1 = 1.0 / (e10 + e11)

    c0 = (e00 * r0) * v0 + (e01 * r0) * v1               # (b, 16)
    c1 = (e10 * r1) * v0 + (e11 * r1) * v1

    y0 = jnp.dot(c0, wo, preferred_element_type=f32) + bo
    y1 = jnp.dot(c1, wo, preferred_element_type=f32) + bo

    # --- dense head; (c, h*w)-major flatten folded into even/odd W1 rows -----
    h1 = jnp.dot(y0, w1e_ref[...], preferred_element_type=f32)
    h1 = h1 + jnp.dot(y1, w1o_ref[...], preferred_element_type=f32)
    h1 = jnp.maximum(h1 + bd1_ref[...], 0.0)             # (b, 512)

    cp2.wait()                                           # dense2 bf16 weights resident
    h2 = jnp.dot(h1.astype(jnp.bfloat16), wd2_vmem[...],
                 preferred_element_type=f32)
    h2 = jnp.maximum(h2 + bd2_ref[...], 0.0)             # (b, 1024)

    cp3.wait()                                           # dense3 bf16 weights resident
    h3 = jnp.dot(h2.astype(jnp.bfloat16), wd3_vmem[...],
                 preferred_element_type=f32)
    o_ref[...] = jnp.maximum(h3 + bd3_ref[...], 0.0)     # (b, 1024)


# ----------------------------------------------------------------------------
# Forward wrapper (one pallas_call)
# ----------------------------------------------------------------------------
def descryptor_encoder_forward(prepared, x):
    b = x.shape[0]
    if b == 0:
        # Mirrors the PyTorch module's early return (note: different rank than
        # the normal (b, 1024) path, by design of the reference module).
        return jnp.zeros((0, 16, 2, 1), jnp.float32)
    assert x.shape[1:] == (1, H0, W0), x.shape

    # Tiny one-shot prep (fused by XLA under jit): zero-pad the 1-channel
    # input once and put batch on the sublane axis so every in-kernel spatial
    # tap is a plain leading-dim index / lane slice (no relayouts in-kernel).
    xp = jnp.pad(x[:, 0], ((0, 0), (1, 1), (1, 1)))      # (b, 10, 6)
    xp = jnp.transpose(xp, (1, 0, 2))                    # (10, b, 6)

    vm_operands = [
        xp, prepared["w1"], prepared["b1"], prepared["w2"], prepared["b2"],
        prepared["wq"], prepared["bq"], prepared["wk"], prepared["bk"],
        prepared["wv"], prepared["bv"], prepared["wo"], prepared["bo"],
        prepared["pair"], prepared["w1e"], prepared["w1o"], prepared["bd1"],
        prepared["bd2"], prepared["bd3"],
    ]
    in_specs = [pl.BlockSpec(a.shape, lambda i, _nd=a.ndim: (0,) * _nd)
                for a in vm_operands]
    # The two big dense weights stay in HBM; the kernel DMAs them into VMEM
    # scratch itself so the copy overlaps the earlier compute.
    hbm_operands = [prepared["wd2"], prepared["wd3"]]
    in_specs += [pl.BlockSpec(memory_space=pl.ANY),
                 pl.BlockSpec(memory_space=pl.ANY)]

    return pl.pallas_call(
        _fused_forward_kernel,
        out_shape=jax.ShapeDtypeStruct((b, D3), jnp.float32),
        grid=(1,),
        in_specs=in_specs,
        out_specs=pl.BlockSpec((b, D3), lambda i: (0, 0)),
        scratch_shapes=[
            pltpu.VMEM((D1, D2), jnp.bfloat16),          # dense2 weights
            pltpu.VMEM((D2, D3), jnp.bfloat16),          # dense3 weights
            pltpu.SemaphoreType.DMA((2,)),
        ],
        compiler_params=pltpu.CompilerParams(
            dimension_semantics=("arbitrary",),
        ),
    )(*vm_operands, *hbm_operands)


# ----------------------------------------------------------------------------
# Parameters (deterministic, PyTorch default-init style) + one-time repack
# ----------------------------------------------------------------------------
def _uniform(key, shape, fan_in):
    bound = 1.0 / math.sqrt(fan_in)
    return jax.random.uniform(key, shape, jnp.float32, -bound, bound)


def init_params(key):
    ks = jax.random.split(key, 16)
    p = {}
    p["conv1_w"] = _uniform(ks[0], (C1, 1, 3, 3), 1 * 9)
    p["conv1_b"] = _uniform(ks[1], (C1,), 1 * 9)
    p["conv2_w"] = _uniform(ks[2], (C2, C1, 3, 3), C1 * 9)
    p["conv2_b"] = _uniform(ks[3], (C2,), C1 * 9)
    # attention (stored as (in, out)): qkv Linear(16, 48), out Linear(16, 16)
    p["qkv_w"] = _uniform(ks[4], (EMBED, 3 * EMBED), EMBED)
    p["qkv_b"] = _uniform(ks[5], (3 * EMBED,), EMBED)
    p["att_out_w"] = _uniform(ks[6], (EMBED, EMBED), EMBED)
    p["att_out_b"] = _uniform(ks[7], (EMBED,), EMBED)
    # dense layers (stored as (in, out))
    p["d1_w"] = _uniform(ks[8], (32, D1), 32)
    p["d1_b"] = _uniform(ks[9], (D1,), 32)
    p["d2_w"] = _uniform(ks[10], (D1, D2), D1)
    p["d2_b"] = _uniform(ks[11], (D2,), D1)
    p["d3_w"] = _uniform(ks[12], (D2, D3), D2)
    p["d3_b"] = _uniform(ks[13], (D3,), D2)
    return p


def prepare_params(p):
    """One-time repack of module-layout parameters into kernel layout."""
    pair = (jnp.arange(EMBED)[:, None] // HEAD_DIM
            == jnp.arange(EMBED)[None, :] // HEAD_DIM)
    pair = pair.astype(jnp.float32) / math.sqrt(HEAD_DIM)
    qkv_w, qkv_b = p["qkv_w"], p["qkv_b"]
    return {
        # conv1 weight as (9, 8); row = di*3 + dj (matches in-kernel im2col)
        "w1": jnp.transpose(p["conv1_w"][:, 0], (1, 2, 0)).reshape(9, C1),
        "b1": p["conv1_b"].reshape(1, C1),
        # conv2 weight as (72, 16); row = (di*3 + dj)*8 + cin
        "w2": jnp.transpose(p["conv2_w"], (2, 3, 1, 0)).reshape(9 * C1, C2),
        "b2": p["conv2_b"].reshape(1, C2),
        # attention projections
        "wq": qkv_w[:, 0:EMBED],
        "wk": qkv_w[:, EMBED:2 * EMBED],
        "wv": qkv_w[:, 2 * EMBED:3 * EMBED],
        "bq": qkv_b[0:EMBED].reshape(1, EMBED),
        "bk": qkv_b[EMBED:2 * EMBED].reshape(1, EMBED),
        "bv": qkv_b[2 * EMBED:3 * EMBED].reshape(1, EMBED),
        "wo": p["att_out_w"], "bo": p["att_out_b"].reshape(1, EMBED),
        "pair": pair,
        # dense1: even rows feed seq position 0, odd rows seq position 1
        # (folds the PyTorch channel-major flatten into the weight).
        "w1e": p["d1_w"][0::2, :], "w1o": p["d1_w"][1::2, :],
        "bd1": p["d1_b"].reshape(1, D1),
        # dense2 / dense3 weights in bf16 (the HBM-bound layers); biases f32.
        "wd2": p["d2_w"].astype(jnp.bfloat16), "bd2": p["d2_b"].reshape(1, D2),
        "wd3": p["d3_w"].astype(jnp.bfloat16), "bd3": p["d3_b"].reshape(1, D3),
    }


# ----------------------------------------------------------------------------
# Pure-jnp reference (mirrors the PyTorch module and the kernel's bf16 dense)
# ----------------------------------------------------------------------------
def _ref_attention(x, wqkv, bqkv, wout, bout):
    b, s, e = x.shape
    hd = e // NUM_HEADS
    qkv = x @ wqkv + bqkv
    q, k, v = jnp.split(qkv, 3, axis=-1)

    def heads(t):
        return t.reshape(b, s, NUM_HEADS, hd).transpose(0, 2, 1, 3)

    q, k, v = heads(q), heads(k), heads(v)
    scores = (q @ jnp.swapaxes(k, -1, -2)) / math.sqrt(hd)
    attn = jax.nn.softmax(scores, axis=-1)
    out = (attn @ v).transpose(0, 2, 1, 3).reshape(b, s, e)
    return out @ wout + bout


def reference_forward(params, x):
    b = x.shape[0]

    def conv(t, w, bias):
        y = jax.lax.conv_general_dilated(
            t, w, window_strides=(1, 1), padding=((1, 1), (1, 1)),
            dimension_numbers=("NCHW", "OIHW", "NCHW"))
        return jnp.maximum(y + bias.reshape(1, -1, 1, 1), 0.0)

    def maxpool(t):
        bb, c, h, w = t.shape
        return t.reshape(bb, c, h // 2, 2, w // 2, 2).max(axis=(3, 5))

    y = maxpool(conv(x, params["conv1_w"], params["conv1_b"]))
    y = maxpool(conv(y, params["conv2_w"], params["conv2_b"]))

    bb, c, h, w = y.shape
    xs = y.reshape(bb, c, h * w).transpose(0, 2, 1)
    xs = _ref_attention(xs, params["qkv_w"], params["qkv_b"],
                        params["att_out_w"], params["att_out_b"])
    feat = xs.transpose(0, 2, 1).reshape(bb, c * h * w)

    def bf16_mm(a, w):
        return jnp.dot(a.astype(jnp.bfloat16), w.astype(jnp.bfloat16),
                       preferred_element_type=jnp.float32)

    h1 = jnp.maximum(feat @ params["d1_w"] + params["d1_b"], 0.0)
    h2 = jnp.maximum(bf16_mm(h1, params["d2_w"]) + params["d2_b"], 0.0)
    h3 = jnp.maximum(bf16_mm(h2, params["d3_w"]) + params["d3_b"], 0.0)
    return h3


# ----------------------------------------------------------------------------
if __name__ == "__main__":
    params = init_params(jax.random.PRNGKey(42))
    prepared = prepare_params(params)

    x = jax.random.normal(jax.random.PRNGKey(0), (2, 1, H0, W0), jnp.float32)

    fwd = jax.jit(descryptor_encoder_forward)
    out = jax.block_until_ready(fwd(prepared, x))

    assert out.shape == (2, D3), out.shape
    assert bool(jnp.all(jnp.isfinite(out)))
    assert bool(jnp.all(out >= 0.0))           # final ReLU

    ref = jax.jit(reference_forward)(params, x)
    max_err = float(jnp.max(jnp.abs(out - ref)))
    assert max_err < 5e-2, f"kernel vs reference max |diff| = {max_err}"

    print("KERNEL_OK")
</pallas_src>

<mosaic_0001>
module attributes {stable_mosaic.version = 11 : i64} {
  func.func @_fused_forward_kernel(%arg0: i32, %arg1: memref<10x2x6xf32, #tpu.memory_space<vmem>>, %arg2: memref<9x8xf32, #tpu.memory_space<vmem>>, %arg3: memref<1x8xf32, #tpu.memory_space<vmem>>, %arg4: memref<72x16xf32, #tpu.memory_space<vmem>>, %arg5: memref<1x16xf32, #tpu.memory_space<vmem>>, %arg6: memref<16x16xf32, #tpu.memory_space<vmem>>, %arg7: memref<1x16xf32, #tpu.memory_space<vmem>>, %arg8: memref<16x16xf32, #tpu.memory_space<vmem>>, %arg9: memref<1x16xf32, #tpu.memory_space<vmem>>, %arg10: memref<16x16xf32, #tpu.memory_space<vmem>>, %arg11: memref<1x16xf32, #tpu.memory_space<vmem>>, %arg12: memref<16x16xf32, #tpu.memory_space<vmem>>, %arg13: memref<1x16xf32, #tpu.memory_space<vmem>>, %arg14: memref<16x16xf32, #tpu.memory_space<vmem>>, %arg15: memref<16x512xf32, #tpu.memory_space<vmem>>, %arg16: memref<16x512xf32, #tpu.memory_space<vmem>>, %arg17: memref<1x512xf32, #tpu.memory_space<vmem>>, %arg18: memref<1x1024xf32, #tpu.memory_space<vmem>>, %arg19: memref<1x1024xf32, #tpu.memory_space<vmem>>, %arg20: memref<512x1024xbf16, #tpu.memory_space<any>>, %arg21: memref<1024x1024xbf16, #tpu.memory_space<any>>, %arg22: memref<2x1024xf32, #tpu.memory_space<vmem>>, %arg23: memref<512x1024xbf16, #tpu.memory_space<vmem>>, %arg24: memref<1024x1024xbf16, #tpu.memory_space<vmem>>, %arg25: memref<2x!tpu.dma_semaphore, #tpu.memory_space<semaphore_mem>>) attributes {dimension_semantics = [#tpu.dimension_semantics<arbitrary>], iteration_bounds = array<i64: 1>, scalar_prefetch = 0 : i64, scratch_operands = 3 : i64, tpu.core_type = #tpu.core_type<tc>, window_params = [{pipeline_mode = #tpu.pipeline_mode<synchronous>, transform_indices = @transform_0, window_bounds = array<i64: 10, 2, 6>}, {pipeline_mode = #tpu.pipeline_mode<synchronous>, transform_indices = @transform_1, window_bounds = array<i64: 9, 8>}, {pipeline_mode = #tpu.pipeline_mode<synchronous>, transform_indices = @transform_2, window_bounds = array<i64: 1, 8>}, {pipeline_mode = #tpu.pipeline_mode<synchronous>, transform_indices = @transform_3, window_bounds = array<i64: 72, 16>}, {pipeline_mode = #tpu.pipeline_mode<synchronous>, transform_indices = @transform_4, window_bounds = array<i64: 1, 16>}, {pipeline_mode = #tpu.pipeline_mode<synchronous>, transform_indices = @transform_5, window_bounds = array<i64: 16, 16>}, {pipeline_mode = #tpu.pipeline_mode<synchronous>, transform_indices = @transform_6, window_bounds = array<i64: 1, 16>}, {pipeline_mode = #tpu.pipeline_mode<synchronous>, transform_indices = @transform_7, window_bounds = array<i64: 16, 16>}, {pipeline_mode = #tpu.pipeline_mode<synchronous>, transform_indices = @transform_8, window_bounds = array<i64: 1, 16>}, {pipeline_mode = #tpu.pipeline_mode<synchronous>, transform_indices = @transform_9, window_bounds = array<i64: 16, 16>}, {pipeline_mode = #tpu.pipeline_mode<synchronous>, transform_indices = @transform_10, window_bounds = array<i64: 1, 16>}, {pipeline_mode = #tpu.pipeline_mode<synchronous>, transform_indices = @transform_11, window_bounds = array<i64: 16, 16>}, {pipeline_mode = #tpu.pipeline_mode<synchronous>, transform_indices = @transform_12, window_bounds = array<i64: 1, 16>}, {pipeline_mode = #tpu.pipeline_mode<synchronous>, transform_indices = @transform_13, window_bounds = array<i64: 16, 16>}, {pipeline_mode = #tpu.pipeline_mode<synchronous>, transform_indices = @transform_14, window_bounds = array<i64: 16, 512>}, {pipeline_mode = #tpu.pipeline_mode<synchronous>, transform_indices = @transform_15, window_bounds = array<i64: 16, 512>}, {pipeline_mode = #tpu.pipeline_mode<synchronous>, transform_indices = @transform_16, window_bounds = array<i64: 1, 512>}, {pipeline_mode = #tpu.pipeline_mode<synchronous>, transform_indices = @transform_17, window_bounds = array<i64: 1, 1024>}, {pipeline_mode = #tpu.pipeline_mode<synchronous>, transform_indices = @transform_18, window_bounds = array<i64: 1, 1024>}, {}, {}, {pipeline_mode = #tpu.pipeline_mode<synchronous>, transform_indices = @transform_21, window_bounds = array<i64: 2, 1024>}]} {
    %c0_i32 = arith.constant 0 : i32
    %0 = tpu.memref_slice %arg25[%c0_i32] : memref<2x!tpu.dma_semaphore, #tpu.memory_space<semaphore_mem>> -> memref<1x!tpu.dma_semaphore, #tpu.memory_space<semaphore_mem>>
    %1 = tpu.memref_squeeze %0 : memref<1x!tpu.dma_semaphore, #tpu.memory_space<semaphore_mem>> -> memref<!tpu.dma_semaphore, #tpu.memory_space<semaphore_mem>>
    tpu.enqueue_dma source(%arg20 : memref<512x1024xbf16, #tpu.memory_space<any>>) target(%arg23 : memref<512x1024xbf16, #tpu.memory_space<vmem>>) target_semaphore(%1 : memref<!tpu.dma_semaphore, #tpu.memory_space<semaphore_mem>>)
    %c1_i32 = arith.constant 1 : i32
    %2 = tpu.memref_slice %arg25[%c1_i32] : memref<2x!tpu.dma_semaphore, #tpu.memory_space<semaphore_mem>> -> memref<1x!tpu.dma_semaphore, #tpu.memory_space<semaphore_mem>>
    %3 = tpu.memref_squeeze %2 : memref<1x!tpu.dma_semaphore, #tpu.memory_space<semaphore_mem>> -> memref<!tpu.dma_semaphore, #tpu.memory_space<semaphore_mem>>
    tpu.enqueue_dma source(%arg21 : memref<1024x1024xbf16, #tpu.memory_space<any>>) target(%arg24 : memref<1024x1024xbf16, #tpu.memory_space<vmem>>) target_semaphore(%3 : memref<!tpu.dma_semaphore, #tpu.memory_space<semaphore_mem>>)
    %c0 = arith.constant 0 : index
    %c0_0 = arith.constant 0 : index
    %c0_1 = arith.constant 0 : index
    %4 = vector.load %arg1[%c0, %c0_0, %c0_1] : memref<10x2x6xf32, #tpu.memory_space<vmem>>, vector<1x2x6xf32>
    %5 = vector.shape_cast %4 : vector<1x2x6xf32> to vector<2x6xf32>
    %c1 = arith.constant 1 : index
    %c0_2 = arith.constant 0 : index
    %c0_3 = arith.constant 0 : index
    %6 = vector.load %arg1[%c1, %c0_2, %c0_3] : memref<10x2x6xf32, #tpu.memory_space<vmem>>, vector<1x2x6xf32>
    %7 = vector.shape_cast %6 : vector<1x2x6xf32> to vector<2x6xf32>
    %c2 = arith.constant 2 : index
    %c0_4 = arith.constant 0 : index
    %c0_5 = arith.constant 0 : index
    %8 = vector.load %arg1[%c2, %c0_4, %c0_5] : memref<10x2x6xf32, #tpu.memory_space<vmem>>, vector<1x2x6xf32>
    %9 = vector.shape_cast %8 : vector<1x2x6xf32> to vector<2x6xf32>
    %c3 = arith.constant 3 : index
    %c0_6 = arith.constant 0 : index
    %c0_7 = arith.constant 0 : index
    %10 = vector.load %arg1[%c3, %c0_6, %c0_7] : memref<10x2x6xf32, #tpu.memory_space<vmem>>, vector<1x2x6xf32>
    %11 = vector.shape_cast %10 : vector<1x2x6xf32> to vector<2x6xf32>
    %c4 = arith.constant 4 : index
    %c0_8 = arith.constant 0 : index
    %c0_9 = arith.constant 0 : index
    %12 = vector.load %arg1[%c4, %c0_8, %c0_9] : memref<10x2x6xf32, #tpu.memory_space<vmem>>, vector<1x2x6xf32>
    %13 = vector.shape_cast %12 : vector<1x2x6xf32> to vector<2x6xf32>
    %c5 = arith.constant 5 : index
    %c0_10 = arith.constant 0 : index
    %c0_11 = arith.constant 0 : index
    %14 = vector.load %arg1[%c5, %c0_10, %c0_11] : memref<10x2x6xf32, #tpu.memory_space<vmem>>, vector<1x2x6xf32>
    %15 = vector.shape_cast %14 : vector<1x2x6xf32> to vector<2x6xf32>
    %c6 = arith.constant 6 : index
    %c0_12 = arith.constant 0 : index
    %c0_13 = arith.constant 0 : index
    %16 = vector.load %arg1[%c6, %c0_12, %c0_13] : memref<10x2x6xf32, #tpu.memory_space<vmem>>, vector<1x2x6xf32>
    %17 = vector.shape_cast %16 : vector<1x2x6xf32> to vector<2x6xf32>
    %c7 = arith.constant 7 : index
    %c0_14 = arith.constant 0 : index
    %c0_15 = arith.constant 0 : index
    %18 = vector.load %arg1[%c7, %c0_14, %c0_15] : memref<10x2x6xf32, #tpu.memory_space<vmem>>, vector<1x2x6xf32>
    %19 = vector.shape_cast %18 : vector<1x2x6xf32> to vector<2x6xf32>
    %c8 = arith.constant 8 : index
    %c0_16 = arith.constant 0 : index
    %c0_17 = arith.constant 0 : index
    %20 = vector.load %arg1[%c8, %c0_16, %c0_17] : memref<10x2x6xf32, #tpu.memory_space<vmem>>, vector<1x2x6xf32>
    %21 = vector.shape_cast %20 : vector<1x2x6xf32> to vector<2x6xf32>
    %c9 = arith.constant 9 : index
    %c0_18 = arith.constant 0 : index
    %c0_19 = arith.constant 0 : index
    %22 = vector.load %arg1[%c9, %c0_18, %c0_19] : memref<10x2x6xf32, #tpu.memory_space<vmem>>, vector<1x2x6xf32>
    %23 = vector.shape_cast %22 : vector<1x2x6xf32> to vector<2x6xf32>
    %24 = vector.extract_strided_slice %5 {offsets = [0, 0], sizes = [2, 3], strides = [1, 1]} : vector<2x6xf32> to vector<2x3xf32>
    %25 = vector.extract_strided_slice %7 {offsets = [0, 0], sizes = [2, 3], strides = [1, 1]} : vector<2x6xf32> to vector<2x3xf32>
    %26 = vector.extract_strided_slice %9 {offsets = [0, 0], sizes = [2, 3], strides = [1, 1]} : vector<2x6xf32> to vector<2x3xf32>
    %27 = tpu.concatenate %24, %25, %26 in 1 : vector<2x3xf32>, vector<2x3xf32>, vector<2x3xf32> -> vector<2x9xf32>
    %28 = vector.extract_strided_slice %5 {offsets = [0, 1], sizes = [2, 3], strides = [1, 1]} : vector<2x6xf32> to vector<2x3xf32>
    %29 = vector.extract_strided_slice %7 {offsets = [0, 1], sizes = [2, 3], strides = [1, 1]} : vector<2x6xf32> to vector<2x3xf32>
    %30 = vector.extract_strided_slice %9 {offsets = [0, 1], sizes = [2, 3], strides = [1, 1]} : vector<2x6xf32> to vector<2x3xf32>
    %31 = tpu.concatenate %28, %29, %30 in 1 : vector<2x3xf32>, vector<2x3xf32>, vector<2x3xf32> -> vector<2x9xf32>
    %32 = vector.extract_strided_slice %5 {offsets = [0, 2], sizes = [2, 3], strides = [1, 1]} : vector<2x6xf32> to vector<2x3xf32>
    %33 = vector.extract_strided_slice %7 {offsets = [0, 2], sizes = [2, 3], strides = [1, 1]} : vector<2x6xf32> to vector<2x3xf32>
    %34 = vector.extract_strided_slice %9 {offsets = [0, 2], sizes = [2, 3], strides = [1, 1]} : vector<2x6xf32> to vector<2x3xf32>
    %35 = tpu.concatenate %32, %33, %34 in 1 : vector<2x3xf32>, vector<2x3xf32>, vector<2x3xf32> -> vector<2x9xf32>
    %36 = vector.extract_strided_slice %5 {offsets = [0, 3], sizes = [2, 3], strides = [1, 1]} : vector<2x6xf32> to vector<2x3xf32>
    %37 = vector.extract_strided_slice %7 {offsets = [0, 3], sizes = [2, 3], strides = [1, 1]} : vector<2x6xf32> to vector<2x3xf32>
    %38 = vector.extract_strided_slice %9 {offsets = [0, 3], sizes = [2, 3], strides = [1, 1]} : vector<2x6xf32> to vector<2x3xf32>
    %39 = tpu.concatenate %36, %37, %38 in 1 : vector<2x3xf32>, vector<2x3xf32>, vector<2x3xf32> -> vector<2x9xf32>
    %40 = vector.extract_strided_slice %7 {offsets = [0, 0], sizes = [2, 3], strides = [1, 1]} : vector<2x6xf32> to vector<2x3xf32>
    %41 = vector.extract_strided_slice %9 {offsets = [0, 0], sizes = [2, 3], strides = [1, 1]} : vector<2x6xf32> to vector<2x3xf32>
    %42 = vector.extract_strided_slice %11 {offsets = [0, 0], sizes = [2, 3], strides = [1, 1]} : vector<2x6xf32> to vector<2x3xf32>
    %43 = tpu.concatenate %40, %41, %42 in 1 : vector<2x3xf32>, vector<2x3xf32>, vector<2x3xf32> -> vector<2x9xf32>
    %44 = vector.extract_strided_slice %7 {offsets = [0, 1], sizes = [2, 3], strides = [1, 1]} : vector<2x6xf32> to vector<2x3xf32>
    %45 = vector.extract_strided_slice %9 {offsets = [0, 1], sizes = [2, 3], strides = [1, 1]} : vector<2x6xf32> to vector<2x3xf32>
    %46 = vector.extract_strided_slice %11 {offsets = [0, 1], sizes = [2, 3], strides = [1, 1]} : vector<2x6xf32> to vector<2x3xf32>
    %47 = tpu.concatenate %44, %45, %46 in 1 : vector<2x3xf32>, vector<2x3xf32>, vector<2x3xf32> -> vector<2x9xf32>
    %48 = vector.extract_strided_slice %7 {offsets = [0, 2], sizes = [2, 3], strides = [1, 1]} : vector<2x6xf32> to vector<2x3xf32>
    %49 = vector.extract_strided_slice %9 {offsets = [0, 2], sizes = [2, 3], strides = [1, 1]} : vector<2x6xf32> to vector<2x3xf32>
    %50 = vector.extract_strided_slice %11 {offsets = [0, 2], sizes = [2, 3], strides = [1, 1]} : vector<2x6xf32> to vector<2x3xf32>
    %51 = tpu.concatenate %48, %49, %50 in 1 : vector<2x3xf32>, vector<2x3xf32>, vector<2x3xf32> -> vector<2x9xf32>
    %52 = vector.extract_strided_slice %7 {offsets = [0, 3], sizes = [2, 3], strides = [1, 1]} : vector<2x6xf32> to vector<2x3xf32>
    %53 = vector.extract_strided_slice %9 {offsets = [0, 3], sizes = [2, 3], strides = [1, 1]} : vector<2x6xf32> to vector<2x3xf32>
    %54 = vector.extract_strided_slice %11 {offsets = [0, 3], sizes = [2, 3], strides = [1, 1]} : vector<2x6xf32> to vector<2x3xf32>
    %55 = tpu.concatenate %52, %53, %54 in 1 : vector<2x3xf32>, vector<2x3xf32>, vector<2x3xf32> -> vector<2x9xf32>
    %56 = vector.extract_strided_slice %9 {offsets = [0, 0], sizes = [2, 3], strides = [1, 1]} : vector<2x6xf32> to vector<2x3xf32>
    %57 = vector.extract_strided_slice %11 {offsets = [0, 0], sizes = [2, 3], strides = [1, 1]} : vector<2x6xf32> to vector<2x3xf32>
    %58 = vector.extract_strided_slice %13 {offsets = [0, 0], sizes = [2, 3], strides = [1, 1]} : vector<2x6xf32> to vector<2x3xf32>
    %59 = tpu.concatenate %56, %57, %58 in 1 : vector<2x3xf32>, vector<2x3xf32>, vector<2x3xf32> -> vector<2x9xf32>
    %60 = vector.extract_strided_slice %9 {offsets = [0, 1], sizes = [2, 3], strides = [1, 1]} : vector<2x6xf32> to vector<2x3xf32>
    %61 = vector.extract_strided_slice %11 {offsets = [0, 1], sizes = [2, 3], strides = [1, 1]} : vector<2x6xf32> to vector<2x3xf32>
    %62 = vector.extract_strided_slice %13 {offsets = [0, 1], sizes = [2, 3], strides = [1, 1]} : vector<2x6xf32> to vector<2x3xf32>
    %63 = tpu.concatenate %60, %61, %62 in 1 : vector<2x3xf32>, vector<2x3xf32>, vector<2x3xf32> -> vector<2x9xf32>
    %64 = vector.extract_strided_slice %9 {offsets = [0, 2], sizes = [2, 3], strides = [1, 1]} : vector<2x6xf32> to vector<2x3xf32>
    %65 = vector.extract_strided_slice %11 {offsets = [0, 2], sizes = [2, 3], strides = [1, 1]} : vector<2x6xf32> to vector<2x3xf32>
    %66 = vector.extract_strided_slice %13 {offsets = [0, 2], sizes = [2, 3], strides = [1, 1]} : vector<2x6xf32> to vector<2x3xf32>
    %67 = tpu.concatenate %64, %65, %66 in 1 : vector<2x3xf32>, vector<2x3xf32>, vector<2x3xf32> -> vector<2x9xf32>
    %68 = vector.extract_strided_slice %9 {offsets = [0, 3], sizes = [2, 3], strides = [1, 1]} : vector<2x6xf32> to vector<2x3xf32>
    %69 = vector.extract_strided_slice %11 {offsets = [0, 3], sizes = [2, 3], strides = [1, 1]} : vector<2x6xf32> to vector<2x3xf32>
    %70 = vector.extract_strided_slice %13 {offsets = [0, 3], sizes = [2, 3], strides = [1, 1]} : vector<2x6xf32> to vector<2x3xf32>
    %71 = tpu.concatenate %68, %69, %70 in 1 : vector<2x3xf32>, vector<2x3xf32>, vector<2x3xf32> -> vector<2x9xf32>
    %72 = vector.extract_strided_slice %11 {offsets = [0, 0], sizes = [2, 3], strides = [1, 1]} : vector<2x6xf32> to vector<2x3xf32>
    %73 = vector.extract_strided_slice %13 {offsets = [0, 0], sizes = [2, 3], strides = [1, 1]} : vector<2x6xf32> to vector<2x3xf32>
    %74 = vector.extract_strided_slice %15 {offsets = [0, 0], sizes = [2, 3], strides = [1, 1]} : vector<2x6xf32> to vector<2x3xf32>
    %75 = tpu.concatenate %72, %73, %74 in 1 : vector<2x3xf32>, vector<2x3xf32>, vector<2x3xf32> -> vector<2x9xf32>
    %76 = vector.extract_strided_slice %11 {offsets = [0, 1], sizes = [2, 3], strides = [1, 1]} : vector<2x6xf32> to vector<2x3xf32>
    %77 = vector.extract_strided_slice %13 {offsets = [0, 1], sizes = [2, 3], strides = [1, 1]} : vector<2x6xf32> to vector<2x3xf32>
    %78 = vector.extract_strided_slice %15 {offsets = [0, 1], sizes = [2, 3], strides = [1, 1]} : vector<2x6xf32> to vector<2x3xf32>
    %79 = tpu.concatenate %76, %77, %78 in 1 : vector<2x3xf32>, vector<2x3xf32>, vector<2x3xf32> -> vector<2x9xf32>
    %80 = vector.extract_strided_slice %11 {offsets = [0, 2], sizes = [2, 3], strides = [1, 1]} : vector<2x6xf32> to vector<2x3xf32>
    %81 = vector.extract_strided_slice %13 {offsets = [0, 2], sizes = [2, 3], strides = [1, 1]} : vector<2x6xf32> to vector<2x3xf32>
    %82 = vector.extract_strided_slice %15 {offsets = [0, 2], sizes = [2, 3], strides = [1, 1]} : vector<2x6xf32> to vector<2x3xf32>
    %83 = tpu.concatenate %80, %81, %82 in 1 : vector<2x3xf32>, vector<2x3xf32>, vector<2x3xf32> -> vector<2x9xf32>
    %84 = vector.extract_strided_slice %11 {offsets = [0, 3], sizes = [2, 3], strides = [1, 1]} : vector<2x6xf32> to vector<2x3xf32>
    %85 = vector.extract_strided_slice %13 {offsets = [0, 3], sizes = [2, 3], strides = [1, 1]} : vector<2x6xf32> to vector<2x3xf32>
    %86 = vector.extract_strided_slice %15 {offsets = [0, 3], sizes = [2, 3], strides = [1, 1]} : vector<2x6xf32> to vector<2x3xf32>
    %87 = tpu.concatenate %84, %85, %86 in 1 : vector<2x3xf32>, vector<2x3xf32>, vector<2x3xf32> -> vector<2x9xf32>
    %88 = vector.extract_strided_slice %13 {offsets = [0, 0], sizes = [2, 3], strides = [1, 1]} : vector<2x6xf32> to vector<2x3xf32>
    %89 = vector.extract_strided_slice %15 {offsets = [0, 0], sizes = [2, 3], strides = [1, 1]} : vector<2x6xf32> to vector<2x3xf32>
    %90 = vector.extract_strided_slice %17 {offsets = [0, 0], sizes = [2, 3], strides = [1, 1]} : vector<2x6xf32> to vector<2x3xf32>
    %91 = tpu.concatenate %88, %89, %90 in 1 : vector<2x3xf32>, vector<2x3xf32>, vector<2x3xf32> -> vector<2x9xf32>
    %92 = vector.extract_strided_slice %13 {offsets = [0, 1], sizes = [2, 3], strides = [1, 1]} : vector<2x6xf32> to vector<2x3xf32>
    %93 = vector.extract_strided_slice %15 {offsets = [0, 1], sizes = [2, 3], strides = [1, 1]} : vector<2x6xf32> to vector<2x3xf32>
    %94 = vector.extract_strided_slice %17 {offsets = [0, 1], sizes = [2, 3], strides = [1, 1]} : vector<2x6xf32> to vector<2x3xf32>
    %95 = tpu.concatenate %92, %93, %94 in 1 : vector<2x3xf32>, vector<2x3xf32>, vector<2x3xf32> -> vector<2x9xf32>
    %96 = vector.extract_strided_slice %13 {offsets = [0, 2], sizes = [2, 3], strides = [1, 1]} : vector<2x6xf32> to vector<2x3xf32>
    %97 = vector.extract_strided_slice %15 {offsets = [0, 2], sizes = [2, 3], strides = [1, 1]} : vector<2x6xf32> to vector<2x3xf32>
    %98 = vector.extract_strided_slice %17 {offsets = [0, 2], sizes = [2, 3], strides = [1, 1]} : vector<2x6xf32> to vector<2x3xf32>
    %99 = tpu.concatenate %96, %97, %98 in 1 : vector<2x3xf32>, vector<2x3xf32>, vector<2x3xf32> -> vector<2x9xf32>
    %100 = vector.extract_strided_slice %13 {offsets = [0, 3], sizes = [2, 3], strides = [1, 1]} : vector<2x6xf32> to vector<2x3xf32>
    %101 = vector.extract_strided_slice %15 {offsets = [0, 3], sizes = [2, 3], strides = [1, 1]} : vector<2x6xf32> to vector<2x3xf32>
    %102 = vector.extract_strided_slice %17 {offsets = [0, 3], sizes = [2, 3], strides = [1, 1]} : vector<2x6xf32> to vector<2x3xf32>
    %103 = tpu.concatenate %100, %101, %102 in 1 : vector<2x3xf32>, vector<2x3xf32>, vector<2x3xf32> -> vector<2x9xf32>
    %104 = vector.extract_strided_slice %15 {offsets = [0, 0], sizes = [2, 3], strides = [1, 1]} : vector<2x6xf32> to vector<2x3xf32>
    %105 = vector.extract_strided_slice %17 {offsets = [0, 0], sizes = [2, 3], strides = [1, 1]} : vector<2x6xf32> to vector<2x3xf32>
    %106 = vector.extract_strided_slice %19 {offsets = [0, 0], sizes = [2, 3], strides = [1, 1]} : vector<2x6xf32> to vector<2x3xf32>
    %107 = tpu.concatenate %104, %105, %106 in 1 : vector<2x3xf32>, vector<2x3xf32>, vector<2x3xf32> -> vector<2x9xf32>
    %108 = vector.extract_strided_slice %15 {offsets = [0, 1], sizes = [2, 3], strides = [1, 1]} : vector<2x6xf32> to vector<2x3xf32>
    %109 = vector.extract_strided_slice %17 {offsets = [0, 1], sizes = [2, 3], strides = [1, 1]} : vector<2x6xf32> to vector<2x3xf32>
    %110 = vector.extract_strided_slice %19 {offsets = [0, 1], sizes = [2, 3], strides = [1, 1]} : vector<2x6xf32> to vector<2x3xf32>
    %111 = tpu.concatenate %108, %109, %110 in 1 : vector<2x3xf32>, vector<2x3xf32>, vector<2x3xf32> -> vector<2x9xf32>
    %112 = vector.extract_strided_slice %15 {offsets = [0, 2], sizes = [2, 3], strides = [1, 1]} : vector<2x6xf32> to vector<2x3xf32>
    %113 = vector.extract_strided_slice %17 {offsets = [0, 2], sizes = [2, 3], strides = [1, 1]} : vector<2x6xf32> to vector<2x3xf32>
    %114 = vector.extract_strided_slice %19 {offsets = [0, 2], sizes = [2, 3], strides = [1, 1]} : vector<2x6xf32> to vector<2x3xf32>
    %115 = tpu.concatenate %112, %113, %114 in 1 : vector<2x3xf32>, vector<2x3xf32>, vector<2x3xf32> -> vector<2x9xf32>
    %116 = vector.extract_strided_slice %15 {offsets = [0, 3], sizes = [2, 3], strides = [1, 1]} : vector<2x6xf32> to vector<2x3xf32>
    %117 = vector.extract_strided_slice %17 {offsets = [0, 3], sizes = [2, 3], strides = [1, 1]} : vector<2x6xf32> to vector<2x3xf32>
    %118 = vector.extract_strided_slice %19 {offsets = [0, 3], sizes = [2, 3], strides = [1, 1]} : vector<2x6xf32> to vector<2x3xf32>
    %119 = tpu.concatenate %116, %117, %118 in 1 : vector<2x3xf32>, vector<2x3xf32>, vector<2x3xf32> -> vector<2x9xf32>
    %120 = vector.extract_strided_slice %17 {offsets = [0, 0], sizes = [2, 3], strides = [1, 1]} : vector<2x6xf32> to vector<2x3xf32>
    %121 = vector.extract_strided_slice %19 {offsets = [0, 0], sizes = [2, 3], strides = [1, 1]} : vector<2x6xf32> to vector<2x3xf32>
    %122 = vector.extract_strided_slice %21 {offsets = [0, 0], sizes = [2, 3], strides = [1, 1]} : vector<2x6xf32> to vector<2x3xf32>
    %123 = tpu.concatenate %120, %121, %122 in 1 : vector<2x3xf32>, vector<2x3xf32>, vector<2x3xf32> -> vector<2x9xf32>
    %124 = vector.extract_strided_slice %17 {offsets = [0, 1], sizes = [2, 3], strides = [1, 1]} : vector<2x6xf32> to vector<2x3xf32>
    %125 = vector.extract_strided_slice %19 {offsets = [0, 1], sizes = [2, 3], strides = [1, 1]} : vector<2x6xf32> to vector<2x3xf32>
    %126 = vector.extract_strided_slice %21 {offsets = [0, 1], sizes = [2, 3], strides = [1, 1]} : vector<2x6xf32> to vector<2x3xf32>
    %127 = tpu.concatenate %124, %125, %126 in 1 : vector<2x3xf32>, vector<2x3xf32>, vector<2x3xf32> -> vector<2x9xf32>
    %128 = vector.extract_strided_slice %17 {offsets = [0, 2], sizes = [2, 3], strides = [1, 1]} : vector<2x6xf32> to vector<2x3xf32>
    %129 = vector.extract_strided_slice %19 {offsets = [0, 2], sizes = [2, 3], strides = [1, 1]} : vector<2x6xf32> to vector<2x3xf32>
    %130 = vector.extract_strided_slice %21 {offsets = [0, 2], sizes = [2, 3], strides = [1, 1]} : vector<2x6xf32> to vector<2x3xf32>
    %131 = tpu.concatenate %128, %129, %130 in 1 : vector<2x3xf32>, vector<2x3xf32>, vector<2x3xf32> -> vector<2x9xf32>
    %132 = vector.extract_strided_slice %17 {offsets = [0, 3], sizes = [2, 3], strides = [1, 1]} : vector<2x6xf32> to vector<2x3xf32>
    %133 = vector.extract_strided_slice %19 {offsets = [0, 3], sizes = [2, 3], strides = [1, 1]} : vector<2x6xf32> to vector<2x3xf32>
    %134 = vector.extract_strided_slice %21 {offsets = [0, 3], sizes = [2, 3], strides = [1, 1]} : vector<2x6xf32> to vector<2x3xf32>
    %135 = tpu.concatenate %132, %133, %134 in 1 : vector<2x3xf32>, vector<2x3xf32>, vector<2x3xf32> -> vector<2x9xf32>
    %136 = vector.extract_strided_slice %19 {offsets = [0, 0], sizes = [2, 3], strides = [1, 1]} : vector<2x6xf32> to vector<2x3xf32>
    %137 = vector.extract_strided_slice %21 {offsets = [0, 0], sizes = [2, 3], strides = [1, 1]} : vector<2x6xf32> to vector<2x3xf32>
    %138 = vector.extract_strided_slice %23 {offsets = [0, 0], sizes = [2, 3], strides = [1, 1]} : vector<2x6xf32> to vector<2x3xf32>
    %139 = tpu.concatenate %136, %137, %138 in 1 : vector<2x3xf32>, vector<2x3xf32>, vector<2x3xf32> -> vector<2x9xf32>
    %140 = vector.extract_strided_slice %19 {offsets = [0, 1], sizes = [2, 3], strides = [1, 1]} : vector<2x6xf32> to vector<2x3xf32>
    %141 = vector.extract_strided_slice %21 {offsets = [0, 1], sizes = [2, 3], strides = [1, 1]} : vector<2x6xf32> to vector<2x3xf32>
    %142 = vector.extract_strided_slice %23 {offsets = [0, 1], sizes = [2, 3], strides = [1, 1]} : vector<2x6xf32> to vector<2x3xf32>
    %143 = tpu.concatenate %140, %141, %142 in 1 : vector<2x3xf32>, vector<2x3xf32>, vector<2x3xf32> -> vector<2x9xf32>
    %144 = vector.extract_strided_slice %19 {offsets = [0, 2], sizes = [2, 3], strides = [1, 1]} : vector<2x6xf32> to vector<2x3xf32>
    %145 = vector.extract_strided_slice %21 {offsets = [0, 2], sizes = [2, 3], strides = [1, 1]} : vector<2x6xf32> to vector<2x3xf32>
    %146 = vector.extract_strided_slice %23 {offsets = [0, 2], sizes = [2, 3], strides = [1, 1]} : vector<2x6xf32> to vector<2x3xf32>
    %147 = tpu.concatenate %144, %145, %146 in 1 : vector<2x3xf32>, vector<2x3xf32>, vector<2x3xf32> -> vector<2x9xf32>
    %148 = vector.extract_strided_slice %19 {offsets = [0, 3], sizes = [2, 3], strides = [1, 1]} : vector<2x6xf32> to vector<2x3xf32>
    %149 = vector.extract_strided_slice %21 {offsets = [0, 3], sizes = [2, 3], strides = [1, 1]} : vector<2x6xf32> to vector<2x3xf32>
    %150 = vector.extract_strided_slice %23 {offsets = [0, 3], sizes = [2, 3], strides = [1, 1]} : vector<2x6xf32> to vector<2x3xf32>
    %151 = tpu.concatenate %148, %149, %150 in 1 : vector<2x3xf32>, vector<2x3xf32>, vector<2x3xf32> -> vector<2x9xf32>
    %152 = tpu.concatenate %27, %31, %35, %39, %43, %47, %51, %55, %59, %63, %67, %71, %75, %79, %83, %87 in 0 : vector<2x9xf32>, vector<2x9xf32>, vector<2x9xf32>, vector<2x9xf32>, vector<2x9xf32>, vector<2x9xf32>, vector<2x9xf32>, vector<2x9xf32>, vector<2x9xf32>, vector<2x9xf32>, vector<2x9xf32>, vector<2x9xf32>, vector<2x9xf32>, vector<2x9xf32>, vector<2x9xf32>, vector<2x9xf32> -> vector<32x9xf32>
    %153 = tpu.concatenate %91, %95, %99, %103, %107, %111, %115, %119, %123, %127, %131, %135, %139, %143, %147, %151 in 0 : vector<2x9xf32>, vector<2x9xf32>, vector<2x9xf32>, vector<2x9xf32>, vector<2x9xf32>, vector<2x9xf32>, vector<2x9xf32>, vector<2x9xf32>, vector<2x9xf32>, vector<2x9xf32>, vector<2x9xf32>, vector<2x9xf32>, vector<2x9xf32>, vector<2x9xf32>, vector<2x9xf32>, vector<2x9xf32> -> vector<32x9xf32>
    %154 = tpu.concatenate %152, %153 in 0 : vector<32x9xf32>, vector<32x9xf32> -> vector<64x9xf32>
    %c0_20 = arith.constant 0 : index
    %c0_21 = arith.constant 0 : index
    %155 = vector.load %arg2[%c0_20, %c0_21] : memref<9x8xf32, #tpu.memory_space<vmem>>, vector<9x8xf32>
    %cst = arith.constant dense<0.000000e+00> : vector<64x8xf32>
    %156 = tpu.matmul %154, %155, %cst {dimension_numbers = #tpu.dot_dimension_numbers<[1], [0], [0], [1], [0, 0, 1, 1], [], []>} : vector<64x9xf32>, vector<9x8xf32>, vector<64x8xf32> -> vector<64x8xf32>
    %c0_22 = arith.constant 0 : index
    %c0_23 = arith.constant 0 : index
    %157 = vector.load %arg3[%c0_22, %c0_23] : memref<1x8xf32, #tpu.memory_space<vmem>>, vector<1x8xf32>
    %158 = vector.broadcast %157 : vector<1x8xf32> to vector<64x8xf32>
    %159 = arith.addf %156, %158 : vector<64x8xf32>
    %cst_24 = arith.constant 0.000000e+00 : f32
    %160 = vector.broadcast %cst_24 : f32 to vector<64x8xf32>
    %161 = arith.maximumf %159, %160 : vector<64x8xf32>
    %162 = vector.extract_strided_slice %161 {offsets = [0, 0], sizes = [2, 8], strides = [1, 1]} : vector<64x8xf32> to vector<2x8xf32>
    %163 = vector.extract_strided_slice %161 {offsets = [2, 0], sizes = [2, 8], strides = [1, 1]} : vector<64x8xf32> to vector<2x8xf32>
    %164 = arith.maximumf %162, %163 : vector<2x8xf32>
    %165 = vector.extract_strided_slice %161 {offsets = [8, 0], sizes = [2, 8], strides = [1, 1]} : vector<64x8xf32> to vector<2x8xf32>
    %166 = vector.extract_strided_slice %161 {offsets = [10, 0], sizes = [2, 8], strides = [1, 1]} : vector<64x8xf32> to vector<2x8xf32>
    %167 = arith.maximumf %165, %166 : vector<2x8xf32>
    %168 = arith.maximumf %164, %167 : vector<2x8xf32>
    %169 = vector.extract_strided_slice %161 {offsets = [4, 0], sizes = [2, 8], strides = [1, 1]} : vector<64x8xf32> to vector<2x8xf32>
    %170 = vector.extract_strided_slice %161 {offsets = [6, 0], sizes = [2, 8], strides = [1, 1]} : vector<64x8xf32> to vector<2x8xf32>
    %171 = arith.maximumf %169, %170 : vector<2x8xf32>
    %172 = vector.extract_strided_slice %161 {offsets = [12, 0], sizes = [2, 8], strides = [1, 1]} : vector<64x8xf32> to vector<2x8xf32>
    %173 = vector.extract_strided_slice %161 {offsets = [14, 0], sizes = [2, 8], strides = [1, 1]} : vector<64x8xf32> to vector<2x8xf32>
    %174 = arith.maximumf %172, %173 : vector<2x8xf32>
    %175 = arith.maximumf %171, %174 : vector<2x8xf32>
    %176 = vector.extract_strided_slice %161 {offsets = [16, 0], sizes = [2, 8], strides = [1, 1]} : vector<64x8xf32> to vector<2x8xf32>
    %177 = vector.extract_strided_slice %161 {offsets = [18, 0], sizes = [2, 8], strides = [1, 1]} : vector<64x8xf32> to vector<2x8xf32>
    %178 = arith.maximumf %176, %177 : vector<2x8xf32>
    %179 = vector.extract_strided_slice %161 {offsets = [24, 0], sizes = [2, 8], strides = [1, 1]} : vector<64x8xf32> to vector<2x8xf32>
    %180 = vector.extract_strided_slice %161 {offsets = [26, 0], sizes = [2, 8], strides = [1, 1]} : vector<64x8xf32> to vector<2x8xf32>
    %181 = arith.maximumf %179, %180 : vector<2x8xf32>
    %182 = arith.maximumf %178, %181 : vector<2x8xf32>
    %183 = vector.extract_strided_slice %161 {offsets = [20, 0], sizes = [2, 8], strides = [1, 1]} : vector<64x8xf32> to vector<2x8xf32>
    %184 = vector.extract_strided_slice %161 {offsets = [22, 0], sizes = [2, 8], strides = [1, 1]} : vector<64x8xf32> to vector<2x8xf32>
    %185 = arith.maximumf %183, %184 : vector<2x8xf32>
    %186 = vector.extract_strided_slice %161 {offsets = [28, 0], sizes = [2, 8], strides = [1, 1]} : vector<64x8xf32> to vector<2x8xf32>
    %187 = vector.extract_strided_slice %161 {offsets = [30, 0], sizes = [2, 8], strides = [1, 1]} : vector<64x8xf32> to vector<2x8xf32>
    %188 = arith.maximumf %186, %187 : vector<2x8xf32>
    %189 = arith.maximumf %185, %188 : vector<2x8xf32>
    %190 = vector.extract_strided_slice %161 {offsets = [32, 0], sizes = [2, 8], strides = [1, 1]} : vector<64x8xf32> to vector<2x8xf32>
    %191 = vector.extract_strided_slice %161 {offsets = [34, 0], sizes = [2, 8], strides = [1, 1]} : vector<64x8xf32> to vector<2x8xf32>
    %192 = arith.maximumf %190, %191 : vector<2x8xf32>
    %193 = vector.extract_strided_slice %161 {offsets = [40, 0], sizes = [2, 8], strides = [1, 1]} : vector<64x8xf32> to vector<2x8xf32>
    %194 = vector.extract_strided_slice %161 {offsets = [42, 0], sizes = [2, 8], strides = [1, 1]} : vector<64x8xf32> to vector<2x8xf32>
    %195 = arith.maximumf %193, %194 : vector<2x8xf32>
    %196 = arith.maximumf %192, %195 : vector<2x8xf32>
    %197 = vector.extract_strided_slice %161 {offsets = [36, 0], sizes = [2, 8], strides = [1, 1]} : vector<64x8xf32> to vector<2x8xf32>
    %198 = vector.extract_strided_slice %161 {offsets = [38, 0], sizes = [2, 8], strides = [1, 1]} : vector<64x8xf32> to vector<2x8xf32>
    %199 = arith.maximumf %197, %198 : vector<2x8xf32>
    %200 = vector.extract_strided_slice %161 {offsets = [44, 0], sizes = [2, 8], strides = [1, 1]} : vector<64x8xf32> to vector<2x8xf32>
    %201 = vector.extract_strided_slice %161 {offsets = [46, 0], sizes = [2, 8], strides = [1, 1]} : vector<64x8xf32> to vector<2x8xf32>
    %202 = arith.maximumf %200, %201 : vector<2x8xf32>
    %203 = arith.maximumf %199, %202 : vector<2x8xf32>
    %204 = vector.extract_strided_slice %161 {offsets = [48, 0], sizes = [2, 8], strides = [1, 1]} : vector<64x8xf32> to vector<2x8xf32>
    %205 = vector.extract_strided_slice %161 {offsets = [50, 0], sizes = [2, 8], strides = [1, 1]} : vector<64x8xf32> to vector<2x8xf32>
    %206 = arith.maximumf %204, %205 : vector<2x8xf32>
    %207 = vector.extract_strided_slice %161 {offsets = [56, 0], sizes = [2, 8], strides = [1, 1]} : vector<64x8xf32> to vector<2x8xf32>
    %208 = vector.extract_strided_slice %161 {offsets = [58, 0], sizes = [2, 8], strides = [1, 1]} : vector<64x8xf32> to vector<2x8xf32>
    %209 = arith.maximumf %207, %208 : vector<2x8xf32>
    %210 = arith.maximumf %206, %209 : vector<2x8xf32>
    %211 = vector.extract_strided_slice %161 {offsets = [52, 0], sizes = [2, 8], strides = [1, 1]} : vector<64x8xf32> to vector<2x8xf32>
    %212 = vector.extract_strided_slice %161 {offsets = [54, 0], sizes = [2, 8], strides = [1, 1]} : vector<64x8xf32> to vector<2x8xf32>
    %213 = arith.maximumf %211, %212 : vector<2x8xf32>
    %214 = vector.extract_strided_slice %161 {offsets = [60, 0], sizes = [2, 8], strides = [1, 1]} : vector<64x8xf32> to vector<2x8xf32>
    %215 = vector.extract_strided_slice %161 {offsets = [62, 0], sizes = [2, 8], strides = [1, 1]} : vector<64x8xf32> to vector<2x8xf32>
    %216 = arith.maximumf %214, %215 : vector<2x8xf32>
    %217 = arith.maximumf %213, %216 : vector<2x8xf32>
    %cst_25 = arith.constant 0.000000e+00 : f32
    %218 = vector.broadcast %cst_25 : f32 to vector<2x8xf32>
    %cst_26 = arith.constant 0.000000e+00 : f32
    %219 = vector.broadcast %cst_26 : f32 to vector<16x16xf32>
    %220 = tpu.concatenate %218, %218, %218, %168, %218, %182, %218, %196 in 0 : vector<2x8xf32>, vector<2x8xf32>, vector<2x8xf32>, vector<2x8xf32>, vector<2x8xf32>, vector<2x8xf32>, vector<2x8xf32>, vector<2x8xf32> -> vector<16x8xf32>
    %c0_27 = arith.constant 0 : index
    %c0_28 = arith.constant 0 : index
    %221 = vector.load %arg4[%c0_27, %c0_28] : memref<72x16xf32, #tpu.memory_space<vmem>>, vector<8x16xf32>
    %cst_29 = arith.constant dense<0.000000e+00> : vector<16x16xf32>
    %222 = tpu.matmul %220, %221, %cst_29 {dimension_numbers = #tpu.dot_dimension_numbers<[1], [0], [0], [1], [0, 0, 1, 1], [], []>} : vector<16x8xf32>, vector<8x16xf32>, vector<16x16xf32> -> vector<16x16xf32>
    %223 = arith.addf %219, %222 : vector<16x16xf32>
    %224 = tpu.concatenate %218, %218, %168, %175, %182, %189, %196, %203 in 0 : vector<2x8xf32>, vector<2x8xf32>, vector<2x8xf32>, vector<2x8xf32>, vector<2x8xf32>, vector<2x8xf32>, vector<2x8xf32>, vector<2x8xf32> -> vector<16x8xf32>
    %c8_30 = arith.constant 8 : index
    %c0_31 = arith.constant 0 : index
    %225 = vector.load %arg4[%c8_30, %c0_31] : memref<72x16xf32, #tpu.memory_space<vmem>>, vector<8x16xf32>
    %cst_32 = arith.constant dense<0.000000e+00> : vector<16x16xf32>
    %226 = tpu.matmul %224, %225, %cst_32 {dimension_numbers = #tpu.dot_dimension_numbers<[1], [0], [0], [1], [0, 0, 1, 1], [], []>} : vector<16x8xf32>, vector<8x16xf32>, vector<16x16xf32> -> vector<16x16xf32>
    %227 = arith.addf %223, %226 : vector<16x16xf32>
    %228 = tpu.concatenate %218, %218, %175, %218, %189, %218, %203, %218 in 0 : vector<2x8xf32>, vector<2x8xf32>, vector<2x8xf32>, vector<2x8xf32>, vector<2x8xf32>, vector<2x8xf32>, vector<2x8xf32>, vector<2x8xf32> -> vector<16x8xf32>
    %c16 = arith.constant 16 : index
    %c0_33 = arith.constant 0 : index
    %229 = vector.load %arg4[%c16, %c0_33] : memref<72x16xf32, #tpu.memory_space<vmem>>, vector<8x16xf32>
    %cst_34 = arith.constant dense<0.000000e+00> : vector<16x16xf32>
    %230 = tpu.matmul %228, %229, %cst_34 {dimension_numbers = #tpu.dot_dimension_numbers<[1], [0], [0], [1], [0, 0, 1, 1], [], []>} : vector<16x8xf32>, vector<8x16xf32>, vector<16x16xf32> -> vector<16x16xf32>
    %231 = arith.addf %227, %230 : vector<16x16xf32>
    %232 = tpu.concatenate %218, %168, %218, %182, %218, %196, %218, %210 in 0 : vector<2x8xf32>, vector<2x8xf32>, vector<2x8xf32>, vector<2x8xf32>, vector<2x8xf32>, vector<2x8xf32>, vector<2x8xf32>, vector<2x8xf32> -> vector<16x8xf32>
    %c24 = arith.constant 24 : index
    %c0_35 = arith.constant 0 : index
    %233 = vector.load %arg4[%c24, %c0_35] : memref<72x16xf32, #tpu.memory_space<vmem>>, vector<8x16xf32>
    %cst_36 = arith.constant dense<0.000000e+00> : vector<16x16xf32>
    %234 = tpu.matmul %232, %233, %cst_36 {dimension_numbers = #tpu.dot_dimension_numbers<[1], [0], [0], [1], [0, 0, 1, 1], [], []>} : vector<16x8xf32>, vector<8x16xf32>, vector<16x16xf32> -> vector<16x16xf32>
    %235 = arith.addf %231, %234 : vector<16x16xf32>
    %236 = tpu.concatenate %168, %175, %182, %189, %196, %203, %210, %217 in 0 : vector<2x8xf32>, vector<2x8xf32>, vector<2x8xf32>, vector<2x8xf32>, vector<2x8xf32>, vector<2x8xf32>, vector<2x8xf32>, vector<2x8xf32> -> vector<16x8xf32>
    %c32 = arith.constant 32 : index
    %c0_37 = arith.constant 0 : index
    %237 = vector.load %arg4[%c32, %c0_37] : memref<72x16xf32, #tpu.memory_space<vmem>>, vector<8x16xf32>
    %cst_38 = arith.constant dense<0.000000e+00> : vector<16x16xf32>
    %238 = tpu.matmul %236, %237, %cst_38 {dimension_numbers = #tpu.dot_dimension_numbers<[1], [0], [0], [1], [0, 0, 1, 1], [], []>} : vector<16x8xf32>, vector<8x16xf32>, vector<16x16xf32> -> vector<16x16xf32>
    %239 = arith.addf %235, %238 : vector<16x16xf32>
    %240 = tpu.concatenate %175, %218, %189, %218, %203, %218, %217, %218 in 0 : vector<2x8xf32>, vector<2x8xf32>, vector<2x8xf32>, vector<2x8xf32>, vector<2x8xf32>, vector<2x8xf32>, vector<2x8xf32>, vector<2x8xf32> -> vector<16x8xf32>
    %c40 = arith.constant 40 : index
    %c0_39 = arith.constant 0 : index
    %241 = vector.load %arg4[%c40, %c0_39] : memref<72x16xf32, #tpu.memory_space<vmem>>, vector<8x16xf32>
    %cst_40 = arith.constant dense<0.000000e+00> : vector<16x16xf32>
    %242 = tpu.matmul %240, %241, %cst_40 {dimension_numbers = #tpu.dot_dimension_numbers<[1], [0], [0], [1], [0, 0, 1, 1], [], []>} : vector<16x8xf32>, vector<8x16xf32>, vector<16x16xf32> -> vector<16x16xf32>
    %243 = arith.addf %239, %242 : vector<16x16xf32>
    %244 = tpu.concatenate %218, %182, %218, %196, %218, %210, %218, %218 in 0 : vector<2x8xf32>, vector<2x8xf32>, vector<2x8xf32>, vector<2x8xf32>, vector<2x8xf32>, vector<2x8xf32>, vector<2x8xf32>, vector<2x8xf32> -> vector<16x8xf32>
    %c48 = arith.constant 48 : index
    %c0_41 = arith.constant 0 : index
    %245 = vector.load %arg4[%c48, %c0_41] : memref<72x16xf32, #tpu.memory_space<vmem>>, vector<8x16xf32>
    %cst_42 = arith.constant dense<0.000000e+00> : vector<16x16xf32>
    %246 = tpu.matmul %244, %245, %cst_42 {dimension_numbers = #tpu.dot_dimension_numbers<[1], [0], [0], [1], [0, 0, 1, 1], [], []>} : vector<16x8xf32>, vector<8x16xf32>, vector<16x16xf32> -> vector<16x16xf32>
    %247 = arith.addf %243, %246 : vector<16x16xf32>
    %248 = tpu.concatenate %182, %189, %196, %203, %210, %217, %218, %218 in 0 : vector<2x8xf32>, vector<2x8xf32>, vector<2x8xf32>, vector<2x8xf32>, vector<2x8xf32>, vector<2x8xf32>, vector<2x8xf32>, vector<2x8xf32> -> vector<16x8xf32>
    %c56 = arith.constant 56 : index
    %c0_43 = arith.constant 0 : index
    %249 = vector.load %arg4[%c56, %c0_43] : memref<72x16xf32, #tpu.memory_space<vmem>>, vector<8x16xf32>
    %cst_44 = arith.constant dense<0.000000e+00> : vector<16x16xf32>
    %250 = tpu.matmul %248, %249, %cst_44 {dimension_numbers = #tpu.dot_dimension_numbers<[1], [0], [0], [1], [0, 0, 1, 1], [], []>} : vector<16x8xf32>, vector<8x16xf32>, vector<16x16xf32> -> vector<16x16xf32>
    %251 = arith.addf %247, %250 : vector<16x16xf32>
    %252 = tpu.concatenate %189, %218, %203, %218, %217, %218, %218, %218 in 0 : vector<2x8xf32>, vector<2x8xf32>, vector<2x8xf32>, vector<2x8xf32>, vector<2x8xf32>, vector<2x8xf32>, vector<2x8xf32>, vector<2x8xf32> -> vector<16x8xf32>
    %c64 = arith.constant 64 : index
    %c0_45 = arith.constant 0 : index
    %253 = vector.load %arg4[%c64, %c0_45] : memref<72x16xf32, #tpu.memory_space<vmem>>, vector<8x16xf32>
    %cst_46 = arith.constant dense<0.000000e+00> : vector<16x16xf32>
    %254 = tpu.matmul %252, %253, %cst_46 {dimension_numbers = #tpu.dot_dimension_numbers<[1], [0], [0], [1], [0, 0, 1, 1], [], []>} : vector<16x8xf32>, vector<8x16xf32>, vector<16x16xf32> -> vector<16x16xf32>
    %255 = arith.addf %251, %254 : vector<16x16xf32>
    %c0_47 = arith.constant 0 : index
    %c0_48 = arith.constant 0 : index
    %256 = vector.load %arg5[%c0_47, %c0_48] : memref<1x16xf32, #tpu.memory_space<vmem>>, vector<1x16xf32>
    %257 = vector.broadcast %256 : vector<1x16xf32> to vector<16x16xf32>
    %258 = arith.addf %255, %257 : vector<16x16xf32>
    %cst_49 = arith.constant 0.000000e+00 : f32
    %259 = vector.broadcast %cst_49 : f32 to vector<16x16xf32>
    %260 = arith.maximumf %258, %259 : vector<16x16xf32>
    %261 = vector.extract_strided_slice %260 {offsets = [0, 0], sizes = [2, 16], strides = [1, 1]} : vector<16x16xf32> to vector<2x16xf32>
    %262 = vector.extract_strided_slice %260 {offsets = [2, 0], sizes = [2, 16], strides = [1, 1]} : vector<16x16xf32> to vector<2x16xf32>
    %263 = arith.maximumf %261, %262 : vector<2x16xf32>
    %264 = vector.extract_strided_slice %260 {offsets = [4, 0], sizes = [2, 16], strides = [1, 1]} : vector<16x16xf32> to vector<2x16xf32>
    %265 = vector.extract_strided_slice %260 {offsets = [6, 0], sizes = [2, 16], strides = [1, 1]} : vector<16x16xf32> to vector<2x16xf32>
    %266 = arith.maximumf %264, %265 : vector<2x16xf32>
    %267 = arith.maximumf %263, %266 : vector<2x16xf32>
    %268 = vector.extract_strided_slice %260 {offsets = [8, 0], sizes = [2, 16], strides = [1, 1]} : vector<16x16xf32> to vector<2x16xf32>
    %269 = vector.extract_strided_slice %260 {offsets = [10, 0], sizes = [2, 16], strides = [1, 1]} : vector<16x16xf32> to vector<2x16xf32>
    %270 = arith.maximumf %268, %269 : vector<2x16xf32>
    %271 = vector.extract_strided_slice %260 {offsets = [12, 0], sizes = [2, 16], strides = [1, 1]} : vector<16x16xf32> to vector<2x16xf32>
    %272 = vector.extract_strided_slice %260 {offsets = [14, 0], sizes = [2, 16], strides = [1, 1]} : vector<16x16xf32> to vector<2x16xf32>
    %273 = arith.maximumf %271, %272 : vector<2x16xf32>
    %274 = arith.maximumf %270, %273 : vector<2x16xf32>
    %c0_50 = arith.constant 0 : index
    %c0_51 = arith.constant 0 : index
    %275 = vector.load %arg6[%c0_50, %c0_51] : memref<16x16xf32, #tpu.memory_space<vmem>>, vector<16x16xf32>
    %c0_52 = arith.constant 0 : index
    %c0_53 = arith.constant 0 : index
    %276 = vector.load %arg8[%c0_52, %c0_53] : memref<16x16xf32, #tpu.memory_space<vmem>>, vector<16x16xf32>
    %c0_54 = arith.constant 0 : index
    %c0_55 = arith.constant 0 : index
    %277 = vector.load %arg10[%c0_54, %c0_55] : memref<16x16xf32, #tpu.memory_space<vmem>>, vector<16x16xf32>
    %c0_56 = arith.constant 0 : index
    %c0_57 = arith.constant 0 : index
    %278 = vector.load %arg12[%c0_56, %c0_57] : memref<16x16xf32, #tpu.memory_space<vmem>>, vector<16x16xf32>
    %c0_58 = arith.constant 0 : index
    %c0_59 = arith.constant 0 : index
    %279 = vector.load %arg7[%c0_58, %c0_59] : memref<1x16xf32, #tpu.memory_space<vmem>>, vector<1x16xf32>
    %c0_60 = arith.constant 0 : index
    %c0_61 = arith.constant 0 : index
    %280 = vector.load %arg9[%c0_60, %c0_61] : memref<1x16xf32, #tpu.memory_space<vmem>>, vector<1x16xf32>
    %c0_62 = arith.constant 0 : index
    %c0_63 = arith.constant 0 : index
    %281 = vector.load %arg11[%c0_62, %c0_63] : memref<1x16xf32, #tpu.memory_space<vmem>>, vector<1x16xf32>
    %c0_64 = arith.constant 0 : index
    %c0_65 = arith.constant 0 : index
    %282 = vector.load %arg13[%c0_64, %c0_65] : memref<1x16xf32, #tpu.memory_space<vmem>>, vector<1x16xf32>
    %c0_66 = arith.constant 0 : index
    %c0_67 = arith.constant 0 : index
    %283 = vector.load %arg14[%c0_66, %c0_67] : memref<16x16xf32, #tpu.memory_space<vmem>>, vector<16x16xf32>
    %cst_68 = arith.constant dense<0.000000e+00> : vector<2x16xf32>
    %284 = tpu.matmul %267, %275, %cst_68 {dimension_numbers = #tpu.dot_dimension_numbers<[1], [0], [0], [1], [0, 0, 1, 1], [], []>} : vector<2x16xf32>, vector<16x16xf32>, vector<2x16xf32> -> vector<2x16xf32>
    %285 = vector.broadcast %279 : vector<1x16xf32> to vector<2x16xf32>
    %286 = arith.addf %284, %285 : vector<2x16xf32>
    %cst_69 = arith.constant dense<0.000000e+00> : vector<2x16xf32>
    %287 = tpu.matmul %274, %275, %cst_69 {dimension_numbers = #tpu.dot_dimension_numbers<[1], [0], [0], [1], [0, 0, 1, 1], [], []>} : vector<2x16xf32>, vector<16x16xf32>, vector<2x16xf32> -> vector<2x16xf32>
    %288 = vector.broadcast %279 : vector<1x16xf32> to vector<2x16xf32>
    %289 = arith.addf %287, %288 : vector<2x16xf32>
    %cst_70 = arith.constant dense<0.000000e+00> : vector<2x16xf32>
    %290 = tpu.matmul %267, %276, %cst_70 {dimension_numbers = #tpu.dot_dimension_numbers<[1], [0], [0], [1], [0, 0, 1, 1], [], []>} : vector<2x16xf32>, vector<16x16xf32>, vector<2x16xf32> -> vector<2x16xf32>
    %291 = vector.broadcast %280 : vector<1x16xf32> to vector<2x16xf32>
    %292 = arith.addf %290, %291 : vector<2x16xf32>
    %cst_71 = arith.constant dense<0.000000e+00> : vector<2x16xf32>
    %293 = tpu.matmul %274, %276, %cst_71 {dimension_numbers = #tpu.dot_dimension_numbers<[1], [0], [0], [1], [0, 0, 1, 1], [], []>} : vector<2x16xf32>, vector<16x16xf32>, vector<2x16xf32> -> vector<2x16xf32>
    %294 = vector.broadcast %280 : vector<1x16xf32> to vector<2x16xf32>
    %295 = arith.addf %293, %294 : vector<2x16xf32>
    %cst_72 = arith.constant dense<0.000000e+00> : vector<2x16xf32>
    %296 = tpu.matmul %267, %277, %cst_72 {dimension_numbers = #tpu.dot_dimension_numbers<[1], [0], [0], [1], [0, 0, 1, 1], [], []>} : vector<2x16xf32>, vector<16x16xf32>, vector<2x16xf32> -> vector<2x16xf32>
    %297 = vector.broadcast %281 : vector<1x16xf32> to vector<2x16xf32>
    %298 = arith.addf %296, %297 : vector<2x16xf32>
    %cst_73 = arith.constant dense<0.000000e+00> : vector<2x16xf32>
    %299 = tpu.matmul %274, %277, %cst_73 {dimension_numbers = #tpu.dot_dimension_numbers<[1], [0], [0], [1], [0, 0, 1, 1], [], []>} : vector<2x16xf32>, vector<16x16xf32>, vector<2x16xf32> -> vector<2x16xf32>
    %300 = vector.broadcast %281 : vector<1x16xf32> to vector<2x16xf32>
    %301 = arith.addf %299, %300 : vector<2x16xf32>
    %302 = arith.mulf %286, %292 : vector<2x16xf32>
    %cst_74 = arith.constant dense<0.000000e+00> : vector<2x16xf32>
    %303 = tpu.matmul %302, %283, %cst_74 {dimension_numbers = #tpu.dot_dimension_numbers<[1], [0], [0], [1], [0, 0, 1, 1], [], []>} : vector<2x16xf32>, vector<16x16xf32>, vector<2x16xf32> -> vector<2x16xf32>
    %304 = arith.mulf %286, %295 : vector<2x16xf32>
    %cst_75 = arith.constant dense<0.000000e+00> : vector<2x16xf32>
    %305 = tpu.matmul %304, %283, %cst_75 {dimension_numbers = #tpu.dot_dimension_numbers<[1], [0], [0], [1], [0, 0, 1, 1], [], []>} : vector<2x16xf32>, vector<16x16xf32>, vector<2x16xf32> -> vector<2x16xf32>
    %306 = arith.mulf %289, %292 : vector<2x16xf32>
    %cst_76 = arith.constant dense<0.000000e+00> : vector<2x16xf32>
    %307 = tpu.matmul %306, %283, %cst_76 {dimension_numbers = #tpu.dot_dimension_numbers<[1], [0], [0], [1], [0, 0, 1, 1], [], []>} : vector<2x16xf32>, vector<16x16xf32>, vector<2x16xf32> -> vector<2x16xf32>
    %308 = arith.mulf %289, %295 : vector<2x16xf32>
    %cst_77 = arith.constant dense<0.000000e+00> : vector<2x16xf32>
    %309 = tpu.matmul %308, %283, %cst_77 {dimension_numbers = #tpu.dot_dimension_numbers<[1], [0], [0], [1], [0, 0, 1, 1], [], []>} : vector<2x16xf32>, vector<16x16xf32>, vector<2x16xf32> -> vector<2x16xf32>
    %310 = arith.maximumf %303, %305 : vector<2x16xf32>
    %311 = arith.subf %303, %310 : vector<2x16xf32>
    %312 = math.exp %311 : vector<2x16xf32>
    %313 = arith.subf %305, %310 : vector<2x16xf32>
    %314 = math.exp %313 : vector<2x16xf32>
    %315 = arith.addf %312, %314 : vector<2x16xf32>
    %cst_78 = arith.constant 1.000000e+00 : f32
    %316 = vector.broadcast %cst_78 : f32 to vector<2x16xf32>
    %317 = arith.divf %316, %315 : vector<2x16xf32>
    %318 = arith.maximumf %307, %309 : vector<2x16xf32>
    %319 = arith.subf %307, %318 : vector<2x16xf32>
    %320 = math.exp %319 : vector<2x16xf32>
    %321 = arith.subf %309, %318 : vector<2x16xf32>
    %322 = math.exp %321 : vector<2x16xf32>
    %323 = arith.addf %320, %322 : vector<2x16xf32>
    %cst_79 = arith.constant 1.000000e+00 : f32
    %324 = vector.broadcast %cst_79 : f32 to vector<2x16xf32>
    %325 = arith.divf %324, %323 : vector<2x16xf32>
    %326 = arith.mulf %312, %317 : vector<2x16xf32>
    %327 = arith.mulf %326, %298 : vector<2x16xf32>
    %328 = arith.mulf %314, %317 : vector<2x16xf32>
    %329 = arith.mulf %328, %301 : vector<2x16xf32>
    %330 = arith.addf %327, %329 : vector<2x16xf32>
    %331 = arith.mulf %320, %325 : vector<2x16xf32>
    %332 = arith.mulf %331, %298 : vector<2x16xf32>
    %333 = arith.mulf %322, %325 : vector<2x16xf32>
    %334 = arith.mulf %333, %301 : vector<2x16xf32>
    %335 = arith.addf %332, %334 : vector<2x16xf32>
    %cst_80 = arith.constant dense<0.000000e+00> : vector<2x16xf32>
    %336 = tpu.matmul %330, %278, %cst_80 {dimension_numbers = #tpu.dot_dimension_numbers<[1], [0], [0], [1], [0, 0, 1, 1], [], []>} : vector<2x16xf32>, vector<16x16xf32>, vector<2x16xf32> -> vector<2x16xf32>
    %337 = vector.broadcast %282 : vector<1x16xf32> to vector<2x16xf32>
    %338 = arith.addf %336, %337 : vector<2x16xf32>
    %cst_81 = arith.constant dense<0.000000e+00> : vector<2x16xf32>
    %339 = tpu.matmul %335, %278, %cst_81 {dimension_numbers = #tpu.dot_dimension_numbers<[1], [0], [0], [1], [0, 0, 1, 1], [], []>} : vector<2x16xf32>, vector<16x16xf32>, vector<2x16xf32> -> vector<2x16xf32>
    %340 = vector.broadcast %282 : vector<1x16xf32> to vector<2x16xf32>
    %341 = arith.addf %339, %340 : vector<2x16xf32>
    %c0_82 = arith.constant 0 : index
    %c0_83 = arith.constant 0 : index
    %342 = vector.load %arg15[%c0_82, %c0_83] : memref<16x512xf32, #tpu.memory_space<vmem>>, vector<16x512xf32>
    %cst_84 = arith.constant dense<0.000000e+00> : vector<2x512xf32>
    %343 = tpu.matmul %338, %342, %cst_84 {dimension_numbers = #tpu.dot_dimension_numbers<[1], [0], [0], [1], [0, 0, 1, 1], [], []>} : vector<2x16xf32>, vector<16x512xf32>, vector<2x512xf32> -> vector<2x512xf32>
    %c0_85 = arith.constant 0 : index
    %c0_86 = arith.constant 0 : index
    %344 = vector.load %arg16[%c0_85, %c0_86] : memref<16x512xf32, #tpu.memory_space<vmem>>, vector<16x512xf32>
    %cst_87 = arith.constant dense<0.000000e+00> : vector<2x512xf32>
    %345 = tpu.matmul %341, %344, %cst_87 {dimension_numbers = #tpu.dot_dimension_numbers<[1], [0], [0], [1], [0, 0, 1, 1], [], []>} : vector<2x16xf32>, vector<16x512xf32>, vector<2x512xf32> -> vector<2x512xf32>
    %346 = arith.addf %343, %345 : vector<2x512xf32>
    %c0_88 = arith.constant 0 : index
    %c0_89 = arith.constant 0 : index
    %347 = vector.load %arg17[%c0_88, %c0_89] : memref<1x512xf32, #tpu.memory_space<vmem>>, vector<1x512xf32>
    %348 = vector.broadcast %347 : vector<1x512xf32> to vector<2x512xf32>
    %349 = arith.addf %346, %348 : vector<2x512xf32>
    %cst_90 = arith.constant 0.000000e+00 : f32
    %350 = vector.broadcast %cst_90 : f32 to vector<2x512xf32>
    %351 = arith.maximumf %349, %350 : vector<2x512xf32>
    %c0_i32_91 = arith.constant 0 : i32
    %352 = tpu.memref_slice %arg25[%c0_i32_91] : memref<2x!tpu.dma_semaphore, #tpu.memory_space<semaphore_mem>> -> memref<1x!tpu.dma_semaphore, #tpu.memory_space<semaphore_mem>>
    %353 = tpu.memref_squeeze %352 : memref<1x!tpu.dma_semaphore, #tpu.memory_space<semaphore_mem>> -> memref<!tpu.dma_semaphore, #tpu.memory_space<semaphore_mem>>
    tpu.wait_dma2 semaphore(%353 : memref<!tpu.dma_semaphore, #tpu.memory_space<semaphore_mem>>) src(%arg20 : memref<512x1024xbf16, #tpu.memory_space<any>>) dst(%arg23 : memref<512x1024xbf16, #tpu.memory_space<vmem>>)
    %354 = arith.truncf %351 : vector<2x512xf32> to vector<2x512xbf16>
    %c0_92 = arith.constant 0 : index
    %c0_93 = arith.constant 0 : index
    %355 = vector.load %arg23[%c0_92, %c0_93] : memref<512x1024xbf16, #tpu.memory_space<vmem>>, vector<512x1024xbf16>
    %cst_94 = arith.constant dense<0.000000e+00> : vector<2x1024xf32>
    %356 = tpu.matmul %354, %355, %cst_94 {dimension_numbers = #tpu.dot_dimension_numbers<[1], [0], [0], [1], [0, 0, 1, 1], [], []>} : vector<2x512xbf16>, vector<512x1024xbf16>, vector<2x1024xf32> -> vector<2x1024xf32>
    %c0_95 = arith.constant 0 : index
    %c0_96 = arith.constant 0 : index
    %357 = vector.load %arg18[%c0_95, %c0_96] : memref<1x1024xf32, #tpu.memory_space<vmem>>, vector<1x1024xf32>
    %358 = vector.broadcast %357 : vector<1x1024xf32> to vector<2x1024xf32>
    %359 = arith.addf %356, %358 : vector<2x1024xf32>
    %cst_97 = arith.constant 0.000000e+00 : f32
    %360 = vector.broadcast %cst_97 : f32 to vector<2x1024xf32>
    %361 = arith.maximumf %359, %360 : vector<2x1024xf32>
    %c1_i32_98 = arith.constant 1 : i32
    %362 = tpu.memref_slice %arg25[%c1_i32_98] : memref<2x!tpu.dma_semaphore, #tpu.memory_space<semaphore_mem>> -> memref<1x!tpu.dma_semaphore, #tpu.memory_space<semaphore_mem>>
    %363 = tpu.memref_squeeze %362 : memref<1x!tpu.dma_semaphore, #tpu.memory_space<semaphore_mem>> -> memref<!tpu.dma_semaphore, #tpu.memory_space<semaphore_mem>>
    tpu.wait_dma2 semaphore(%363 : memref<!tpu.dma_semaphore, #tpu.memory_space<semaphore_mem>>) src(%arg21 : memref<1024x1024xbf16, #tpu.memory_space<any>>) dst(%arg24 : memref<1024x1024xbf16, #tpu.memory_space<vmem>>)
    %364 = arith.truncf %361 : vector<2x1024xf32> to vector<2x1024xbf16>
    %c0_99 = arith.constant 0 : index
    %c0_100 = arith.constant 0 : index
    %365 = vector.load %arg24[%c0_99, %c0_100] : memref<1024x1024xbf16, #tpu.memory_space<vmem>>, vector<1024x1024xbf16>
    %cst_101 = arith.constant dense<0.000000e+00> : vector<2x1024xf32>
    %366 = tpu.matmul %364, %365, %cst_101 {dimension_numbers = #tpu.dot_dimension_numbers<[1], [0], [0], [1], [0, 0, 1, 1], [], []>} : vector<2x1024xbf16>, vector<1024x1024xbf16>, vector<2x1024xf32> -> vector<2x1024xf32>
    %c0_102 = arith.constant 0 : index
    %c0_103 = arith.constant 0 : index
    %367 = vector.load %arg19[%c0_102, %c0_103] : memref<1x1024xf32, #tpu.memory_space<vmem>>, vector<1x1024xf32>
    %368 = vector.broadcast %367 : vector<1x1024xf32> to vector<2x1024xf32>
    %369 = arith.addf %366, %368 : vector<2x1024xf32>
    %cst_104 = arith.constant 0.000000e+00 : f32
    %370 = vector.broadcast %cst_104 : f32 to vector<2x1024xf32>
    %371 = arith.maximumf %369, %370 : vector<2x1024xf32>
    %c0_105 = arith.constant 0 : index
    %c0_106 = arith.constant 0 : index
    %372 = vector.load %arg22[%c0_105, %c0_106] : memref<2x1024xf32, #tpu.memory_space<vmem>>, vector<2x1024xf32>
    tpu.vector_store %arg22[%c0_105, %c0_106], %371 {strides = array<i32>} : memref<2x1024xf32, #tpu.memory_space<vmem>>, vector<2x1024xf32>,
    return
  }
  func.func @transform_0(%arg0: i32) -> (i32, i32, i32) {
    %c0_i32 = arith.constant 0 : i32
    %c0_i32_0 = arith.constant 0 : i32
    %c0_i32_1 = arith.constant 0 : i32
    %c0_i32_2 = arith.constant 0 : i32
    return %c0_i32, %c0_i32_0, %c0_i32_1 : i32, i32, i32
  }
  func.func @transform_1(%arg0: i32) -> (i32, i32) {
    %c0_i32 = arith.constant 0 : i32
    %c0_i32_0 = arith.constant 0 : i32
    %c0_i32_1 = arith.constant 0 : i32
    return %c0_i32, %c0_i32_0 : i32, i32
  }
  func.func @transform_2(%arg0: i32) -> (i32, i32) {
    %c0_i32 = arith.constant 0 : i32
    %c0_i32_0 = arith.constant 0 : i32
    %c0_i32_1 = arith.constant 0 : i32
    return %c0_i32, %c0_i32_0 : i32, i32
  }
  func.func @transform_3(%arg0: i32) -> (i32, i32) {
    %c0_i32 = arith.constant 0 : i32
    %c0_i32_0 = arith.constant 0 : i32
    %c0_i32_1 = arith.constant 0 : i32
    return %c0_i32, %c0_i32_0 : i32, i32
  }
  func.func @transform_4(%arg0: i32) -> (i32, i32) {
    %c0_i32 = arith.constant 0 : i32
    %c0_i32_0 = arith.constant 0 : i32
    %c0_i32_1 = arith.constant 0 : i32
    return %c0_i32, %c0_i32_0 : i32, i32
  }
  func.func @transform_5(%arg0: i32) -> (i32, i32) {
    %c0_i32 = arith.constant 0 : i32
    %c0_i32_0 = arith.constant 0 : i32
    %c0_i32_1 = arith.constant 0 : i32
    return %c0_i32, %c0_i32_0 : i32, i32
  }
  func.func @transform_6(%arg0: i32) -> (i32, i32) {
    %c0_i32 = arith.constant 0 : i32
    %c0_i32_0 = arith.constant 0 : i32
    %c0_i32_1 = arith.constant 0 : i32
    return %c0_i32, %c0_i32_0 : i32, i32
  }
  func.func @transform_7(%arg0: i32) -> (i32, i32) {
    %c0_i32 = arith.constant 0 : i32
    %c0_i32_0 = arith.constant 0 : i32
    %c0_i32_1 = arith.constant 0 : i32
    return %c0_i32, %c0_i32_0 : i32, i32
  }
  func.func @transform_8(%arg0: i32) -> (i32, i32) {
    %c0_i32 = arith.constant 0 : i32
    %c0_i32_0 = arith.constant 0 : i32
    %c0_i32_1 = arith.constant 0 : i32
    return %c0_i32, %c0_i32_0 : i32, i32
  }
  func.func @transform_9(%arg0: i32) -> (i32, i32) {
    %c0_i32 = arith.constant 0 : i32
    %c0_i32_0 = arith.constant 0 : i32
    %c0_i32_1 = arith.constant 0 : i32
    return %c0_i32, %c0_i32_0 : i32, i32
  }
  func.func @transform_10(%arg0: i32) -> (i32, i32) {
    %c0_i32 = arith.constant 0 : i32
    %c0_i32_0 = arith.constant 0 : i32
    %c0_i32_1 = arith.constant 0 : i32
    return %c0_i32, %c0_i32_0 : i32, i32
  }
  func.func @transform_11(%arg0: i32) -> (i32, i32) {
    %c0_i32 = arith.constant 0 : i32
    %c0_i32_0 = arith.constant 0 : i32
    %c0_i32_1 = arith.constant 0 : i32
    return %c0_i32, %c0_i32_0 : i32, i32
  }
  func.func @transform_12(%arg0: i32) -> (i32, i32) {
    %c0_i32 = arith.constant 0 : i32
    %c0_i32_0 = arith.constant 0 : i32
    %c0_i32_1 = arith.constant 0 : i32
    return %c0_i32, %c0_i32_0 : i32, i32
  }
  func.func @transform_13(%arg0: i32) -> (i32, i32) {
    %c0_i32 = arith.constant 0 : i32
    %c0_i32_0 = arith.constant 0 : i32
    %c0_i32_1 = arith.constant 0 : i32
    return %c0_i32, %c0_i32_0 : i32, i32
  }
  func.func @transform_14(%arg0: i32) -> (i32, i32) {
    %c0_i32 = arith.constant 0 : i32
    %c0_i32_0 = arith.constant 0 : i32
    %c0_i32_1 = arith.constant 0 : i32
    return %c0_i32, %c0_i32_0 : i32, i32
  }
  func.func @transform_15(%arg0: i32) -> (i32, i32) {
    %c0_i32 = arith.constant 0 : i32
    %c0_i32_0 = arith.constant 0 : i32
    %c0_i32_1 = arith.constant 0 : i32
    return %c0_i32, %c0_i32_0 : i32, i32
  }
  func.func @transform_16(%arg0: i32) -> (i32, i32) {
    %c0_i32 = arith.constant 0 : i32
    %c0_i32_0 = arith.constant 0 : i32
    %c0_i32_1 = arith.constant 0 : i32
    return %c0_i32, %c0_i32_0 : i32, i32
  }
  func.func @transform_17(%arg0: i32) -> (i32, i32) {
    %c0_i32 = arith.constant 0 : i32
    %c0_i32_0 = arith.constant 0 : i32
    %c0_i32_1 = arith.constant 0 : i32
    return %c0_i32, %c0_i32_0 : i32, i32
  }
  func.func @transform_18(%arg0: i32) -> (i32, i32) {
    %c0_i32 = arith.constant 0 : i32
    %c0_i32_0 = arith.constant 0 : i32
    %c0_i32_1 = arith.constant 0 : i32
    return %c0_i32, %c0_i32_0 : i32, i32
  }
  func.func @transform_21(%arg0: i32) -> (i32, i32) {
    %c0_i32 = arith.constant 0 : i32
    %c0_i32_0 = arith.constant 0 : i32
    %c0_i32_1 = arith.constant 0 : i32
    return %c0_i32, %c0_i32_0 : i32, i32
  }
}

</mosaic_0001>

<llo_original>
// kernel: descryptor_encoder_forward.1
$region0: #{descryptor_encoder_forward.1}
  #allocation0 [shape = 'u32[]', space=smem, size = 0x4, offset = 0x4, fixed_abs, tag = 'smem constant byte address 0x4 - core index']
  #allocation1 [shape = 'u32[144,128]{1,0:T(1,128)}', space=vmem, size = 0x12000, scoped, tag = 'internal scratch']
  #allocation2 [shape = 'bf16[512,1024]{1,0:T(16,128)(2,1)}', space=vmem, size = 0x100000, scoped, tag = 'scratch operand']
  #allocation3 [shape = 'bf16[1024,1024]{1,0:T(16,128)(2,1)}', space=vmem, size = 0x200000, scoped, tag = 'scratch operand']
  #allocation4 [shape = 's32[2]{0}', space=sflag, size = 0x8, scoped, tag = 'scratch operand']
  #allocation32 [shape = 's32[]', space=sflag, size = 0x4, offset = 0, fixed_abs, tag = 'sflag constant byte address 0x0 - dummy sync flag']
  #allocation34 [shape = 's32[]', space=sflag, size = 0x4, offset = 0, fixed_abs, tag = 'sflag constant byte address 0x0 - dummy sync flag']
  %s0 = inlined_call_operand.vmem [shape: f32[10,2,6], index: 0, kind: input, shape index: {}]
  %s1 = inlined_call_operand.vmem [shape: f32[9,8], index: 1, kind: input, shape index: {}]
  %s2 = inlined_call_operand.hbm [shape: f32[1,8], index: 2, kind: input, shape index: {}]
  %s3 = inlined_call_operand.vmem [shape: f32[72,16], index: 3, kind: input, shape index: {}]
  %s4 = inlined_call_operand.hbm [shape: f32[1,16], index: 4, kind: input, shape index: {}]
  %s5 = inlined_call_operand.hbm [shape: f32[16,16], index: 5, kind: input, shape index: {}]
  %s6 = inlined_call_operand.hbm [shape: f32[1,16], index: 6, kind: input, shape index: {}]
  %s7 = inlined_call_operand.hbm [shape: f32[16,16], index: 7, kind: input, shape index: {}]
  %s8 = inlined_call_operand.hbm [shape: f32[1,16], index: 8, kind: input, shape index: {}]
  %s9 = inlined_call_operand.hbm [shape: f32[16,16], index: 9, kind: input, shape index: {}]
  %s10 = inlined_call_operand.hbm [shape: f32[1,16], index: 10, kind: input, shape index: {}]
  %s11 = inlined_call_operand.hbm [shape: f32[16,16], index: 11, kind: input, shape index: {}]
  %s12 = inlined_call_operand.hbm [shape: f32[1,16], index: 12, kind: input, shape index: {}]
  %s13 = inlined_call_operand.hbm [shape: f32[16,16], index: 13, kind: input, shape index: {}]
  %s14 = inlined_call_operand.hbm [shape: f32[16,512], index: 14, kind: input, shape index: {}]
  %s15 = inlined_call_operand.hbm [shape: f32[16,512], index: 15, kind: input, shape index: {}]
  %s16 = inlined_call_operand.hbm [shape: f32[1,512], index: 16, kind: input, shape index: {}]
  %s17 = inlined_call_operand.hbm [shape: f32[1,1024], index: 17, kind: input, shape index: {}]
  %s18 = inlined_call_operand.hbm [shape: f32[1,1024], index: 18, kind: input, shape index: {}]
  %s19 = inlined_call_operand.hbm [shape: bf16[512,1024], index: 19, kind: input, shape index: {}]
  %s20 = inlined_call_operand.hbm [shape: bf16[1024,1024], index: 20, kind: input, shape index: {}]
  %s21 = inlined_call_operand.hbm [shape: f32[2,1024], index: 21, kind: output, shape index: {}]
  %s22 = sld [smem:[#allocation0]]
  $region150: #{descryptor_encoder_forward.1} parent=0
    _
  %s24 = ssub.s32 1, %s22
  %s25 = scalar_select 0, %s24, %s22
  $region1: #{descryptor_encoder_forward.1} parent=0
    #allocation5 [shape = 'u8[512]{0}', space=vmem, size = 0x400, scoped, tag = 'input window, operand 2, single buffered']
    #allocation6 [shape = 's32[1]{0}', space=sflag, size = 0x4, scoped, tag = 'scoped memory for descryptor_encoder_forward.1']
    #allocation7 [shape = 's32[1]{0}', space=sflag, size = 0x4, scoped, tag = 'scoped memory for descryptor_encoder_forward.1']
    #allocation8 [shape = 'u8[512]{0}', space=vmem, size = 0x400, scoped, tag = 'input window, operand 4, single buffered']
    #allocation9 [shape = 's32[1]{0}', space=sflag, size = 0x4, scoped, tag = 'scoped memory for descryptor_encoder_forward.1']
    #allocation10 [shape = 'u8[8192]{0}', space=vmem, size = 0x2000, scoped, tag = 'input window, operand 5, single buffered']
    #allocation11 [shape = 'u8[512]{0}', space=vmem, size = 0x400, scoped, tag = 'input window, operand 6, single buffered']
    #allocation12 [shape = 's32[1]{0}', space=sflag, size = 0x4, scoped, tag = 'scoped memory for descryptor_encoder_forward.1']
    #allocation13 [shape = 'u8[8192]{0}', space=vmem, size = 0x2000, scoped, tag = 'input window, operand 7, single buffered']
    #allocation14 [shape = 'u8[512]{0}', space=vmem, size = 0x400, scoped, tag = 'input window, operand 8, single buffered']
    #allocation15 [shape = 's32[1]{0}', space=sflag, size = 0x4, scoped, tag = 'scoped memory for descryptor_encoder_forward.1']
    #allocation16 [shape = 'u8[8192]{0}', space=vmem, size = 0x2000, scoped, tag = 'input window, operand 9, single buffered']
    #allocation17 [shape = 'u8[512]{0}', space=vmem, size = 0x400, scoped, tag = 'input window, operand 10, single buffered']
    #allocation18 [shape = 's32[1]{0}', space=sflag, size = 0x4, scoped, tag = 'scoped memory for descryptor_encoder_forward.1']
    #allocation19 [shape = 'u8[8192]{0}', space=vmem, size = 0x2000, scoped, tag = 'input window, operand 11, single buffered']
    #allocation20 [shape = 'u8[512]{0}', space=vmem, size = 0x400, scoped, tag = 'input window, operand 12, single buffered']
    #allocation21 [shape = 's32[1]{0}', space=sflag, size = 0x4, scoped, tag = 'scoped memory for descryptor_encoder_forward.1']
    #allocation22 [shape = 'u8[8192]{0}', space=vmem, size = 0x2000, scoped, tag = 'input window, operand 13, single buffered']
    #allocation23 [shape = 'u8[32768]{0}', space=vmem, size = 0x8000, scoped, tag = 'input window, operand 14, single buffered']
    #allocation24 [shape = 's32[1]{0}', space=sflag, size = 0x4, scoped, tag = 'scoped memory for descryptor_encoder_forward.1']
    #allocation25 [shape = 'u8[32768]{0}', space=vmem, size = 0x8000, scoped, tag = 'input window, operand 15, single buffered']
    #allocation26 [shape = 'u8[2048]{0}', space=vmem, size = 0x800, scoped, tag = 'input window, operand 16, single buffered']
    #allocation27 [shape = 's32[1]{0}', space=sflag, size = 0x4, scoped, tag = 'scoped memory for descryptor_encoder_forward.1']
    #allocation28 [shape = 'u8[4096]{0}', space=vmem, size = 0x1000, scoped, tag = 'input window, operand 17, single buffered']
    #allocation29 [shape = 'u8[4096]{0}', space=vmem, size = 0x1000, scoped, tag = 'input window, operand 18, single buffered']
    #allocation30 [shape = 's32[1]{0}', space=sflag, size = 0x4, scoped, tag = 'scoped memory for descryptor_encoder_forward.1']
    #allocation31 [shape = 'u8[8192]{0}', space=vmem, size = 0x2000, scoped, tag = 'output window, operand 0, single buffered']
    #allocation33 [shape = 'u32[9]{0}', space=smem, size = 0x24, scoped, tag = 'DMA stride descriptor']
    #allocation35 [shape = 'u32[9]{0}', space=smem, size = 0x24, scoped, tag = 'DMA stride descriptor']
    %26 = vsyncpa [#allocation6], 0
    %27 = vsyncpa [#allocation9], 0
    %28 = vsyncpa [#allocation12], 0
    %29 = vsyncpa [#allocation15], 0
    %30 = vsyncpa [#allocation18], 0
    %31 = vsyncpa [#allocation21], 0
    %32 = vsyncpa [#allocation24], 0
    %33 = vsyncpa [#allocation27], 0
    %34 = vsyncpa [#allocation30], 0
    %35 = vsyncpa [#allocation7], 0
    // Predicated region
    $region2: #{descryptor_encoder_forward.1} parent=1 // pred_check
      _
    $region3: #{descryptor_encoder_forward.1} parent=1 // pred_check_branch
      %37 = sbr.rel (0) target = $region5
    $region4: #{descryptor_encoder_forward.1} parent=1 // pred_region
      _
    $region5: #{descryptor_encoder_forward.1} parent=1 // pred_fallthru
      _
    // Predicated region
    $region6: #{descryptor_encoder_forward.1} parent=1 // pred_check
      _
    $region7: #{descryptor_encoder_forward.1} parent=1 // pred_check_branch
      %39 = sbr.rel (0) target = $region9
    $region8: #{descryptor_encoder_forward.1} parent=1 // pred_region
      _
    $region9: #{descryptor_encoder_forward.1} parent=1 // pred_fallthru
      _
    // Predicated region
    $region10: #{descryptor_encoder_forward.1} parent=1 // pred_check
      _
    $region11: #{descryptor_encoder_forward.1} parent=1 // pred_check_branch
      %41 = sbr.rel (0) target = $region13
    $region12: #{descryptor_encoder_forward.1} parent=1 // pred_region
      %s43 = ssub.s32 16, 16
      %44 = vsyncadd [#allocation6], %s43
      %s46 = sshll.u32 [#allocation5], 4
      %s47 = int_to_ptr.vmem [resolvable:$true] %s46
      %49 = dma.hbm_to_vmem [thread:$0]  %s2, 16, %s47, [#allocation6]
    $region13: #{descryptor_encoder_forward.1} parent=1 // pred_fallthru
      _
    // Predicated region
    $region14: #{descryptor_encoder_forward.1} parent=1 // pred_check
      _
    $region15: #{descryptor_encoder_forward.1} parent=1 // pred_check_branch
      %51 = sbr.rel (0) target = $region17
    $region16: #{descryptor_encoder_forward.1} parent=1 // pred_region
      _
    $region17: #{descryptor_encoder_forward.1} parent=1 // pred_fallthru
      _
    // Predicated region
    $region18: #{descryptor_encoder_forward.1} parent=1 // pred_check
      _
    $region19: #{descryptor_encoder_forward.1} parent=1 // pred_check_branch
      %53 = sbr.rel (0) target = $region21
    $region20: #{descryptor_encoder_forward.1} parent=1 // pred_region
      %s55 = ssub.s32 16, 16
      %56 = vsyncadd [#allocation9], %s55
      %s58 = sshll.u32 [#allocation8], 4
      %s59 = int_to_ptr.vmem [resolvable:$true] %s58
      %61 = dma.hbm_to_vmem [thread:$0]  %s4, 16, %s59, [#allocation9]
    $region21: #{descryptor_encoder_forward.1} parent=1 // pred_fallthru
      _
    // Predicated region
    $region22: #{descryptor_encoder_forward.1} parent=1 // pred_check
      _
    $region23: #{descryptor_encoder_forward.1} parent=1 // pred_check_branch
      %63 = sbr.rel (0) target = $region25
    $region24: #{descryptor_encoder_forward.1} parent=1 // pred_region
      %s65 = ssub.s32 256, 256
      %66 = vsyncadd [#allocation9], %s65
      %s67 = sshll.u32 [#allocation10], 4
      %s68 = int_to_ptr.vmem [resolvable:$true] %s67
      %73 = dma.hbm_to_vmem [thread:$0]  %s5, 256, %s68, [#allocation9], 128, 128, 8
    $region25: #{descryptor_encoder_forward.1} parent=1 // pred_fallthru
      _
    // Predicated region
    $region26: #{descryptor_encoder_forward.1} parent=1 // pred_check
      _
    $region27: #{descryptor_encoder_forward.1} parent=1 // pred_check_branch
      %75 = sbr.rel (0) target = $region29
    $region28: #{descryptor_encoder_forward.1} parent=1 // pred_region
      %s77 = ssub.s32 16, 16
      %78 = vsyncadd [#allocation12], %s77
      %s80 = sshll.u32 [#allocation11], 4
      %s81 = int_to_ptr.vmem [resolvable:$true] %s80
      %83 = dma.hbm_to_vmem [thread:$0]  %s6, 16, %s81, [#allocation12]
    $region29: #{descryptor_encoder_forward.1} parent=1 // pred_fallthru
      _
    // Predicated region
    $region30: #{descryptor_encoder_forward.1} parent=1 // pred_check
      _
    $region31: #{descryptor_encoder_forward.1} parent=1 // pred_check_branch
      %85 = sbr.rel (0) target = $region33
    $region32: #{descryptor_encoder_forward.1} parent=1 // pred_region
      %s87 = ssub.s32 256, 256
      %88 = vsyncadd [#allocation12], %s87
      %s89 = sshll.u32 [#allocation13], 4
      %s90 = int_to_ptr.vmem [resolvable:$true] %s89
      %95 = dma.hbm_to_vmem [thread:$0]  %s7, 256, %s90, [#allocation12], 128, 128, 8
    $region33: #{descryptor_encoder_forward.1} parent=1 // pred_fallthru
      _
    // Predicated region
    $region34: #{descryptor_encoder_forward.1} parent=1 // pred_check
      _
    $region35: #{descryptor_encoder_forward.1} parent=1 // pred_check_branch
      %97 = sbr.rel (0) target = $region37
    $region36: #{descryptor_encoder_forward.1} parent=1 // pred_region
      %s99 = ssub.s32 16, 16
      %100 = vsyncadd [#allocation15], %s99
      %s102 = sshll.u32 [#allocation14], 4
      %s103 = int_to_ptr.vmem [resolvable:$true] %s102
      %105 = dma.hbm_to_vmem [thread:$0]  %s8, 16, %s103, [#allocation15]
    $region37: #{descryptor_encoder_forward.1} parent=1 // pred_fallthru
      _
    // Predicated region
    $region38: #{descryptor_encoder_forward.1} parent=1 // pred_check
      _
    $region39: #{descryptor_encoder_forward.1} parent=1 // pred_check_branch
      %107 = sbr.rel (0) target = $region41
    $region40: #{descryptor_encoder_forward.1} parent=1 // pred_region
      %s109 = ssub.s32 256, 256
      %110 = vsyncadd [#allocation15], %s109
      %s111 = sshll.u32 [#allocation16], 4
      %s112 = int_to_ptr.vmem [resolvable:$true] %s111
      %117 = dma.hbm_to_vmem [thread:$0]  %s9, 256, %s112, [#allocation15], 128, 128, 8
    $region41: #{descryptor_encoder_forward.1} parent=1 // pred_fallthru
      _
    // Predicated region
    $region42: #{descryptor_encoder_forward.1} parent=1 // pred_check
      _
    $region43: #{descryptor_encoder_forward.1} parent=1 // pred_check_branch
      %119 = sbr.rel (0) target = $region45
    $region44: #{descryptor_encoder_forward.1} parent=1 // pred_region
      %s121 = ssub.s32 16, 16
      %122 = vsyncadd [#allocation18], %s121
      %s124 = sshll.u32 [#allocation17], 4
      %s125 = int_to_ptr.vmem [resolvable:$true] %s124
      %127 = dma.hbm_to_vmem [thread:$0]  %s10, 16, %s125, [#allocation18]
    $region45: #{descryptor_encoder_forward.1} parent=1 // pred_fallthru
      _
    // Predicated region
    $region46: #{descryptor_encoder_forward.1} parent=1 // pred_check
      _
    $region47: #{descryptor_encoder_forward.1} parent=1 // pred_check_branch
      %129 = sbr.rel (0) target = $region49
    $region48: #{descryptor_encoder_forward.1} parent=1 // pred_region
      %s131 = ssub.s32 256, 256
      %132 = vsyncadd [#allocation18], %s131
      %s133 = sshll.u32 [#allocation19], 4
      %s134 = int_to_ptr.vmem [resolvable:$true] %s133
      %139 = dma.hbm_to_vmem [thread:$0]  %s11, 256, %s134, [#allocation18], 128, 128, 8
    $region49: #{descryptor_encoder_forward.1} parent=1 // pred_fallthru
      _
    // Predicated region
    $region50: #{descryptor_encoder_forward.1} parent=1 // pred_check
      _
    $region51: #{descryptor_encoder_forward.1} parent=1 // pred_check_branch
      %141 = sbr.rel (0) target = $region53
    $region52: #{descryptor_encoder_forward.1} parent=1 // pred_region
      %s143 = ssub.s32 16, 16
      %144 = vsyncadd [#allocation21], %s143
      %s146 = sshll.u32 [#allocation20], 4
      %s147 = int_to_ptr.vmem [resolvable:$true] %s146
      %149 = dma.hbm_to_vmem [thread:$0]  %s12, 16, %s147, [#allocation21]
    $region53: #{descryptor_encoder_forward.1} parent=1 // pred_fallthru
      _
    // Predicated region
    $region54: #{descryptor_encoder_forward.1} parent=1 // pred_check
      _
    $region55: #{descryptor_encoder_forward.1} parent=1 // pred_check_branch
      %151 = sbr.rel (0) target = $region57
    $region56: #{descryptor_encoder_forward.1} parent=1 // pred_region
      %s153 = ssub.s32 256, 256
      %154 = vsyncadd [#allocation21], %s153
      %s155 = sshll.u32 [#allocation22], 4
      %s156 = int_to_ptr.vmem [resolvable:$true] %s155
      %161 = dma.hbm_to_vmem [thread:$0]  %s13, 256, %s156, [#allocation21], 128, 128, 8
    $region57: #{descryptor_encoder_forward.1} parent=1 // pred_fallthru
      _
    // Predicated region
    $region58: #{descryptor_encoder_forward.1} parent=1 // pred_check
      _
    $region59: #{descryptor_encoder_forward.1} parent=1 // pred_check_branch
      %163 = sbr.rel (0) target = $region61
    $region60: #{descryptor_encoder_forward.1} parent=1 // pred_region
      %s165 = ssub.s32 1024, 1024
      %166 = vsyncadd [#allocation24], %s165
      %s167 = sshll.u32 [#allocation23], 4
      %s168 = int_to_ptr.vmem [resolvable:$true] %s167
      %173 = dma.hbm_to_vmem [thread:$0]  %s14, 1024, %s168, [#allocation24], 512, 512, 32
    $region61: #{descryptor_encoder_forward.1} parent=1 // pred_fallthru
      _
    // Predicated region
    $region62: #{descryptor_encoder_forward.1} parent=1 // pred_check
      _
    $region63: #{descryptor_encoder_forward.1} parent=1 // pred_check_branch
      %175 = sbr.rel (0) target = $region65
    $region64: #{descryptor_encoder_forward.1} parent=1 // pred_region
      %s177 = ssub.s32 1024, 1024
      %178 = vsyncadd [#allocation24], %s177
      %s179 = sshll.u32 [#allocation25], 4
      %s180 = int_to_ptr.vmem [resolvable:$true] %s179
      %185 = dma.hbm_to_vmem [thread:$0]  %s15, 1024, %s180, [#allocation24], 512, 512, 32
    $region65: #{descryptor_encoder_forward.1} parent=1 // pred_fallthru
      _
    // Predicated region
    $region66: #{descryptor_encoder_forward.1} parent=1 // pred_check
      _
    $region67: #{descryptor_encoder_forward.1} parent=1 // pred_check_branch
      %187 = sbr.rel (0) target = $region69
    $region68: #{descryptor_encoder_forward.1} parent=1 // pred_region
      %s189 = ssub.s32 64, 64
      %190 = vsyncadd [#allocation27], %s189
      %s192 = sshll.u32 [#allocation26], 4
      %s193 = int_to_ptr.vmem [resolvable:$true] %s192
      %195 = dma.hbm_to_vmem [thread:$0]  %s16, 64, %s193, [#allocation27]
    $region69: #{descryptor_encoder_forward.1} parent=1 // pred_fallthru
      _
    // Predicated region
    $region70: #{descryptor_encoder_forward.1} parent=1 // pred_check
      _
    $region71: #{descryptor_encoder_forward.1} parent=1 // pred_check_branch
      %197 = sbr.rel (0) target = $region73
    $region72: #{descryptor_encoder_forward.1} parent=1 // pred_region
      %s199 = ssub.s32 128, 128
      %200 = vsyncadd [#allocation27], %s199
      %s202 = sshll.u32 [#allocation28], 4
      %s203 = int_to_ptr.vmem [resolvable:$true] %s202
      %205 = dma.hbm_to_vmem [thread:$0]  %s17, 128, %s203, [#allocation27]
    $region73: #{descryptor_encoder_forward.1} parent=1 // pred_fallthru
      _
    // Predicated region
    $region74: #{descryptor_encoder_forward.1} parent=1 // pred_check
      _
    $region75: #{descryptor_encoder_forward.1} parent=1 // pred_check_branch
      %207 = sbr.rel (0) target = $region77
    $region76: #{descryptor_encoder_forward.1} parent=1 // pred_region
      %s209 = ssub.s32 128, 128
      %210 = vsyncadd [#allocation30], %s209
      %s212 = sshll.u32 [#allocation29], 4
      %s213 = int_to_ptr.vmem [resolvable:$true] %s212
      %215 = dma.hbm_to_vmem [thread:$0]  %s18, 128, %s213, [#allocation30]
    $region77: #{descryptor_encoder_forward.1} parent=1 // pred_fallthru
      _
    // Predicated region
    $region78: #{descryptor_encoder_forward.1} parent=1 // pred_check
      _
    $region79: #{descryptor_encoder_forward.1} parent=1 // pred_check_branch
      %217 = sbr.rel (0) target = $region81
    $region80: #{descryptor_encoder_forward.1} parent=1 // pred_region
      %218 = dma.done [#allocation6], 16
    $region81: #{descryptor_encoder_forward.1} parent=1 // pred_fallthru
      _
    // Predicated region
    $region82: #{descryptor_encoder_forward.1} parent=1 // pred_check
      _
    $region83: #{descryptor_encoder_forward.1} parent=1 // pred_check_branch
      %220 = sbr.rel (0) target = $region85
    $region84: #{descryptor_encoder_forward.1} parent=1 // pred_region
      %221 = dma.done [#allocation9], 16
    $region85: #{descryptor_encoder_forward.1} parent=1 // pred_fallthru
      _
    // Predicated region
    $region86: #{descryptor_encoder_forward.1} parent=1 // pred_check
      _
    $region87: #{descryptor_encoder_forward.1} parent=1 // pred_check_branch
      %223 = sbr.rel (0) target = $region89
    $region88: #{descryptor_encoder_forward.1} parent=1 // pred_region
      %224 = dma.done [#allocation9], 256
    $region89: #{descryptor_encoder_forward.1} parent=1 // pred_fallthru
      _
    // Predicated region
    $region90: #{descryptor_encoder_forward.1} parent=1 // pred_check
      _
    $region91: #{descryptor_encoder_forward.1} parent=1 // pred_check_branch
      %226 = sbr.rel (0) target = $region93
    $region92: #{descryptor_encoder_forward.1} parent=1 // pred_region
      %227 = dma.done [#allocation12], 16
    $region93: #{descryptor_encoder_forward.1} parent=1 // pred_fallthru
      _
    // Predicated region
    $region94: #{descryptor_encoder_forward.1} parent=1 // pred_check
      _
    $region95: #{descryptor_encoder_forward.1} parent=1 // pred_check_branch
      %229 = sbr.rel (0) target = $region97
    $region96: #{descryptor_encoder_forward.1} parent=1 // pred_region
      %230 = dma.done [#allocation12], 256
    $region97: #{descryptor_encoder_forward.1} parent=1 // pred_fallthru
      _
    // Predicated region
    $region98: #{descryptor_encoder_forward.1} parent=1 // pred_check
      _
    $region99: #{descryptor_encoder_forward.1} parent=1 // pred_check_branch
      %232 = sbr.rel (0) target = $region101
    $region100: #{descryptor_encoder_forward.1} parent=1 // pred_region
      %233 = dma.done [#allocation15], 16
    $region101: #{descryptor_encoder_forward.1} parent=1 // pred_fallthru
      _
    // Predicated region
    $region102: #{descryptor_encoder_forward.1} parent=1 // pred_check
      _
    $region103: #{descryptor_encoder_forward.1} parent=1 // pred_check_branch
      %235 = sbr.rel (0) target = $region105
    $region104: #{descryptor_encoder_forward.1} parent=1 // pred_region
      %236 = dma.done [#allocation15], 256
    $region105: #{descryptor_encoder_forward.1} parent=1 // pred_fallthru
      _
    // Predicated region
    $region106: #{descryptor_encoder_forward.1} parent=1 // pred_check
      _
    $region107: #{descryptor_encoder_forward.1} parent=1 // pred_check_branch
      %238 = sbr.rel (0) target = $region109
    $region108: #{descryptor_encoder_forward.1} parent=1 // pred_region
      %239 = dma.done [#allocation18], 16
    $region109: #{descryptor_encoder_forward.1} parent=1 // pred_fallthru
      _
    // Predicated region
    $region110: #{descryptor_encoder_forward.1} parent=1 // pred_check
      _
    $region111: #{descryptor_encoder_forward.1} parent=1 // pred_check_branch
      %241 = sbr.rel (0) target = $region113
    $region112: #{descryptor_encoder_forward.1} parent=1 // pred_region
      %242 = dma.done [#allocation18], 256
    $region113: #{descryptor_encoder_forward.1} parent=1 // pred_fallthru
      _
    // Predicated region
    $region114: #{descryptor_encoder_forward.1} parent=1 // pred_check
      _
    $region115: #{descryptor_encoder_forward.1} parent=1 // pred_check_branch
      %244 = sbr.rel (0) target = $region117
    $region116: #{descryptor_encoder_forward.1} parent=1 // pred_region
      %245 = dma.done [#allocation21], 16
    $region117: #{descryptor_encoder_forward.1} parent=1 // pred_fallthru
      _
    // Predicated region
    $region118: #{descryptor_encoder_forward.1} parent=1 // pred_check
      _
    $region119: #{descryptor_encoder_forward.1} parent=1 // pred_check_branch
      %247 = sbr.rel (0) target = $region121
    $region120: #{descryptor_encoder_forward.1} parent=1 // pred_region
      %248 = dma.done [#allocation21], 256
    $region121: #{descryptor_encoder_forward.1} parent=1 // pred_fallthru
      _
    // Predicated region
    $region122: #{descryptor_encoder_forward.1} parent=1 // pred_check
      _
    $region123: #{descryptor_encoder_forward.1} parent=1 // pred_check_branch
      %250 = sbr.rel (0) target = $region125
    $region124: #{descryptor_encoder_forward.1} parent=1 // pred_region
      %251 = dma.done [#allocation24], 1024
    $region125: #{descryptor_encoder_forward.1} parent=1 // pred_fallthru
      _
    // Predicated region
    $region126: #{descryptor_encoder_forward.1} parent=1 // pred_check
      _
    $region127: #{descryptor_encoder_forward.1} parent=1 // pred_check_branch
      %253 = sbr.rel (0) target = $region129
    $region128: #{descryptor_encoder_forward.1} parent=1 // pred_region
      %254 = dma.done [#allocation24], 1024
    $region129: #{descryptor_encoder_forward.1} parent=1 // pred_fallthru
      _
    // Predicated region
    $region130: #{descryptor_encoder_forward.1} parent=1 // pred_check
      _
    $region131: #{descryptor_encoder_forward.1} parent=1 // pred_check_branch
      %256 = sbr.rel (0) target = $region133
    $region132: #{descryptor_encoder_forward.1} parent=1 // pred_region
      %257 = dma.done [#allocation27], 64
    $region133: #{descryptor_encoder_forward.1} parent=1 // pred_fallthru
      _
    // Predicated region
    $region134: #{descryptor_encoder_forward.1} parent=1 // pred_check
      _
    $region135: #{descryptor_encoder_forward.1} parent=1 // pred_check_branch
      %259 = sbr.rel (0) target = $region137
    $region136: #{descryptor_encoder_forward.1} parent=1 // pred_region
      %260 = dma.done [#allocation27], 128
    $region137: #{descryptor_encoder_forward.1} parent=1 // pred_fallthru
      _
    // Predicated region
    $region138: #{descryptor_encoder_forward.1} parent=1 // pred_check
      _
    $region139: #{descryptor_encoder_forward.1} parent=1 // pred_check_branch
      %262 = sbr.rel (0) target = $region141
    $region140: #{descryptor_encoder_forward.1} parent=1 // pred_region
      %263 = dma.done [#allocation30], 128
    $region141: #{descryptor_encoder_forward.1} parent=1 // pred_fallthru
      _
    %s265 = sshll.u32 1, 14
    %s266 = sxor.u32 4294967295, %s265
    %s268 = sld [smem:[#allocation0]]
    %s269 = sadd.s32 2, %s268
    %s271 = sshll.u32 7, 26
    %s272 = sxor.u32 4294967295, %s271
    %s273 = sand.u32 0, %s272
    %s274 = sshll.u32 %s269, 26
    %s275 = sor.u32 %s273, %s274
    %s276 = sshll.u32 [#allocation2], 4
    %s277 = int_to_ptr.vmem [resolvable:$true] %s276
    %280 = sst [smem:[#allocation33]] 1024
    %s281 = scalar_lea.smem [#allocation33], 1
    %282 = sst [smem:[%s281]] 1024
    %s283 = scalar_lea.smem [#allocation33], 2
    %284 = sst [smem:[%s283]] 8
    %s285 = scalar_lea.smem [#allocation33], 3
    %286 = sst [smem:[%s285]] 64
    %s287 = scalar_lea.smem [#allocation33], 4
    %288 = sst [smem:[%s287]] 128
    %s289 = scalar_lea.smem [#allocation33], 5
    %290 = sst [smem:[%s289]] 2
    %s291 = scalar_lea.smem [#allocation33], 6
    %292 = sst [smem:[%s291]] 512
    %s293 = scalar_lea.smem [#allocation33], 7
    %294 = sst [smem:[%s293]] 64
    %s295 = scalar_lea.smem [#allocation33], 8
    %296 = sst [smem:[%s295]] 4
    %298 = dma.general %s19, 32768, %s277, [#allocation4], [#allocation32], [#allocation33], %s275, 0
    %s299 = scalar_lea.sflag [#allocation4], 1
    %s301 = sshll.u32 1, 14
    %s302 = sxor.u32 4294967295, %s301
    %s304 = sadd.s32 2, %s268
    %s306 = sshll.u32 7, 26
    %s307 = sxor.u32 4294967295, %s306
    %s308 = sand.u32 0, %s307
    %s309 = sshll.u32 %s304, 26
    %s310 = sor.u32 %s308, %s309
    %s311 = sshll.u32 [#allocation3], 4
    %s312 = int_to_ptr.vmem [resolvable:$true] %s311
    %315 = sst [smem:[#allocation35]] 1024
    %s316 = scalar_lea.smem [#allocation35], 1
    %317 = sst [smem:[%s316]] 1024
    %s318 = scalar_lea.smem [#allocation35], 2
    %319 = sst [smem:[%s318]] 8
    %s320 = scalar_lea.smem [#allocation35], 3
    %321 = sst [smem:[%s320]] 64
    %s322 = scalar_lea.smem [#allocation35], 4
    %323 = sst [smem:[%s322]] 128
    %s324 = scalar_lea.smem [#allocation35], 5
    %325 = sst [smem:[%s324]] 2
    %s326 = scalar_lea.smem [#allocation35], 6
    %327 = sst [smem:[%s326]] 512
    %s328 = scalar_lea.smem [#allocation35], 7
    %329 = sst [smem:[%s328]] 64
    %s330 = scalar_lea.smem [#allocation35], 8
    %331 = sst [smem:[%s330]] 4
    %333 = dma.general %s20, 65536, %s312, %s299, [#allocation34], [#allocation35], %s310, 0
    %v334 = vld [vmem:[%s0] sm:$0x3]
    %s335 = scalar_lea.vmem %s0, 2
    %v336 = vld [vmem:[%s335] sm:$0x3]
    %s337 = scalar_lea.vmem %s0, 4
    %v338 = vld [vmem:[%s337] sm:$0x3]
    %s339 = scalar_lea.vmem %s0, 6
    %v340 = vld [vmem:[%s339] sm:$0x3]
    %s341 = scalar_lea.vmem %s0, 8
    %v342 = vld [vmem:[%s341] sm:$0x3]
    %s343 = scalar_lea.vmem %s0, 10
    %v344 = vld [vmem:[%s343] sm:$0x3]
    %s345 = scalar_lea.vmem %s0, 12
    %v346 = vld [vmem:[%s345] sm:$0x3]
    %s347 = scalar_lea.vmem %s0, 14
    %v348 = vld [vmem:[%s347] sm:$0x3]
    %s349 = scalar_lea.vmem %s0, 16
    %v350 = vld [vmem:[%s349] sm:$0x3]
    %s351 = scalar_lea.vmem %s0, 18
    %v352 = vld [vmem:[%s351] sm:$0x3]
    %354 = vrot.lane.b32.xlu0 %v336, 3
    %v355 = vpop.permute.xlu0 %354
    %358 = vrot.lane.b32.xlu0 %v338, 6
    %v359 = vpop.permute.xlu0 %358
    %vm361 = vcmask 23552
    %v362 = vsel %vm361, %v334, %v355
    %vm363 = vcmask 48128
    %v364 = vsel %vm363, %v362, %v359
    %366 = vrot.lane.b32.xlu0 %v334, 127
    %v367 = vpop.permute.xlu0 %366
    %369 = vrot.lane.b32.xlu0 %v336, 2
    %v370 = vpop.permute.xlu0 %369
    %372 = vrot.lane.b32.xlu0 %v338, 5
    %v373 = vpop.permute.xlu0 %372
    %v375 = vsel %vm361, %v367, %v370
    %v376 = vsel %vm363, %v375, %v373
    %377 = vrot.lane.b32.xlu0 %v334, 126
    %v378 = vpop.permute.xlu0 %377
    %380 = vrot.lane.b32.xlu0 %v336, 1
    %v381 = vpop.permute.xlu0 %380
    %383 = vrot.lane.b32.xlu0 %v338, 4
    %v384 = vpop.permute.xlu0 %383
    %v386 = vsel %vm361, %v378, %v381
    %v387 = vsel %vm363, %v386, %v384
    %388 = vrot.lane.b32.xlu0 %v334, 125
    %v389 = vpop.permute.xlu0 %388
    %391 = vrot.lane.b32.xlu0 %v338, 3
    %v392 = vpop.permute.xlu0 %391
    %v394 = vsel %vm361, %v389, %v336
    %v395 = vsel %vm363, %v394, %v392
    %397 = vrot.lane.b32.xlu0 %v340, 6
    %v398 = vpop.permute.xlu0 %397
    %v400 = vsel %vm361, %v336, %v392
    %v401 = vsel %vm363, %v400, %v398
    %402 = vrot.lane.b32.xlu0 %v336, 127
    %v403 = vpop.permute.xlu0 %402
    %405 = vrot.lane.b32.xlu0 %v338, 2
    %v406 = vpop.permute.xlu0 %405
    %408 = vrot.lane.b32.xlu0 %v340, 5
    %v409 = vpop.permute.xlu0 %408
    %v411 = vsel %vm361, %v403, %v406
    %v412 = vsel %vm363, %v411, %v409
    %413 = vrot.lane.b32.xlu0 %v336, 126
    %v414 = vpop.permute.xlu0 %413
    %416 = vrot.lane.b32.xlu0 %v338, 1
    %v417 = vpop.permute.xlu0 %416
    %419 = vrot.lane.b32.xlu0 %v340, 4
    %v420 = vpop.permute.xlu0 %419
    %v422 = vsel %vm361, %v414, %v417
    %v423 = vsel %vm363, %v422, %v420
    %424 = vrot.lane.b32.xlu0 %v336, 125
    %v425 = vpop.permute.xlu0 %424
    %427 = vrot.lane.b32.xlu0 %v340, 3
    %v428 = vpop.permute.xlu0 %427
    %v430 = vsel %vm361, %v425, %v338
    %v431 = vsel %vm363, %v430, %v428
    %433 = vrot.lane.b32.xlu0 %v342, 6
    %v434 = vpop.permute.xlu0 %433
    %v436 = vsel %vm361, %v338, %v428
    %v437 = vsel %vm363, %v436, %v434
    %438 = vrot.lane.b32.xlu0 %v338, 127
    %v439 = vpop.permute.xlu0 %438
    %441 = vrot.lane.b32.xlu0 %v340, 2
    %v442 = vpop.permute.xlu0 %441
    %444 = vrot.lane.b32.xlu0 %v342, 5
    %v445 = vpop.permute.xlu0 %444
    %v447 = vsel %vm361, %v439, %v442
    %v448 = vsel %vm363, %v447, %v445
    %449 = vrot.lane.b32.xlu0 %v338, 126
    %v450 = vpop.permute.xlu0 %449
    %452 = vrot.lane.b32.xlu0 %v340, 1
    %v453 = vpop.permute.xlu0 %452
    %455 = vrot.lane.b32.xlu0 %v342, 4
    %v456 = vpop.permute.xlu0 %455
    %v458 = vsel %vm361, %v450, %v453
    %v459 = vsel %vm363, %v458, %v456
    %460 = vrot.lane.b32.xlu0 %v338, 125
    %v461 = vpop.permute.xlu0 %460
    %463 = vrot.lane.b32.xlu0 %v342, 3
    %v464 = vpop.permute.xlu0 %463
    %v466 = vsel %vm361, %v461, %v340
    %v467 = vsel %vm363, %v466, %v464
    %469 = vrot.lane.b32.xlu0 %v344, 6
    %v470 = vpop.permute.xlu0 %469
    %v472 = vsel %vm361, %v340, %v464
    %v473 = vsel %vm363, %v472, %v470
    %474 = vrot.lane.b32.xlu0 %v340, 127
    %v475 = vpop.permute.xlu0 %474
    %477 = vrot.lane.b32.xlu0 %v342, 2
    %v478 = vpop.permute.xlu0 %477
    %480 = vrot.lane.b32.xlu0 %v344, 5
    %v481 = vpop.permute.xlu0 %480
    %v483 = vsel %vm361, %v475, %v478
    %v484 = vsel %vm363, %v483, %v481
    %485 = vrot.lane.b32.xlu0 %v340, 126
    %v486 = vpop.permute.xlu0 %485
    %488 = vrot.lane.b32.xlu0 %v342, 1
    %v489 = vpop.permute.xlu0 %488
    %491 = vrot.lane.b32.xlu0 %v344, 4
    %v492 = vpop.permute.xlu0 %491
    %v494 = vsel %vm361, %v486, %v489
    %v495 = vsel %vm363, %v494, %v492
    %496 = vrot.lane.b32.xlu0 %v340, 125
    %v497 = vpop.permute.xlu0 %496
    %499 = vrot.lane.b32.xlu0 %v344, 3
    %v500 = vpop.permute.xlu0 %499
    %v502 = vsel %vm361, %v497, %v342
    %v503 = vsel %vm363, %v502, %v500
    %505 = vrot.lane.b32.xlu0 %v346, 6
    %v506 = vpop.permute.xlu0 %505
    %v508 = vsel %vm361, %v342, %v500
    %v509 = vsel %vm363, %v508, %v506
    %510 = vrot.lane.b32.xlu0 %v342, 127
    %v511 = vpop.permute.xlu0 %510
    %513 = vrot.lane.b32.xlu0 %v344, 2
    %v514 = vpop.permute.xlu0 %513
    %516 = vrot.lane.b32.xlu0 %v346, 5
    %v517 = vpop.permute.xlu0 %516
    %v519 = vsel %vm361, %v511, %v514
    %v520 = vsel %vm363, %v519, %v517
    %521 = vrot.lane.b32.xlu0 %v342, 126
    %v522 = vpop.permute.xlu0 %521
    %524 = vrot.lane.b32.xlu0 %v344, 1
    %v525 = vpop.permute.xlu0 %524
    %527 = vrot.lane.b32.xlu0 %v346, 4
    %v528 = vpop.permute.xlu0 %527
    %v530 = vsel %vm361, %v522, %v525
    %v531 = vsel %vm363, %v530, %v528
    %532 = vrot.lane.b32.xlu0 %v342, 125
    %v533 = vpop.permute.xlu0 %532
    %535 = vrot.lane.b32.xlu0 %v346, 3
    %v536 = vpop.permute.xlu0 %535
    %v538 = vsel %vm361, %v533, %v344
    %v539 = vsel %vm363, %v538, %v536
    %541 = vrot.lane.b32.xlu0 %v348, 6
    %v542 = vpop.permute.xlu0 %541
    %v544 = vsel %vm361, %v344, %v536
    %v545 = vsel %vm363, %v544, %v542
    %546 = vrot.lane.b32.xlu0 %v344, 127
    %v547 = vpop.permute.xlu0 %546
    %549 = vrot.lane.b32.xlu0 %v346, 2
    %v550 = vpop.permute.xlu0 %549
    %552 = vrot.lane.b32.xlu0 %v348, 5
    %v553 = vpop.permute.xlu0 %552
    %v555 = vsel %vm361, %v547, %v550
    %v556 = vsel %vm363, %v555, %v553
    %557 = vrot.lane.b32.xlu0 %v344, 126
    %v558 = vpop.permute.xlu0 %557
    %560 = vrot.lane.b32.xlu0 %v346, 1
    %v561 = vpop.permute.xlu0 %560
    %563 = vrot.lane.b32.xlu0 %v348, 4
    %v564 = vpop.permute.xlu0 %563
    %v566 = vsel %vm361, %v558, %v561
    %v567 = vsel %vm363, %v566, %v564
    %568 = vrot.lane.b32.xlu0 %v344, 125
    %v569 = vpop.permute.xlu0 %568
    %571 = vrot.lane.b32.xlu0 %v348, 3
    %v572 = vpop.permute.xlu0 %571
    %v574 = vsel %vm361, %v569, %v346
    %v575 = vsel %vm363, %v574, %v572
    %577 = vrot.lane.b32.xlu0 %v350, 6
    %v578 = vpop.permute.xlu0 %577
    %v580 = vsel %vm361, %v346, %v572
    %v581 = vsel %vm363, %v580, %v578
    %582 = vrot.lane.b32.xlu0 %v346, 127
    %v583 = vpop.permute.xlu0 %582
    %585 = vrot.lane.b32.xlu0 %v348, 2
    %v586 = vpop.permute.xlu0 %585
    %588 = vrot.lane.b32.xlu0 %v350, 5
    %v589 = vpop.permute.xlu0 %588
    %v591 = vsel %vm361, %v583, %v586
    %v592 = vsel %vm363, %v591, %v589
    %593 = vrot.lane.b32.xlu0 %v346, 126
    %v594 = vpop.permute.xlu0 %593
    %596 = vrot.lane.b32.xlu0 %v348, 1
    %v597 = vpop.permute.xlu0 %596
    %599 = vrot.lane.b32.xlu0 %v350, 4
    %v600 = vpop.permute.xlu0 %599
    %v602 = vsel %vm361, %v594, %v597
    %v603 = vsel %vm363, %v602, %v600
    %604 = vrot.lane.b32.xlu0 %v346, 125
    %v605 = vpop.permute.xlu0 %604
    %607 = vrot.lane.b32.xlu0 %v350, 3
    %v608 = vpop.permute.xlu0 %607
    %v610 = vsel %vm361, %v605, %v348
    %v611 = vsel %vm363, %v610, %v608
    %613 = vrot.lane.b32.xlu0 %v352, 6
    %v614 = vpop.permute.xlu0 %613
    %v616 = vsel %vm361, %v348, %v608
    %v617 = vsel %vm363, %v616, %v614
    %618 = vrot.lane.b32.xlu0 %v348, 127
    %v619 = vpop.permute.xlu0 %618
    %621 = vrot.lane.b32.xlu0 %v350, 2
    %v622 = vpop.permute.xlu0 %621
    %624 = vrot.lane.b32.xlu0 %v352, 5
    %v625 = vpop.permute.xlu0 %624
    %v627 = vsel %vm361, %v619, %v622
    %v628 = vsel %vm363, %v627, %v625
    %629 = vrot.lane.b32.xlu0 %v348, 126
    %v630 = vpop.permute.xlu0 %629
    %632 = vrot.lane.b32.xlu0 %v350, 1
    %v633 = vpop.permute.xlu0 %632
    %635 = vrot.lane.b32.xlu0 %v352, 4
    %v636 = vpop.permute.xlu0 %635
    %v638 = vsel %vm361, %v630, %v633
    %v639 = vsel %vm363, %v638, %v636
    %640 = vrot.lane.b32.xlu0 %v348, 125
    %v641 = vpop.permute.xlu0 %640
    %643 = vrot.lane.b32.xlu0 %v352, 3
    %v644 = vpop.permute.xlu0 %643
    %v646 = vsel %vm361, %v641, %v350
    %v647 = vsel %vm363, %v646, %v644
    %v649 = vrot.slane %v376, 6
    %v652 = vrot.slane %v387, 4
    %v655 = vrot.slane %v395, 2
    %v658 = vrot.slane %v412, 6
    %v661 = vrot.slane %v423, 4
    %v664 = vrot.slane %v431, 2
    %v667 = vrot.slane %v448, 6
    %v670 = vrot.slane %v459, 4
    %v673 = vrot.slane %v467, 2
    %v676 = vrot.slane %v484, 6
    %v679 = vrot.slane %v495, 4
    %v682 = vrot.slane %v503, 2
    %vm684 = vcmask 1041408
    %v685 = vsel %vm684, %v364, %v649
    %vm686 = vcmask 1043456
    %v687 = vsel %vm686, %v685, %v652
    %vm688 = vcmask 1045504
    %v689 = vsel %vm688, %v687, %v655
    %v690 = vsel %vm684, %v401, %v658
    %v691 = vsel %vm686, %v690, %v661
    %v692 = vsel %vm688, %v691, %v664
    %v693 = vsel %vm684, %v437, %v667
    %v694 = vsel %vm686, %v693, %v670
    %v695 = vsel %vm688, %v694, %v673
    %v696 = vsel %vm684, %v473, %v676
    %v697 = vsel %vm686, %v696, %v679
    %v698 = vsel %vm688, %v697, %v682
    %v700 = vrot.slane %v520, 6
    %v703 = vrot.slane %v531, 4
    %v706 = vrot.slane %v539, 2
    %v709 = vrot.slane %v556, 6
    %v712 = vrot.slane %v567, 4
    %v715 = vrot.slane %v575, 2
    %v718 = vrot.slane %v592, 6
    %v721 = vrot.slane %v603, 4
    %v724 = vrot.slane %v611, 2
    %v727 = vrot.slane %v628, 6
    %v730 = vrot.slane %v639, 4
    %v733 = vrot.slane %v647, 2
    %v735 = vsel %vm684, %v509, %v700
    %v736 = vsel %vm686, %v735, %v703
    %v737 = vsel %vm688, %v736, %v706
    %v738 = vsel %vm684, %v545, %v709
    %v739 = vsel %vm686, %v738, %v712
    %v740 = vsel %vm688, %v739, %v715
    %v741 = vsel %vm684, %v581, %v718
    %v742 = vsel %vm686, %v741, %v721
    %v743 = vsel %vm688, %v742, %v724
    %v744 = vsel %vm684, %v617, %v727
    %v745 = vsel %vm686, %v744, %v730
    %v746 = vsel %vm688, %v745, %v733
    %v747 = vld [vmem:[%s1] sm:$0xff]
    %v748 = vld [vmem:[%s1 + $0x8] sm:$0x1]
    %v749 = vld [vmem:[#allocation5] sm:$0x1]
    %v751 = vlaneseq
    %v752 = vshrl.u32 %v751, 7
    %v753 = vsub.s32 0, %v752
    %v754 = vrot.slane %v749, %v753
    %vm756 = vcmask 72704
    %v758 = vsel %vm756, %v689, 0
    %v761 = vsel %vm756, %v692, 0
    %v764 = vsel %vm756, %v695, 0
    %v767 = vsel %vm756, %v698, 0
    %v770 = vsel %vm756, %v737, 0
    %v773 = vsel %vm756, %v740, 0
    %v776 = vsel %vm756, %v743, 0
    %v779 = vsel %vm756, %v746, 0
    %vm781 = vcmask 1040384
    %v783 = vsel %vm781, %v748, 0
    %785 = vmatprep.subr.mxu0 0.0
    %786 = vmatpush1.msra.mxu0 %v747
    %787 = vmatprep.subr.mxu0 0.0
    %788 = vmatpush1.msra.mxu0 %v783
    %789 = vmatprep.subr.mxu0 0.0
    %790 = vmatpush1.msra.mxu0 0.0
    %791 = vmatprep.subr.mxu0 0.0
    %792 = vmatpush1.msra.mxu0 0.0
    %793 = vmatprep.subr.mxu0 0.0
    %794 = vmatpush1.msra.mxu0 0.0
    %795 = vmatprep.subr.mxu0 0.0
    %796 = vmatpush1.msra.mxu0 0.0
    %797 = vmatprep.subr.mxu0 0.0
    %798 = vmatpush1.msra.mxu0 0.0
    %799 = vmatprep.subr.mxu0 0.0
    %800 = vmatpush1.msra.mxu0 0.0
    %801 = vmatprep.subr.mxu0 0.0
    %802 = vmatpush1.msra.mxu0 0.0
    %803 = vmatprep.subr.mxu0 0.0
    %804 = vmatpush1.msra.mxu0 0.0
    %805 = vmatprep.subr.mxu0 0.0
    %806 = vmatpush1.msra.mxu0 0.0
    %807 = vmatprep.subr.mxu0 0.0
    %808 = vmatpush1.msra.mxu0 0.0
    %809 = vmatprep.subr.mxu0 0.0
    %810 = vmatpush1.msra.mxu0 0.0
    %811 = vmatprep.subr.mxu0 0.0
    %812 = vmatpush1.msra.mxu0 0.0
    %813 = vmatprep.subr.mxu0 0.0
    %814 = vmatpush1.msra.mxu0 0.0
    %815 = vmatprep.subr.mxu0 0.0
    %816 = vmatpush1.msra.mxu0 0.0
    %817 = vmatprep.subr.mxu0 0.0
    %818 = vmatpush1.msra.mxu0 0.0
    %819 = vmatprep.subr.mxu0 0.0
    %820 = vmatpush1.msra.mxu0 0.0
    %821 = vmatprep.subr.mxu0 0.0
    %822 = vmatpush1.msra.mxu0 0.0
    %823 = vmatprep.subr.mxu0 0.0
    %824 = vmatpush1.msra.mxu0 0.0
    %825 = vmatprep.subr.mxu0 0.0
    %826 = vmatpush1.msra.mxu0 0.0
    %827 = vmatprep.subr.mxu0 0.0
    %828 = vmatpush1.msra.mxu0 0.0
    %829 = vmatprep.subr.mxu0 0.0
    %830 = vmatpush1.msra.mxu0 0.0
    %831 = vmatprep.subr.mxu0 0.0
    %832 = vmatpush1.msra.mxu0 0.0
    %833 = vmatprep.subr.mxu0 0.0
    %834 = vmatpush1.msra.mxu0 0.0
    %835 = vmatprep.subr.mxu0 0.0
    %836 = vmatpush1.msra.mxu0 0.0
    %837 = vmatprep.subr.mxu0 0.0
    %838 = vmatpush1.msra.mxu0 0.0
    %839 = vmatprep.subr.mxu0 0.0
    %840 = vmatpush1.msra.mxu0 0.0
    %841 = vmatprep.subr.mxu0 0.0
    %842 = vmatpush1.msra.mxu0 0.0
    %843 = vmatprep.subr.mxu0 0.0
    %844 = vmatpush1.msra.mxu0 0.0
    %845 = vmatprep.subr.mxu0 0.0
    %846 = vmatpush1.msra.mxu0 0.0
    %847 = vmatprep.subr.mxu0 0.0
    %848 = vmatpush1.msra.mxu0 0.0
    %849 = vmatprep.mubr.f32.mxu0 0.0
    %850 = vmatmul.mubr.f32.gmra.mrb[0].mxu0 %v758
    %v851 = vpop.f32.mrb[0].mxu0
    %v852 = vadd.f32 %v754, %v851
    %v853 = vpop.f32.mrb[0].mxu0
    %854 = vmatprep.mubr.f32.mxu0 0.0
    %855 = vmatmul.mubr.f32.gmra.mrb[0].mxu0 %v761
    %v856 = vpop.f32.mrb[0].mxu0
    %v857 = vadd.f32 %v754, %v856
    %v858 = vpop.f32.mrb[0].mxu0
    %859 = vmatprep.mubr.f32.mxu0 0.0
    %860 = vmatmul.mubr.f32.gmra.mrb[0].mxu0 %v764
    %v861 = vpop.f32.mrb[0].mxu0
    %v862 = vadd.f32 %v754, %v861
    %v863 = vpop.f32.mrb[0].mxu0
    %864 = vmatprep.mubr.f32.mxu0 0.0
    %865 = vmatmul.mubr.f32.gmra.mrb[0].mxu0 %v767
    %v866 = vpop.f32.mrb[0].mxu0
    %v867 = vadd.f32 %v754, %v866
    %v868 = vpop.f32.mrb[0].mxu0
    %869 = vmatprep.mubr.f32.mxu0 0.0
    %870 = vmatmul.mubr.f32.gmra.mrb[0].mxu0 %v770
    %v871 = vpop.f32.mrb[0].mxu0
    %v872 = vadd.f32 %v754, %v871
    %v873 = vpop.f32.mrb[0].mxu0
    %874 = vmatprep.mubr.f32.mxu0 0.0
    %875 = vmatmul.mubr.f32.gmra.mrb[0].mxu0 %v773
    %v876 = vpop.f32.mrb[0].mxu0
    %v877 = vadd.f32 %v754, %v876
    %v878 = vpop.f32.mrb[0].mxu0
    %879 = vmatprep.mubr.f32.mxu0 0.0
    %880 = vmatmul.mubr.f32.gmra.mrb[0].mxu0 %v776
    %v881 = vpop.f32.mrb[0].mxu0
    %v882 = vadd.f32 %v754, %v881
    %v883 = vpop.f32.mrb[0].mxu0
    %884 = vmatprep.mubr.f32.mxu0 0.0
    %885 = vmatmul.mubr.f32.gmra.mrb[0].mxu0 %v779
    %v886 = vpop.f32.mrb[0].mxu0
    %v887 = vadd.f32 %v754, %v886
    %v888 = vpop.f32.mrb[0].mxu0
    %889 = vdwg.mxu0
    %v890 = vmax.f32 %v852, 0.0
    %v891 = vmax.f32 %v857, 0.0
    %v892 = vmax.f32 %v862, 0.0
    %v893 = vmax.f32 %v867, 0.0
    %v894 = vmax.f32 %v872, 0.0
    %v895 = vmax.f32 %v877, 0.0
    %v896 = vmax.f32 %v882, 0.0
    %v897 = vmax.f32 %v887, 0.0
    %v899 = vrot.slane %v890, 2
    %v901 = vmax.f32 %v890, %v899
    %v903 = vrot.slane %v891, 2
    %v905 = vmax.f32 %v891, %v903
    %v906 = vmax.f32 %v901, %v905
    %v908 = vrot.slane %v892, 2
    %v910 = vmax.f32 %v892, %v908
    %v912 = vrot.slane %v893, 2
    %v914 = vmax.f32 %v893, %v912
    %v915 = vmax.f32 %v910, %v914
    %v917 = vrot.slane %v894, 2
    %v919 = vmax.f32 %v894, %v917
    %v921 = vrot.slane %v895, 2
    %v923 = vmax.f32 %v895, %v921
    %v924 = vmax.f32 %v919, %v923
    %v926 = vrot.slane %v896, 2
    %v928 = vmax.f32 %v896, %v926
    %v930 = vrot.slane %v897, 2
    %v932 = vmax.f32 %v897, %v930
    %v933 = vmax.f32 %v928, %v932
    %v935 = vrot.slane %v906, 2
    %v938 = vrot.slane %v915, 6
    %v941 = vrot.slane %v924, 2
    %v943 = vsel %vm688, 0.0, %v935
    %v944 = vsel %vm684, 0.0, %v938
    %v945 = vsel %vm686, %v944, 0.0
    %v946 = vsel %vm688, %v945, %v941
    %v947 = vld [vmem:[%s3] sm:$0xff]
    %v948 = vrot.slane %v906, 4
    %v950 = vrot.slane %v906, 6
    %v952 = vrot.slane %v915, 2
    %v954 = vrot.slane %v924, 4
    %v956 = vrot.slane %v924, 6
    %v958 = vsel %vm686, 0.0, %v948
    %v959 = vsel %vm688, %v958, %v950
    %v960 = vsel %vm684, %v915, %v952
    %v961 = vsel %vm686, %v960, %v954
    %v962 = vsel %vm688, %v961, %v956
    %v963 = vld [vmem:[%s3 + $0x8] sm:$0xff]
    %vm964 = vcmask 64512
    %v966 = vsel %vm964, %v959, 0
    %v969 = vsel %vm964, %v962, 0
    %971 = vmatprep.subr.mxu0 0.0
    %972 = vmatpush1.msra.mxu0 %v963
    %973 = vmatprep.subr.mxu0 0.0
    %974 = vmatpush1.msra.mxu0 0.0
    %975 = vmatprep.subr.mxu0 0.0
    %976 = vmatpush1.msra.mxu0 0.0
    %977 = vmatprep.subr.mxu0 0.0
    %978 = vmatpush1.msra.mxu0 0.0
    %979 = vmatprep.subr.mxu0 0.0
    %980 = vmatpush1.msra.mxu0 0.0
    %981 = vmatprep.subr.mxu0 0.0
    %982 = vmatpush1.msra.mxu0 0.0
    %983 = vmatprep.subr.mxu0 0.0
    %984 = vmatpush1.msra.mxu0 0.0
    %985 = vmatprep.subr.mxu0 0.0
    %986 = vmatpush1.msra.mxu0 0.0
    %987 = vmatprep.subr.mxu0 0.0
    %988 = vmatpush1.msra.mxu0 0.0
    %989 = vmatprep.subr.mxu0 0.0
    %990 = vmatpush1.msra.mxu0 0.0
    %991 = vmatprep.subr.mxu0 0.0
    %992 = vmatpush1.msra.mxu0 0.0
    %993 = vmatprep.subr.mxu0 0.0
    %994 = vmatpush1.msra.mxu0 0.0
    %995 = vmatprep.subr.mxu0 0.0
    %996 = vmatpush1.msra.mxu0 0.0
    %997 = vmatprep.subr.mxu0 0.0
    %998 = vmatpush1.msra.mxu0 0.0
    %999 = vmatprep.subr.mxu0 0.0
    %1000 = vmatpush1.msra.mxu0 0.0
    %1001 = vmatprep.subr.mxu0 0.0
    %1002 = vmatpush1.msra.mxu0 0.0
    %1003 = vmatprep.subr.mxu0 0.0
    %1004 = vmatpush1.msra.mxu0 0.0
    %1005 = vmatprep.subr.mxu0 0.0
    %1006 = vmatpush1.msra.mxu0 0.0
    %1007 = vmatprep.subr.mxu0 0.0
    %1008 = vmatpush1.msra.mxu0 0.0
    %1009 = vmatprep.subr.mxu0 0.0
    %1010 = vmatpush1.msra.mxu0 0.0
    %1011 = vmatprep.subr.mxu0 0.0
    %1012 = vmatpush1.msra.mxu0 0.0
    %1013 = vmatprep.subr.mxu0 0.0
    %1014 = vmatpush1.msra.mxu0 0.0
    %1015 = vmatprep.subr.mxu0 0.0
    %1016 = vmatpush1.msra.mxu0 0.0
    %1017 = vmatprep.subr.mxu0 0.0
    %1018 = vmatpush1.msra.mxu0 0.0
    %1019 = vmatprep.subr.mxu0 0.0
    %1020 = vmatpush1.msra.mxu0 0.0
    %1021 = vmatprep.subr.mxu0 0.0
    %1022 = vmatpush1.msra.mxu0 0.0
    %1023 = vmatprep.subr.mxu0 0.0
    %1024 = vmatpush1.msra.mxu0 0.0
    %1025 = vmatprep.subr.mxu0 0.0
    %1026 = vmatpush1.msra.mxu0 0.0
    %1027 = vmatprep.subr.mxu0 0.0
    %1028 = vmatpush1.msra.mxu0 0.0
    %1029 = vmatprep.subr.mxu0 0.0
    %1030 = vmatpush1.msra.mxu0 0.0
    %1031 = vmatprep.subr.mxu0 0.0
    %1032 = vmatpush1.msra.mxu0 0.0
    %1033 = vmatprep.subr.mxu0 0.0
    %1034 = vmatpush1.msra.mxu0 0.0
    %1035 = vmatprep.mubr.f32.mxu0 0.0
    %1036 = vmatmul.mubr.f32.gmra.mrb[0].mxu0 %v966
    %v1037 = vpop.f32.mrb[0].mxu0
    %v1038 = vadd.f32 0.0, %v1037
    %v1039 = vpop.f32.mrb[0].mxu0
    %1040 = vmatprep.mubr.f32.mxu0 0.0
    %1041 = vmatmul.mubr.f32.gmra.mrb[0].mxu0 %v969
    %v1042 = vpop.f32.mrb[0].mxu0
    %v1043 = vadd.f32 0.0, %v1042
    %v1044 = vpop.f32.mrb[0].mxu0
    %1045 = vdwg.mxu0
    %v1047 = vsel %vm964, %v943, 0
    %v1050 = vsel %vm964, %v946, 0
    %1052 = vmatprep.subr.mxu0 0.0
    %1053 = vmatpush1.msra.mxu0 %v947
    %1054 = vmatprep.subr.mxu0 0.0
    %1055 = vmatpush1.msra.mxu0 0.0
    %1056 = vmatprep.subr.mxu0 0.0
    %1057 = vmatpush1.msra.mxu0 0.0
    %1058 = vmatprep.subr.mxu0 0.0
    %1059 = vmatpush1.msra.mxu0 0.0
    %1060 = vmatprep.subr.mxu0 0.0
    %1061 = vmatpush1.msra.mxu0 0.0
    %1062 = vmatprep.subr.mxu0 0.0
    %1063 = vmatpush1.msra.mxu0 0.0
    %1064 = vmatprep.subr.mxu0 0.0
    %1065 = vmatpush1.msra.mxu0 0.0
    %1066 = vmatprep.subr.mxu0 0.0
    %1067 = vmatpush1.msra.mxu0 0.0
    %1068 = vmatprep.subr.mxu0 0.0
    %1069 = vmatpush1.msra.mxu0 0.0
    %1070 = vmatprep.subr.mxu0 0.0
    %1071 = vmatpush1.msra.mxu0 0.0
    %1072 = vmatprep.subr.mxu0 0.0
    %1073 = vmatpush1.msra.mxu0 0.0
    %1074 = vmatprep.subr.mxu0 0.0
    %1075 = vmatpush1.msra.mxu0 0.0
    %1076 = vmatprep.subr.mxu0 0.0
    %1077 = vmatpush1.msra.mxu0 0.0
    %1078 = vmatprep.subr.mxu0 0.0
    %1079 = vmatpush1.msra.mxu0 0.0
    %1080 = vmatprep.subr.mxu0 0.0
    %1081 = vmatpush1.msra.mxu0 0.0
    %1082 = vmatprep.subr.mxu0 0.0
    %1083 = vmatpush1.msra.mxu0 0.0
    %1084 = vmatprep.subr.mxu0 0.0
    %1085 = vmatpush1.msra.mxu0 0.0
    %1086 = vmatprep.subr.mxu0 0.0
    %1087 = vmatpush1.msra.mxu0 0.0
    %1088 = vmatprep.subr.mxu0 0.0
    %1089 = vmatpush1.msra.mxu0 0.0
    %1090 = vmatprep.subr.mxu0 0.0
    %1091 = vmatpush1.msra.mxu0 0.0
    %1092 = vmatprep.subr.mxu0 0.0
    %1093 = vmatpush1.msra.mxu0 0.0
    %1094 = vmatprep.subr.mxu0 0.0
    %1095 = vmatpush1.msra.mxu0 0.0
    %1096 = vmatprep.subr.mxu0 0.0
    %1097 = vmatpush1.msra.mxu0 0.0
    %1098 = vmatprep.subr.mxu0 0.0
    %1099 = vmatpush1.msra.mxu0 0.0
    %1100 = vmatprep.subr.mxu0 0.0
    %1101 = vmatpush1.msra.mxu0 0.0
    %1102 = vmatprep.subr.mxu0 0.0
    %1103 = vmatpush1.msra.mxu0 0.0
    %1104 = vmatprep.subr.mxu0 0.0
    %1105 = vmatpush1.msra.mxu0 0.0
    %1106 = vmatprep.subr.mxu0 0.0
    %1107 = vmatpush1.msra.mxu0 0.0
    %1108 = vmatprep.subr.mxu0 0.0
    %1109 = vmatpush1.msra.mxu0 0.0
    %1110 = vmatprep.subr.mxu0 0.0
    %1111 = vmatpush1.msra.mxu0 0.0
    %1112 = vmatprep.subr.mxu0 0.0
    %1113 = vmatpush1.msra.mxu0 0.0
    %1114 = vmatprep.subr.mxu0 0.0
    %1115 = vmatpush1.msra.mxu0 0.0
    %1116 = vmatprep.mubr.f32.mxu0 0.0
    %1117 = vmatmul.mubr.f32.gmra.mrb[0].mxu0 %v1047
    %v1118 = vpop.f32.mrb[0].mxu0
    %v1119 = vadd.f32 %v1038, %v1118
    %v1120 = vpop.f32.mrb[0].mxu0
    %1121 = vmatprep.mubr.f32.mxu0 0.0
    %1122 = vmatmul.mubr.f32.gmra.mrb[0].mxu0 %v1050
    %v1123 = vpop.f32.mrb[0].mxu0
    %v1124 = vadd.f32 %v1043, %v1123
    %v1125 = vpop.f32.mrb[0].mxu0
    %1126 = vdwg.mxu0
    %v1127 = vrot.slane %v915, 4
    %v1129 = vsel %vm686, 0.0, %v906
    %v1130 = vsel %vm688, %v1129, 0.0
    %v1131 = vsel %vm684, %v1127, 0.0
    %v1132 = vsel %vm686, %v1131, %v924
    %v1133 = vsel %vm688, %v1132, 0.0
    %v1134 = vld [vmem:[%s3 + $0x10] sm:$0xff]
    %v1136 = vsel %vm964, %v1130, 0
    %v1139 = vsel %vm964, %v1133, 0
    %1141 = vmatprep.subr.mxu0 0.0
    %1142 = vmatpush1.msra.mxu0 %v1134
    %1143 = vmatprep.subr.mxu0 0.0
    %1144 = vmatpush1.msra.mxu0 0.0
    %1145 = vmatprep.subr.mxu0 0.0
    %1146 = vmatpush1.msra.mxu0 0.0
    %1147 = vmatprep.subr.mxu0 0.0
    %1148 = vmatpush1.msra.mxu0 0.0
    %1149 = vmatprep.subr.mxu0 0.0
    %1150 = vmatpush1.msra.mxu0 0.0
    %1151 = vmatprep.subr.mxu0 0.0
    %1152 = vmatpush1.msra.mxu0 0.0
    %1153 = vmatprep.subr.mxu0 0.0
    %1154 = vmatpush1.msra.mxu0 0.0
    %1155 = vmatprep.subr.mxu0 0.0
    %1156 = vmatpush1.msra.mxu0 0.0
    %1157 = vmatprep.subr.mxu0 0.0
    %1158 = vmatpush1.msra.mxu0 0.0
    %1159 = vmatprep.subr.mxu0 0.0
    %1160 = vmatpush1.msra.mxu0 0.0
    %1161 = vmatprep.subr.mxu0 0.0
    %1162 = vmatpush1.msra.mxu0 0.0
    %1163 = vmatprep.subr.mxu0 0.0
    %1164 = vmatpush1.msra.mxu0 0.0
    %1165 = vmatprep.subr.mxu0 0.0
    %1166 = vmatpush1.msra.mxu0 0.0
    %1167 = vmatprep.subr.mxu0 0.0
    %1168 = vmatpush1.msra.mxu0 0.0
    %1169 = vmatprep.subr.mxu0 0.0
    %1170 = vmatpush1.msra.mxu0 0.0
    %1171 = vmatprep.subr.mxu0 0.0
    %1172 = vmatpush1.msra.mxu0 0.0
    %1173 = vmatprep.subr.mxu0 0.0
    %1174 = vmatpush1.msra.mxu0 0.0
    %1175 = vmatprep.subr.mxu0 0.0
    %1176 = vmatpush1.msra.mxu0 0.0
    %1177 = vmatprep.subr.mxu0 0.0
    %1178 = vmatpush1.msra.mxu0 0.0
    %1179 = vmatprep.subr.mxu0 0.0
    %1180 = vmatpush1.msra.mxu0 0.0
    %1181 = vmatprep.subr.mxu0 0.0
    %1182 = vmatpush1.msra.mxu0 0.0
    %1183 = vmatprep.subr.mxu0 0.0
    %1184 = vmatpush1.msra.mxu0 0.0
    %1185 = vmatprep.subr.mxu0 0.0
    %1186 = vmatpush1.msra.mxu0 0.0
    %1187 = vmatprep.subr.mxu0 0.0
    %1188 = vmatpush1.msra.mxu0 0.0
    %1189 = vmatprep.subr.mxu0 0.0
    %1190 = vmatpush1.msra.mxu0 0.0
    %1191 = vmatprep.subr.mxu0 0.0
    %1192 = vmatpush1.msra.mxu0 0.0
    %1193 = vmatprep.subr.mxu0 0.0
    %1194 = vmatpush1.msra.mxu0 0.0
    %1195 = vmatprep.subr.mxu0 0.0
    %1196 = vmatpush1.msra.mxu0 0.0
    %1197 = vmatprep.subr.mxu0 0.0
    %1198 = vmatpush1.msra.mxu0 0.0
    %1199 = vmatprep.subr.mxu0 0.0
    %1200 = vmatpush1.msra.mxu0 0.0
    %1201 = vmatprep.subr.mxu0 0.0
    %1202 = vmatpush1.msra.mxu0 0.0
    %1203 = vmatprep.subr.mxu0 0.0
    %1204 = vmatpush1.msra.mxu0 0.0
    %1205 = vmatprep.mubr.f32.mxu0 0.0
    %1206 = vmatmul.mubr.f32.gmra.mrb[0].mxu0 %v1136
    %v1207 = vpop.f32.mrb[0].mxu0
    %v1208 = vadd.f32 0.0, %v1207
    %v1209 = vpop.f32.mrb[0].mxu0
    %1210 = vmatprep.mubr.f32.mxu0 0.0
    %1211 = vmatmul.mubr.f32.gmra.mrb[0].mxu0 %v1139
    %v1212 = vpop.f32.mrb[0].mxu0
    %v1213 = vadd.f32 0.0, %v1212
    %v1214 = vpop.f32.mrb[0].mxu0
    %1215 = vdwg.mxu0
    %v1216 = vadd.f32 %v1119, %v1208
    %v1217 = vadd.f32 %v1124, %v1213
    %v1219 = vrot.slane %v933, 2
    %v1221 = vsel %vm684, 0.0, %v950
    %v1222 = vsel %vm686, %v1221, 0.0
    %v1223 = vsel %vm688, %v1222, %v952
    %v1224 = vsel %vm684, 0.0, %v956
    %v1225 = vsel %vm686, %v1224, 0.0
    %v1226 = vsel %vm688, %v1225, %v1219
    %v1227 = vld [vmem:[%s3 + $0x18] sm:$0xff]
    %v1229 = vsel %vm964, %v1223, 0
    %v1232 = vsel %vm964, %v1226, 0
    %1234 = vmatprep.subr.mxu0 0.0
    %1235 = vmatpush1.msra.mxu0 %v1227
    %1236 = vmatprep.subr.mxu0 0.0
    %1237 = vmatpush1.msra.mxu0 0.0
    %1238 = vmatprep.subr.mxu0 0.0
    %1239 = vmatpush1.msra.mxu0 0.0
    %1240 = vmatprep.subr.mxu0 0.0
    %1241 = vmatpush1.msra.mxu0 0.0
    %1242 = vmatprep.subr.mxu0 0.0
    %1243 = vmatpush1.msra.mxu0 0.0
    %1244 = vmatprep.subr.mxu0 0.0
    %1245 = vmatpush1.msra.mxu0 0.0
    %1246 = vmatprep.subr.mxu0 0.0
    %1247 = vmatpush1.msra.mxu0 0.0
    %1248 = vmatprep.subr.mxu0 0.0
    %1249 = vmatpush1.msra.mxu0 0.0
    %1250 = vmatprep.subr.mxu0 0.0
    %1251 = vmatpush1.msra.mxu0 0.0
    %1252 = vmatprep.subr.mxu0 0.0
    %1253 = vmatpush1.msra.mxu0 0.0
    %1254 = vmatprep.subr.mxu0 0.0
    %1255 = vmatpush1.msra.mxu0 0.0
    %1256 = vmatprep.subr.mxu0 0.0
    %1257 = vmatpush1.msra.mxu0 0.0
    %1258 = vmatprep.subr.mxu0 0.0
    %1259 = vmatpush1.msra.mxu0 0.0
    %1260 = vmatprep.subr.mxu0 0.0
    %1261 = vmatpush1.msra.mxu0 0.0
    %1262 = vmatprep.subr.mxu0 0.0
    %1263 = vmatpush1.msra.mxu0 0.0
    %1264 = vmatprep.subr.mxu0 0.0
    %1265 = vmatpush1.msra.mxu0 0.0
    %1266 = vmatprep.subr.mxu0 0.0
    %1267 = vmatpush1.msra.mxu0 0.0
    %1268 = vmatprep.subr.mxu0 0.0
    %1269 = vmatpush1.msra.mxu0 0.0
    %1270 = vmatprep.subr.mxu0 0.0
    %1271 = vmatpush1.msra.mxu0 0.0
    %1272 = vmatprep.subr.mxu0 0.0
    %1273 = vmatpush1.msra.mxu0 0.0
    %1274 = vmatprep.subr.mxu0 0.0
    %1275 = vmatpush1.msra.mxu0 0.0
    %1276 = vmatprep.subr.mxu0 0.0
    %1277 = vmatpush1.msra.mxu0 0.0
    %1278 = vmatprep.subr.mxu0 0.0
    %1279 = vmatpush1.msra.mxu0 0.0
    %1280 = vmatprep.subr.mxu0 0.0
    %1281 = vmatpush1.msra.mxu0 0.0
    %1282 = vmatprep.subr.mxu0 0.0
    %1283 = vmatpush1.msra.mxu0 0.0
    %1284 = vmatprep.subr.mxu0 0.0
    %1285 = vmatpush1.msra.mxu0 0.0
    %1286 = vmatprep.subr.mxu0 0.0
    %1287 = vmatpush1.msra.mxu0 0.0
    %1288 = vmatprep.subr.mxu0 0.0
    %1289 = vmatpush1.msra.mxu0 0.0
    %1290 = vmatprep.subr.mxu0 0.0
    %1291 = vmatpush1.msra.mxu0 0.0
    %1292 = vmatprep.subr.mxu0 0.0
    %1293 = vmatpush1.msra.mxu0 0.0
    %1294 = vmatprep.subr.mxu0 0.0
    %1295 = vmatpush1.msra.mxu0 0.0
    %1296 = vmatprep.subr.mxu0 0.0
    %1297 = vmatpush1.msra.mxu0 0.0
    %1298 = vmatprep.mubr.f32.mxu0 0.0
    %1299 = vmatmul.mubr.f32.gmra.mrb[0].mxu0 %v1229
    %v1300 = vpop.f32.mrb[0].mxu0
    %v1301 = vadd.f32 0.0, %v1300
    %v1302 = vpop.f32.mrb[0].mxu0
    %1303 = vmatprep.mubr.f32.mxu0 0.0
    %1304 = vmatmul.mubr.f32.gmra.mrb[0].mxu0 %v1232
    %v1305 = vpop.f32.mrb[0].mxu0
    %v1306 = vadd.f32 0.0, %v1305
    %v1307 = vpop.f32.mrb[0].mxu0
    %1308 = vdwg.mxu0
    %v1309 = vadd.f32 %v1216, %v1301
    %v1310 = vadd.f32 %v1217, %v1306
    %v1311 = vrot.slane %v933, 4
    %v1313 = vrot.slane %v933, 6
    %v1315 = vsel %vm684, %v906, %v935
    %v1316 = vsel %vm686, %v1315, %v1127
    %v1317 = vsel %vm688, %v1316, %v938
    %v1318 = vsel %vm684, %v924, %v941
    %v1319 = vsel %vm686, %v1318, %v1311
    %v1320 = vsel %vm688, %v1319, %v1313
    %v1321 = vld [vmem:[%s3 + $0x20] sm:$0xff]
    %v1323 = vsel %vm964, %v1317, 0
    %v1326 = vsel %vm964, %v1320, 0
    %1328 = vmatprep.subr.mxu0 0.0
    %1329 = vmatpush1.msra.mxu0 %v1321
    %1330 = vmatprep.subr.mxu0 0.0
    %1331 = vmatpush1.msra.mxu0 0.0
    %1332 = vmatprep.subr.mxu0 0.0
    %1333 = vmatpush1.msra.mxu0 0.0
    %1334 = vmatprep.subr.mxu0 0.0
    %1335 = vmatpush1.msra.mxu0 0.0
    %1336 = vmatprep.subr.mxu0 0.0
    %1337 = vmatpush1.msra.mxu0 0.0
    %1338 = vmatprep.subr.mxu0 0.0
    %1339 = vmatpush1.msra.mxu0 0.0
    %1340 = vmatprep.subr.mxu0 0.0
    %1341 = vmatpush1.msra.mxu0 0.0
    %1342 = vmatprep.subr.mxu0 0.0
    %1343 = vmatpush1.msra.mxu0 0.0
    %1344 = vmatprep.subr.mxu0 0.0
    %1345 = vmatpush1.msra.mxu0 0.0
    %1346 = vmatprep.subr.mxu0 0.0
    %1347 = vmatpush1.msra.mxu0 0.0
    %1348 = vmatprep.subr.mxu0 0.0
    %1349 = vmatpush1.msra.mxu0 0.0
    %1350 = vmatprep.subr.mxu0 0.0
    %1351 = vmatpush1.msra.mxu0 0.0
    %1352 = vmatprep.subr.mxu0 0.0
    %1353 = vmatpush1.msra.mxu0 0.0
    %1354 = vmatprep.subr.mxu0 0.0
    %1355 = vmatpush1.msra.mxu0 0.0
    %1356 = vmatprep.subr.mxu0 0.0
    %1357 = vmatpush1.msra.mxu0 0.0
    %1358 = vmatprep.subr.mxu0 0.0
    %1359 = vmatpush1.msra.mxu0 0.0
    %1360 = vmatprep.subr.mxu0 0.0
    %1361 = vmatpush1.msra.mxu0 0.0
    %1362 = vmatprep.subr.mxu0 0.0
    %1363 = vmatpush1.msra.mxu0 0.0
    %1364 = vmatprep.subr.mxu0 0.0
    %1365 = vmatpush1.msra.mxu0 0.0
    %1366 = vmatprep.subr.mxu0 0.0
    %1367 = vmatpush1.msra.mxu0 0.0
    %1368 = vmatprep.subr.mxu0 0.0
    %1369 = vmatpush1.msra.mxu0 0.0
    %1370 = vmatprep.subr.mxu0 0.0
    %1371 = vmatpush1.msra.mxu0 0.0
    %1372 = vmatprep.subr.mxu0 0.0
    %1373 = vmatpush1.msra.mxu0 0.0
    %1374 = vmatprep.subr.mxu0 0.0
    %1375 = vmatpush1.msra.mxu0 0.0
    %1376 = vmatprep.subr.mxu0 0.0
    %1377 = vmatpush1.msra.mxu0 0.0
    %1378 = vmatprep.subr.mxu0 0.0
    %1379 = vmatpush1.msra.mxu0 0.0
    %1380 = vmatprep.subr.mxu0 0.0
    %1381 = vmatpush1.msra.mxu0 0.0
    %1382 = vmatprep.subr.mxu0 0.0
    %1383 = vmatpush1.msra.mxu0 0.0
    %1384 = vmatprep.subr.mxu0 0.0
    %1385 = vmatpush1.msra.mxu0 0.0
    %1386 = vmatprep.subr.mxu0 0.0
    %1387 = vmatpush1.msra.mxu0 0.0
    %1388 = vmatprep.subr.mxu0 0.0
    %1389 = vmatpush1.msra.mxu0 0.0
    %1390 = vmatprep.subr.mxu0 0.0
    %1391 = vmatpush1.msra.mxu0 0.0
    %1392 = vmatprep.mubr.f32.mxu0 0.0
    %1393 = vmatmul.mubr.f32.gmra.mrb[0].mxu0 %v1323
    %v1394 = vpop.f32.mrb[0].mxu0
    %v1395 = vadd.f32 0.0, %v1394
    %v1396 = vpop.f32.mrb[0].mxu0
    %1397 = vmatprep.mubr.f32.mxu0 0.0
    %1398 = vmatmul.mubr.f32.gmra.mrb[0].mxu0 %v1326
    %v1399 = vpop.f32.mrb[0].mxu0
    %v1400 = vadd.f32 0.0, %v1399
    %v1401 = vpop.f32.mrb[0].mxu0
    %1402 = vdwg.mxu0
    %v1403 = vadd.f32 %v1309, %v1395
    %v1404 = vadd.f32 %v1310, %v1400
    %v1405 = vsel %vm684, %v948, 0.0
    %v1406 = vsel %vm686, %v1405, %v915
    %v1407 = vsel %vm688, %v1406, 0.0
    %v1408 = vsel %vm684, %v954, 0.0
    %v1409 = vsel %vm686, %v1408, %v933
    %v1410 = vsel %vm688, %v1409, 0.0
    %v1411 = vld [vmem:[%s3 + $0x28] sm:$0xff]
    %v1413 = vsel %vm964, %v1407, 0
    %v1416 = vsel %vm964, %v1410, 0
    %1418 = vmatprep.subr.mxu0 0.0
    %1419 = vmatpush1.msra.mxu0 %v1411
    %1420 = vmatprep.subr.mxu0 0.0
    %1421 = vmatpush1.msra.mxu0 0.0
    %1422 = vmatprep.subr.mxu0 0.0
    %1423 = vmatpush1.msra.mxu0 0.0
    %1424 = vmatprep.subr.mxu0 0.0
    %1425 = vmatpush1.msra.mxu0 0.0
    %1426 = vmatprep.subr.mxu0 0.0
    %1427 = vmatpush1.msra.mxu0 0.0
    %1428 = vmatprep.subr.mxu0 0.0
    %1429 = vmatpush1.msra.mxu0 0.0
    %1430 = vmatprep.subr.mxu0 0.0
    %1431 = vmatpush1.msra.mxu0 0.0
    %1432 = vmatprep.subr.mxu0 0.0
    %1433 = vmatpush1.msra.mxu0 0.0
    %1434 = vmatprep.subr.mxu0 0.0
    %1435 = vmatpush1.msra.mxu0 0.0
    %1436 = vmatprep.subr.mxu0 0.0
    %1437 = vmatpush1.msra.mxu0 0.0
    %1438 = vmatprep.subr.mxu0 0.0
    %1439 = vmatpush1.msra.mxu0 0.0
    %1440 = vmatprep.subr.mxu0 0.0
    %1441 = vmatpush1.msra.mxu0 0.0
    %1442 = vmatprep.subr.mxu0 0.0
    %1443 = vmatpush1.msra.mxu0 0.0
    %1444 = vmatprep.subr.mxu0 0.0
    %1445 = vmatpush1.msra.mxu0 0.0
    %1446 = vmatprep.subr.mxu0 0.0
    %1447 = vmatpush1.msra.mxu0 0.0
    %1448 = vmatprep.subr.mxu0 0.0
    %1449 = vmatpush1.msra.mxu0 0.0
    %1450 = vmatprep.subr.mxu0 0.0
    %1451 = vmatpush1.msra.mxu0 0.0
    %1452 = vmatprep.subr.mxu0 0.0
    %1453 = vmatpush1.msra.mxu0 0.0
    %1454 = vmatprep.subr.mxu0 0.0
    %1455 = vmatpush1.msra.mxu0 0.0
    %1456 = vmatprep.subr.mxu0 0.0
    %1457 = vmatpush1.msra.mxu0 0.0
    %1458 = vmatprep.subr.mxu0 0.0
    %1459 = vmatpush1.msra.mxu0 0.0
    %1460 = vmatprep.subr.mxu0 0.0
    %1461 = vmatpush1.msra.mxu0 0.0
    %1462 = vmatprep.subr.mxu0 0.0
    %1463 = vmatpush1.msra.mxu0 0.0
    %1464 = vmatprep.subr.mxu0 0.0
    %1465 = vmatpush1.msra.mxu0 0.0
    %1466 = vmatprep.subr.mxu0 0.0
    %1467 = vmatpush1.msra.mxu0 0.0
    %1468 = vmatprep.subr.mxu0 0.0
    %1469 = vmatpush1.msra.mxu0 0.0
    %1470 = vmatprep.subr.mxu0 0.0
    %1471 = vmatpush1.msra.mxu0 0.0
    %1472 = vmatprep.subr.mxu0 0.0
    %1473 = vmatpush1.msra.mxu0 0.0
    %1474 = vmatprep.subr.mxu0 0.0
    %1475 = vmatpush1.msra.mxu0 0.0
    %1476 = vmatprep.subr.mxu0 0.0
    %1477 = vmatpush1.msra.mxu0 0.0
    %1478 = vmatprep.subr.mxu0 0.0
    %1479 = vmatpush1.msra.mxu0 0.0
    %1480 = vmatprep.subr.mxu0 0.0
    %1481 = vmatpush1.msra.mxu0 0.0
    %1482 = vmatprep.mubr.f32.mxu0 0.0
    %1483 = vmatmul.mubr.f32.gmra.mrb[0].mxu0 %v1413
    %v1484 = vpop.f32.mrb[0].mxu0
    %v1485 = vadd.f32 0.0, %v1484
    %v1486 = vpop.f32.mrb[0].mxu0
    %1487 = vmatprep.mubr.f32.mxu0 0.0
    %1488 = vmatmul.mubr.f32.gmra.mrb[0].mxu0 %v1416
    %v1489 = vpop.f32.mrb[0].mxu0
    %v1490 = vadd.f32 0.0, %v1489
    %v1491 = vpop.f32.mrb[0].mxu0
    %1492 = vdwg.mxu0
    %v1493 = vadd.f32 %v1403, %v1485
    %v1494 = vadd.f32 %v1404, %v1490
    %v1495 = vsel %vm684, 0.0, %v1313
    %v1496 = vsel %vm686, %v1495, 0.0
    %v1497 = vsel %vm688, %v1496, 0.0
    %v1498 = vld [vmem:[%s3 + $0x30] sm:$0xff]
    %v1500 = vsel %vm964, %v1497, 0
    %1502 = vmatprep.subr.mxu0 0.0
    %1503 = vmatpush1.msra.mxu0 %v1498
    %1504 = vmatprep.subr.mxu0 0.0
    %1505 = vmatpush1.msra.mxu0 0.0
    %1506 = vmatprep.subr.mxu0 0.0
    %1507 = vmatpush1.msra.mxu0 0.0
    %1508 = vmatprep.subr.mxu0 0.0
    %1509 = vmatpush1.msra.mxu0 0.0
    %1510 = vmatprep.subr.mxu0 0.0
    %1511 = vmatpush1.msra.mxu0 0.0
    %1512 = vmatprep.subr.mxu0 0.0
    %1513 = vmatpush1.msra.mxu0 0.0
    %1514 = vmatprep.subr.mxu0 0.0
    %1515 = vmatpush1.msra.mxu0 0.0
    %1516 = vmatprep.subr.mxu0 0.0
    %1517 = vmatpush1.msra.mxu0 0.0
    %1518 = vmatprep.subr.mxu0 0.0
    %1519 = vmatpush1.msra.mxu0 0.0
    %1520 = vmatprep.subr.mxu0 0.0
    %1521 = vmatpush1.msra.mxu0 0.0
    %1522 = vmatprep.subr.mxu0 0.0
    %1523 = vmatpush1.msra.mxu0 0.0
    %1524 = vmatprep.subr.mxu0 0.0
    %1525 = vmatpush1.msra.mxu0 0.0
    %1526 = vmatprep.subr.mxu0 0.0
    %1527 = vmatpush1.msra.mxu0 0.0
    %1528 = vmatprep.subr.mxu0 0.0
    %1529 = vmatpush1.msra.mxu0 0.0
    %1530 = vmatprep.subr.mxu0 0.0
    %1531 = vmatpush1.msra.mxu0 0.0
    %1532 = vmatprep.subr.mxu0 0.0
    %1533 = vmatpush1.msra.mxu0 0.0
    %1534 = vmatprep.subr.mxu0 0.0
    %1535 = vmatpush1.msra.mxu0 0.0
    %1536 = vmatprep.subr.mxu0 0.0
    %1537 = vmatpush1.msra.mxu0 0.0
    %1538 = vmatprep.subr.mxu0 0.0
    %1539 = vmatpush1.msra.mxu0 0.0
    %1540 = vmatprep.subr.mxu0 0.0
    %1541 = vmatpush1.msra.mxu0 0.0
    %1542 = vmatprep.subr.mxu0 0.0
    %1543 = vmatpush1.msra.mxu0 0.0
    %1544 = vmatprep.subr.mxu0 0.0
    %1545 = vmatpush1.msra.mxu0 0.0
    %1546 = vmatprep.subr.mxu0 0.0
    %1547 = vmatpush1.msra.mxu0 0.0
    %1548 = vmatprep.subr.mxu0 0.0
    %1549 = vmatpush1.msra.mxu0 0.0
    %1550 = vmatprep.subr.mxu0 0.0
    %1551 = vmatpush1.msra.mxu0 0.0
    %1552 = vmatprep.subr.mxu0 0.0
    %1553 = vmatpush1.msra.mxu0 0.0
    %1554 = vmatprep.subr.mxu0 0.0
    %1555 = vmatpush1.msra.mxu0 0.0
    %1556 = vmatprep.subr.mxu0 0.0
    %1557 = vmatpush1.msra.mxu0 0.0
    %1558 = vmatprep.subr.mxu0 0.0
    %1559 = vmatpush1.msra.mxu0 0.0
    %1560 = vmatprep.subr.mxu0 0.0
    %1561 = vmatpush1.msra.mxu0 0.0
    %1562 = vmatprep.subr.mxu0 0.0
    %1563 = vmatpush1.msra.mxu0 0.0
    %1564 = vmatprep.subr.mxu0 0.0
    %1565 = vmatpush1.msra.mxu0 0.0
    %1566 = vmatprep.mubr.f32.mxu0 0.0
    %1567 = vmatmul.mubr.f32.gmra.mrb[0].mxu0 %v1050
    %v1568 = vpop.f32.mrb[0].mxu0
    %v1569 = vadd.f32 0.0, %v1568
    %v1570 = vpop.f32.mrb[0].mxu0
    %1571 = vmatprep.mubr.f32.mxu0 0.0
    %1572 = vmatmul.mubr.f32.gmra.mrb[0].mxu0 %v1500
    %v1573 = vpop.f32.mrb[0].mxu0
    %v1574 = vadd.f32 0.0, %v1573
    %v1575 = vpop.f32.mrb[0].mxu0
    %1576 = vdwg.mxu0
    %v1577 = vadd.f32 %v1493, %v1569
    %v1578 = vadd.f32 %v1494, %v1574
    %v1579 = vsel %vm684, %v933, %v1219
    %v1580 = vsel %vm686, %v1579, 0.0
    %v1581 = vsel %vm688, %v1580, 0.0
    %v1582 = vld [vmem:[%s3 + $0x38] sm:$0xff]
    %v1584 = vsel %vm964, %v1581, 0
    %1586 = vmatprep.subr.mxu0 0.0
    %1587 = vmatpush1.msra.mxu0 %v1582
    %1588 = vmatprep.subr.mxu0 0.0
    %1589 = vmatpush1.msra.mxu0 0.0
    %1590 = vmatprep.subr.mxu0 0.0
    %1591 = vmatpush1.msra.mxu0 0.0
    %1592 = vmatprep.subr.mxu0 0.0
    %1593 = vmatpush1.msra.mxu0 0.0
    %1594 = vmatprep.subr.mxu0 0.0
    %1595 = vmatpush1.msra.mxu0 0.0
    %1596 = vmatprep.subr.mxu0 0.0
    %1597 = vmatpush1.msra.mxu0 0.0
    %1598 = vmatprep.subr.mxu0 0.0
    %1599 = vmatpush1.msra.mxu0 0.0
    %1600 = vmatprep.subr.mxu0 0.0
    %1601 = vmatpush1.msra.mxu0 0.0
    %1602 = vmatprep.subr.mxu0 0.0
    %1603 = vmatpush1.msra.mxu0 0.0
    %1604 = vmatprep.subr.mxu0 0.0
    %1605 = vmatpush1.msra.mxu0 0.0
    %1606 = vmatprep.subr.mxu0 0.0
    %1607 = vmatpush1.msra.mxu0 0.0
    %1608 = vmatprep.subr.mxu0 0.0
    %1609 = vmatpush1.msra.mxu0 0.0
    %1610 = vmatprep.subr.mxu0 0.0
    %1611 = vmatpush1.msra.mxu0 0.0
    %1612 = vmatprep.subr.mxu0 0.0
    %1613 = vmatpush1.msra.mxu0 0.0
    %1614 = vmatprep.subr.mxu0 0.0
    %1615 = vmatpush1.msra.mxu0 0.0
    %1616 = vmatprep.subr.mxu0 0.0
    %1617 = vmatpush1.msra.mxu0 0.0
    %1618 = vmatprep.subr.mxu0 0.0
    %1619 = vmatpush1.msra.mxu0 0.0
    %1620 = vmatprep.subr.mxu0 0.0
    %1621 = vmatpush1.msra.mxu0 0.0
    %1622 = vmatprep.subr.mxu0 0.0
    %1623 = vmatpush1.msra.mxu0 0.0
    %1624 = vmatprep.subr.mxu0 0.0
    %1625 = vmatpush1.msra.mxu0 0.0
    %1626 = vmatprep.subr.mxu0 0.0
    %1627 = vmatpush1.msra.mxu0 0.0
    %1628 = vmatprep.subr.mxu0 0.0
    %1629 = vmatpush1.msra.mxu0 0.0
    %1630 = vmatprep.subr.mxu0 0.0
    %1631 = vmatpush1.msra.mxu0 0.0
    %1632 = vmatprep.subr.mxu0 0.0
    %1633 = vmatpush1.msra.mxu0 0.0
    %1634 = vmatprep.subr.mxu0 0.0
    %1635 = vmatpush1.msra.mxu0 0.0
    %1636 = vmatprep.subr.mxu0 0.0
    %1637 = vmatpush1.msra.mxu0 0.0
    %1638 = vmatprep.subr.mxu0 0.0
    %1639 = vmatpush1.msra.mxu0 0.0
    %1640 = vmatprep.subr.mxu0 0.0
    %1641 = vmatpush1.msra.mxu0 0.0
    %1642 = vmatprep.subr.mxu0 0.0
    %1643 = vmatpush1.msra.mxu0 0.0
    %1644 = vmatprep.subr.mxu0 0.0
    %1645 = vmatpush1.msra.mxu0 0.0
    %1646 = vmatprep.subr.mxu0 0.0
    %1647 = vmatpush1.msra.mxu0 0.0
    %1648 = vmatprep.subr.mxu0 0.0
    %1649 = vmatpush1.msra.mxu0 0.0
    %1650 = vmatprep.mubr.f32.mxu0 0.0
    %1651 = vmatmul.mubr.f32.gmra.mrb[0].mxu0 %v969
    %v1652 = vpop.f32.mrb[0].mxu0
    %v1653 = vadd.f32 0.0, %v1652
    %v1654 = vpop.f32.mrb[0].mxu0
    %1655 = vmatprep.mubr.f32.mxu0 0.0
    %1656 = vmatmul.mubr.f32.gmra.mrb[0].mxu0 %v1584
    %v1657 = vpop.f32.mrb[0].mxu0
    %v1658 = vadd.f32 0.0, %v1657
    %v1659 = vpop.f32.mrb[0].mxu0
    %1660 = vdwg.mxu0
    %v1661 = vadd.f32 %v1577, %v1653
    %v1662 = vadd.f32 %v1578, %v1658
    %v1663 = vsel %vm684, %v1311, 0.0
    %v1664 = vsel %vm686, %v1663, 0.0
    %v1665 = vsel %vm688, %v1664, 0.0
    %v1666 = vld [vmem:[%s3 + $0x40] sm:$0xff]
    %v1668 = vsel %vm964, %v1665, 0
    %1670 = vmatprep.subr.mxu0 0.0
    %1671 = vmatpush1.msra.mxu0 %v1666
    %1672 = vmatprep.subr.mxu0 0.0
    %1673 = vmatpush1.msra.mxu0 0.0
    %1674 = vmatprep.subr.mxu0 0.0
    %1675 = vmatpush1.msra.mxu0 0.0
    %1676 = vmatprep.subr.mxu0 0.0
    %1677 = vmatpush1.msra.mxu0 0.0
    %1678 = vmatprep.subr.mxu0 0.0
    %1679 = vmatpush1.msra.mxu0 0.0
    %1680 = vmatprep.subr.mxu0 0.0
    %1681 = vmatpush1.msra.mxu0 0.0
    %1682 = vmatprep.subr.mxu0 0.0
    %1683 = vmatpush1.msra.mxu0 0.0
    %1684 = vmatprep.subr.mxu0 0.0
    %1685 = vmatpush1.msra.mxu0 0.0
    %1686 = vmatprep.subr.mxu0 0.0
    %1687 = vmatpush1.msra.mxu0 0.0
    %1688 = vmatprep.subr.mxu0 0.0
    %1689 = vmatpush1.msra.mxu0 0.0
    %1690 = vmatprep.subr.mxu0 0.0
    %1691 = vmatpush1.msra.mxu0 0.0
    %1692 = vmatprep.subr.mxu0 0.0
    %1693 = vmatpush1.msra.mxu0 0.0
    %1694 = vmatprep.subr.mxu0 0.0
    %1695 = vmatpush1.msra.mxu0 0.0
    %1696 = vmatprep.subr.mxu0 0.0
    %1697 = vmatpush1.msra.mxu0 0.0
    %1698 = vmatprep.subr.mxu0 0.0
    %1699 = vmatpush1.msra.mxu0 0.0
    %1700 = vmatprep.subr.mxu0 0.0
    %1701 = vmatpush1.msra.mxu0 0.0
    %1702 = vmatprep.subr.mxu0 0.0
    %1703 = vmatpush1.msra.mxu0 0.0
    %1704 = vmatprep.subr.mxu0 0.0
    %1705 = vmatpush1.msra.mxu0 0.0
    %1706 = vmatprep.subr.mxu0 0.0
    %1707 = vmatpush1.msra.mxu0 0.0
    %1708 = vmatprep.subr.mxu0 0.0
    %1709 = vmatpush1.msra.mxu0 0.0
    %1710 = vmatprep.subr.mxu0 0.0
    %1711 = vmatpush1.msra.mxu0 0.0
    %1712 = vmatprep.subr.mxu0 0.0
    %1713 = vmatpush1.msra.mxu0 0.0
    %1714 = vmatprep.subr.mxu0 0.0
    %1715 = vmatpush1.msra.mxu0 0.0
    %1716 = vmatprep.subr.mxu0 0.0
    %1717 = vmatpush1.msra.mxu0 0.0
    %1718 = vmatprep.subr.mxu0 0.0
    %1719 = vmatpush1.msra.mxu0 0.0
    %1720 = vmatprep.subr.mxu0 0.0
    %1721 = vmatpush1.msra.mxu0 0.0
    %1722 = vmatprep.subr.mxu0 0.0
    %1723 = vmatpush1.msra.mxu0 0.0
    %1724 = vmatprep.subr.mxu0 0.0
    %1725 = vmatpush1.msra.mxu0 0.0
    %1726 = vmatprep.subr.mxu0 0.0
    %1727 = vmatpush1.msra.mxu0 0.0
    %1728 = vmatprep.subr.mxu0 0.0
    %1729 = vmatpush1.msra.mxu0 0.0
    %1730 = vmatprep.subr.mxu0 0.0
    %1731 = vmatpush1.msra.mxu0 0.0
    %1732 = vmatprep.subr.mxu0 0.0
    %1733 = vmatpush1.msra.mxu0 0.0
    %1734 = vmatprep.mubr.f32.mxu0 0.0
    %1735 = vmatmul.mubr.f32.gmra.mrb[0].mxu0 %v1139
    %v1736 = vpop.f32.mrb[0].mxu0
    %v1737 = vadd.f32 0.0, %v1736
    %v1738 = vpop.f32.mrb[0].mxu0
    %1739 = vmatprep.mubr.f32.mxu0 0.0
    %1740 = vmatmul.mubr.f32.gmra.mrb[0].mxu0 %v1668
    %v1741 = vpop.f32.mrb[0].mxu0
    %v1742 = vadd.f32 0.0, %v1741
    %v1743 = vpop.f32.mrb[0].mxu0
    %1744 = vdwg.mxu0
    %v1745 = vadd.f32 %v1661, %v1737
    %v1746 = vadd.f32 %v1662, %v1742
    %v1747 = vld [vmem:[#allocation8] sm:$0x1]
    %v1749 = vlaneseq
    %v1750 = vshrl.u32 %v1749, 7
    %v1751 = vsub.s32 0, %v1750
    %v1752 = vrot.slane %v1747, %v1751
    %v1754 = vadd.f32 %v1745, %v1752
    %v1755 = vadd.f32 %v1746, %v1752
    %v1756 = vmax.f32 %v1754, 0.0
    %v1757 = vmax.f32 %v1755, 0.0
    %v1759 = vrot.slane %v1756, 2
    %v1761 = vmax.f32 %v1756, %v1759
    %v1763 = vrot.slane %v1761, 4
    %v1765 = vmax.f32 %v1761, %v1763
    %v1767 = vrot.slane %v1757, 2
    %v1769 = vmax.f32 %v1757, %v1767
    %v1771 = vrot.slane %v1769, 4
    %v1773 = vmax.f32 %v1769, %v1771
    %v1774 = vld [vmem:[#allocation10] sm:$0xff]
    %v1775 = vld [vmem:[#allocation10 + $0x8] sm:$0xff]
    %v1776 = vld [vmem:[#allocation13] sm:$0xff]
    %v1777 = vld [vmem:[#allocation13 + $0x8] sm:$0xff]
    %v1778 = vld [vmem:[#allocation16] sm:$0xff]
    %v1779 = vld [vmem:[#allocation16 + $0x8] sm:$0xff]
    %v1780 = vld [vmem:[#allocation19] sm:$0xff]
    %v1781 = vld [vmem:[#allocation19 + $0x8] sm:$0xff]
    %v1782 = vld [vmem:[#allocation11] sm:$0x1]
    %v1783 = vld [vmem:[#allocation14] sm:$0x1]
    %v1784 = vld [vmem:[#allocation17] sm:$0x1]
    %v1785 = vld [vmem:[#allocation20] sm:$0x1]
    %v1786 = vld [vmem:[#allocation22] sm:$0xff]
    %v1787 = vld [vmem:[#allocation22 + $0x8] sm:$0xff]
    %v1789 = vlaneseq
    %v1790 = vshrl.u32 %v1789, 7
    %v1791 = vsub.s32 0, %v1790
    %v1792 = vrot.slane %v1782, %v1791
    %vm1794 = vcmask 130048
    %v1796 = vsel %vm1794, %v1765, 0
    %1798 = vmatprep.subr.mxu0 0.0
    %1799 = vmatpush1.msra.mxu0 %v1774
    %1800 = vmatprep.subr.mxu0 0.0
    %1801 = vmatpush1.msra.mxu0 %v1775
    %1802 = vmatprep.subr.mxu0 0.0
    %1803 = vmatpush1.msra.mxu0 0.0
    %1804 = vmatprep.subr.mxu0 0.0
    %1805 = vmatpush1.msra.mxu0 0.0
    %1806 = vmatprep.subr.mxu0 0.0
    %1807 = vmatpush1.msra.mxu0 0.0
    %1808 = vmatprep.subr.mxu0 0.0
    %1809 = vmatpush1.msra.mxu0 0.0
    %1810 = vmatprep.subr.mxu0 0.0
    %1811 = vmatpush1.msra.mxu0 0.0
    %1812 = vmatprep.subr.mxu0 0.0
    %1813 = vmatpush1.msra.mxu0 0.0
    %1814 = vmatprep.subr.mxu0 0.0
    %1815 = vmatpush1.msra.mxu0 0.0
    %1816 = vmatprep.subr.mxu0 0.0
    %1817 = vmatpush1.msra.mxu0 0.0
    %1818 = vmatprep.subr.mxu0 0.0
    %1819 = vmatpush1.msra.mxu0 0.0
    %1820 = vmatprep.subr.mxu0 0.0
    %1821 = vmatpush1.msra.mxu0 0.0
    %1822 = vmatprep.subr.mxu0 0.0
    %1823 = vmatpush1.msra.mxu0 0.0
    %1824 = vmatprep.subr.mxu0 0.0
    %1825 = vmatpush1.msra.mxu0 0.0
    %1826 = vmatprep.subr.mxu0 0.0
    %1827 = vmatpush1.msra.mxu0 0.0
    %1828 = vmatprep.subr.mxu0 0.0
    %1829 = vmatpush1.msra.mxu0 0.0
    %1830 = vmatprep.subr.mxu0 0.0
    %1831 = vmatpush1.msra.mxu0 0.0
    %1832 = vmatprep.subr.mxu0 0.0
    %1833 = vmatpush1.msra.mxu0 0.0
    %1834 = vmatprep.subr.mxu0 0.0
    %1835 = vmatpush1.msra.mxu0 0.0
    %1836 = vmatprep.subr.mxu0 0.0
    %1837 = vmatpush1.msra.mxu0 0.0
    %1838 = vmatprep.subr.mxu0 0.0
    %1839 = vmatpush1.msra.mxu0 0.0
    %1840 = vmatprep.subr.mxu0 0.0
    %1841 = vmatpush1.msra.mxu0 0.0
    %1842 = vmatprep.subr.mxu0 0.0
    %1843 = vmatpush1.msra.mxu0 0.0
    %1844 = vmatprep.subr.mxu0 0.0
    %1845 = vmatpush1.msra.mxu0 0.0
    %1846 = vmatprep.subr.mxu0 0.0
    %1847 = vmatpush1.msra.mxu0 0.0
    %1848 = vmatprep.subr.mxu0 0.0
    %1849 = vmatpush1.msra.mxu0 0.0
    %1850 = vmatprep.subr.mxu0 0.0
    %1851 = vmatpush1.msra.mxu0 0.0
    %1852 = vmatprep.subr.mxu0 0.0
    %1853 = vmatpush1.msra.mxu0 0.0
    %1854 = vmatprep.subr.mxu0 0.0
    %1855 = vmatpush1.msra.mxu0 0.0
    %1856 = vmatprep.subr.mxu0 0.0
    %1857 = vmatpush1.msra.mxu0 0.0
    %1858 = vmatprep.subr.mxu0 0.0
    %1859 = vmatpush1.msra.mxu0 0.0
    %1860 = vmatprep.subr.mxu0 0.0
    %1861 = vmatpush1.msra.mxu0 0.0
    %1862 = vmatprep.mubr.f32.mxu0 0.0
    %1863 = vmatmul.mubr.f32.gmra.mrb[0].mxu0 %v1796
    %v1864 = vpop.f32.mrb[0].mxu0
    %v1865 = vadd.f32 %v1792, %v1864
    %v1866 = vpop.f32.mrb[0].mxu0
    %1867 = vdwg.mxu0
    %v1869 = vsel %vm1794, %v1773, 0
    %1871 = vmatprep.subr.mxu0 0.0
    %1872 = vmatpush1.msra.mxu0 %v1774
    %1873 = vmatprep.subr.mxu0 0.0
    %1874 = vmatpush1.msra.mxu0 %v1775
    %1875 = vmatprep.subr.mxu0 0.0
    %1876 = vmatpush1.msra.mxu0 0.0
    %1877 = vmatprep.subr.mxu0 0.0
    %1878 = vmatpush1.msra.mxu0 0.0
    %1879 = vmatprep.subr.mxu0 0.0
    %1880 = vmatpush1.msra.mxu0 0.0
    %1881 = vmatprep.subr.mxu0 0.0
    %1882 = vmatpush1.msra.mxu0 0.0
    %1883 = vmatprep.subr.mxu0 0.0
    %1884 = vmatpush1.msra.mxu0 0.0
    %1885 = vmatprep.subr.mxu0 0.0
    %1886 = vmatpush1.msra.mxu0 0.0
    %1887 = vmatprep.subr.mxu0 0.0
    %1888 = vmatpush1.msra.mxu0 0.0
    %1889 = vmatprep.subr.mxu0 0.0
    %1890 = vmatpush1.msra.mxu0 0.0
    %1891 = vmatprep.subr.mxu0 0.0
    %1892 = vmatpush1.msra.mxu0 0.0
    %1893 = vmatprep.subr.mxu0 0.0
    %1894 = vmatpush1.msra.mxu0 0.0
    %1895 = vmatprep.subr.mxu0 0.0
    %1896 = vmatpush1.msra.mxu0 0.0
    %1897 = vmatprep.subr.mxu0 0.0
    %1898 = vmatpush1.msra.mxu0 0.0
    %1899 = vmatprep.subr.mxu0 0.0
    %1900 = vmatpush1.msra.mxu0 0.0
    %1901 = vmatprep.subr.mxu0 0.0
    %1902 = vmatpush1.msra.mxu0 0.0
    %1903 = vmatprep.subr.mxu0 0.0
    %1904 = vmatpush1.msra.mxu0 0.0
    %1905 = vmatprep.subr.mxu0 0.0
    %1906 = vmatpush1.msra.mxu0 0.0
    %1907 = vmatprep.subr.mxu0 0.0
    %1908 = vmatpush1.msra.mxu0 0.0
    %1909 = vmatprep.subr.mxu0 0.0
    %1910 = vmatpush1.msra.mxu0 0.0
    %1911 = vmatprep.subr.mxu0 0.0
    %1912 = vmatpush1.msra.mxu0 0.0
    %1913 = vmatprep.subr.mxu0 0.0
    %1914 = vmatpush1.msra.mxu0 0.0
    %1915 = vmatprep.subr.mxu0 0.0
    %1916 = vmatpush1.msra.mxu0 0.0
    %1917 = vmatprep.subr.mxu0 0.0
    %1918 = vmatpush1.msra.mxu0 0.0
    %1919 = vmatprep.subr.mxu0 0.0
    %1920 = vmatpush1.msra.mxu0 0.0
    %1921 = vmatprep.subr.mxu0 0.0
    %1922 = vmatpush1.msra.mxu0 0.0
    %1923 = vmatprep.subr.mxu0 0.0
    %1924 = vmatpush1.msra.mxu0 0.0
    %1925 = vmatprep.subr.mxu0 0.0
    %1926 = vmatpush1.msra.mxu0 0.0
    %1927 = vmatprep.subr.mxu0 0.0
    %1928 = vmatpush1.msra.mxu0 0.0
    %1929 = vmatprep.subr.mxu0 0.0
    %1930 = vmatpush1.msra.mxu0 0.0
    %1931 = vmatprep.subr.mxu0 0.0
    %1932 = vmatpush1.msra.mxu0 0.0
    %1933 = vmatprep.subr.mxu0 0.0
    %1934 = vmatpush1.msra.mxu0 0.0
    %1935 = vmatprep.mubr.f32.mxu0 0.0
    %1936 = vmatmul.mubr.f32.gmra.mrb[0].mxu0 %v1869
    %v1937 = vpop.f32.mrb[0].mxu0
    %v1938 = vadd.f32 %v1792, %v1937
    %v1939 = vpop.f32.mrb[0].mxu0
    %1940 = vdwg.mxu0
    %v1942 = vlaneseq
    %v1943 = vshrl.u32 %v1942, 7
    %v1944 = vsub.s32 0, %v1943
    %v1945 = vrot.slane %v1783, %v1944
    %1947 = vmatprep.subr.mxu0 0.0
    %1948 = vmatpush1.msra.mxu0 %v1776
    %1949 = vmatprep.subr.mxu0 0.0
    %1950 = vmatpush1.msra.mxu0 %v1777
    %1951 = vmatprep.subr.mxu0 0.0
    %1952 = vmatpush1.msra.mxu0 0.0
    %1953 = vmatprep.subr.mxu0 0.0
    %1954 = vmatpush1.msra.mxu0 0.0
    %1955 = vmatprep.subr.mxu0 0.0
    %1956 = vmatpush1.msra.mxu0 0.0
    %1957 = vmatprep.subr.mxu0 0.0
    %1958 = vmatpush1.msra.mxu0 0.0
    %1959 = vmatprep.subr.mxu0 0.0
    %1960 = vmatpush1.msra.mxu0 0.0
    %1961 = vmatprep.subr.mxu0 0.0
    %1962 = vmatpush1.msra.mxu0 0.0
    %1963 = vmatprep.subr.mxu0 0.0
    %1964 = vmatpush1.msra.mxu0 0.0
    %1965 = vmatprep.subr.mxu0 0.0
    %1966 = vmatpush1.msra.mxu0 0.0
    %1967 = vmatprep.subr.mxu0 0.0
    %1968 = vmatpush1.msra.mxu0 0.0
    %1969 = vmatprep.subr.mxu0 0.0
    %1970 = vmatpush1.msra.mxu0 0.0
    %1971 = vmatprep.subr.mxu0 0.0
    %1972 = vmatpush1.msra.mxu0 0.0
    %1973 = vmatprep.subr.mxu0 0.0
    %1974 = vmatpush1.msra.mxu0 0.0
    %1975 = vmatprep.subr.mxu0 0.0
    %1976 = vmatpush1.msra.mxu0 0.0
    %1977 = vmatprep.subr.mxu0 0.0
    %1978 = vmatpush1.msra.mxu0 0.0
    %1979 = vmatprep.subr.mxu0 0.0
    %1980 = vmatpush1.msra.mxu0 0.0
    %1981 = vmatprep.subr.mxu0 0.0
    %1982 = vmatpush1.msra.mxu0 0.0
    %1983 = vmatprep.subr.mxu0 0.0
    %1984 = vmatpush1.msra.mxu0 0.0
    %1985 = vmatprep.subr.mxu0 0.0
    %1986 = vmatpush1.msra.mxu0 0.0
    %1987 = vmatprep.subr.mxu0 0.0
    %1988 = vmatpush1.msra.mxu0 0.0
    %1989 = vmatprep.subr.mxu0 0.0
    %1990 = vmatpush1.msra.mxu0 0.0
    %1991 = vmatprep.subr.mxu0 0.0
    %1992 = vmatpush1.msra.mxu0 0.0
    %1993 = vmatprep.subr.mxu0 0.0
    %1994 = vmatpush1.msra.mxu0 0.0
    %1995 = vmatprep.subr.mxu0 0.0
    %1996 = vmatpush1.msra.mxu0 0.0
    %1997 = vmatprep.subr.mxu0 0.0
    %1998 = vmatpush1.msra.mxu0 0.0
    %1999 = vmatprep.subr.mxu0 0.0
    %2000 = vmatpush1.msra.mxu0 0.0
    %2001 = vmatprep.subr.mxu0 0.0
    %2002 = vmatpush1.msra.mxu0 0.0
    %2003 = vmatprep.subr.mxu0 0.0
    %2004 = vmatpush1.msra.mxu0 0.0
    %2005 = vmatprep.subr.mxu0 0.0
    %2006 = vmatpush1.msra.mxu0 0.0
    %2007 = vmatprep.subr.mxu0 0.0
    %2008 = vmatpush1.msra.mxu0 0.0
    %2009 = vmatprep.subr.mxu0 0.0
    %2010 = vmatpush1.msra.mxu0 0.0
    %2011 = vmatprep.mubr.f32.mxu0 0.0
    %2012 = vmatmul.mubr.f32.gmra.mrb[0].mxu0 %v1796
    %v2013 = vpop.f32.mrb[0].mxu0
    %v2014 = vadd.f32 %v1945, %v2013
    %v2015 = vpop.f32.mrb[0].mxu0
    %2016 = vdwg.mxu0
    %2017 = vmatprep.subr.mxu0 0.0
    %2018 = vmatpush1.msra.mxu0 %v1776
    %2019 = vmatprep.subr.mxu0 0.0
    %2020 = vmatpush1.msra.mxu0 %v1777
    %2021 = vmatprep.subr.mxu0 0.0
    %2022 = vmatpush1.msra.mxu0 0.0
    %2023 = vmatprep.subr.mxu0 0.0
    %2024 = vmatpush1.msra.mxu0 0.0
    %2025 = vmatprep.subr.mxu0 0.0
    %2026 = vmatpush1.msra.mxu0 0.0
    %2027 = vmatprep.subr.mxu0 0.0
    %2028 = vmatpush1.msra.mxu0 0.0
    %2029 = vmatprep.subr.mxu0 0.0
    %2030 = vmatpush1.msra.mxu0 0.0
    %2031 = vmatprep.subr.mxu0 0.0
    %2032 = vmatpush1.msra.mxu0 0.0
    %2033 = vmatprep.subr.mxu0 0.0
    %2034 = vmatpush1.msra.mxu0 0.0
    %2035 = vmatprep.subr.mxu0 0.0
    %2036 = vmatpush1.msra.mxu0 0.0
    %2037 = vmatprep.subr.mxu0 0.0
    %2038 = vmatpush1.msra.mxu0 0.0
    %2039 = vmatprep.subr.mxu0 0.0
    %2040 = vmatpush1.msra.mxu0 0.0
    %2041 = vmatprep.subr.mxu0 0.0
    %2042 = vmatpush1.msra.mxu0 0.0
    %2043 = vmatprep.subr.mxu0 0.0
    %2044 = vmatpush1.msra.mxu0 0.0
    %2045 = vmatprep.subr.mxu0 0.0
    %2046 = vmatpush1.msra.mxu0 0.0
    %2047 = vmatprep.subr.mxu0 0.0
    %2048 = vmatpush1.msra.mxu0 0.0
    %2049 = vmatprep.subr.mxu0 0.0
    %2050 = vmatpush1.msra.mxu0 0.0
    %2051 = vmatprep.subr.mxu0 0.0
    %2052 = vmatpush1.msra.mxu0 0.0
    %2053 = vmatprep.subr.mxu0 0.0
    %2054 = vmatpush1.msra.mxu0 0.0
    %2055 = vmatprep.subr.mxu0 0.0
    %2056 = vmatpush1.msra.mxu0 0.0
    %2057 = vmatprep.subr.mxu0 0.0
    %2058 = vmatpush1.msra.mxu0 0.0
    %2059 = vmatprep.subr.mxu0 0.0
    %2060 = vmatpush1.msra.mxu0 0.0
    %2061 = vmatprep.subr.mxu0 0.0
    %2062 = vmatpush1.msra.mxu0 0.0
    %2063 = vmatprep.subr.mxu0 0.0
    %2064 = vmatpush1.msra.mxu0 0.0
    %2065 = vmatprep.subr.mxu0 0.0
    %2066 = vmatpush1.msra.mxu0 0.0
    %2067 = vmatprep.subr.mxu0 0.0
    %2068 = vmatpush1.msra.mxu0 0.0
    %2069 = vmatprep.subr.mxu0 0.0
    %2070 = vmatpush1.msra.mxu0 0.0
    %2071 = vmatprep.subr.mxu0 0.0
    %2072 = vmatpush1.msra.mxu0 0.0
    %2073 = vmatprep.subr.mxu0 0.0
    %2074 = vmatpush1.msra.mxu0 0.0
    %2075 = vmatprep.subr.mxu0 0.0
    %2076 = vmatpush1.msra.mxu0 0.0
    %2077 = vmatprep.subr.mxu0 0.0
    %2078 = vmatpush1.msra.mxu0 0.0
    %2079 = vmatprep.subr.mxu0 0.0
    %2080 = vmatpush1.msra.mxu0 0.0
    %2081 = vmatprep.mubr.f32.mxu0 0.0
    %2082 = vmatmul.mubr.f32.gmra.mrb[0].mxu0 %v1869
    %v2083 = vpop.f32.mrb[0].mxu0
    %v2084 = vadd.f32 %v1945, %v2083
    %v2085 = vpop.f32.mrb[0].mxu0
    %2086 = vdwg.mxu0
    %v2088 = vlaneseq
    %v2089 = vshrl.u32 %v2088, 7
    %v2090 = vsub.s32 0, %v2089
    %v2091 = vrot.slane %v1784, %v2090
    %2093 = vmatprep.subr.mxu0 0.0
    %2094 = vmatpush1.msra.mxu0 %v1778
    %2095 = vmatprep.subr.mxu0 0.0
    %2096 = vmatpush1.msra.mxu0 %v1779
    %2097 = vmatprep.subr.mxu0 0.0
    %2098 = vmatpush1.msra.mxu0 0.0
    %2099 = vmatprep.subr.mxu0 0.0
    %2100 = vmatpush1.msra.mxu0 0.0
    %2101 = vmatprep.subr.mxu0 0.0
    %2102 = vmatpush1.msra.mxu0 0.0
    %2103 = vmatprep.subr.mxu0 0.0
    %2104 = vmatpush1.msra.mxu0 0.0
    %2105 = vmatprep.subr.mxu0 0.0
    %2106 = vmatpush1.msra.mxu0 0.0
    %2107 = vmatprep.subr.mxu0 0.0
    %2108 = vmatpush1.msra.mxu0 0.0
    %2109 = vmatprep.subr.mxu0 0.0
    %2110 = vmatpush1.msra.mxu0 0.0
    %2111 = vmatprep.subr.mxu0 0.0
    %2112 = vmatpush1.msra.mxu0 0.0
    %2113 = vmatprep.subr.mxu0 0.0
    %2114 = vmatpush1.msra.mxu0 0.0
    %2115 = vmatprep.subr.mxu0 0.0
    %2116 = vmatpush1.msra.mxu0 0.0
    %2117 = vmatprep.subr.mxu0 0.0
    %2118 = vmatpush1.msra.mxu0 0.0
    %2119 = vmatprep.subr.mxu0 0.0
    %2120 = vmatpush1.msra.mxu0 0.0
    %2121 = vmatprep.subr.mxu0 0.0
    %2122 = vmatpush1.msra.mxu0 0.0
    %2123 = vmatprep.subr.mxu0 0.0
    %2124 = vmatpush1.msra.mxu0 0.0
    %2125 = vmatprep.subr.mxu0 0.0
    %2126 = vmatpush1.msra.mxu0 0.0
    %2127 = vmatprep.subr.mxu0 0.0
    %2128 = vmatpush1.msra.mxu0 0.0
    %2129 = vmatprep.subr.mxu0 0.0
    %2130 = vmatpush1.msra.mxu0 0.0
    %2131 = vmatprep.subr.mxu0 0.0
    %2132 = vmatpush1.msra.mxu0 0.0
    %2133 = vmatprep.subr.mxu0 0.0
    %2134 = vmatpush1.msra.mxu0 0.0
    %2135 = vmatprep.subr.mxu0 0.0
    %2136 = vmatpush1.msra.mxu0 0.0
    %2137 = vmatprep.subr.mxu0 0.0
    %2138 = vmatpush1.msra.mxu0 0.0
    %2139 = vmatprep.subr.mxu0 0.0
    %2140 = vmatpush1.msra.mxu0 0.0
    %2141 = vmatprep.subr.mxu0 0.0
    %2142 = vmatpush1.msra.mxu0 0.0
    %2143 = vmatprep.subr.mxu0 0.0
    %2144 = vmatpush1.msra.mxu0 0.0
    %2145 = vmatprep.subr.mxu0 0.0
    %2146 = vmatpush1.msra.mxu0 0.0
    %2147 = vmatprep.subr.mxu0 0.0
    %2148 = vmatpush1.msra.mxu0 0.0
    %2149 = vmatprep.subr.mxu0 0.0
    %2150 = vmatpush1.msra.mxu0 0.0
    %2151 = vmatprep.subr.mxu0 0.0
    %2152 = vmatpush1.msra.mxu0 0.0
    %2153 = vmatprep.subr.mxu0 0.0
    %2154 = vmatpush1.msra.mxu0 0.0
    %2155 = vmatprep.subr.mxu0 0.0
    %2156 = vmatpush1.msra.mxu0 0.0
    %2157 = vmatprep.mubr.f32.mxu0 0.0
    %2158 = vmatmul.mubr.f32.gmra.mrb[0].mxu0 %v1796
    %v2159 = vpop.f32.mrb[0].mxu0
    %v2160 = vadd.f32 %v2091, %v2159
    %v2161 = vpop.f32.mrb[0].mxu0
    %2162 = vdwg.mxu0
    %2163 = vmatprep.subr.mxu0 0.0
    %2164 = vmatpush1.msra.mxu0 %v1778
    %2165 = vmatprep.subr.mxu0 0.0
    %2166 = vmatpush1.msra.mxu0 %v1779
    %2167 = vmatprep.subr.mxu0 0.0
    %2168 = vmatpush1.msra.mxu0 0.0
    %2169 = vmatprep.subr.mxu0 0.0
    %2170 = vmatpush1.msra.mxu0 0.0
    %2171 = vmatprep.subr.mxu0 0.0
    %2172 = vmatpush1.msra.mxu0 0.0
    %2173 = vmatprep.subr.mxu0 0.0
    %2174 = vmatpush1.msra.mxu0 0.0
    %2175 = vmatprep.subr.mxu0 0.0
    %2176 = vmatpush1.msra.mxu0 0.0
    %2177 = vmatprep.subr.mxu0 0.0
    %2178 = vmatpush1.msra.mxu0 0.0
    %2179 = vmatprep.subr.mxu0 0.0
    %2180 = vmatpush1.msra.mxu0 0.0
    %2181 = vmatprep.subr.mxu0 0.0
    %2182 = vmatpush1.msra.mxu0 0.0
    %2183 = vmatprep.subr.mxu0 0.0
    %2184 = vmatpush1.msra.mxu0 0.0
    %2185 = vmatprep.subr.mxu0 0.0
    %2186 = vmatpush1.msra.mxu0 0.0
    %2187 = vmatprep.subr.mxu0 0.0
    %2188 = vmatpush1.msra.mxu0 0.0
    %2189 = vmatprep.subr.mxu0 0.0
    %2190 = vmatpush1.msra.mxu0 0.0
    %2191 = vmatprep.subr.mxu0 0.0
    %2192 = vmatpush1.msra.mxu0 0.0
    %2193 = vmatprep.subr.mxu0 0.0
    %2194 = vmatpush1.msra.mxu0 0.0
    %2195 = vmatprep.subr.mxu0 0.0
    %2196 = vmatpush1.msra.mxu0 0.0
    %2197 = vmatprep.subr.mxu0 0.0
    %2198 = vmatpush1.msra.mxu0 0.0
    %2199 = vmatprep.subr.mxu0 0.0
    %2200 = vmatpush1.msra.mxu0 0.0
    %2201 = vmatprep.subr.mxu0 0.0
    %2202 = vmatpush1.msra.mxu0 0.0
    %2203 = vmatprep.subr.mxu0 0.0
    %2204 = vmatpush1.msra.mxu0 0.0
    %2205 = vmatprep.subr.mxu0 0.0
    %2206 = vmatpush1.msra.mxu0 0.0
    %2207 = vmatprep.subr.mxu0 0.0
    %2208 = vmatpush1.msra.mxu0 0.0
    %2209 = vmatprep.subr.mxu0 0.0
    %2210 = vmatpush1.msra.mxu0 0.0
    %2211 = vmatprep.subr.mxu0 0.0
    %2212 = vmatpush1.msra.mxu0 0.0
    %2213 = vmatprep.subr.mxu0 0.0
    %2214 = vmatpush1.msra.mxu0 0.0
    %2215 = vmatprep.subr.mxu0 0.0
    %2216 = vmatpush1.msra.mxu0 0.0
    %2217 = vmatprep.subr.mxu0 0.0
    %2218 = vmatpush1.msra.mxu0 0.0
    %2219 = vmatprep.subr.mxu0 0.0
    %2220 = vmatpush1.msra.mxu0 0.0
    %2221 = vmatprep.subr.mxu0 0.0
    %2222 = vmatpush1.msra.mxu0 0.0
    %2223 = vmatprep.subr.mxu0 0.0
    %2224 = vmatpush1.msra.mxu0 0.0
    %2225 = vmatprep.subr.mxu0 0.0
    %2226 = vmatpush1.msra.mxu0 0.0
    %2227 = vmatprep.mubr.f32.mxu0 0.0
    %2228 = vmatmul.mubr.f32.gmra.mrb[0].mxu0 %v1869
    %v2229 = vpop.f32.mrb[0].mxu0
    %v2230 = vadd.f32 %v2091, %v2229
    %v2231 = vpop.f32.mrb[0].mxu0
    %2232 = vdwg.mxu0
    %v2233 = vmul.f32 %v1865, %v2014
    %v2235 = vsel %vm1794, %v2233, 0
    %2237 = vmatprep.subr.mxu0 0.0
    %2238 = vmatpush1.msra.mxu0 %v1786
    %2239 = vmatprep.subr.mxu0 0.0
    %2240 = vmatpush1.msra.mxu0 %v1787
    %2241 = vmatprep.subr.mxu0 0.0
    %2242 = vmatpush1.msra.mxu0 0.0
    %2243 = vmatprep.subr.mxu0 0.0
    %2244 = vmatpush1.msra.mxu0 0.0
    %2245 = vmatprep.subr.mxu0 0.0
    %2246 = vmatpush1.msra.mxu0 0.0
    %2247 = vmatprep.subr.mxu0 0.0
    %2248 = vmatpush1.msra.mxu0 0.0
    %2249 = vmatprep.subr.mxu0 0.0
    %2250 = vmatpush1.msra.mxu0 0.0
    %2251 = vmatprep.subr.mxu0 0.0
    %2252 = vmatpush1.msra.mxu0 0.0
    %2253 = vmatprep.subr.mxu0 0.0
    %2254 = vmatpush1.msra.mxu0 0.0
    %2255 = vmatprep.subr.mxu0 0.0
    %2256 = vmatpush1.msra.mxu0 0.0
    %2257 = vmatprep.subr.mxu0 0.0
    %2258 = vmatpush1.msra.mxu0 0.0
    %2259 = vmatprep.subr.mxu0 0.0
    %2260 = vmatpush1.msra.mxu0 0.0
    %2261 = vmatprep.subr.mxu0 0.0
    %2262 = vmatpush1.msra.mxu0 0.0
    %2263 = vmatprep.subr.mxu0 0.0
    %2264 = vmatpush1.msra.mxu0 0.0
    %2265 = vmatprep.subr.mxu0 0.0
    %2266 = vmatpush1.msra.mxu0 0.0
    %2267 = vmatprep.subr.mxu0 0.0
    %2268 = vmatpush1.msra.mxu0 0.0
    %2269 = vmatprep.subr.mxu0 0.0
    %2270 = vmatpush1.msra.mxu0 0.0
    %2271 = vmatprep.subr.mxu0 0.0
    %2272 = vmatpush1.msra.mxu0 0.0
    %2273 = vmatprep.subr.mxu0 0.0
    %2274 = vmatpush1.msra.mxu0 0.0
    %2275 = vmatprep.subr.mxu0 0.0
    %2276 = vmatpush1.msra.mxu0 0.0
    %2277 = vmatprep.subr.mxu0 0.0
    %2278 = vmatpush1.msra.mxu0 0.0
    %2279 = vmatprep.subr.mxu0 0.0
    %2280 = vmatpush1.msra.mxu0 0.0
    %2281 = vmatprep.subr.mxu0 0.0
    %2282 = vmatpush1.msra.mxu0 0.0
    %2283 = vmatprep.subr.mxu0 0.0
    %2284 = vmatpush1.msra.mxu0 0.0
    %2285 = vmatprep.subr.mxu0 0.0
    %2286 = vmatpush1.msra.mxu0 0.0
    %2287 = vmatprep.subr.mxu0 0.0
    %2288 = vmatpush1.msra.mxu0 0.0
    %2289 = vmatprep.subr.mxu0 0.0
    %2290 = vmatpush1.msra.mxu0 0.0
    %2291 = vmatprep.subr.mxu0 0.0
    %2292 = vmatpush1.msra.mxu0 0.0
    %2293 = vmatprep.subr.mxu0 0.0
    %2294 = vmatpush1.msra.mxu0 0.0
    %2295 = vmatprep.subr.mxu0 0.0
    %2296 = vmatpush1.msra.mxu0 0.0
    %2297 = vmatprep.subr.mxu0 0.0
    %2298 = vmatpush1.msra.mxu0 0.0
    %2299 = vmatprep.subr.mxu0 0.0
    %2300 = vmatpush1.msra.mxu0 0.0
    %2301 = vmatprep.mubr.f32.mxu0 0.0
    %2302 = vmatmul.mubr.f32.gmra.mrb[0].mxu0 %v2235
    %v2303 = vpop.f32.mrb[0].mxu0
    %v2304 = vadd.f32 0.0, %v2303
    %v2305 = vpop.f32.mrb[0].mxu0
    %2306 = vdwg.mxu0
    %v2307 = vmul.f32 %v1865, %v2084
    %v2309 = vsel %vm1794, %v2307, 0
    %2311 = vmatprep.subr.mxu0 0.0
    %2312 = vmatpush1.msra.mxu0 %v1786
    %2313 = vmatprep.subr.mxu0 0.0
    %2314 = vmatpush1.msra.mxu0 %v1787
    %2315 = vmatprep.subr.mxu0 0.0
    %2316 = vmatpush1.msra.mxu0 0.0
    %2317 = vmatprep.subr.mxu0 0.0
    %2318 = vmatpush1.msra.mxu0 0.0
    %2319 = vmatprep.subr.mxu0 0.0
    %2320 = vmatpush1.msra.mxu0 0.0
    %2321 = vmatprep.subr.mxu0 0.0
    %2322 = vmatpush1.msra.mxu0 0.0
    %2323 = vmatprep.subr.mxu0 0.0
    %2324 = vmatpush1.msra.mxu0 0.0
    %2325 = vmatprep.subr.mxu0 0.0
    %2326 = vmatpush1.msra.mxu0 0.0
    %2327 = vmatprep.subr.mxu0 0.0
    %2328 = vmatpush1.msra.mxu0 0.0
    %2329 = vmatprep.subr.mxu0 0.0
    %2330 = vmatpush1.msra.mxu0 0.0
    %2331 = vmatprep.subr.mxu0 0.0
    %2332 = vmatpush1.msra.mxu0 0.0
    %2333 = vmatprep.subr.mxu0 0.0
    %2334 = vmatpush1.msra.mxu0 0.0
    %2335 = vmatprep.subr.mxu0 0.0
    %2336 = vmatpush1.msra.mxu0 0.0
    %2337 = vmatprep.subr.mxu0 0.0
    %2338 = vmatpush1.msra.mxu0 0.0
    %2339 = vmatprep.subr.mxu0 0.0
    %2340 = vmatpush1.msra.mxu0 0.0
    %2341 = vmatprep.subr.mxu0 0.0
    %2342 = vmatpush1.msra.mxu0 0.0
    %2343 = vmatprep.subr.mxu0 0.0
    %2344 = vmatpush1.msra.mxu0 0.0
    %2345 = vmatprep.subr.mxu0 0.0
    %2346 = vmatpush1.msra.mxu0 0.0
    %2347 = vmatprep.subr.mxu0 0.0
    %2348 = vmatpush1.msra.mxu0 0.0
    %2349 = vmatprep.subr.mxu0 0.0
    %2350 = vmatpush1.msra.mxu0 0.0
    %2351 = vmatprep.subr.mxu0 0.0
    %2352 = vmatpush1.msra.mxu0 0.0
    %2353 = vmatprep.subr.mxu0 0.0
    %2354 = vmatpush1.msra.mxu0 0.0
    %2355 = vmatprep.subr.mxu0 0.0
    %2356 = vmatpush1.msra.mxu0 0.0
    %2357 = vmatprep.subr.mxu0 0.0
    %2358 = vmatpush1.msra.mxu0 0.0
    %2359 = vmatprep.subr.mxu0 0.0
    %2360 = vmatpush1.msra.mxu0 0.0
    %2361 = vmatprep.subr.mxu0 0.0
    %2362 = vmatpush1.msra.mxu0 0.0
    %2363 = vmatprep.subr.mxu0 0.0
    %2364 = vmatpush1.msra.mxu0 0.0
    %2365 = vmatprep.subr.mxu0 0.0
    %2366 = vmatpush1.msra.mxu0 0.0
    %2367 = vmatprep.subr.mxu0 0.0
    %2368 = vmatpush1.msra.mxu0 0.0
    %2369 = vmatprep.subr.mxu0 0.0
    %2370 = vmatpush1.msra.mxu0 0.0
    %2371 = vmatprep.subr.mxu0 0.0
    %2372 = vmatpush1.msra.mxu0 0.0
    %2373 = vmatprep.subr.mxu0 0.0
    %2374 = vmatpush1.msra.mxu0 0.0
    %2375 = vmatprep.mubr.f32.mxu0 0.0
    %2376 = vmatmul.mubr.f32.gmra.mrb[0].mxu0 %v2309
    %v2377 = vpop.f32.mrb[0].mxu0
    %v2378 = vadd.f32 0.0, %v2377
    %v2379 = vpop.f32.mrb[0].mxu0
    %2380 = vdwg.mxu0
    %v2381 = vmul.f32 %v1938, %v2014
    %v2383 = vsel %vm1794, %v2381, 0
    %2385 = vmatprep.subr.mxu0 0.0
    %2386 = vmatpush1.msra.mxu0 %v1786
    %2387 = vmatprep.subr.mxu0 0.0
    %2388 = vmatpush1.msra.mxu0 %v1787
    %2389 = vmatprep.subr.mxu0 0.0
    %2390 = vmatpush1.msra.mxu0 0.0
    %2391 = vmatprep.subr.mxu0 0.0
    %2392 = vmatpush1.msra.mxu0 0.0
    %2393 = vmatprep.subr.mxu0 0.0
    %2394 = vmatpush1.msra.mxu0 0.0
    %2395 = vmatprep.subr.mxu0 0.0
    %2396 = vmatpush1.msra.mxu0 0.0
    %2397 = vmatprep.subr.mxu0 0.0
    %2398 = vmatpush1.msra.mxu0 0.0
    %2399 = vmatprep.subr.mxu0 0.0
    %2400 = vmatpush1.msra.mxu0 0.0
    %2401 = vmatprep.subr.mxu0 0.0
    %2402 = vmatpush1.msra.mxu0 0.0
    %2403 = vmatprep.subr.mxu0 0.0
    %2404 = vmatpush1.msra.mxu0 0.0
    %2405 = vmatprep.subr.mxu0 0.0
    %2406 = vmatpush1.msra.mxu0 0.0
    %2407 = vmatprep.subr.mxu0 0.0
    %2408 = vmatpush1.msra.mxu0 0.0
    %2409 = vmatprep.subr.mxu0 0.0
    %2410 = vmatpush1.msra.mxu0 0.0
    %2411 = vmatprep.subr.mxu0 0.0
    %2412 = vmatpush1.msra.mxu0 0.0
    %2413 = vmatprep.subr.mxu0 0.0
    %2414 = vmatpush1.msra.mxu0 0.0
    %2415 = vmatprep.subr.mxu0 0.0
    %2416 = vmatpush1.msra.mxu0 0.0
    %2417 = vmatprep.subr.mxu0 0.0
    %2418 = vmatpush1.msra.mxu0 0.0
    %2419 = vmatprep.subr.mxu0 0.0
    %2420 = vmatpush1.msra.mxu0 0.0
    %2421 = vmatprep.subr.mxu0 0.0
    %2422 = vmatpush1.msra.mxu0 0.0
    %2423 = vmatprep.subr.mxu0 0.0
    %2424 = vmatpush1.msra.mxu0 0.0
    %2425 = vmatprep.subr.mxu0 0.0
    %2426 = vmatpush1.msra.mxu0 0.0
    %2427 = vmatprep.subr.mxu0 0.0
    %2428 = vmatpush1.msra.mxu0 0.0
    %2429 = vmatprep.subr.mxu0 0.0
    %2430 = vmatpush1.msra.mxu0 0.0
    %2431 = vmatprep.subr.mxu0 0.0
    %2432 = vmatpush1.msra.mxu0 0.0
    %2433 = vmatprep.subr.mxu0 0.0
    %2434 = vmatpush1.msra.mxu0 0.0
    %2435 = vmatprep.subr.mxu0 0.0
    %2436 = vmatpush1.msra.mxu0 0.0
    %2437 = vmatprep.subr.mxu0 0.0
    %2438 = vmatpush1.msra.mxu0 0.0
    %2439 = vmatprep.subr.mxu0 0.0
    %2440 = vmatpush1.msra.mxu0 0.0
    %2441 = vmatprep.subr.mxu0 0.0
    %2442 = vmatpush1.msra.mxu0 0.0
    %2443 = vmatprep.subr.mxu0 0.0
    %2444 = vmatpush1.msra.mxu0 0.0
    %2445 = vmatprep.subr.mxu0 0.0
    %2446 = vmatpush1.msra.mxu0 0.0
    %2447 = vmatprep.subr.mxu0 0.0
    %2448 = vmatpush1.msra.mxu0 0.0
    %2449 = vmatprep.mubr.f32.mxu0 0.0
    %2450 = vmatmul.mubr.f32.gmra.mrb[0].mxu0 %v2383
    %v2451 = vpop.f32.mrb[0].mxu0
    %v2452 = vadd.f32 0.0, %v2451
    %v2453 = vpop.f32.mrb[0].mxu0
    %2454 = vdwg.mxu0
    %v2455 = vmul.f32 %v1938, %v2084
    %v2457 = vsel %vm1794, %v2455, 0
    %2459 = vmatprep.subr.mxu0 0.0
    %2460 = vmatpush1.msra.mxu0 %v1786
    %2461 = vmatprep.subr.mxu0 0.0
    %2462 = vmatpush1.msra.mxu0 %v1787
    %2463 = vmatprep.subr.mxu0 0.0
    %2464 = vmatpush1.msra.mxu0 0.0
    %2465 = vmatprep.subr.mxu0 0.0
    %2466 = vmatpush1.msra.mxu0 0.0
    %2467 = vmatprep.subr.mxu0 0.0
    %2468 = vmatpush1.msra.mxu0 0.0
    %2469 = vmatprep.subr.mxu0 0.0
    %2470 = vmatpush1.msra.mxu0 0.0
    %2471 = vmatprep.subr.mxu0 0.0
    %2472 = vmatpush1.msra.mxu0 0.0
    %2473 = vmatprep.subr.mxu0 0.0
    %2474 = vmatpush1.msra.mxu0 0.0
    %2475 = vmatprep.subr.mxu0 0.0
    %2476 = vmatpush1.msra.mxu0 0.0
    %2477 = vmatprep.subr.mxu0 0.0
    %2478 = vmatpush1.msra.mxu0 0.0
    %2479 = vmatprep.subr.mxu0 0.0
    %2480 = vmatpush1.msra.mxu0 0.0
    %2481 = vmatprep.subr.mxu0 0.0
    %2482 = vmatpush1.msra.mxu0 0.0
    %2483 = vmatprep.subr.mxu0 0.0
    %2484 = vmatpush1.msra.mxu0 0.0
    %2485 = vmatprep.subr.mxu0 0.0
    %2486 = vmatpush1.msra.mxu0 0.0
    %2487 = vmatprep.subr.mxu0 0.0
    %2488 = vmatpush1.msra.mxu0 0.0
    %2489 = vmatprep.subr.mxu0 0.0
    %2490 = vmatpush1.msra.mxu0 0.0
    %2491 = vmatprep.subr.mxu0 0.0
    %2492 = vmatpush1.msra.mxu0 0.0
    %2493 = vmatprep.subr.mxu0 0.0
    %2494 = vmatpush1.msra.mxu0 0.0
    %2495 = vmatprep.subr.mxu0 0.0
    %2496 = vmatpush1.msra.mxu0 0.0
    %2497 = vmatprep.subr.mxu0 0.0
    %2498 = vmatpush1.msra.mxu0 0.0
    %2499 = vmatprep.subr.mxu0 0.0
    %2500 = vmatpush1.msra.mxu0 0.0
    %2501 = vmatprep.subr.mxu0 0.0
    %2502 = vmatpush1.msra.mxu0 0.0
    %2503 = vmatprep.subr.mxu0 0.0
    %2504 = vmatpush1.msra.mxu0 0.0
    %2505 = vmatprep.subr.mxu0 0.0
    %2506 = vmatpush1.msra.mxu0 0.0
    %2507 = vmatprep.subr.mxu0 0.0
    %2508 = vmatpush1.msra.mxu0 0.0
    %2509 = vmatprep.subr.mxu0 0.0
    %2510 = vmatpush1.msra.mxu0 0.0
    %2511 = vmatprep.subr.mxu0 0.0
    %2512 = vmatpush1.msra.mxu0 0.0
    %2513 = vmatprep.subr.mxu0 0.0
    %2514 = vmatpush1.msra.mxu0 0.0
    %2515 = vmatprep.subr.mxu0 0.0
    %2516 = vmatpush1.msra.mxu0 0.0
    %2517 = vmatprep.subr.mxu0 0.0
    %2518 = vmatpush1.msra.mxu0 0.0
    %2519 = vmatprep.subr.mxu0 0.0
    %2520 = vmatpush1.msra.mxu0 0.0
    %2521 = vmatprep.subr.mxu0 0.0
    %2522 = vmatpush1.msra.mxu0 0.0
    %2523 = vmatprep.mubr.f32.mxu0 0.0
    %2524 = vmatmul.mubr.f32.gmra.mrb[0].mxu0 %v2457
    %v2525 = vpop.f32.mrb[0].mxu0
    %v2526 = vadd.f32 0.0, %v2525
    %v2527 = vpop.f32.mrb[0].mxu0
    %2528 = vdwg.mxu0
    %v2529 = vmax.f32 %v2304, %v2378
    %v2530 = vsub.f32 %v2304, %v2529
    %v2531 = vmul.f32 %v2530, 1.442695
    %v2532 = vpow.pop %v2531
    %v2533 = vsub.f32 %v2378, %v2529
    %v2534 = vmul.f32 %v2533, 1.442695
    %v2535 = vpow.pop %v2534
    %v2536 = vadd.f32 %v2532, %v2535
    %v2537 = vrcp.pop %v2536
    %v2538 = vmul.f32 1.0, %v2537
    %v2539 = vmax.f32 %v2452, %v2526
    %v2540 = vsub.f32 %v2452, %v2539
    %v2541 = vmul.f32 %v2540, 1.442695
    %v2542 = vpow.pop %v2541
    %v2543 = vsub.f32 %v2526, %v2539
    %v2544 = vmul.f32 %v2543, 1.442695
    %v2545 = vpow.pop %v2544
    %v2546 = vadd.f32 %v2542, %v2545
    %v2547 = vrcp.pop %v2546
    %v2548 = vmul.f32 1.0, %v2547
    %v2549 = vmul.f32 %v2532, %v2538
    %v2550 = vmul.f32 %v2549, %v2160
    %v2551 = vmul.f32 %v2535, %v2538
    %v2552 = vmul.f32 %v2551, %v2230
    %v2553 = vadd.f32 %v2550, %v2552
    %v2554 = vmul.f32 %v2542, %v2548
    %v2555 = vmul.f32 %v2554, %v2160
    %v2556 = vmul.f32 %v2545, %v2548
    %v2557 = vmul.f32 %v2556, %v2230
    %v2558 = vadd.f32 %v2555, %v2557
    %v2560 = vlaneseq
    %v2561 = vshrl.u32 %v2560, 7
    %v2562 = vsub.s32 0, %v2561
    %v2563 = vrot.slane %v1785, %v2562
    %v2566 = vsel %vm1794, %v2553, 0
    %2568 = vmatprep.subr.mxu0 0.0
    %2569 = vmatpush1.msra.mxu0 %v1780
    %2570 = vmatprep.subr.mxu0 0.0
    %2571 = vmatpush1.msra.mxu0 %v1781
    %2572 = vmatprep.subr.mxu0 0.0
    %2573 = vmatpush1.msra.mxu0 0.0
    %2574 = vmatprep.subr.mxu0 0.0
    %2575 = vmatpush1.msra.mxu0 0.0
    %2576 = vmatprep.subr.mxu0 0.0
    %2577 = vmatpush1.msra.mxu0 0.0
    %2578 = vmatprep.subr.mxu0 0.0
    %2579 = vmatpush1.msra.mxu0 0.0
    %2580 = vmatprep.subr.mxu0 0.0
    %2581 = vmatpush1.msra.mxu0 0.0
    %2582 = vmatprep.subr.mxu0 0.0
    %2583 = vmatpush1.msra.mxu0 0.0
    %2584 = vmatprep.subr.mxu0 0.0
    %2585 = vmatpush1.msra.mxu0 0.0
    %2586 = vmatprep.subr.mxu0 0.0
    %2587 = vmatpush1.msra.mxu0 0.0
    %2588 = vmatprep.subr.mxu0 0.0
    %2589 = vmatpush1.msra.mxu0 0.0
    %2590 = vmatprep.subr.mxu0 0.0
    %2591 = vmatpush1.msra.mxu0 0.0
    %2592 = vmatprep.subr.mxu0 0.0
    %2593 = vmatpush1.msra.mxu0 0.0
    %2594 = vmatprep.subr.mxu0 0.0
    %2595 = vmatpush1.msra.mxu0 0.0
    %2596 = vmatprep.subr.mxu0 0.0
    %2597 = vmatpush1.msra.mxu0 0.0
    %2598 = vmatprep.subr.mxu0 0.0
    %2599 = vmatpush1.msra.mxu0 0.0
    %2600 = vmatprep.subr.mxu0 0.0
    %2601 = vmatpush1.msra.mxu0 0.0
    %2602 = vmatprep.subr.mxu0 0.0
    %2603 = vmatpush1.msra.mxu0 0.0
    %2604 = vmatprep.subr.mxu0 0.0
    %2605 = vmatpush1.msra.mxu0 0.0
    %2606 = vmatprep.subr.mxu0 0.0
    %2607 = vmatpush1.msra.mxu0 0.0
    %2608 = vmatprep.subr.mxu0 0.0
    %2609 = vmatpush1.msra.mxu0 0.0
    %2610 = vmatprep.subr.mxu0 0.0
    %2611 = vmatpush1.msra.mxu0 0.0
    %2612 = vmatprep.subr.mxu0 0.0
    %2613 = vmatpush1.msra.mxu0 0.0
    %2614 = vmatprep.subr.mxu0 0.0
    %2615 = vmatpush1.msra.mxu0 0.0
    %2616 = vmatprep.subr.mxu0 0.0
    %2617 = vmatpush1.msra.mxu0 0.0
    %2618 = vmatprep.subr.mxu0 0.0
    %2619 = vmatpush1.msra.mxu0 0.0
    %2620 = vmatprep.subr.mxu0 0.0
    %2621 = vmatpush1.msra.mxu0 0.0
    %2622 = vmatprep.subr.mxu0 0.0
    %2623 = vmatpush1.msra.mxu0 0.0
    %2624 = vmatprep.subr.mxu0 0.0
    %2625 = vmatpush1.msra.mxu0 0.0
    %2626 = vmatprep.subr.mxu0 0.0
    %2627 = vmatpush1.msra.mxu0 0.0
    %2628 = vmatprep.subr.mxu0 0.0
    %2629 = vmatpush1.msra.mxu0 0.0
    %2630 = vmatprep.subr.mxu0 0.0
    %2631 = vmatpush1.msra.mxu0 0.0
    %2632 = vmatprep.mubr.f32.mxu0 0.0
    %2633 = vmatmul.mubr.f32.gmra.mrb[0].mxu0 %v2566
    %v2634 = vpop.f32.mrb[0].mxu0
    %v2635 = vadd.f32 %v2563, %v2634
    %v2636 = vpop.f32.mrb[0].mxu0
    %2637 = vdwg.mxu0
    %v2639 = vsel %vm1794, %v2558, 0
    %2641 = vmatprep.subr.mxu0 0.0
    %2642 = vmatpush1.msra.mxu0 %v1780
    %2643 = vmatprep.subr.mxu0 0.0
    %2644 = vmatpush1.msra.mxu0 %v1781
    %2645 = vmatprep.subr.mxu0 0.0
    %2646 = vmatpush1.msra.mxu0 0.0
    %2647 = vmatprep.subr.mxu0 0.0
    %2648 = vmatpush1.msra.mxu0 0.0
    %2649 = vmatprep.subr.mxu0 0.0
    %2650 = vmatpush1.msra.mxu0 0.0
    %2651 = vmatprep.subr.mxu0 0.0
    %2652 = vmatpush1.msra.mxu0 0.0
    %2653 = vmatprep.subr.mxu0 0.0
    %2654 = vmatpush1.msra.mxu0 0.0
    %2655 = vmatprep.subr.mxu0 0.0
    %2656 = vmatpush1.msra.mxu0 0.0
    %2657 = vmatprep.subr.mxu0 0.0
    %2658 = vmatpush1.msra.mxu0 0.0
    %2659 = vmatprep.subr.mxu0 0.0
    %2660 = vmatpush1.msra.mxu0 0.0
    %2661 = vmatprep.subr.mxu0 0.0
    %2662 = vmatpush1.msra.mxu0 0.0
    %2663 = vmatprep.subr.mxu0 0.0
    %2664 = vmatpush1.msra.mxu0 0.0
    %2665 = vmatprep.subr.mxu0 0.0
    %2666 = vmatpush1.msra.mxu0 0.0
    %2667 = vmatprep.subr.mxu0 0.0
    %2668 = vmatpush1.msra.mxu0 0.0
    %2669 = vmatprep.subr.mxu0 0.0
    %2670 = vmatpush1.msra.mxu0 0.0
    %2671 = vmatprep.subr.mxu0 0.0
    %2672 = vmatpush1.msra.mxu0 0.0
    %2673 = vmatprep.subr.mxu0 0.0
    %2674 = vmatpush1.msra.mxu0 0.0
    %2675 = vmatprep.subr.mxu0 0.0
    %2676 = vmatpush1.msra.mxu0 0.0
    %2677 = vmatprep.subr.mxu0 0.0
    %2678 = vmatpush1.msra.mxu0 0.0
    %2679 = vmatprep.subr.mxu0 0.0
    %2680 = vmatpush1.msra.mxu0 0.0
    %2681 = vmatprep.subr.mxu0 0.0
    %2682 = vmatpush1.msra.mxu0 0.0
    %2683 = vmatprep.subr.mxu0 0.0
    %2684 = vmatpush1.msra.mxu0 0.0
    %2685 = vmatprep.subr.mxu0 0.0
    %2686 = vmatpush1.msra.mxu0 0.0
    %2687 = vmatprep.subr.mxu0 0.0
    %2688 = vmatpush1.msra.mxu0 0.0
    %2689 = vmatprep.subr.mxu0 0.0
    %2690 = vmatpush1.msra.mxu0 0.0
    %2691 = vmatprep.subr.mxu0 0.0
    %2692 = vmatpush1.msra.mxu0 0.0
    %2693 = vmatprep.subr.mxu0 0.0
    %2694 = vmatpush1.msra.mxu0 0.0
    %2695 = vmatprep.subr.mxu0 0.0
    %2696 = vmatpush1.msra.mxu0 0.0
    %2697 = vmatprep.subr.mxu0 0.0
    %2698 = vmatpush1.msra.mxu0 0.0
    %2699 = vmatprep.subr.mxu0 0.0
    %2700 = vmatpush1.msra.mxu0 0.0
    %2701 = vmatprep.subr.mxu0 0.0
    %2702 = vmatpush1.msra.mxu0 0.0
    %2703 = vmatprep.subr.mxu0 0.0
    %2704 = vmatpush1.msra.mxu0 0.0
    %2705 = vmatprep.mubr.f32.mxu0 0.0
    %2706 = vmatmul.mubr.f32.gmra.mrb[0].mxu0 %v2639
    %v2707 = vpop.f32.mrb[0].mxu0
    %v2708 = vadd.f32 %v2563, %v2707
    %v2709 = vpop.f32.mrb[0].mxu0
    %2710 = vdwg.mxu0
    %v2711 = vld [vmem:[#allocation23] sm:$0xff]
    %v2712 = vld [vmem:[#allocation23 + $0x8] sm:$0xff]
    %v2713 = vld [vmem:[#allocation23 + $0x10] sm:$0xff]
    %v2714 = vld [vmem:[#allocation23 + $0x18] sm:$0xff]
    %v2715 = vld [vmem:[#allocation23 + $0x20] sm:$0xff]
    %v2716 = vld [vmem:[#allocation23 + $0x28] sm:$0xff]
    %v2717 = vld [vmem:[#allocation23 + $0x30] sm:$0xff]
    %v2718 = vld [vmem:[#allocation23 + $0x38] sm:$0xff]
    %v2719 = vld [vmem:[#allocation25] sm:$0xff]
    %v2720 = vld [vmem:[#allocation25 + $0x8] sm:$0xff]
    %v2721 = vld [vmem:[#allocation25 + $0x10] sm:$0xff]
    %v2722 = vld [vmem:[#allocation25 + $0x18] sm:$0xff]
    %v2723 = vld [vmem:[#allocation25 + $0x20] sm:$0xff]
    %v2724 = vld [vmem:[#allocation25 + $0x28] sm:$0xff]
    %v2725 = vld [vmem:[#allocation25 + $0x30] sm:$0xff]
    %v2726 = vld [vmem:[#allocation25 + $0x38] sm:$0xff]
    %v2728 = vsel %vm1794, %v2708, 0
    %2730 = vmatprep.subr.mxu0 %v2720
    %2731 = vmatpush1.msra.mxu0 %v2719
    %2732 = vmatprep.subr.mxu0 %v2724
    %2733 = vmatpush1.msra.mxu0 %v2723
    %2734 = vmatprep.subr.mxu0 0.0
    %2735 = vmatpush1.msra.mxu0 0.0
    %2736 = vmatprep.subr.mxu0 0.0
    %2737 = vmatpush1.msra.mxu0 0.0
    %2738 = vmatprep.subr.mxu0 0.0
    %2739 = vmatpush1.msra.mxu0 0.0
    %2740 = vmatprep.subr.mxu0 0.0
    %2741 = vmatpush1.msra.mxu0 0.0
    %2742 = vmatprep.subr.mxu0 0.0
    %2743 = vmatpush1.msra.mxu0 0.0
    %2744 = vmatprep.subr.mxu0 0.0
    %2745 = vmatpush1.msra.mxu0 0.0
    %2746 = vmatprep.subr.mxu0 0.0
    %2747 = vmatpush1.msra.mxu0 0.0
    %2748 = vmatprep.subr.mxu0 0.0
    %2749 = vmatpush1.msra.mxu0 0.0
    %2750 = vmatprep.subr.mxu0 0.0
    %2751 = vmatpush1.msra.mxu0 0.0
    %2752 = vmatprep.subr.mxu0 0.0
    %2753 = vmatpush1.msra.mxu0 0.0
    %2754 = vmatprep.subr.mxu0 0.0
    %2755 = vmatpush1.msra.mxu0 0.0
    %2756 = vmatprep.subr.mxu0 0.0
    %2757 = vmatpush1.msra.mxu0 0.0
    %2758 = vmatprep.subr.mxu0 0.0
    %2759 = vmatpush1.msra.mxu0 0.0
    %2760 = vmatprep.subr.mxu0 0.0
    %2761 = vmatpush1.msra.mxu0 0.0
    %2762 = vmatprep.subr.mxu0 0.0
    %2763 = vmatpush1.msra.mxu0 0.0
    %2764 = vmatprep.subr.mxu0 0.0
    %2765 = vmatpush1.msra.mxu0 0.0
    %2766 = vmatprep.subr.mxu0 0.0
    %2767 = vmatpush1.msra.mxu0 0.0
    %2768 = vmatprep.subr.mxu0 0.0
    %2769 = vmatpush1.msra.mxu0 0.0
    %2770 = vmatprep.subr.mxu0 0.0
    %2771 = vmatpush1.msra.mxu0 0.0
    %2772 = vmatprep.subr.mxu0 0.0
    %2773 = vmatpush1.msra.mxu0 0.0
    %2774 = vmatprep.subr.mxu0 0.0
    %2775 = vmatpush1.msra.mxu0 0.0
    %2776 = vmatprep.subr.mxu0 0.0
    %2777 = vmatpush1.msra.mxu0 0.0
    %2778 = vmatprep.subr.mxu0 0.0
    %2779 = vmatpush1.msra.mxu0 0.0
    %2780 = vmatprep.subr.mxu0 0.0
    %2781 = vmatpush1.msra.mxu0 0.0
    %2782 = vmatprep.subr.mxu0 0.0
    %2783 = vmatpush1.msra.mxu0 0.0
    %2784 = vmatprep.subr.mxu0 0.0
    %2785 = vmatpush1.msra.mxu0 0.0
    %2786 = vmatprep.subr.mxu0 0.0
    %2787 = vmatpush1.msra.mxu0 0.0
    %2788 = vmatprep.subr.mxu0 0.0
    %2789 = vmatpush1.msra.mxu0 0.0
    %2790 = vmatprep.subr.mxu0 0.0
    %2791 = vmatpush1.msra.mxu0 0.0
    %2792 = vmatprep.subr.mxu0 0.0
    %2793 = vmatpush1.msra.mxu0 0.0
    %2794 = vmatprep.mubr.f32.mxu0 0.0
    %2795 = vmatmul.mubr.f32.gmra.mrb[0].mxu0 %v2728
    %v2796 = vpop.f32.mrb[0].mxu0
    %v2797 = vadd.f32 0.0, %v2796
    %v2798 = vpop.f32.mrb[0].mxu0
    %v2799 = vadd.f32 0.0, %v2798
    %2800 = vdwg.mxu0
    %2801 = vmatprep.subr.mxu0 %v2722
    %2802 = vmatpush1.msra.mxu0 %v2721
    %2803 = vmatprep.subr.mxu0 %v2726
    %2804 = vmatpush1.msra.mxu0 %v2725
    %2805 = vmatprep.subr.mxu0 0.0
    %2806 = vmatpush1.msra.mxu0 0.0
    %2807 = vmatprep.subr.mxu0 0.0
    %2808 = vmatpush1.msra.mxu0 0.0
    %2809 = vmatprep.subr.mxu0 0.0
    %2810 = vmatpush1.msra.mxu0 0.0
    %2811 = vmatprep.subr.mxu0 0.0
    %2812 = vmatpush1.msra.mxu0 0.0
    %2813 = vmatprep.subr.mxu0 0.0
    %2814 = vmatpush1.msra.mxu0 0.0
    %2815 = vmatprep.subr.mxu0 0.0
    %2816 = vmatpush1.msra.mxu0 0.0
    %2817 = vmatprep.subr.mxu0 0.0
    %2818 = vmatpush1.msra.mxu0 0.0
    %2819 = vmatprep.subr.mxu0 0.0
    %2820 = vmatpush1.msra.mxu0 0.0
    %2821 = vmatprep.subr.mxu0 0.0
    %2822 = vmatpush1.msra.mxu0 0.0
    %2823 = vmatprep.subr.mxu0 0.0
    %2824 = vmatpush1.msra.mxu0 0.0
    %2825 = vmatprep.subr.mxu0 0.0
    %2826 = vmatpush1.msra.mxu0 0.0
    %2827 = vmatprep.subr.mxu0 0.0
    %2828 = vmatpush1.msra.mxu0 0.0
    %2829 = vmatprep.subr.mxu0 0.0
    %2830 = vmatpush1.msra.mxu0 0.0
    %2831 = vmatprep.subr.mxu0 0.0
    %2832 = vmatpush1.msra.mxu0 0.0
    %2833 = vmatprep.subr.mxu0 0.0
    %2834 = vmatpush1.msra.mxu0 0.0
    %2835 = vmatprep.subr.mxu0 0.0
    %2836 = vmatpush1.msra.mxu0 0.0
    %2837 = vmatprep.subr.mxu0 0.0
    %2838 = vmatpush1.msra.mxu0 0.0
    %2839 = vmatprep.subr.mxu0 0.0
    %2840 = vmatpush1.msra.mxu0 0.0
    %2841 = vmatprep.subr.mxu0 0.0
    %2842 = vmatpush1.msra.mxu0 0.0
    %2843 = vmatprep.subr.mxu0 0.0
    %2844 = vmatpush1.msra.mxu0 0.0
    %2845 = vmatprep.subr.mxu0 0.0
    %2846 = vmatpush1.msra.mxu0 0.0
    %2847 = vmatprep.subr.mxu0 0.0
    %2848 = vmatpush1.msra.mxu0 0.0
    %2849 = vmatprep.subr.mxu0 0.0
    %2850 = vmatpush1.msra.mxu0 0.0
    %2851 = vmatprep.subr.mxu0 0.0
    %2852 = vmatpush1.msra.mxu0 0.0
    %2853 = vmatprep.subr.mxu0 0.0
    %2854 = vmatpush1.msra.mxu0 0.0
    %2855 = vmatprep.subr.mxu0 0.0
    %2856 = vmatpush1.msra.mxu0 0.0
    %2857 = vmatprep.subr.mxu0 0.0
    %2858 = vmatpush1.msra.mxu0 0.0
    %2859 = vmatprep.subr.mxu0 0.0
    %2860 = vmatpush1.msra.mxu0 0.0
    %2861 = vmatprep.subr.mxu0 0.0
    %2862 = vmatpush1.msra.mxu0 0.0
    %2863 = vmatprep.subr.mxu0 0.0
    %2864 = vmatpush1.msra.mxu0 0.0
    %2865 = vmatprep.mubr.f32.mxu0 0.0
    %2866 = vmatmul.mubr.f32.gmra.mrb[0].mxu0 %v2728
    %v2867 = vpop.f32.mrb[0].mxu0
    %v2868 = vadd.f32 0.0, %v2867
    %v2869 = vpop.f32.mrb[0].mxu0
    %v2870 = vadd.f32 0.0, %v2869
    %2871 = vdwg.mxu0
    %v2873 = vsel %vm1794, %v2635, 0
    %2875 = vmatprep.subr.mxu0 %v2712
    %2876 = vmatpush1.msra.mxu0 %v2711
    %2877 = vmatprep.subr.mxu0 %v2716
    %2878 = vmatpush1.msra.mxu0 %v2715
    %2879 = vmatprep.subr.mxu0 0.0
    %2880 = vmatpush1.msra.mxu0 0.0
    %2881 = vmatprep.subr.mxu0 0.0
    %2882 = vmatpush1.msra.mxu0 0.0
    %2883 = vmatprep.subr.mxu0 0.0
    %2884 = vmatpush1.msra.mxu0 0.0
    %2885 = vmatprep.subr.mxu0 0.0
    %2886 = vmatpush1.msra.mxu0 0.0
    %2887 = vmatprep.subr.mxu0 0.0
    %2888 = vmatpush1.msra.mxu0 0.0
    %2889 = vmatprep.subr.mxu0 0.0
    %2890 = vmatpush1.msra.mxu0 0.0
    %2891 = vmatprep.subr.mxu0 0.0
    %2892 = vmatpush1.msra.mxu0 0.0
    %2893 = vmatprep.subr.mxu0 0.0
    %2894 = vmatpush1.msra.mxu0 0.0
    %2895 = vmatprep.subr.mxu0 0.0
    %2896 = vmatpush1.msra.mxu0 0.0
    %2897 = vmatprep.subr.mxu0 0.0
    %2898 = vmatpush1.msra.mxu0 0.0
    %2899 = vmatprep.subr.mxu0 0.0
    %2900 = vmatpush1.msra.mxu0 0.0
    %2901 = vmatprep.subr.mxu0 0.0
    %2902 = vmatpush1.msra.mxu0 0.0
    %2903 = vmatprep.subr.mxu0 0.0
    %2904 = vmatpush1.msra.mxu0 0.0
    %2905 = vmatprep.subr.mxu0 0.0
    %2906 = vmatpush1.msra.mxu0 0.0
    %2907 = vmatprep.subr.mxu0 0.0
    %2908 = vmatpush1.msra.mxu0 0.0
    %2909 = vmatprep.subr.mxu0 0.0
    %2910 = vmatpush1.msra.mxu0 0.0
    %2911 = vmatprep.subr.mxu0 0.0
    %2912 = vmatpush1.msra.mxu0 0.0
    %2913 = vmatprep.subr.mxu0 0.0
    %2914 = vmatpush1.msra.mxu0 0.0
    %2915 = vmatprep.subr.mxu0 0.0
    %2916 = vmatpush1.msra.mxu0 0.0
    %2917 = vmatprep.subr.mxu0 0.0
    %2918 = vmatpush1.msra.mxu0 0.0
    %2919 = vmatprep.subr.mxu0 0.0
    %2920 = vmatpush1.msra.mxu0 0.0
    %2921 = vmatprep.subr.mxu0 0.0
    %2922 = vmatpush1.msra.mxu0 0.0
    %2923 = vmatprep.subr.mxu0 0.0
    %2924 = vmatpush1.msra.mxu0 0.0
    %2925 = vmatprep.subr.mxu0 0.0
    %2926 = vmatpush1.msra.mxu0 0.0
    %2927 = vmatprep.subr.mxu0 0.0
    %2928 = vmatpush1.msra.mxu0 0.0
    %2929 = vmatprep.subr.mxu0 0.0
    %2930 = vmatpush1.msra.mxu0 0.0
    %2931 = vmatprep.subr.mxu0 0.0
    %2932 = vmatpush1.msra.mxu0 0.0
    %2933 = vmatprep.subr.mxu0 0.0
    %2934 = vmatpush1.msra.mxu0 0.0
    %2935 = vmatprep.subr.mxu0 0.0
    %2936 = vmatpush1.msra.mxu0 0.0
    %2937 = vmatprep.subr.mxu0 0.0
    %2938 = vmatpush1.msra.mxu0 0.0
    %2939 = vmatprep.mubr.f32.mxu0 0.0
    %2940 = vmatmul.mubr.f32.gmra.mrb[0].mxu0 %v2873
    %v2941 = vpop.f32.mrb[0].mxu0
    %v2942 = vadd.f32 %v2797, %v2941
    %v2943 = vpop.f32.mrb[0].mxu0
    %v2944 = vadd.f32 %v2799, %v2943
    %2945 = vdwg.mxu0
    %2946 = vmatprep.subr.mxu0 %v2714
    %2947 = vmatpush1.msra.mxu0 %v2713
    %2948 = vmatprep.subr.mxu0 %v2718
    %2949 = vmatpush1.msra.mxu0 %v2717
    %2950 = vmatprep.subr.mxu0 0.0
    %2951 = vmatpush1.msra.mxu0 0.0
    %2952 = vmatprep.subr.mxu0 0.0
    %2953 = vmatpush1.msra.mxu0 0.0
    %2954 = vmatprep.subr.mxu0 0.0
    %2955 = vmatpush1.msra.mxu0 0.0
    %2956 = vmatprep.subr.mxu0 0.0
    %2957 = vmatpush1.msra.mxu0 0.0
    %2958 = vmatprep.subr.mxu0 0.0
    %2959 = vmatpush1.msra.mxu0 0.0
    %2960 = vmatprep.subr.mxu0 0.0
    %2961 = vmatpush1.msra.mxu0 0.0
    %2962 = vmatprep.subr.mxu0 0.0
    %2963 = vmatpush1.msra.mxu0 0.0
    %2964 = vmatprep.subr.mxu0 0.0
    %2965 = vmatpush1.msra.mxu0 0.0
    %2966 = vmatprep.subr.mxu0 0.0
    %2967 = vmatpush1.msra.mxu0 0.0
    %2968 = vmatprep.subr.mxu0 0.0
    %2969 = vmatpush1.msra.mxu0 0.0
    %2970 = vmatprep.subr.mxu0 0.0
    %2971 = vmatpush1.msra.mxu0 0.0
    %2972 = vmatprep.subr.mxu0 0.0
    %2973 = vmatpush1.msra.mxu0 0.0
    %2974 = vmatprep.subr.mxu0 0.0
    %2975 = vmatpush1.msra.mxu0 0.0
    %2976 = vmatprep.subr.mxu0 0.0
    %2977 = vmatpush1.msra.mxu0 0.0
    %2978 = vmatprep.subr.mxu0 0.0
    %2979 = vmatpush1.msra.mxu0 0.0
    %2980 = vmatprep.subr.mxu0 0.0
    %2981 = vmatpush1.msra.mxu0 0.0
    %2982 = vmatprep.subr.mxu0 0.0
    %2983 = vmatpush1.msra.mxu0 0.0
    %2984 = vmatprep.subr.mxu0 0.0
    %2985 = vmatpush1.msra.mxu0 0.0
    %2986 = vmatprep.subr.mxu0 0.0
    %2987 = vmatpush1.msra.mxu0 0.0
    %2988 = vmatprep.subr.mxu0 0.0
    %2989 = vmatpush1.msra.mxu0 0.0
    %2990 = vmatprep.subr.mxu0 0.0
    %2991 = vmatpush1.msra.mxu0 0.0
    %2992 = vmatprep.subr.mxu0 0.0
    %2993 = vmatpush1.msra.mxu0 0.0
    %2994 = vmatprep.subr.mxu0 0.0
    %2995 = vmatpush1.msra.mxu0 0.0
    %2996 = vmatprep.subr.mxu0 0.0
    %2997 = vmatpush1.msra.mxu0 0.0
    %2998 = vmatprep.subr.mxu0 0.0
    %2999 = vmatpush1.msra.mxu0 0.0
    %3000 = vmatprep.subr.mxu0 0.0
    %3001 = vmatpush1.msra.mxu0 0.0
    %3002 = vmatprep.subr.mxu0 0.0
    %3003 = vmatpush1.msra.mxu0 0.0
    %3004 = vmatprep.subr.mxu0 0.0
    %3005 = vmatpush1.msra.mxu0 0.0
    %3006 = vmatprep.subr.mxu0 0.0
    %3007 = vmatpush1.msra.mxu0 0.0
    %3008 = vmatprep.subr.mxu0 0.0
    %3009 = vmatpush1.msra.mxu0 0.0
    %3010 = vmatprep.mubr.f32.mxu0 0.0
    %3011 = vmatmul.mubr.f32.gmra.mrb[0].mxu0 %v2873
    %v3012 = vpop.f32.mrb[0].mxu0
    %v3013 = vadd.f32 %v2868, %v3012
    %v3014 = vpop.f32.mrb[0].mxu0
    %v3015 = vadd.f32 %v2870, %v3014
    %3016 = vdwg.mxu0
    %v3017 = vld [vmem:[#allocation26] sm:$0xf]
    %v3019 = vlaneseq
    %v3020 = vshrl.u32 %v3019, 7
    %v3021 = vsub.s32 0, %v3020
    %v3022 = vrot.slane %v3017, %v3021
    %v3023 = vlaneseq
    %v3024 = vshrl.u32 %v3023, 7
    %v3025 = vsub.s32 1, %v3024
    %v3026 = vrot.slane %v3017, %v3025
    %v3027 = vlaneseq
    %v3028 = vshrl.u32 %v3027, 7
    %v3029 = vsub.s32 2, %v3028
    %v3030 = vrot.slane %v3017, %v3029
    %v3031 = vlaneseq
    %v3032 = vshrl.u32 %v3031, 7
    %v3033 = vsub.s32 3, %v3032
    %v3034 = vrot.slane %v3017, %v3033
    %v3039 = vadd.f32 %v2942, %v3022
    %v3040 = vadd.f32 %v2944, %v3026
    %v3041 = vadd.f32 %v3013, %v3030
    %v3042 = vadd.f32 %v3015, %v3034
    %v3043 = vmax.f32 %v3039, 0.0
    %v3044 = vmax.f32 %v3040, 0.0
    %v3045 = vmax.f32 %v3041, 0.0
    %v3046 = vmax.f32 %v3042, 0.0
    %s3047 = smul.u32 4, 64
    %s3048 = smul.u32 %s3047, 8
    %s3049 = sshll.u32 %s3048, 4
    %3050 = dma.done [#allocation4], %s3049
    %v3051 = vpack.c.bf16 %v3043, %v3043
    %v3052 = vpack.c.bf16 %v3044, %v3044
    %v3053 = vpack.c.bf16 %v3045, %v3045
    %v3054 = vpack.c.bf16 %v3046, %v3046
    %v3055 = vld [vmem:[#allocation2] sm:$0xff]
    %v3056 = vld [vmem:[#allocation2 + $0x8] sm:$0xff]
    %v3057 = vld [vmem:[#allocation2 + $0x10] sm:$0xff]
    %v3058 = vld [vmem:[#allocation2 + $0x18] sm:$0xff]
    %v3059 = vld [vmem:[#allocation2 + $0x20] sm:$0xff]
    %v3060 = vld [vmem:[#allocation2 + $0x28] sm:$0xff]
    %v3061 = vld [vmem:[#allocation2 + $0x30] sm:$0xff]
    %v3062 = vld [vmem:[#allocation2 + $0x38] sm:$0xff]
    %v3063 = vld [vmem:[#allocation2 + $0x40] sm:$0xff]
    %v3064 = vld [vmem:[#allocation2 + $0x48] sm:$0xff]
    %v3065 = vld [vmem:[#allocation2 + $0x50] sm:$0xff]
    %v3066 = vld [vmem:[#allocation2 + $0x58] sm:$0xff]
    %v3067 = vld [vmem:[#allocation2 + $0x60] sm:$0xff]
    %v3068 = vld [vmem:[#allocation2 + $0x68] sm:$0xff]
    %v3069 = vld [vmem:[#allocation2 + $0x70] sm:$0xff]
    %v3070 = vld [vmem:[#allocation2 + $0x78] sm:$0xff]
    %v3071 = vld [vmem:[#allocation2 + $0x80] sm:$0xff]
    %v3072 = vld [vmem:[#allocation2 + $0x88] sm:$0xff]
    %v3073 = vld [vmem:[#allocation2 + $0x90] sm:$0xff]
    %v3074 = vld [vmem:[#allocation2 + $0x98] sm:$0xff]
    %v3075 = vld [vmem:[#allocation2 + $0xa0] sm:$0xff]
    %v3076 = vld [vmem:[#allocation2 + $0xa8] sm:$0xff]
    %v3077 = vld [vmem:[#allocation2 + $0xb0] sm:$0xff]
    %v3078 = vld [vmem:[#allocation2 + $0xb8] sm:$0xff]
    %v3079 = vld [vmem:[#allocation2 + $0xc0] sm:$0xff]
    %v3080 = vld [vmem:[#allocation2 + $0xc8] sm:$0xff]
    %v3081 = vld [vmem:[#allocation2 + $0xd0] sm:$0xff]
    %v3082 = vld [vmem:[#allocation2 + $0xd8] sm:$0xff]
    %v3083 = vld [vmem:[#allocation2 + $0xe0] sm:$0xff]
    %v3084 = vld [vmem:[#allocation2 + $0xe8] sm:$0xff]
    %v3085 = vld [vmem:[#allocation2 + $0xf0] sm:$0xff]
    %v3086 = vld [vmem:[#allocation2 + $0xf8] sm:$0xff]
    %v3087 = vld [vmem:[#allocation2 + $0x100] sm:$0xff]
    %v3088 = vld [vmem:[#allocation2 + $0x108] sm:$0xff]
    %v3089 = vld [vmem:[#allocation2 + $0x110] sm:$0xff]
    %v3090 = vld [vmem:[#allocation2 + $0x118] sm:$0xff]
    %v3091 = vld [vmem:[#allocation2 + $0x120] sm:$0xff]
    %v3092 = vld [vmem:[#allocation2 + $0x128] sm:$0xff]
    %v3093 = vld [vmem:[#allocation2 + $0x130] sm:$0xff]
    %v3094 = vld [vmem:[#allocation2 + $0x138] sm:$0xff]
    %v3095 = vld [vmem:[#allocation2 + $0x140] sm:$0xff]
    %v3096 = vld [vmem:[#allocation2 + $0x148] sm:$0xff]
    %v3097 = vld [vmem:[#allocation2 + $0x150] sm:$0xff]
    %v3098 = vld [vmem:[#allocation2 + $0x158] sm:$0xff]
    %v3099 = vld [vmem:[#allocation2 + $0x160] sm:$0xff]
    %v3100 = vld [vmem:[#allocation2 + $0x168] sm:$0xff]
    %v3101 = vld [vmem:[#allocation2 + $0x170] sm:$0xff]
    %v3102 = vld [vmem:[#allocation2 + $0x178] sm:$0xff]
    %v3103 = vld [vmem:[#allocation2 + $0x180] sm:$0xff]
    %v3104 = vld [vmem:[#allocation2 + $0x188] sm:$0xff]
    %v3105 = vld [vmem:[#allocation2 + $0x190] sm:$0xff]
    %v3106 = vld [vmem:[#allocation2 + $0x198] sm:$0xff]
    %v3107 = vld [vmem:[#allocation2 + $0x1a0] sm:$0xff]
    %v3108 = vld [vmem:[#allocation2 + $0x1a8] sm:$0xff]
    %v3109 = vld [vmem:[#allocation2 + $0x1b0] sm:$0xff]
    %v3110 = vld [vmem:[#allocation2 + $0x1b8] sm:$0xff]
    %v3111 = vld [vmem:[#allocation2 + $0x1c0] sm:$0xff]
    %v3112 = vld [vmem:[#allocation2 + $0x1c8] sm:$0xff]
    %v3113 = vld [vmem:[#allocation2 + $0x1d0] sm:$0xff]
    %v3114 = vld [vmem:[#allocation2 + $0x1d8] sm:$0xff]
    %v3115 = vld [vmem:[#allocation2 + $0x1e0] sm:$0xff]
    %v3116 = vld [vmem:[#allocation2 + $0x1e8] sm:$0xff]
    %v3117 = vld [vmem:[#allocation2 + $0x1f0] sm:$0xff]
    %v3118 = vld [vmem:[#allocation2 + $0x1f8] sm:$0xff]
    %v3119 = vld [vmem:[#allocation2 + $0x200] sm:$0xff]
    %v3120 = vld [vmem:[#allocation2 + $0x208] sm:$0xff]
    %v3121 = vld [vmem:[#allocation2 + $0x210] sm:$0xff]
    %v3122 = vld [vmem:[#allocation2 + $0x218] sm:$0xff]
    %v3123 = vld [vmem:[#allocation2 + $0x220] sm:$0xff]
    %v3124 = vld [vmem:[#allocation2 + $0x228] sm:$0xff]
    %v3125 = vld [vmem:[#allocation2 + $0x230] sm:$0xff]
    %v3126 = vld [vmem:[#allocation2 + $0x238] sm:$0xff]
    %v3127 = vld [vmem:[#allocation2 + $0x240] sm:$0xff]
    %v3128 = vld [vmem:[#allocation2 + $0x248] sm:$0xff]
    %v3129 = vld [vmem:[#allocation2 + $0x250] sm:$0xff]
    %v3130 = vld [vmem:[#allocation2 + $0x258] sm:$0xff]
    %v3131 = vld [vmem:[#allocation2 + $0x260] sm:$0xff]
    %v3132 = vld [vmem:[#allocation2 + $0x268] sm:$0xff]
    %v3133 = vld [vmem:[#allocation2 + $0x270] sm:$0xff]
    %v3134 = vld [vmem:[#allocation2 + $0x278] sm:$0xff]
    %v3135 = vld [vmem:[#allocation2 + $0x280] sm:$0xff]
    %v3136 = vld [vmem:[#allocation2 + $0x288] sm:$0xff]
    %v3137 = vld [vmem:[#allocation2 + $0x290] sm:$0xff]
    %v3138 = vld [vmem:[#allocation2 + $0x298] sm:$0xff]
    %v3139 = vld [vmem:[#allocation2 + $0x2a0] sm:$0xff]
    %v3140 = vld [vmem:[#allocation2 + $0x2a8] sm:$0xff]
    %v3141 = vld [vmem:[#allocation2 + $0x2b0] sm:$0xff]
    %v3142 = vld [vmem:[#allocation2 + $0x2b8] sm:$0xff]
    %v3143 = vld [vmem:[#allocation2 + $0x2c0] sm:$0xff]
    %v3144 = vld [vmem:[#allocation2 + $0x2c8] sm:$0xff]
    %v3145 = vld [vmem:[#allocation2 + $0x2d0] sm:$0xff]
    %v3146 = vld [vmem:[#allocation2 + $0x2d8] sm:$0xff]
    %v3147 = vld [vmem:[#allocation2 + $0x2e0] sm:$0xff]
    %v3148 = vld [vmem:[#allocation2 + $0x2e8] sm:$0xff]
    %v3149 = vld [vmem:[#allocation2 + $0x2f0] sm:$0xff]
    %v3150 = vld [vmem:[#allocation2 + $0x2f8] sm:$0xff]
    %v3151 = vld [vmem:[#allocation2 + $0x300] sm:$0xff]
    %v3152 = vld [vmem:[#allocation2 + $0x308] sm:$0xff]
    %v3153 = vld [vmem:[#allocation2 + $0x310] sm:$0xff]
    %v3154 = vld [vmem:[#allocation2 + $0x318] sm:$0xff]
    %v3155 = vld [vmem:[#allocation2 + $0x320] sm:$0xff]
    %v3156 = vld [vmem:[#allocation2 + $0x328] sm:$0xff]
    %v3157 = vld [vmem:[#allocation2 + $0x330] sm:$0xff]
    %v3158 = vld [vmem:[#allocation2 + $0x338] sm:$0xff]
    %v3159 = vld [vmem:[#allocation2 + $0x340] sm:$0xff]
    %v3160 = vld [vmem:[#allocation2 + $0x348] sm:$0xff]
    %v3161 = vld [vmem:[#allocation2 + $0x350] sm:$0xff]
    %v3162 = vld [vmem:[#allocation2 + $0x358] sm:$0xff]
    %v3163 = vld [vmem:[#allocation2 + $0x360] sm:$0xff]
    %v3164 = vld [vmem:[#allocation2 + $0x368] sm:$0xff]
    %v3165 = vld [vmem:[#allocation2 + $0x370] sm:$0xff]
    %v3166 = vld [vmem:[#allocation2 + $0x378] sm:$0xff]
    %v3167 = vld [vmem:[#allocation2 + $0x380] sm:$0xff]
    %v3168 = vld [vmem:[#allocation2 + $0x388] sm:$0xff]
    %v3169 = vld [vmem:[#allocation2 + $0x390] sm:$0xff]
    %v3170 = vld [vmem:[#allocation2 + $0x398] sm:$0xff]
    %v3171 = vld [vmem:[#allocation2 + $0x3a0] sm:$0xff]
    %v3172 = vld [vmem:[#allocation2 + $0x3a8] sm:$0xff]
    %v3173 = vld [vmem:[#allocation2 + $0x3b0] sm:$0xff]
    %v3174 = vld [vmem:[#allocation2 + $0x3b8] sm:$0xff]
    %v3175 = vld [vmem:[#allocation2 + $0x3c0] sm:$0xff]
    %v3176 = vld [vmem:[#allocation2 + $0x3c8] sm:$0xff]
    %v3177 = vld [vmem:[#allocation2 + $0x3d0] sm:$0xff]
    %v3178 = vld [vmem:[#allocation2 + $0x3d8] sm:$0xff]
    %v3179 = vld [vmem:[#allocation2 + $0x3e0] sm:$0xff]
    %v3180 = vld [vmem:[#allocation2 + $0x3e8] sm:$0xff]
    %v3181 = vld [vmem:[#allocation2 + $0x3f0] sm:$0xff]
    %v3182 = vld [vmem:[#allocation2 + $0x3f8] sm:$0xff]
    %v3183 = vld [vmem:[#allocation2 + $0x400] sm:$0xff]
    %v3184 = vld [vmem:[#allocation2 + $0x408] sm:$0xff]
    %v3185 = vld [vmem:[#allocation2 + $0x410] sm:$0xff]
    %v3186 = vld [vmem:[#allocation2 + $0x418] sm:$0xff]
    %v3187 = vld [vmem:[#allocation2 + $0x420] sm:$0xff]
    %v3188 = vld [vmem:[#allocation2 + $0x428] sm:$0xff]
    %v3189 = vld [vmem:[#allocation2 + $0x430] sm:$0xff]
    %v3190 = vld [vmem:[#allocation2 + $0x438] sm:$0xff]
    %v3191 = vld [vmem:[#allocation2 + $0x440] sm:$0xff]
    %v3192 = vld [vmem:[#allocation2 + $0x448] sm:$0xff]
    %v3193 = vld [vmem:[#allocation2 + $0x450] sm:$0xff]
    %v3194 = vld [vmem:[#allocation2 + $0x458] sm:$0xff]
    %v3195 = vld [vmem:[#allocation2 + $0x460] sm:$0xff]
    %v3196 = vld [vmem:[#allocation2 + $0x468] sm:$0xff]
    %v3197 = vld [vmem:[#allocation2 + $0x470] sm:$0xff]
    %v3198 = vld [vmem:[#allocation2 + $0x478] sm:$0xff]
    %v3199 = vld [vmem:[#allocation2 + $0x480] sm:$0xff]
    %v3200 = vld [vmem:[#allocation2 + $0x488] sm:$0xff]
    %v3201 = vld [vmem:[#allocation2 + $0x490] sm:$0xff]
    %v3202 = vld [vmem:[#allocation2 + $0x498] sm:$0xff]
    %v3203 = vld [vmem:[#allocation2 + $0x4a0] sm:$0xff]
    %v3204 = vld [vmem:[#allocation2 + $0x4a8] sm:$0xff]
    %v3205 = vld [vmem:[#allocation2 + $0x4b0] sm:$0xff]
    %v3206 = vld [vmem:[#allocation2 + $0x4b8] sm:$0xff]
    %v3207 = vld [vmem:[#allocation2 + $0x4c0] sm:$0xff]
    %v3208 = vld [vmem:[#allocation2 + $0x4c8] sm:$0xff]
    %v3209 = vld [vmem:[#allocation2 + $0x4d0] sm:$0xff]
    %v3210 = vld [vmem:[#allocation2 + $0x4d8] sm:$0xff]
    %v3211 = vld [vmem:[#allocation2 + $0x4e0] sm:$0xff]
    %v3212 = vld [vmem:[#allocation2 + $0x4e8] sm:$0xff]
    %v3213 = vld [vmem:[#allocation2 + $0x4f0] sm:$0xff]
    %v3214 = vld [vmem:[#allocation2 + $0x4f8] sm:$0xff]
    %v3215 = vld [vmem:[#allocation2 + $0x500] sm:$0xff]
    %v3216 = vld [vmem:[#allocation2 + $0x508] sm:$0xff]
    %v3217 = vld [vmem:[#allocation2 + $0x510] sm:$0xff]
    %v3218 = vld [vmem:[#allocation2 + $0x518] sm:$0xff]
    %v3219 = vld [vmem:[#allocation2 + $0x520] sm:$0xff]
    %v3220 = vld [vmem:[#allocation2 + $0x528] sm:$0xff]
    %v3221 = vld [vmem:[#allocation2 + $0x530] sm:$0xff]
    %v3222 = vld [vmem:[#allocation2 + $0x538] sm:$0xff]
    %v3223 = vld [vmem:[#allocation2 + $0x540] sm:$0xff]
    %v3224 = vld [vmem:[#allocation2 + $0x548] sm:$0xff]
    %v3225 = vld [vmem:[#allocation2 + $0x550] sm:$0xff]
    %v3226 = vld [vmem:[#allocation2 + $0x558] sm:$0xff]
    %v3227 = vld [vmem:[#allocation2 + $0x560] sm:$0xff]
    %v3228 = vld [vmem:[#allocation2 + $0x568] sm:$0xff]
    %v3229 = vld [vmem:[#allocation2 + $0x570] sm:$0xff]
    %v3230 = vld [vmem:[#allocation2 + $0x578] sm:$0xff]
    %v3231 = vld [vmem:[#allocation2 + $0x580] sm:$0xff]
    %v3232 = vld [vmem:[#allocation2 + $0x588] sm:$0xff]
    %v3233 = vld [vmem:[#allocation2 + $0x590] sm:$0xff]
    %v3234 = vld [vmem:[#allocation2 + $0x598] sm:$0xff]
    %v3235 = vld [vmem:[#allocation2 + $0x5a0] sm:$0xff]
    %v3236 = vld [vmem:[#allocation2 + $0x5a8] sm:$0xff]
    %v3237 = vld [vmem:[#allocation2 + $0x5b0] sm:$0xff]
    %v3238 = vld [vmem:[#allocation2 + $0x5b8] sm:$0xff]
    %v3239 = vld [vmem:[#allocation2 + $0x5c0] sm:$0xff]
    %v3240 = vld [vmem:[#allocation2 + $0x5c8] sm:$0xff]
    %v3241 = vld [vmem:[#allocation2 + $0x5d0] sm:$0xff]
    %v3242 = vld [vmem:[#allocation2 + $0x5d8] sm:$0xff]
    %v3243 = vld [vmem:[#allocation2 + $0x5e0] sm:$0xff]
    %v3244 = vld [vmem:[#allocation2 + $0x5e8] sm:$0xff]
    %v3245 = vld [vmem:[#allocation2 + $0x5f0] sm:$0xff]
    %v3246 = vld [vmem:[#allocation2 + $0x5f8] sm:$0xff]
    %v3247 = vld [vmem:[#allocation2 + $0x600] sm:$0xff]
    %v3248 = vld [vmem:[#allocation2 + $0x608] sm:$0xff]
    %v3249 = vld [vmem:[#allocation2 + $0x610] sm:$0xff]
    %v3250 = vld [vmem:[#allocation2 + $0x618] sm:$0xff]
    %v3251 = vld [vmem:[#allocation2 + $0x620] sm:$0xff]
    %v3252 = vld [vmem:[#allocation2 + $0x628] sm:$0xff]
    %v3253 = vld [vmem:[#allocation2 + $0x630] sm:$0xff]
    %v3254 = vld [vmem:[#allocation2 + $0x638] sm:$0xff]
    %v3255 = vld [vmem:[#allocation2 + $0x640] sm:$0xff]
    %v3256 = vld [vmem:[#allocation2 + $0x648] sm:$0xff]
    %v3257 = vld [vmem:[#allocation2 + $0x650] sm:$0xff]
    %v3258 = vld [vmem:[#allocation2 + $0x658] sm:$0xff]
    %v3259 = vld [vmem:[#allocation2 + $0x660] sm:$0xff]
    %v3260 = vld [vmem:[#allocation2 + $0x668] sm:$0xff]
    %v3261 = vld [vmem:[#allocation2 + $0x670] sm:$0xff]
    %v3262 = vld [vmem:[#allocation2 + $0x678] sm:$0xff]
    %v3263 = vld [vmem:[#allocation2 + $0x680] sm:$0xff]
    %v3264 = vld [vmem:[#allocation2 + $0x688] sm:$0xff]
    %v3265 = vld [vmem:[#allocation2 + $0x690] sm:$0xff]
    %v3266 = vld [vmem:[#allocation2 + $0x698] sm:$0xff]
    %v3267 = vld [vmem:[#allocation2 + $0x6a0] sm:$0xff]
    %v3268 = vld [vmem:[#allocation2 + $0x6a8] sm:$0xff]
    %v3269 = vld [vmem:[#allocation2 + $0x6b0] sm:$0xff]
    %v3270 = vld [vmem:[#allocation2 + $0x6b8] sm:$0xff]
    %v3271 = vld [vmem:[#allocation2 + $0x6c0] sm:$0xff]
    %v3272 = vld [vmem:[#allocation2 + $0x6c8] sm:$0xff]
    %v3273 = vld [vmem:[#allocation2 + $0x6d0] sm:$0xff]
    %v3274 = vld [vmem:[#allocation2 + $0x6d8] sm:$0xff]
    %v3275 = vld [vmem:[#allocation2 + $0x6e0] sm:$0xff]
    %v3276 = vld [vmem:[#allocation2 + $0x6e8] sm:$0xff]
    %v3277 = vld [vmem:[#allocation2 + $0x6f0] sm:$0xff]
    %v3278 = vld [vmem:[#allocation2 + $0x6f8] sm:$0xff]
    %v3279 = vld [vmem:[#allocation2 + $0x700] sm:$0xff]
    %v3280 = vld [vmem:[#allocation2 + $0x708] sm:$0xff]
    %v3281 = vld [vmem:[#allocation2 + $0x710] sm:$0xff]
    %v3282 = vld [vmem:[#allocation2 + $0x718] sm:$0xff]
    %v3283 = vld [vmem:[#allocation2 + $0x720] sm:$0xff]
    %v3284 = vld [vmem:[#allocation2 + $0x728] sm:$0xff]
    %v3285 = vld [vmem:[#allocation2 + $0x730] sm:$0xff]
    %v3286 = vld [vmem:[#allocation2 + $0x738] sm:$0xff]
    %v3287 = vld [vmem:[#allocation2 + $0x740] sm:$0xff]
    %v3288 = vld [vmem:[#allocation2 + $0x748] sm:$0xff]
    %v3289 = vld [vmem:[#allocation2 + $0x750] sm:$0xff]
    %v3290 = vld [vmem:[#allocation2 + $0x758] sm:$0xff]
    %v3291 = vld [vmem:[#allocation2 + $0x760] sm:$0xff]
    %v3292 = vld [vmem:[#allocation2 + $0x768] sm:$0xff]
    %v3293 = vld [vmem:[#allocation2 + $0x770] sm:$0xff]
    %v3294 = vld [vmem:[#allocation2 + $0x778] sm:$0xff]
    %v3295 = vld [vmem:[#allocation2 + $0x780] sm:$0xff]
    %v3296 = vld [vmem:[#allocation2 + $0x788] sm:$0xff]
    %v3297 = vld [vmem:[#allocation2 + $0x790] sm:$0xff]
    %v3298 = vld [vmem:[#allocation2 + $0x798] sm:$0xff]
    %v3299 = vld [vmem:[#allocation2 + $0x7a0] sm:$0xff]
    %v3300 = vld [vmem:[#allocation2 + $0x7a8] sm:$0xff]
    %v3301 = vld [vmem:[#allocation2 + $0x7b0] sm:$0xff]
    %v3302 = vld [vmem:[#allocation2 + $0x7b8] sm:$0xff]
    %v3303 = vld [vmem:[#allocation2 + $0x7c0] sm:$0xff]
    %v3304 = vld [vmem:[#allocation2 + $0x7c8] sm:$0xff]
    %v3305 = vld [vmem:[#allocation2 + $0x7d0] sm:$0xff]
    %v3306 = vld [vmem:[#allocation2 + $0x7d8] sm:$0xff]
    %v3307 = vld [vmem:[#allocation2 + $0x7e0] sm:$0xff]
    %v3308 = vld [vmem:[#allocation2 + $0x7e8] sm:$0xff]
    %v3309 = vld [vmem:[#allocation2 + $0x7f0] sm:$0xff]
    %v3310 = vld [vmem:[#allocation2 + $0x7f8] sm:$0xff]
    %v3311 = vld [vmem:[#allocation28] sm:$0xff]
    %v3313 = vlaneseq
    %v3314 = vshrl.u32 %v3313, 7
    %v3315 = vsub.s32 0, %v3314
    %v3316 = vrot.slane %v3311, %v3315
    %v3317 = vlaneseq
    %v3318 = vshrl.u32 %v3317, 7
    %v3319 = vsub.s32 1, %v3318
    %v3320 = vrot.slane %v3311, %v3319
    %v3321 = vlaneseq
    %v3322 = vshrl.u32 %v3321, 7
    %v3323 = vsub.s32 2, %v3322
    %v3324 = vrot.slane %v3311, %v3323
    %v3325 = vlaneseq
    %v3326 = vshrl.u32 %v3325, 7
    %v3327 = vsub.s32 3, %v3326
    %v3328 = vrot.slane %v3311, %v3327
    %v3329 = vlaneseq
    %v3330 = vshrl.u32 %v3329, 7
    %v3331 = vsub.s32 4, %v3330
    %v3332 = vrot.slane %v3311, %v3331
    %v3333 = vlaneseq
    %v3334 = vshrl.u32 %v3333, 7
    %v3335 = vsub.s32 5, %v3334
    %v3336 = vrot.slane %v3311, %v3335
    %v3337 = vlaneseq
    %v3338 = vshrl.u32 %v3337, 7
    %v3339 = vsub.s32 6, %v3338
    %v3340 = vrot.slane %v3311, %v3339
    %v3341 = vlaneseq
    %v3342 = vshrl.u32 %v3341, 7
    %v3343 = vsub.s32 7, %v3342
    %v3344 = vrot.slane %v3311, %v3343
    %3353 = vmatprep.subr.bf16.mxu0 %v3056
    %3354 = vmatpush1.bf16.msra.mxu0 %v3055
    %3355 = vmatprep.subr.bf16.mxu0 %v3064
    %3356 = vmatpush1.bf16.msra.mxu0 %v3063
    %3357 = vmatprep.subr.bf16.mxu0 %v3072
    %3358 = vmatpush1.bf16.msra.mxu0 %v3071
    %3359 = vmatprep.subr.bf16.mxu0 %v3080
    %3360 = vmatpush1.bf16.msra.mxu0 %v3079
    %3361 = vmatprep.subr.bf16.mxu0 %v3088
    %3362 = vmatpush1.bf16.msra.mxu0 %v3087
    %3363 = vmatprep.subr.bf16.mxu0 %v3096
    %3364 = vmatpush1.bf16.msra.mxu0 %v3095
    %3365 = vmatprep.subr.bf16.mxu0 %v3104
    %3366 = vmatpush1.bf16.msra.mxu0 %v3103
    %3367 = vmatprep.subr.bf16.mxu0 %v3112
    %3368 = vmatpush1.bf16.msra.mxu0 %v3111
    %3369 = vmatprep.subr.bf16.mxu0 %v3120
    %3370 = vmatpush1.bf16.msra.mxu0 %v3119
    %3371 = vmatprep.subr.bf16.mxu0 %v3128
    %3372 = vmatpush1.bf16.msra.mxu0 %v3127
    %3373 = vmatprep.subr.bf16.mxu0 %v3136
    %3374 = vmatpush1.bf16.msra.mxu0 %v3135
    %3375 = vmatprep.subr.bf16.mxu0 %v3144
    %3376 = vmatpush1.bf16.msra.mxu0 %v3143
    %3377 = vmatprep.subr.bf16.mxu0 %v3152
    %3378 = vmatpush1.bf16.msra.mxu0 %v3151
    %3379 = vmatprep.subr.bf16.mxu0 %v3160
    %3380 = vmatpush1.bf16.msra.mxu0 %v3159
    %3381 = vmatprep.subr.bf16.mxu0 %v3168
    %3382 = vmatpush1.bf16.msra.mxu0 %v3167
    %3383 = vmatprep.subr.bf16.mxu0 %v3176
    %3384 = vmatpush1.bf16.msra.mxu0 %v3175
    %3385 = vmatprep.mubr.bf16.mxu0 %v3052
    %3386 = vmatmul.mubr.bf16.gmra.mrb[0].mxu0 %v3051
    %v3387 = vpop.f32.mrb[0].mxu0
    %v3388 = vadd.f32 %v3316, %v3387
    %v3389 = vpop.f32.mrb[0].mxu0
    %v3390 = vadd.f32 %v3320, %v3389
    %v3391 = vpop.f32.mrb[0].mxu0
    %v3392 = vpop.f32.mrb[0].mxu0
    %3393 = vdwg.mxu0
    %3394 = vmatprep.subr.bf16.mxu0 %v3184
    %3395 = vmatpush1.bf16.msra.mxu0 %v3183
    %3396 = vmatprep.subr.bf16.mxu0 %v3192
    %3397 = vmatpush1.bf16.msra.mxu0 %v3191
    %3398 = vmatprep.subr.bf16.mxu0 %v3200
    %3399 = vmatpush1.bf16.msra.mxu0 %v3199
    %3400 = vmatprep.subr.bf16.mxu0 %v3208
    %3401 = vmatpush1.bf16.msra.mxu0 %v3207
    %3402 = vmatprep.subr.bf16.mxu0 %v3216
    %3403 = vmatpush1.bf16.msra.mxu0 %v3215
    %3404 = vmatprep.subr.bf16.mxu0 %v3224
    %3405 = vmatpush1.bf16.msra.mxu0 %v3223
    %3406 = vmatprep.subr.bf16.mxu0 %v3232
    %3407 = vmatpush1.bf16.msra.mxu0 %v3231
    %3408 = vmatprep.subr.bf16.mxu0 %v3240
    %3409 = vmatpush1.bf16.msra.mxu0 %v3239
    %3410 = vmatprep.subr.bf16.mxu0 %v3248
    %3411 = vmatpush1.bf16.msra.mxu0 %v3247
    %3412 = vmatprep.subr.bf16.mxu0 %v3256
    %3413 = vmatpush1.bf16.msra.mxu0 %v3255
    %3414 = vmatprep.subr.bf16.mxu0 %v3264
    %3415 = vmatpush1.bf16.msra.mxu0 %v3263
    %3416 = vmatprep.subr.bf16.mxu0 %v3272
    %3417 = vmatpush1.bf16.msra.mxu0 %v3271
    %3418 = vmatprep.subr.bf16.mxu0 %v3280
    %3419 = vmatpush1.bf16.msra.mxu0 %v3279
    %3420 = vmatprep.subr.bf16.mxu0 %v3288
    %3421 = vmatpush1.bf16.msra.mxu0 %v3287
    %3422 = vmatprep.subr.bf16.mxu0 %v3296
    %3423 = vmatpush1.bf16.msra.mxu0 %v3295
    %3424 = vmatprep.subr.bf16.mxu0 %v3304
    %3425 = vmatpush1.bf16.msra.mxu0 %v3303
    %3426 = vmatprep.mubr.bf16.mxu0 %v3054
    %3427 = vmatmul.mubr.bf16.gmra.mrb[0].mxu0 %v3053
    %v3428 = vpop.f32.mrb[0].mxu0
    %v3429 = vadd.f32 %v3388, %v3428
    %v3430 = vpop.f32.mrb[0].mxu0
    %v3431 = vadd.f32 %v3390, %v3430
    %v3432 = vpop.f32.mrb[0].mxu0
    %v3433 = vpop.f32.mrb[0].mxu0
    %3434 = vdwg.mxu0
    %3435 = vmatprep.subr.bf16.mxu0 %v3058
    %3436 = vmatpush1.bf16.msra.mxu0 %v3057
    %3437 = vmatprep.subr.bf16.mxu0 %v3066
    %3438 = vmatpush1.bf16.msra.mxu0 %v3065
    %3439 = vmatprep.subr.bf16.mxu0 %v3074
    %3440 = vmatpush1.bf16.msra.mxu0 %v3073
    %3441 = vmatprep.subr.bf16.mxu0 %v3082
    %3442 = vmatpush1.bf16.msra.mxu0 %v3081
    %3443 = vmatprep.subr.bf16.mxu0 %v3090
    %3444 = vmatpush1.bf16.msra.mxu0 %v3089
    %3445 = vmatprep.subr.bf16.mxu0 %v3098
    %3446 = vmatpush1.bf16.msra.mxu0 %v3097
    %3447 = vmatprep.subr.bf16.mxu0 %v3106
    %3448 = vmatpush1.bf16.msra.mxu0 %v3105
    %3449 = vmatprep.subr.bf16.mxu0 %v3114
    %3450 = vmatpush1.bf16.msra.mxu0 %v3113
    %3451 = vmatprep.subr.bf16.mxu0 %v3122
    %3452 = vmatpush1.bf16.msra.mxu0 %v3121
    %3453 = vmatprep.subr.bf16.mxu0 %v3130
    %3454 = vmatpush1.bf16.msra.mxu0 %v3129
    %3455 = vmatprep.subr.bf16.mxu0 %v3138
    %3456 = vmatpush1.bf16.msra.mxu0 %v3137
    %3457 = vmatprep.subr.bf16.mxu0 %v3146
    %3458 = vmatpush1.bf16.msra.mxu0 %v3145
    %3459 = vmatprep.subr.bf16.mxu0 %v3154
    %3460 = vmatpush1.bf16.msra.mxu0 %v3153
    %3461 = vmatprep.subr.bf16.mxu0 %v3162
    %3462 = vmatpush1.bf16.msra.mxu0 %v3161
    %3463 = vmatprep.subr.bf16.mxu0 %v3170
    %3464 = vmatpush1.bf16.msra.mxu0 %v3169
    %3465 = vmatprep.subr.bf16.mxu0 %v3178
    %3466 = vmatpush1.bf16.msra.mxu0 %v3177
    %3467 = vmatprep.mubr.bf16.mxu0 %v3052
    %3468 = vmatmul.mubr.bf16.gmra.mrb[0].mxu0 %v3051
    %v3469 = vpop.f32.mrb[0].mxu0
    %v3470 = vadd.f32 %v3324, %v3469
    %v3471 = vpop.f32.mrb[0].mxu0
    %v3472 = vadd.f32 %v3328, %v3471
    %v3473 = vpop.f32.mrb[0].mxu0
    %v3474 = vpop.f32.mrb[0].mxu0
    %3475 = vdwg.mxu0
    %3476 = vmatprep.subr.bf16.mxu0 %v3186
    %3477 = vmatpush1.bf16.msra.mxu0 %v3185
    %3478 = vmatprep.subr.bf16.mxu0 %v3194
    %3479 = vmatpush1.bf16.msra.mxu0 %v3193
    %3480 = vmatprep.subr.bf16.mxu0 %v3202
    %3481 = vmatpush1.bf16.msra.mxu0 %v3201
    %3482 = vmatprep.subr.bf16.mxu0 %v3210
    %3483 = vmatpush1.bf16.msra.mxu0 %v3209
    %3484 = vmatprep.subr.bf16.mxu0 %v3218
    %3485 = vmatpush1.bf16.msra.mxu0 %v3217
    %3486 = vmatprep.subr.bf16.mxu0 %v3226
    %3487 = vmatpush1.bf16.msra.mxu0 %v3225
    %3488 = vmatprep.subr.bf16.mxu0 %v3234
    %3489 = vmatpush1.bf16.msra.mxu0 %v3233
    %3490 = vmatprep.subr.bf16.mxu0 %v3242
    %3491 = vmatpush1.bf16.msra.mxu0 %v3241
    %3492 = vmatprep.subr.bf16.mxu0 %v3250
    %3493 = vmatpush1.bf16.msra.mxu0 %v3249
    %3494 = vmatprep.subr.bf16.mxu0 %v3258
    %3495 = vmatpush1.bf16.msra.mxu0 %v3257
    %3496 = vmatprep.subr.bf16.mxu0 %v3266
    %3497 = vmatpush1.bf16.msra.mxu0 %v3265
    %3498 = vmatprep.subr.bf16.mxu0 %v3274
    %3499 = vmatpush1.bf16.msra.mxu0 %v3273
    %3500 = vmatprep.subr.bf16.mxu0 %v3282
    %3501 = vmatpush1.bf16.msra.mxu0 %v3281
    %3502 = vmatprep.subr.bf16.mxu0 %v3290
    %3503 = vmatpush1.bf16.msra.mxu0 %v3289
    %3504 = vmatprep.subr.bf16.mxu0 %v3298
    %3505 = vmatpush1.bf16.msra.mxu0 %v3297
    %3506 = vmatprep.subr.bf16.mxu0 %v3306
    %3507 = vmatpush1.bf16.msra.mxu0 %v3305
    %3508 = vmatprep.mubr.bf16.mxu0 %v3054
    %3509 = vmatmul.mubr.bf16.gmra.mrb[0].mxu0 %v3053
    %v3510 = vpop.f32.mrb[0].mxu0
    %v3511 = vadd.f32 %v3470, %v3510
    %v3512 = vpop.f32.mrb[0].mxu0
    %v3513 = vadd.f32 %v3472, %v3512
    %v3514 = vpop.f32.mrb[0].mxu0
    %v3515 = vpop.f32.mrb[0].mxu0
    %3516 = vdwg.mxu0
    %3517 = vmatprep.subr.bf16.mxu0 %v3060
    %3518 = vmatpush1.bf16.msra.mxu0 %v3059
    %3519 = vmatprep.subr.bf16.mxu0 %v3068
    %3520 = vmatpush1.bf16.msra.mxu0 %v3067
    %3521 = vmatprep.subr.bf16.mxu0 %v3076
    %3522 = vmatpush1.bf16.msra.mxu0 %v3075
    %3523 = vmatprep.subr.bf16.mxu0 %v3084
    %3524 = vmatpush1.bf16.msra.mxu0 %v3083
    %3525 = vmatprep.subr.bf16.mxu0 %v3092
    %3526 = vmatpush1.bf16.msra.mxu0 %v3091
    %3527 = vmatprep.subr.bf16.mxu0 %v3100
    %3528 = vmatpush1.bf16.msra.mxu0 %v3099
    %3529 = vmatprep.subr.bf16.mxu0 %v3108
    %3530 = vmatpush1.bf16.msra.mxu0 %v3107
    %3531 = vmatprep.subr.bf16.mxu0 %v3116
    %3532 = vmatpush1.bf16.msra.mxu0 %v3115
    %3533 = vmatprep.subr.bf16.mxu0 %v3124
    %3534 = vmatpush1.bf16.msra.mxu0 %v3123
    %3535 = vmatprep.subr.bf16.mxu0 %v3132
    %3536 = vmatpush1.bf16.msra.mxu0 %v3131
    %3537 = vmatprep.subr.bf16.mxu0 %v3140
    %3538 = vmatpush1.bf16.msra.mxu0 %v3139
    %3539 = vmatprep.subr.bf16.mxu0 %v3148
    %3540 = vmatpush1.bf16.msra.mxu0 %v3147
    %3541 = vmatprep.subr.bf16.mxu0 %v3156
    %3542 = vmatpush1.bf16.msra.mxu0 %v3155
    %3543 = vmatprep.subr.bf16.mxu0 %v3164
    %3544 = vmatpush1.bf16.msra.mxu0 %v3163
    %3545 = vmatprep.subr.bf16.mxu0 %v3172
    %3546 = vmatpush1.bf16.msra.mxu0 %v3171
    %3547 = vmatprep.subr.bf16.mxu0 %v3180
    %3548 = vmatpush1.bf16.msra.mxu0 %v3179
    %3549 = vmatprep.mubr.bf16.mxu0 %v3052
    %3550 = vmatmul.mubr.bf16.gmra.mrb[0].mxu0 %v3051
    %v3551 = vpop.f32.mrb[0].mxu0
    %v3552 = vadd.f32 %v3332, %v3551
    %v3553 = vpop.f32.mrb[0].mxu0
    %v3554 = vadd.f32 %v3336, %v3553
    %v3555 = vpop.f32.mrb[0].mxu0
    %v3556 = vpop.f32.mrb[0].mxu0
    %3557 = vdwg.mxu0
    %3558 = vmatprep.subr.bf16.mxu0 %v3188
    %3559 = vmatpush1.bf16.msra.mxu0 %v3187
    %3560 = vmatprep.subr.bf16.mxu0 %v3196
    %3561 = vmatpush1.bf16.msra.mxu0 %v3195
    %3562 = vmatprep.subr.bf16.mxu0 %v3204
    %3563 = vmatpush1.bf16.msra.mxu0 %v3203
    %3564 = vmatprep.subr.bf16.mxu0 %v3212
    %3565 = vmatpush1.bf16.msra.mxu0 %v3211
    %3566 = vmatprep.subr.bf16.mxu0 %v3220
    %3567 = vmatpush1.bf16.msra.mxu0 %v3219
    %3568 = vmatprep.subr.bf16.mxu0 %v3228
    %3569 = vmatpush1.bf16.msra.mxu0 %v3227
    %3570 = vmatprep.subr.bf16.mxu0 %v3236
    %3571 = vmatpush1.bf16.msra.mxu0 %v3235
    %3572 = vmatprep.subr.bf16.mxu0 %v3244
    %3573 = vmatpush1.bf16.msra.mxu0 %v3243
    %3574 = vmatprep.subr.bf16.mxu0 %v3252
    %3575 = vmatpush1.bf16.msra.mxu0 %v3251
    %3576 = vmatprep.subr.bf16.mxu0 %v3260
    %3577 = vmatpush1.bf16.msra.mxu0 %v3259
    %3578 = vmatprep.subr.bf16.mxu0 %v3268
    %3579 = vmatpush1.bf16.msra.mxu0 %v3267
    %3580 = vmatprep.subr.bf16.mxu0 %v3276
    %3581 = vmatpush1.bf16.msra.mxu0 %v3275
    %3582 = vmatprep.subr.bf16.mxu0 %v3284
    %3583 = vmatpush1.bf16.msra.mxu0 %v3283
    %3584 = vmatprep.subr.bf16.mxu0 %v3292
    %3585 = vmatpush1.bf16.msra.mxu0 %v3291
    %3586 = vmatprep.subr.bf16.mxu0 %v3300
    %3587 = vmatpush1.bf16.msra.mxu0 %v3299
    %3588 = vmatprep.subr.bf16.mxu0 %v3308
    %3589 = vmatpush1.bf16.msra.mxu0 %v3307
    %3590 = vmatprep.mubr.bf16.mxu0 %v3054
    %3591 = vmatmul.mubr.bf16.gmra.mrb[0].mxu0 %v3053
    %v3592 = vpop.f32.mrb[0].mxu0
    %v3593 = vadd.f32 %v3552, %v3592
    %v3594 = vpop.f32.mrb[0].mxu0
    %v3595 = vadd.f32 %v3554, %v3594
    %v3596 = vpop.f32.mrb[0].mxu0
    %v3597 = vpop.f32.mrb[0].mxu0
    %3598 = vdwg.mxu0
    %3599 = vmatprep.subr.bf16.mxu0 %v3062
    %3600 = vmatpush1.bf16.msra.mxu0 %v3061
    %3601 = vmatprep.subr.bf16.mxu0 %v3070
    %3602 = vmatpush1.bf16.msra.mxu0 %v3069
    %3603 = vmatprep.subr.bf16.mxu0 %v3078
    %3604 = vmatpush1.bf16.msra.mxu0 %v3077
    %3605 = vmatprep.subr.bf16.mxu0 %v3086
    %3606 = vmatpush1.bf16.msra.mxu0 %v3085
    %3607 = vmatprep.subr.bf16.mxu0 %v3094
    %3608 = vmatpush1.bf16.msra.mxu0 %v3093
    %3609 = vmatprep.subr.bf16.mxu0 %v3102
    %3610 = vmatpush1.bf16.msra.mxu0 %v3101
    %3611 = vmatprep.subr.bf16.mxu0 %v3110
    %3612 = vmatpush1.bf16.msra.mxu0 %v3109
    %3613 = vmatprep.subr.bf16.mxu0 %v3118
    %3614 = vmatpush1.bf16.msra.mxu0 %v3117
    %3615 = vmatprep.subr.bf16.mxu0 %v3126
    %3616 = vmatpush1.bf16.msra.mxu0 %v3125
    %3617 = vmatprep.subr.bf16.mxu0 %v3134
    %3618 = vmatpush1.bf16.msra.mxu0 %v3133
    %3619 = vmatprep.subr.bf16.mxu0 %v3142
    %3620 = vmatpush1.bf16.msra.mxu0 %v3141
    %3621 = vmatprep.subr.bf16.mxu0 %v3150
    %3622 = vmatpush1.bf16.msra.mxu0 %v3149
    %3623 = vmatprep.subr.bf16.mxu0 %v3158
    %3624 = vmatpush1.bf16.msra.mxu0 %v3157
    %3625 = vmatprep.subr.bf16.mxu0 %v3166
    %3626 = vmatpush1.bf16.msra.mxu0 %v3165
    %3627 = vmatprep.subr.bf16.mxu0 %v3174
    %3628 = vmatpush1.bf16.msra.mxu0 %v3173
    %3629 = vmatprep.subr.bf16.mxu0 %v3182
    %3630 = vmatpush1.bf16.msra.mxu0 %v3181
    %3631 = vmatprep.mubr.bf16.mxu0 %v3052
    %3632 = vmatmul.mubr.bf16.gmra.mrb[0].mxu0 %v3051
    %v3633 = vpop.f32.mrb[0].mxu0
    %v3634 = vadd.f32 %v3340, %v3633
    %v3635 = vpop.f32.mrb[0].mxu0
    %v3636 = vadd.f32 %v3344, %v3635
    %v3637 = vpop.f32.mrb[0].mxu0
    %v3638 = vpop.f32.mrb[0].mxu0
    %3639 = vdwg.mxu0
    %3640 = vmatprep.subr.bf16.mxu0 %v3190
    %3641 = vmatpush1.bf16.msra.mxu0 %v3189
    %3642 = vmatprep.subr.bf16.mxu0 %v3198
    %3643 = vmatpush1.bf16.msra.mxu0 %v3197
    %3644 = vmatprep.subr.bf16.mxu0 %v3206
    %3645 = vmatpush1.bf16.msra.mxu0 %v3205
    %3646 = vmatprep.subr.bf16.mxu0 %v3214
    %3647 = vmatpush1.bf16.msra.mxu0 %v3213
    %3648 = vmatprep.subr.bf16.mxu0 %v3222
    %3649 = vmatpush1.bf16.msra.mxu0 %v3221
    %3650 = vmatprep.subr.bf16.mxu0 %v3230
    %3651 = vmatpush1.bf16.msra.mxu0 %v3229
    %3652 = vmatprep.subr.bf16.mxu0 %v3238
    %3653 = vmatpush1.bf16.msra.mxu0 %v3237
    %3654 = vmatprep.subr.bf16.mxu0 %v3246
    %3655 = vmatpush1.bf16.msra.mxu0 %v3245
    %3656 = vmatprep.subr.bf16.mxu0 %v3254
    %3657 = vmatpush1.bf16.msra.mxu0 %v3253
    %3658 = vmatprep.subr.bf16.mxu0 %v3262
    %3659 = vmatpush1.bf16.msra.mxu0 %v3261
    %3660 = vmatprep.subr.bf16.mxu0 %v3270
    %3661 = vmatpush1.bf16.msra.mxu0 %v3269
    %3662 = vmatprep.subr.bf16.mxu0 %v3278
    %3663 = vmatpush1.bf16.msra.mxu0 %v3277
    %3664 = vmatprep.subr.bf16.mxu0 %v3286
    %3665 = vmatpush1.bf16.msra.mxu0 %v3285
    %3666 = vmatprep.subr.bf16.mxu0 %v3294
    %3667 = vmatpush1.bf16.msra.mxu0 %v3293
    %3668 = vmatprep.subr.bf16.mxu0 %v3302
    %3669 = vmatpush1.bf16.msra.mxu0 %v3301
    %3670 = vmatprep.subr.bf16.mxu0 %v3310
    %3671 = vmatpush1.bf16.msra.mxu0 %v3309
    %3672 = vmatprep.mubr.bf16.mxu0 %v3054
    %3673 = vmatmul.mubr.bf16.gmra.mrb[0].mxu0 %v3053
    %v3674 = vpop.f32.mrb[0].mxu0
    %v3675 = vadd.f32 %v3634, %v3674
    %v3676 = vpop.f32.mrb[0].mxu0
    %v3677 = vadd.f32 %v3636, %v3676
    %v3678 = vpop.f32.mrb[0].mxu0
    %v3679 = vpop.f32.mrb[0].mxu0
    %3680 = vdwg.mxu0
    %v3681 = vmax.f32 %v3429, 0.0
    %v3682 = vmax.f32 %v3431, 0.0
    %v3683 = vmax.f32 %v3511, 0.0
    %v3684 = vmax.f32 %v3513, 0.0
    %v3685 = vmax.f32 %v3593, 0.0
    %v3686 = vmax.f32 %v3595, 0.0
    %v3687 = vmax.f32 %v3675, 0.0
    %v3688 = vmax.f32 %v3677, 0.0
    %s3689 = smul.u32 4, 128
    %s3690 = smul.u32 %s3689, 8
    %s3691 = sshll.u32 %s3690, 4
    %3692 = dma.done %s299, %s3691
    %v3693 = vpack.c.bf16 %v3681, %v3681
    %v3694 = vpack.c.bf16 %v3682, %v3682
    %v3695 = vpack.c.bf16 %v3683, %v3683
    %v3696 = vpack.c.bf16 %v3684, %v3684
    %v3697 = vpack.c.bf16 %v3685, %v3685
    %v3698 = vpack.c.bf16 %v3686, %v3686
    %v3699 = vpack.c.bf16 %v3687, %v3687
    %v3700 = vpack.c.bf16 %v3688, %v3688
    %v3701 = vld [vmem:[#allocation3] sm:$0xff]
    %v3702 = vld [vmem:[#allocation3 + $0x8] sm:$0xff]
    %v3703 = vld [vmem:[#allocation3 + $0x10] sm:$0xff]
    %v3704 = vld [vmem:[#allocation3 + $0x18] sm:$0xff]
    %v3705 = vld [vmem:[#allocation3 + $0x20] sm:$0xff]
    %v3706 = vld [vmem:[#allocation3 + $0x28] sm:$0xff]
    %v3707 = vld [vmem:[#allocation3 + $0x30] sm:$0xff]
    %v3708 = vld [vmem:[#allocation3 + $0x38] sm:$0xff]
    %v3709 = vld [vmem:[#allocation3 + $0x40] sm:$0xff]
    %v3710 = vld [vmem:[#allocation3 + $0x48] sm:$0xff]
    %v3711 = vld [vmem:[#allocation3 + $0x50] sm:$0xff]
    %v3712 = vld [vmem:[#allocation3 + $0x58] sm:$0xff]
    %v3713 = vld [vmem:[#allocation3 + $0x60] sm:$0xff]
    %v3714 = vld [vmem:[#allocation3 + $0x68] sm:$0xff]
    %v3715 = vld [vmem:[#allocation3 + $0x70] sm:$0xff]
    %v3716 = vld [vmem:[#allocation3 + $0x78] sm:$0xff]
    %v3717 = vld [vmem:[#allocation3 + $0x80] sm:$0xff]
    %v3718 = vld [vmem:[#allocation3 + $0x88] sm:$0xff]
    %v3719 = vld [vmem:[#allocation3 + $0x90] sm:$0xff]
    %v3720 = vld [vmem:[#allocation3 + $0x98] sm:$0xff]
    %v3721 = vld [vmem:[#allocation3 + $0xa0] sm:$0xff]
    %v3722 = vld [vmem:[#allocation3 + $0xa8] sm:$0xff]
    %v3723 = vld [vmem:[#allocation3 + $0xb0] sm:$0xff]
    %v3724 = vld [vmem:[#allocation3 + $0xb8] sm:$0xff]
    %v3725 = vld [vmem:[#allocation3 + $0xc0] sm:$0xff]
    %v3726 = vld [vmem:[#allocation3 + $0xc8] sm:$0xff]
    %v3727 = vld [vmem:[#allocation3 + $0xd0] sm:$0xff]
    %v3728 = vld [vmem:[#allocation3 + $0xd8] sm:$0xff]
    %v3729 = vld [vmem:[#allocation3 + $0xe0] sm:$0xff]
    %v3730 = vld [vmem:[#allocation3 + $0xe8] sm:$0xff]
    %v3731 = vld [vmem:[#allocation3 + $0xf0] sm:$0xff]
    %v3732 = vld [vmem:[#allocation3 + $0xf8] sm:$0xff]
    %v3733 = vld [vmem:[#allocation3 + $0x100] sm:$0xff]
    %v3734 = vld [vmem:[#allocation3 + $0x108] sm:$0xff]
    %v3735 = vld [vmem:[#allocation3 + $0x110] sm:$0xff]
    %v3736 = vld [vmem:[#allocation3 + $0x118] sm:$0xff]
    %v3737 = vld [vmem:[#allocation3 + $0x120] sm:$0xff]
    %v3738 = vld [vmem:[#allocation3 + $0x128] sm:$0xff]
    %v3739 = vld [vmem:[#allocation3 + $0x130] sm:$0xff]
    %v3740 = vld [vmem:[#allocation3 + $0x138] sm:$0xff]
    %v3741 = vld [vmem:[#allocation3 + $0x140] sm:$0xff]
    %v3742 = vld [vmem:[#allocation3 + $0x148] sm:$0xff]
    %v3743 = vld [vmem:[#allocation3 + $0x150] sm:$0xff]
    %v3744 = vld [vmem:[#allocation3 + $0x158] sm:$0xff]
    %v3745 = vld [vmem:[#allocation3 + $0x160] sm:$0xff]
    %v3746 = vld [vmem:[#allocation3 + $0x168] sm:$0xff]
    %v3747 = vld [vmem:[#allocation3 + $0x170] sm:$0xff]
    %v3748 = vld [vmem:[#allocation3 + $0x178] sm:$0xff]
    %v3749 = vld [vmem:[#allocation3 + $0x180] sm:$0xff]
    %v3750 = vld [vmem:[#allocation3 + $0x188] sm:$0xff]
    %v3751 = vld [vmem:[#allocation3 + $0x190] sm:$0xff]
    %v3752 = vld [vmem:[#allocation3 + $0x198] sm:$0xff]
    %v3753 = vld [vmem:[#allocation3 + $0x1a0] sm:$0xff]
    %v3754 = vld [vmem:[#allocation3 + $0x1a8] sm:$0xff]
    %v3755 = vld [vmem:[#allocation3 + $0x1b0] sm:$0xff]
    %v3756 = vld [vmem:[#allocation3 + $0x1b8] sm:$0xff]
    %v3757 = vld [vmem:[#allocation3 + $0x1c0] sm:$0xff]
    %v3758 = vld [vmem:[#allocation3 + $0x1c8] sm:$0xff]
    %v3759 = vld [vmem:[#allocation3 + $0x1d0] sm:$0xff]
    %v3760 = vld [vmem:[#allocation3 + $0x1d8] sm:$0xff]
    %v3761 = vld [vmem:[#allocation3 + $0x1e0] sm:$0xff]
    %v3762 = vld [vmem:[#allocation3 + $0x1e8] sm:$0xff]
    %v3763 = vld [vmem:[#allocation3 + $0x1f0] sm:$0xff]
    %v3764 = vld [vmem:[#allocation3 + $0x1f8] sm:$0xff]
    %v3765 = vld [vmem:[#allocation3 + $0x200] sm:$0xff]
    %v3766 = vld [vmem:[#allocation3 + $0x208] sm:$0xff]
    %v3767 = vld [vmem:[#allocation3 + $0x210] sm:$0xff]
    %v3768 = vld [vmem:[#allocation3 + $0x218] sm:$0xff]
    %v3769 = vld [vmem:[#allocation3 + $0x220] sm:$0xff]
    %v3770 = vld [vmem:[#allocation3 + $0x228] sm:$0xff]
    %v3771 = vld [vmem:[#allocation3 + $0x230] sm:$0xff]
    %v3772 = vld [vmem:[#allocation3 + $0x238] sm:$0xff]
    %v3773 = vld [vmem:[#allocation3 + $0x240] sm:$0xff]
    %v3774 = vld [vmem:[#allocation3 + $0x248] sm:$0xff]
    %v3775 = vld [vmem:[#allocation3 + $0x250] sm:$0xff]
    %v3776 = vld [vmem:[#allocation3 + $0x258] sm:$0xff]
    %v3777 = vld [vmem:[#allocation3 + $0x260] sm:$0xff]
    %v3778 = vld [vmem:[#allocation3 + $0x268] sm:$0xff]
    %v3779 = vld [vmem:[#allocation3 + $0x270] sm:$0xff]
    %v3780 = vld [vmem:[#allocation3 + $0x278] sm:$0xff]
    %v3781 = vld [vmem:[#allocation3 + $0x280] sm:$0xff]
    %v3782 = vld [vmem:[#allocation3 + $0x288] sm:$0xff]
    %v3783 = vld [vmem:[#allocation3 + $0x290] sm:$0xff]
    %v3784 = vld [vmem:[#allocation3 + $0x298] sm:$0xff]
    %v3785 = vld [vmem:[#allocation3 + $0x2a0] sm:$0xff]
    %v3786 = vld [vmem:[#allocation3 + $0x2a8] sm:$0xff]
    %v3787 = vld [vmem:[#allocation3 + $0x2b0] sm:$0xff]
    %v3788 = vld [vmem:[#allocation3 + $0x2b8] sm:$0xff]
    %v3789 = vld [vmem:[#allocation3 + $0x2c0] sm:$0xff]
    %v3790 = vld [vmem:[#allocation3 + $0x2c8] sm:$0xff]
    %v3791 = vld [vmem:[#allocation3 + $0x2d0] sm:$0xff]
    %v3792 = vld [vmem:[#allocation3 + $0x2d8] sm:$0xff]
    %v3793 = vld [vmem:[#allocation3 + $0x2e0] sm:$0xff]
    %v3794 = vld [vmem:[#allocation3 + $0x2e8] sm:$0xff]
    %v3795 = vld [vmem:[#allocation3 + $0x2f0] sm:$0xff]
    %v3796 = vld [vmem:[#allocation3 + $0x2f8] sm:$0xff]
    %v3797 = vld [vmem:[#allocation3 + $0x300] sm:$0xff]
    %v3798 = vld [vmem:[#allocation3 + $0x308] sm:$0xff]
    %v3799 = vld [vmem:[#allocation3 + $0x310] sm:$0xff]
    %v3800 = vld [vmem:[#allocation3 + $0x318] sm:$0xff]
    %v3801 = vld [vmem:[#allocation3 + $0x320] sm:$0xff]
    %v3802 = vld [vmem:[#allocation3 + $0x328] sm:$0xff]
    %v3803 = vld [vmem:[#allocation3 + $0x330] sm:$0xff]
    %v3804 = vld [vmem:[#allocation3 + $0x338] sm:$0xff]
    %v3805 = vld [vmem:[#allocation3 + $0x340] sm:$0xff]
    %v3806 = vld [vmem:[#allocation3 + $0x348] sm:$0xff]
    %v3807 = vld [vmem:[#allocation3 + $0x350] sm:$0xff]
    %v3808 = vld [vmem:[#allocation3 + $0x358] sm:$0xff]
    %v3809 = vld [vmem:[#allocation3 + $0x360] sm:$0xff]
    %v3810 = vld [vmem:[#allocation3 + $0x368] sm:$0xff]
    %v3811 = vld [vmem:[#allocation3 + $0x370] sm:$0xff]
    %v3812 = vld [vmem:[#allocation3 + $0x378] sm:$0xff]
    %v3813 = vld [vmem:[#allocation3 + $0x380] sm:$0xff]
    %v3814 = vld [vmem:[#allocation3 + $0x388] sm:$0xff]
    %v3815 = vld [vmem:[#allocation3 + $0x390] sm:$0xff]
    %v3816 = vld [vmem:[#allocation3 + $0x398] sm:$0xff]
    %v3817 = vld [vmem:[#allocation3 + $0x3a0] sm:$0xff]
    %v3818 = vld [vmem:[#allocation3 + $0x3a8] sm:$0xff]
    %v3819 = vld [vmem:[#allocation3 + $0x3b0] sm:$0xff]
    %v3820 = vld [vmem:[#allocation3 + $0x3b8] sm:$0xff]
    %v3821 = vld [vmem:[#allocation3 + $0x3c0] sm:$0xff]
    %v3822 = vld [vmem:[#allocation3 + $0x3c8] sm:$0xff]
    %v3823 = vld [vmem:[#allocation3 + $0x3d0] sm:$0xff]
    %v3824 = vld [vmem:[#allocation3 + $0x3d8] sm:$0xff]
    %v3825 = vld [vmem:[#allocation3 + $0x3e0] sm:$0xff]
    %v3826 = vld [vmem:[#allocation3 + $0x3e8] sm:$0xff]
    %v3827 = vld [vmem:[#allocation3 + $0x3f0] sm:$0xff]
    %v3828 = vld [vmem:[#allocation3 + $0x3f8] sm:$0xff]
    %v3829 = vld [vmem:[#allocation3 + $0x400] sm:$0xff]
    %v3830 = vld [vmem:[#allocation3 + $0x408] sm:$0xff]
    %v3831 = vld [vmem:[#allocation3 + $0x410] sm:$0xff]
    %v3832 = vld [vmem:[#allocation3 + $0x418] sm:$0xff]
    %v3833 = vld [vmem:[#allocation3 + $0x420] sm:$0xff]
    %v3834 = vld [vmem:[#allocation3 + $0x428] sm:$0xff]
    %v3835 = vld [vmem:[#allocation3 + $0x430] sm:$0xff]
    %v3836 = vld [vmem:[#allocation3 + $0x438] sm:$0xff]
    %v3837 = vld [vmem:[#allocation3 + $0x440] sm:$0xff]
    %v3838 = vld [vmem:[#allocation3 + $0x448] sm:$0xff]
    %v3839 = vld [vmem:[#allocation3 + $0x450] sm:$0xff]
    %v3840 = vld [vmem:[#allocation3 + $0x458] sm:$0xff]
    %v3841 = vld [vmem:[#allocation3 + $0x460] sm:$0xff]
    %v3842 = vld [vmem:[#allocation3 + $0x468] sm:$0xff]
    %v3843 = vld [vmem:[#allocation3 + $0x470] sm:$0xff]
    %v3844 = vld [vmem:[#allocation3 + $0x478] sm:$0xff]
    %v3845 = vld [vmem:[#allocation3 + $0x480] sm:$0xff]
    %v3846 = vld [vmem:[#allocation3 + $0x488] sm:$0xff]
    %v3847 = vld [vmem:[#allocation3 + $0x490] sm:$0xff]
    %v3848 = vld [vmem:[#allocation3 + $0x498] sm:$0xff]
    %v3849 = vld [vmem:[#allocation3 + $0x4a0] sm:$0xff]
    %v3850 = vld [vmem:[#allocation3 + $0x4a8] sm:$0xff]
    %v3851 = vld [vmem:[#allocation3 + $0x4b0] sm:$0xff]
    %v3852 = vld [vmem:[#allocation3 + $0x4b8] sm:$0xff]
    %v3853 = vld [vmem:[#allocation3 + $0x4c0] sm:$0xff]
    %v3854 = vld [vmem:[#allocation3 + $0x4c8] sm:$0xff]
    %v3855 = vld [vmem:[#allocation3 + $0x4d0] sm:$0xff]
    %v3856 = vld [vmem:[#allocation3 + $0x4d8] sm:$0xff]
    %v3857 = vld [vmem:[#allocation3 + $0x4e0] sm:$0xff]
    %v3858 = vld [vmem:[#allocation3 + $0x4e8] sm:$0xff]
    %v3859 = vld [vmem:[#allocation3 + $0x4f0] sm:$0xff]
    %v3860 = vld [vmem:[#allocation3 + $0x4f8] sm:$0xff]
    %v3861 = vld [vmem:[#allocation3 + $0x500] sm:$0xff]
    %v3862 = vld [vmem:[#allocation3 + $0x508] sm:$0xff]
    %v3863 = vld [vmem:[#allocation3 + $0x510] sm:$0xff]
    %v3864 = vld [vmem:[#allocation3 + $0x518] sm:$0xff]
    %v3865 = vld [vmem:[#allocation3 + $0x520] sm:$0xff]
    %v3866 = vld [vmem:[#allocation3 + $0x528] sm:$0xff]
    %v3867 = vld [vmem:[#allocation3 + $0x530] sm:$0xff]
    %v3868 = vld [vmem:[#allocation3 + $0x538] sm:$0xff]
    %v3869 = vld [vmem:[#allocation3 + $0x540] sm:$0xff]
    %v3870 = vld [vmem:[#allocation3 + $0x548] sm:$0xff]
    %v3871 = vld [vmem:[#allocation3 + $0x550] sm:$0xff]
    %v3872 = vld [vmem:[#allocation3 + $0x558] sm:$0xff]
    %v3873 = vld [vmem:[#allocation3 + $0x560] sm:$0xff]
    %v3874 = vld [vmem:[#allocation3 + $0x568] sm:$0xff]
    %v3875 = vld [vmem:[#allocation3 + $0x570] sm:$0xff]
    %v3876 = vld [vmem:[#allocation3 + $0x578] sm:$0xff]
    %v3877 = vld [vmem:[#allocation3 + $0x580] sm:$0xff]
    %v3878 = vld [vmem:[#allocation3 + $0x588] sm:$0xff]
    %v3879 = vld [vmem:[#allocation3 + $0x590] sm:$0xff]
    %v3880 = vld [vmem:[#allocation3 + $0x598] sm:$0xff]
    %v3881 = vld [vmem:[#allocation3 + $0x5a0] sm:$0xff]
    %v3882 = vld [vmem:[#allocation3 + $0x5a8] sm:$0xff]
    %v3883 = vld [vmem:[#allocation3 + $0x5b0] sm:$0xff]
    %v3884 = vld [vmem:[#allocation3 + $0x5b8] sm:$0xff]
    %v3885 = vld [vmem:[#allocation3 + $0x5c0] sm:$0xff]
    %v3886 = vld [vmem:[#allocation3 + $0x5c8] sm:$0xff]
    %v3887 = vld [vmem:[#allocation3 + $0x5d0] sm:$0xff]
    %v3888 = vld [vmem:[#allocation3 + $0x5d8] sm:$0xff]
    %v3889 = vld [vmem:[#allocation3 + $0x5e0] sm:$0xff]
    %v3890 = vld [vmem:[#allocation3 + $0x5e8] sm:$0xff]
    %v3891 = vld [vmem:[#allocation3 + $0x5f0] sm:$0xff]
    %v3892 = vld [vmem:[#allocation3 + $0x5f8] sm:$0xff]
    %v3893 = vld [vmem:[#allocation3 + $0x600] sm:$0xff]
    %v3894 = vld [vmem:[#allocation3 + $0x608] sm:$0xff]
    %v3895 = vld [vmem:[#allocation3 + $0x610] sm:$0xff]
    %v3896 = vld [vmem:[#allocation3 + $0x618] sm:$0xff]
    %v3897 = vld [vmem:[#allocation3 + $0x620] sm:$0xff]
    %v3898 = vld [vmem:[#allocation3 + $0x628] sm:$0xff]
    %v3899 = vld [vmem:[#allocation3 + $0x630] sm:$0xff]
    %v3900 = vld [vmem:[#allocation3 + $0x638] sm:$0xff]
    %v3901 = vld [vmem:[#allocation3 + $0x640] sm:$0xff]
    %v3902 = vld [vmem:[#allocation3 + $0x648] sm:$0xff]
    %v3903 = vld [vmem:[#allocation3 + $0x650] sm:$0xff]
    %v3904 = vld [vmem:[#allocation3 + $0x658] sm:$0xff]
    %v3905 = vld [vmem:[#allocation3 + $0x660] sm:$0xff]
    %v3906 = vld [vmem:[#allocation3 + $0x668] sm:$0xff]
    %v3907 = vld [vmem:[#allocation3 + $0x670] sm:$0xff]
    %v3908 = vld [vmem:[#allocation3 + $0x678] sm:$0xff]
    %v3909 = vld [vmem:[#allocation3 + $0x680] sm:$0xff]
    %v3910 = vld [vmem:[#allocation3 + $0x688] sm:$0xff]
    %v3911 = vld [vmem:[#allocation3 + $0x690] sm:$0xff]
    %v3912 = vld [vmem:[#allocation3 + $0x698] sm:$0xff]
    %v3913 = vld [vmem:[#allocation3 + $0x6a0] sm:$0xff]
    %v3914 = vld [vmem:[#allocation3 + $0x6a8] sm:$0xff]
    %v3915 = vld [vmem:[#allocation3 + $0x6b0] sm:$0xff]
    %v3916 = vld [vmem:[#allocation3 + $0x6b8] sm:$0xff]
    %v3917 = vld [vmem:[#allocation3 + $0x6c0] sm:$0xff]
    %v3918 = vld [vmem:[#allocation3 + $0x6c8] sm:$0xff]
    %v3919 = vld [vmem:[#allocation3 + $0x6d0] sm:$0xff]
    %v3920 = vld [vmem:[#allocation3 + $0x6d8] sm:$0xff]
    %v3921 = vld [vmem:[#allocation3 + $0x6e0] sm:$0xff]
    %v3922 = vld [vmem:[#allocation3 + $0x6e8] sm:$0xff]
    %v3923 = vld [vmem:[#allocation3 + $0x6f0] sm:$0xff]
    %v3924 = vld [vmem:[#allocation3 + $0x6f8] sm:$0xff]
    %v3925 = vld [vmem:[#allocation3 + $0x700] sm:$0xff]
    %v3926 = vld [vmem:[#allocation3 + $0x708] sm:$0xff]
    %v3927 = vld [vmem:[#allocation3 + $0x710] sm:$0xff]
    %v3928 = vld [vmem:[#allocation3 + $0x718] sm:$0xff]
    %v3929 = vld [vmem:[#allocation3 + $0x720] sm:$0xff]
    %v3930 = vld [vmem:[#allocation3 + $0x728] sm:$0xff]
    %v3931 = vld [vmem:[#allocation3 + $0x730] sm:$0xff]
    %v3932 = vld [vmem:[#allocation3 + $0x738] sm:$0xff]
    %v3933 = vld [vmem:[#allocation3 + $0x740] sm:$0xff]
    %v3934 = vld [vmem:[#allocation3 + $0x748] sm:$0xff]
    %v3935 = vld [vmem:[#allocation3 + $0x750] sm:$0xff]
    %v3936 = vld [vmem:[#allocation3 + $0x758] sm:$0xff]
    %v3937 = vld [vmem:[#allocation3 + $0x760] sm:$0xff]
    %v3938 = vld [vmem:[#allocation3 + $0x768] sm:$0xff]
    %v3939 = vld [vmem:[#allocation3 + $0x770] sm:$0xff]
    %v3940 = vld [vmem:[#allocation3 + $0x778] sm:$0xff]
    %v3941 = vld [vmem:[#allocation3 + $0x780] sm:$0xff]
    %v3942 = vld [vmem:[#allocation3 + $0x788] sm:$0xff]
    %v3943 = vld [vmem:[#allocation3 + $0x790] sm:$0xff]
    %v3944 = vld [vmem:[#allocation3 + $0x798] sm:$0xff]
    %v3945 = vld [vmem:[#allocation3 + $0x7a0] sm:$0xff]
    %v3946 = vld [vmem:[#allocation3 + $0x7a8] sm:$0xff]
    %v3947 = vld [vmem:[#allocation3 + $0x7b0] sm:$0xff]
    %v3948 = vld [vmem:[#allocation3 + $0x7b8] sm:$0xff]
    %v3949 = vld [vmem:[#allocation3 + $0x7c0] sm:$0xff]
    %v3950 = vld [vmem:[#allocation3 + $0x7c8] sm:$0xff]
    %v3951 = vld [vmem:[#allocation3 + $0x7d0] sm:$0xff]
    %v3952 = vld [vmem:[#allocation3 + $0x7d8] sm:$0xff]
    %v3953 = vld [vmem:[#allocation3 + $0x7e0] sm:$0xff]
    %v3954 = vld [vmem:[#allocation3 + $0x7e8] sm:$0xff]
    %v3955 = vld [vmem:[#allocation3 + $0x7f0] sm:$0xff]
    %v3956 = vld [vmem:[#allocation3 + $0x7f8] sm:$0xff]
    %v3957 = vld [vmem:[#allocation3 + $0x800] sm:$0xff]
    %v3958 = vld [vmem:[#allocation3 + $0x808] sm:$0xff]
    %v3959 = vld [vmem:[#allocation3 + $0x810] sm:$0xff]
    %v3960 = vld [vmem:[#allocation3 + $0x818] sm:$0xff]
    %v3961 = vld [vmem:[#allocation3 + $0x820] sm:$0xff]
    %v3962 = vld [vmem:[#allocation3 + $0x828] sm:$0xff]
    %v3963 = vld [vmem:[#allocation3 + $0x830] sm:$0xff]
    %v3964 = vld [vmem:[#allocation3 + $0x838] sm:$0xff]
    %v3965 = vld [vmem:[#allocation3 + $0x840] sm:$0xff]
    %v3966 = vld [vmem:[#allocation3 + $0x848] sm:$0xff]
    %v3967 = vld [vmem:[#allocation3 + $0x850] sm:$0xff]
    %v3968 = vld [vmem:[#allocation3 + $0x858] sm:$0xff]
    %v3969 = vld [vmem:[#allocation3 + $0x860] sm:$0xff]
    %v3970 = vld [vmem:[#allocation3 + $0x868] sm:$0xff]
    %v3971 = vld [vmem:[#allocation3 + $0x870] sm:$0xff]
    %v3972 = vld [vmem:[#allocation3 + $0x878] sm:$0xff]
    %v3973 = vld [vmem:[#allocation3 + $0x880] sm:$0xff]
    %v3974 = vld [vmem:[#allocation3 + $0x888] sm:$0xff]
    %v3975 = vld [vmem:[#allocation3 + $0x890] sm:$0xff]
    %v3976 = vld [vmem:[#allocation3 + $0x898] sm:$0xff]
    %v3977 = vld [vmem:[#allocation3 + $0x8a0] sm:$0xff]
    %v3978 = vld [vmem:[#allocation3 + $0x8a8] sm:$0xff]
    %v3979 = vld [vmem:[#allocation3 + $0x8b0] sm:$0xff]
    %v3980 = vld [vmem:[#allocation3 + $0x8b8] sm:$0xff]
    %v3981 = vld [vmem:[#allocation3 + $0x8c0] sm:$0xff]
    %v3982 = vld [vmem:[#allocation3 + $0x8c8] sm:$0xff]
    %v3983 = vld [vmem:[#allocation3 + $0x8d0] sm:$0xff]
    %v3984 = vld [vmem:[#allocation3 + $0x8d8] sm:$0xff]
    %v3985 = vld [vmem:[#allocation3 + $0x8e0] sm:$0xff]
    %v3986 = vld [vmem:[#allocation3 + $0x8e8] sm:$0xff]
    %v3987 = vld [vmem:[#allocation3 + $0x8f0] sm:$0xff]
    %v3988 = vld [vmem:[#allocation3 + $0x8f8] sm:$0xff]
    %v3989 = vld [vmem:[#allocation3 + $0x900] sm:$0xff]
    %v3990 = vld [vmem:[#allocation3 + $0x908] sm:$0xff]
    %v3991 = vld [vmem:[#allocation3 + $0x910] sm:$0xff]
    %v3992 = vld [vmem:[#allocation3 + $0x918] sm:$0xff]
    %v3993 = vld [vmem:[#allocation3 + $0x920] sm:$0xff]
    %v3994 = vld [vmem:[#allocation3 + $0x928] sm:$0xff]
    %v3995 = vld [vmem:[#allocation3 + $0x930] sm:$0xff]
    %v3996 = vld [vmem:[#allocation3 + $0x938] sm:$0xff]
    %v3997 = vld [vmem:[#allocation3 + $0x940] sm:$0xff]
    %v3998 = vld [vmem:[#allocation3 + $0x948] sm:$0xff]
    %v3999 = vld [vmem:[#allocation3 + $0x950] sm:$0xff]
    %v4000 = vld [vmem:[#allocation3 + $0x958] sm:$0xff]
    %v4001 = vld [vmem:[#allocation3 + $0x960] sm:$0xff]
    %v4002 = vld [vmem:[#allocation3 + $0x968] sm:$0xff]
    %v4003 = vld [vmem:[#allocation3 + $0x970] sm:$0xff]
    %v4004 = vld [vmem:[#allocation3 + $0x978] sm:$0xff]
    %v4005 = vld [vmem:[#allocation3 + $0x980] sm:$0xff]
    %v4006 = vld [vmem:[#allocation3 + $0x988] sm:$0xff]
    %v4007 = vld [vmem:[#allocation3 + $0x990] sm:$0xff]
    %v4008 = vld [vmem:[#allocation3 + $0x998] sm:$0xff]
    %v4009 = vld [vmem:[#allocation3 + $0x9a0] sm:$0xff]
    %v4010 = vld [vmem:[#allocation3 + $0x9a8] sm:$0xff]
    %v4011 = vld [vmem:[#allocation3 + $0x9b0] sm:$0xff]
    %v4012 = vld [vmem:[#allocation3 + $0x9b8] sm:$0xff]
    %v4013 = vld [vmem:[#allocation3 + $0x9c0] sm:$0xff]
    %v4014 = vld [vmem:[#allocation3 + $0x9c8] sm:$0xff]
    %v4015 = vld [vmem:[#allocation3 + $0x9d0] sm:$0xff]
    %v4016 = vld [vmem:[#allocation3 + $0x9d8] sm:$0xff]
    %v4017 = vld [vmem:[#allocation3 + $0x9e0] sm:$0xff]
    %v4018 = vld [vmem:[#allocation3 + $0x9e8] sm:$0xff]
    %v4019 = vld [vmem:[#allocation3 + $0x9f0] sm:$0xff]
    %v4020 = vld [vmem:[#allocation3 + $0x9f8] sm:$0xff]
    %v4021 = vld [vmem:[#allocation3 + $0xa00] sm:$0xff]
    %v4022 = vld [vmem:[#allocation3 + $0xa08] sm:$0xff]
    %v4023 = vld [vmem:[#allocation3 + $0xa10] sm:$0xff]
    %v4024 = vld [vmem:[#allocation3 + $0xa18] sm:$0xff]
    %v4025 = vld [vmem:[#allocation3 + $0xa20] sm:$0xff]
    %v4026 = vld [vmem:[#allocation3 + $0xa28] sm:$0xff]
    %v4027 = vld [vmem:[#allocation3 + $0xa30] sm:$0xff]
    %v4028 = vld [vmem:[#allocation3 + $0xa38] sm:$0xff]
    %v4029 = vld [vmem:[#allocation3 + $0xa40] sm:$0xff]
    %v4030 = vld [vmem:[#allocation3 + $0xa48] sm:$0xff]
    %v4031 = vld [vmem:[#allocation3 + $0xa50] sm:$0xff]
    %v4032 = vld [vmem:[#allocation3 + $0xa58] sm:$0xff]
    %v4033 = vld [vmem:[#allocation3 + $0xa60] sm:$0xff]
    %v4034 = vld [vmem:[#allocation3 + $0xa68] sm:$0xff]
    %v4035 = vld [vmem:[#allocation3 + $0xa70] sm:$0xff]
    %v4036 = vld [vmem:[#allocation3 + $0xa78] sm:$0xff]
    %v4037 = vld [vmem:[#allocation3 + $0xa80] sm:$0xff]
    %v4038 = vld [vmem:[#allocation3 + $0xa88] sm:$0xff]
    %v4039 = vld [vmem:[#allocation3 + $0xa90] sm:$0xff]
    %v4040 = vld [vmem:[#allocation3 + $0xa98] sm:$0xff]
    %v4041 = vld [vmem:[#allocation3 + $0xaa0] sm:$0xff]
    %v4042 = vld [vmem:[#allocation3 + $0xaa8] sm:$0xff]
    %v4043 = vld [vmem:[#allocation3 + $0xab0] sm:$0xff]
    %v4044 = vld [vmem:[#allocation3 + $0xab8] sm:$0xff]
    %v4045 = vld [vmem:[#allocation3 + $0xac0] sm:$0xff]
    %v4046 = vld [vmem:[#allocation3 + $0xac8] sm:$0xff]
    %v4047 = vld [vmem:[#allocation3 + $0xad0] sm:$0xff]
    %v4048 = vld [vmem:[#allocation3 + $0xad8] sm:$0xff]
    %v4049 = vld [vmem:[#allocation3 + $0xae0] sm:$0xff]
    %v4050 = vld [vmem:[#allocation3 + $0xae8] sm:$0xff]
    %v4051 = vld [vmem:[#allocation3 + $0xaf0] sm:$0xff]
    %v4052 = vld [vmem:[#allocation3 + $0xaf8] sm:$0xff]
    %v4053 = vld [vmem:[#allocation3 + $0xb00] sm:$0xff]
    %v4054 = vld [vmem:[#allocation3 + $0xb08] sm:$0xff]
    %v4055 = vld [vmem:[#allocation3 + $0xb10] sm:$0xff]
    %v4056 = vld [vmem:[#allocation3 + $0xb18] sm:$0xff]
    %v4057 = vld [vmem:[#allocation3 + $0xb20] sm:$0xff]
    %v4058 = vld [vmem:[#allocation3 + $0xb28] sm:$0xff]
    %v4059 = vld [vmem:[#allocation3 + $0xb30] sm:$0xff]
    %v4060 = vld [vmem:[#allocation3 + $0xb38] sm:$0xff]
    %v4061 = vld [vmem:[#allocation3 + $0xb40] sm:$0xff]
    %v4062 = vld [vmem:[#allocation3 + $0xb48] sm:$0xff]
    %v4063 = vld [vmem:[#allocation3 + $0xb50] sm:$0xff]
    %v4064 = vld [vmem:[#allocation3 + $0xb58] sm:$0xff]
    %v4065 = vld [vmem:[#allocation3 + $0xb60] sm:$0xff]
    %v4066 = vld [vmem:[#allocation3 + $0xb68] sm:$0xff]
    %v4067 = vld [vmem:[#allocation3 + $0xb70] sm:$0xff]
    %v4068 = vld [vmem:[#allocation3 + $0xb78] sm:$0xff]
    %v4069 = vld [vmem:[#allocation3 + $0xb80] sm:$0xff]
    %v4070 = vld [vmem:[#allocation3 + $0xb88] sm:$0xff]
    %v4071 = vld [vmem:[#allocation3 + $0xb90] sm:$0xff]
    %v4072 = vld [vmem:[#allocation3 + $0xb98] sm:$0xff]
    %v4073 = vld [vmem:[#allocation3 + $0xba0] sm:$0xff]
    %v4074 = vld [vmem:[#allocation3 + $0xba8] sm:$0xff]
    %v4075 = vld [vmem:[#allocation3 + $0xbb0] sm:$0xff]
    %v4076 = vld [vmem:[#allocation3 + $0xbb8] sm:$0xff]
    %v4077 = vld [vmem:[#allocation3 + $0xbc0] sm:$0xff]
    %v4078 = vld [vmem:[#allocation3 + $0xbc8] sm:$0xff]
    %v4079 = vld [vmem:[#allocation3 + $0xbd0] sm:$0xff]
    %v4080 = vld [vmem:[#allocation3 + $0xbd8] sm:$0xff]
    %v4081 = vld [vmem:[#allocation3 + $0xbe0] sm:$0xff]
    %v4082 = vld [vmem:[#allocation3 + $0xbe8] sm:$0xff]
    %v4083 = vld [vmem:[#allocation3 + $0xbf0] sm:$0xff]
    %v4084 = vld [vmem:[#allocation3 + $0xbf8] sm:$0xff]
    %v4085 = vld [vmem:[#allocation3 + $0xc00] sm:$0xff]
    %v4086 = vld [vmem:[#allocation3 + $0xc08] sm:$0xff]
    %v4087 = vld [vmem:[#allocation3 + $0xc10] sm:$0xff]
    %v4088 = vld [vmem:[#allocation3 + $0xc18] sm:$0xff]
    %v4089 = vld [vmem:[#allocation3 + $0xc20] sm:$0xff]
    %v4090 = vld [vmem:[#allocation3 + $0xc28] sm:$0xff]
    %v4091 = vld [vmem:[#allocation3 + $0xc30] sm:$0xff]
    %v4092 = vld [vmem:[#allocation3 + $0xc38] sm:$0xff]
    %v4093 = vld [vmem:[#allocation3 + $0xc40] sm:$0xff]
    %v4094 = vld [vmem:[#allocation3 + $0xc48] sm:$0xff]
    %v4095 = vld [vmem:[#allocation3 + $0xc50] sm:$0xff]
    %v4096 = vld [vmem:[#allocation3 + $0xc58] sm:$0xff]
    %v4097 = vld [vmem:[#allocation3 + $0xc60] sm:$0xff]
    %v4098 = vld [vmem:[#allocation3 + $0xc68] sm:$0xff]
    %v4099 = vld [vmem:[#allocation3 + $0xc70] sm:$0xff]
    %v4100 = vld [vmem:[#allocation3 + $0xc78] sm:$0xff]
    %v4101 = vld [vmem:[#allocation3 + $0xc80] sm:$0xff]
    %v4102 = vld [vmem:[#allocation3 + $0xc88] sm:$0xff]
    %v4103 = vld [vmem:[#allocation3 + $0xc90] sm:$0xff]
    %v4104 = vld [vmem:[#allocation3 + $0xc98] sm:$0xff]
    %v4105 = vld [vmem:[#allocation3 + $0xca0] sm:$0xff]
    %v4106 = vld [vmem:[#allocation3 + $0xca8] sm:$0xff]
    %v4107 = vld [vmem:[#allocation3 + $0xcb0] sm:$0xff]
    %v4108 = vld [vmem:[#allocation3 + $0xcb8] sm:$0xff]
    %v4109 = vld [vmem:[#allocation3 + $0xcc0] sm:$0xff]
    %v4110 = vld [vmem:[#allocation3 + $0xcc8] sm:$0xff]
    %v4111 = vld [vmem:[#allocation3 + $0xcd0] sm:$0xff]
    %v4112 = vld [vmem:[#allocation3 + $0xcd8] sm:$0xff]
    %v4113 = vld [vmem:[#allocation3 + $0xce0] sm:$0xff]
    %v4114 = vld [vmem:[#allocation3 + $0xce8] sm:$0xff]
    %v4115 = vld [vmem:[#allocation3 + $0xcf0] sm:$0xff]
    %v4116 = vld [vmem:[#allocation3 + $0xcf8] sm:$0xff]
    %v4117 = vld [vmem:[#allocation3 + $0xd00] sm:$0xff]
    %v4118 = vld [vmem:[#allocation3 + $0xd08] sm:$0xff]
    %v4119 = vld [vmem:[#allocation3 + $0xd10] sm:$0xff]
    %v4120 = vld [vmem:[#allocation3 + $0xd18] sm:$0xff]
    %v4121 = vld [vmem:[#allocation3 + $0xd20] sm:$0xff]
    %v4122 = vld [vmem:[#allocation3 + $0xd28] sm:$0xff]
    %v4123 = vld [vmem:[#allocation3 + $0xd30] sm:$0xff]
    %v4124 = vld [vmem:[#allocation3 + $0xd38] sm:$0xff]
    %v4125 = vld [vmem:[#allocation3 + $0xd40] sm:$0xff]
    %v4126 = vld [vmem:[#allocation3 + $0xd48] sm:$0xff]
    %v4127 = vld [vmem:[#allocation3 + $0xd50] sm:$0xff]
    %v4128 = vld [vmem:[#allocation3 + $0xd58] sm:$0xff]
    %v4129 = vld [vmem:[#allocation3 + $0xd60] sm:$0xff]
    %v4130 = vld [vmem:[#allocation3 + $0xd68] sm:$0xff]
    %v4131 = vld [vmem:[#allocation3 + $0xd70] sm:$0xff]
    %v4132 = vld [vmem:[#allocation3 + $0xd78] sm:$0xff]
    %v4133 = vld [vmem:[#allocation3 + $0xd80] sm:$0xff]
    %v4134 = vld [vmem:[#allocation3 + $0xd88] sm:$0xff]
    %v4135 = vld [vmem:[#allocation3 + $0xd90] sm:$0xff]
    %v4136 = vld [vmem:[#allocation3 + $0xd98] sm:$0xff]
    %v4137 = vld [vmem:[#allocation3 + $0xda0] sm:$0xff]
    %v4138 = vld [vmem:[#allocation3 + $0xda8] sm:$0xff]
    %v4139 = vld [vmem:[#allocation3 + $0xdb0] sm:$0xff]
    %v4140 = vld [vmem:[#allocation3 + $0xdb8] sm:$0xff]
    %v4141 = vld [vmem:[#allocation3 + $0xdc0] sm:$0xff]
    %v4142 = vld [vmem:[#allocation3 + $0xdc8] sm:$0xff]
    %v4143 = vld [vmem:[#allocation3 + $0xdd0] sm:$0xff]
    %v4144 = vld [vmem:[#allocation3 + $0xdd8] sm:$0xff]
    %v4145 = vld [vmem:[#allocation3 + $0xde0] sm:$0xff]
    %v4146 = vld [vmem:[#allocation3 + $0xde8] sm:$0xff]
    %v4147 = vld [vmem:[#allocation3 + $0xdf0] sm:$0xff]
    %v4148 = vld [vmem:[#allocation3 + $0xdf8] sm:$0xff]
    %v4149 = vld [vmem:[#allocation3 + $0xe00] sm:$0xff]
    %v4150 = vld [vmem:[#allocation3 + $0xe08] sm:$0xff]
    %v4151 = vld [vmem:[#allocation3 + $0xe10] sm:$0xff]
    %v4152 = vld [vmem:[#allocation3 + $0xe18] sm:$0xff]
    %v4153 = vld [vmem:[#allocation3 + $0xe20] sm:$0xff]
    %v4154 = vld [vmem:[#allocation3 + $0xe28] sm:$0xff]
    %v4155 = vld [vmem:[#allocation3 + $0xe30] sm:$0xff]
    %v4156 = vld [vmem:[#allocation3 + $0xe38] sm:$0xff]
    %v4157 = vld [vmem:[#allocation3 + $0xe40] sm:$0xff]
    %v4158 = vld [vmem:[#allocation3 + $0xe48] sm:$0xff]
    %v4159 = vld [vmem:[#allocation3 + $0xe50] sm:$0xff]
    %v4160 = vld [vmem:[#allocation3 + $0xe58] sm:$0xff]
    %v4161 = vld [vmem:[#allocation3 + $0xe60] sm:$0xff]
    %v4162 = vld [vmem:[#allocation3 + $0xe68] sm:$0xff]
    %v4163 = vld [vmem:[#allocation3 + $0xe70] sm:$0xff]
    %v4164 = vld [vmem:[#allocation3 + $0xe78] sm:$0xff]
    %v4165 = vld [vmem:[#allocation3 + $0xe80] sm:$0xff]
    %v4166 = vld [vmem:[#allocation3 + $0xe88] sm:$0xff]
    %v4167 = vld [vmem:[#allocation3 + $0xe90] sm:$0xff]
    %v4168 = vld [vmem:[#allocation3 + $0xe98] sm:$0xff]
    %v4169 = vld [vmem:[#allocation3 + $0xea0] sm:$0xff]
    %v4170 = vld [vmem:[#allocation3 + $0xea8] sm:$0xff]
    %v4171 = vld [vmem:[#allocation3 + $0xeb0] sm:$0xff]
    %v4172 = vld [vmem:[#allocation3 + $0xeb8] sm:$0xff]
    %v4173 = vld [vmem:[#allocation3 + $0xec0] sm:$0xff]
    %v4174 = vld [vmem:[#allocation3 + $0xec8] sm:$0xff]
    %v4175 = vld [vmem:[#allocation3 + $0xed0] sm:$0xff]
    %v4176 = vld [vmem:[#allocation3 + $0xed8] sm:$0xff]
    %v4177 = vld [vmem:[#allocation3 + $0xee0] sm:$0xff]
    %v4178 = vld [vmem:[#allocation3 + $0xee8] sm:$0xff]
    %v4179 = vld [vmem:[#allocation3 + $0xef0] sm:$0xff]
    %v4180 = vld [vmem:[#allocation3 + $0xef8] sm:$0xff]
    %v4181 = vld [vmem:[#allocation3 + $0xf00] sm:$0xff]
    %v4182 = vld [vmem:[#allocation3 + $0xf08] sm:$0xff]
    %v4183 = vld [vmem:[#allocation3 + $0xf10] sm:$0xff]
    %v4184 = vld [vmem:[#allocation3 + $0xf18] sm:$0xff]
    %v4185 = vld [vmem:[#allocation3 + $0xf20] sm:$0xff]
    %v4186 = vld [vmem:[#allocation3 + $0xf28] sm:$0xff]
    %v4187 = vld [vmem:[#allocation3 + $0xf30] sm:$0xff]
    %v4188 = vld [vmem:[#allocation3 + $0xf38] sm:$0xff]
    %v4189 = vld [vmem:[#allocation3 + $0xf40] sm:$0xff]
    %v4190 = vld [vmem:[#allocation3 + $0xf48] sm:$0xff]
    %v4191 = vld [vmem:[#allocation3 + $0xf50] sm:$0xff]
    %v4192 = vld [vmem:[#allocation3 + $0xf58] sm:$0xff]
    %v4193 = vld [vmem:[#allocation3 + $0xf60] sm:$0xff]
    %v4194 = vld [vmem:[#allocation3 + $0xf68] sm:$0xff]
    %v4195 = vld [vmem:[#allocation3 + $0xf70] sm:$0xff]
    %v4196 = vld [vmem:[#allocation3 + $0xf78] sm:$0xff]
    %v4197 = vld [vmem:[#allocation3 + $0xf80] sm:$0xff]
    %v4198 = vld [vmem:[#allocation3 + $0xf88] sm:$0xff]
    %v4199 = vld [vmem:[#allocation3 + $0xf90] sm:$0xff]
    %v4200 = vld [vmem:[#allocation3 + $0xf98] sm:$0xff]
    %v4201 = vld [vmem:[#allocation3 + $0xfa0] sm:$0xff]
    %v4202 = vld [vmem:[#allocation3 + $0xfa8] sm:$0xff]
    %v4203 = vld [vmem:[#allocation3 + $0xfb0] sm:$0xff]
    %v4204 = vld [vmem:[#allocation3 + $0xfb8] sm:$0xff]
    %v4205 = vld [vmem:[#allocation3 + $0xfc0] sm:$0xff]
    %v4206 = vld [vmem:[#allocation3 + $0xfc8] sm:$0xff]
    %v4207 = vld [vmem:[#allocation3 + $0xfd0] sm:$0xff]
    %v4208 = vld [vmem:[#allocation3 + $0xfd8] sm:$0xff]
    %v4209 = vld [vmem:[#allocation3 + $0xfe0] sm:$0xff]
    %v4210 = vld [vmem:[#allocation3 + $0xfe8] sm:$0xff]
    %v4211 = vld [vmem:[#allocation3 + $0xff0] sm:$0xff]
    %v4212 = vld [vmem:[#allocation3 + $0xff8] sm:$0xff]
    %v4213 = vld [vmem:[#allocation29] sm:$0xff]
    %v4215 = vlaneseq
    %v4216 = vshrl.u32 %v4215, 7
    %v4217 = vsub.s32 0, %v4216
    %v4218 = vrot.slane %v4213, %v4217
    %v4219 = vlaneseq
    %v4220 = vshrl.u32 %v4219, 7
    %v4221 = vsub.s32 1, %v4220
    %v4222 = vrot.slane %v4213, %v4221
    %v4223 = vlaneseq
    %v4224 = vshrl.u32 %v4223, 7
    %v4225 = vsub.s32 2, %v4224
    %v4226 = vrot.slane %v4213, %v4225
    %v4227 = vlaneseq
    %v4228 = vshrl.u32 %v4227, 7
    %v4229 = vsub.s32 3, %v4228
    %v4230 = vrot.slane %v4213, %v4229
    %v4231 = vlaneseq
    %v4232 = vshrl.u32 %v4231, 7
    %v4233 = vsub.s32 4, %v4232
    %v4234 = vrot.slane %v4213, %v4233
    %v4235 = vlaneseq
    %v4236 = vshrl.u32 %v4235, 7
    %v4237 = vsub.s32 5, %v4236
    %v4238 = vrot.slane %v4213, %v4237
    %v4239 = vlaneseq
    %v4240 = vshrl.u32 %v4239, 7
    %v4241 = vsub.s32 6, %v4240
    %v4242 = vrot.slane %v4213, %v4241
    %v4243 = vlaneseq
    %v4244 = vshrl.u32 %v4243, 7
    %v4245 = vsub.s32 7, %v4244
    %v4246 = vrot.slane %v4213, %v4245
    %4255 = vmatprep.subr.bf16.mxu0 %v3702
    %4256 = vmatpush1.bf16.msra.mxu0 %v3701
    %4257 = vmatprep.subr.bf16.mxu0 %v3710
    %4258 = vmatpush1.bf16.msra.mxu0 %v3709
    %4259 = vmatprep.subr.bf16.mxu0 %v3718
    %4260 = vmatpush1.bf16.msra.mxu0 %v3717
    %4261 = vmatprep.subr.bf16.mxu0 %v3726
    %4262 = vmatpush1.bf16.msra.mxu0 %v3725
    %4263 = vmatprep.subr.bf16.mxu0 %v3734
    %4264 = vmatpush1.bf16.msra.mxu0 %v3733
    %4265 = vmatprep.subr.bf16.mxu0 %v3742
    %4266 = vmatpush1.bf16.msra.mxu0 %v3741
    %4267 = vmatprep.subr.bf16.mxu0 %v3750
    %4268 = vmatpush1.bf16.msra.mxu0 %v3749
    %4269 = vmatprep.subr.bf16.mxu0 %v3758
    %4270 = vmatpush1.bf16.msra.mxu0 %v3757
    %4271 = vmatprep.subr.bf16.mxu0 %v3766
    %4272 = vmatpush1.bf16.msra.mxu0 %v3765
    %4273 = vmatprep.subr.bf16.mxu0 %v3774
    %4274 = vmatpush1.bf16.msra.mxu0 %v3773
    %4275 = vmatprep.subr.bf16.mxu0 %v3782
    %4276 = vmatpush1.bf16.msra.mxu0 %v3781
    %4277 = vmatprep.subr.bf16.mxu0 %v3790
    %4278 = vmatpush1.bf16.msra.mxu0 %v3789
    %4279 = vmatprep.subr.bf16.mxu0 %v3798
    %4280 = vmatpush1.bf16.msra.mxu0 %v3797
    %4281 = vmatprep.subr.bf16.mxu0 %v3806
    %4282 = vmatpush1.bf16.msra.mxu0 %v3805
    %4283 = vmatprep.subr.bf16.mxu0 %v3814
    %4284 = vmatpush1.bf16.msra.mxu0 %v3813
    %4285 = vmatprep.subr.bf16.mxu0 %v3822
    %4286 = vmatpush1.bf16.msra.mxu0 %v3821
    %4287 = vmatprep.mubr.bf16.mxu0 %v3694
    %4288 = vmatmul.mubr.bf16.gmra.mrb[0].mxu0 %v3693
    %v4289 = vpop.f32.mrb[0].mxu0
    %v4290 = vadd.f32 %v4218, %v4289
    %v4291 = vpop.f32.mrb[0].mxu0
    %v4292 = vadd.f32 %v4222, %v4291
    %v4293 = vpop.f32.mrb[0].mxu0
    %v4294 = vpop.f32.mrb[0].mxu0
    %4295 = vdwg.mxu0
    %4296 = vmatprep.subr.bf16.mxu0 %v3830
    %4297 = vmatpush1.bf16.msra.mxu0 %v3829
    %4298 = vmatprep.subr.bf16.mxu0 %v3838
    %4299 = vmatpush1.bf16.msra.mxu0 %v3837
    %4300 = vmatprep.subr.bf16.mxu0 %v3846
    %4301 = vmatpush1.bf16.msra.mxu0 %v3845
    %4302 = vmatprep.subr.bf16.mxu0 %v3854
    %4303 = vmatpush1.bf16.msra.mxu0 %v3853
    %4304 = vmatprep.subr.bf16.mxu0 %v3862
    %4305 = vmatpush1.bf16.msra.mxu0 %v3861
    %4306 = vmatprep.subr.bf16.mxu0 %v3870
    %4307 = vmatpush1.bf16.msra.mxu0 %v3869
    %4308 = vmatprep.subr.bf16.mxu0 %v3878
    %4309 = vmatpush1.bf16.msra.mxu0 %v3877
    %4310 = vmatprep.subr.bf16.mxu0 %v3886
    %4311 = vmatpush1.bf16.msra.mxu0 %v3885
    %4312 = vmatprep.subr.bf16.mxu0 %v3894
    %4313 = vmatpush1.bf16.msra.mxu0 %v3893
    %4314 = vmatprep.subr.bf16.mxu0 %v3902
    %4315 = vmatpush1.bf16.msra.mxu0 %v3901
    %4316 = vmatprep.subr.bf16.mxu0 %v3910
    %4317 = vmatpush1.bf16.msra.mxu0 %v3909
    %4318 = vmatprep.subr.bf16.mxu0 %v3918
    %4319 = vmatpush1.bf16.msra.mxu0 %v3917
    %4320 = vmatprep.subr.bf16.mxu0 %v3926
    %4321 = vmatpush1.bf16.msra.mxu0 %v3925
    %4322 = vmatprep.subr.bf16.mxu0 %v3934
    %4323 = vmatpush1.bf16.msra.mxu0 %v3933
    %4324 = vmatprep.subr.bf16.mxu0 %v3942
    %4325 = vmatpush1.bf16.msra.mxu0 %v3941
    %4326 = vmatprep.subr.bf16.mxu0 %v3950
    %4327 = vmatpush1.bf16.msra.mxu0 %v3949
    %4328 = vmatprep.mubr.bf16.mxu0 %v3696
    %4329 = vmatmul.mubr.bf16.gmra.mrb[0].mxu0 %v3695
    %v4330 = vpop.f32.mrb[0].mxu0
    %v4331 = vadd.f32 %v4290, %v4330
    %v4332 = vpop.f32.mrb[0].mxu0
    %v4333 = vadd.f32 %v4292, %v4332
    %v4334 = vpop.f32.mrb[0].mxu0
    %v4335 = vpop.f32.mrb[0].mxu0
    %4336 = vdwg.mxu0
    %4337 = vmatprep.subr.bf16.mxu0 %v3958
    %4338 = vmatpush1.bf16.msra.mxu0 %v3957
    %4339 = vmatprep.subr.bf16.mxu0 %v3966
    %4340 = vmatpush1.bf16.msra.mxu0 %v3965
    %4341 = vmatprep.subr.bf16.mxu0 %v3974
    %4342 = vmatpush1.bf16.msra.mxu0 %v3973
    %4343 = vmatprep.subr.bf16.mxu0 %v3982
    %4344 = vmatpush1.bf16.msra.mxu0 %v3981
    %4345 = vmatprep.subr.bf16.mxu0 %v3990
    %4346 = vmatpush1.bf16.msra.mxu0 %v3989
    %4347 = vmatprep.subr.bf16.mxu0 %v3998
    %4348 = vmatpush1.bf16.msra.mxu0 %v3997
    %4349 = vmatprep.subr.bf16.mxu0 %v4006
    %4350 = vmatpush1.bf16.msra.mxu0 %v4005
    %4351 = vmatprep.subr.bf16.mxu0 %v4014
    %4352 = vmatpush1.bf16.msra.mxu0 %v4013
    %4353 = vmatprep.subr.bf16.mxu0 %v4022
    %4354 = vmatpush1.bf16.msra.mxu0 %v4021
    %4355 = vmatprep.subr.bf16.mxu0 %v4030
    %4356 = vmatpush1.bf16.msra.mxu0 %v4029
    %4357 = vmatprep.subr.bf16.mxu0 %v4038
    %4358 = vmatpush1.bf16.msra.mxu0 %v4037
    %4359 = vmatprep.subr.bf16.mxu0 %v4046
    %4360 = vmatpush1.bf16.msra.mxu0 %v4045
    %4361 = vmatprep.subr.bf16.mxu0 %v4054
    %4362 = vmatpush1.bf16.msra.mxu0 %v4053
    %4363 = vmatprep.subr.bf16.mxu0 %v4062
    %4364 = vmatpush1.bf16.msra.mxu0 %v4061
    %4365 = vmatprep.subr.bf16.mxu0 %v4070
    %4366 = vmatpush1.bf16.msra.mxu0 %v4069
    %4367 = vmatprep.subr.bf16.mxu0 %v4078
    %4368 = vmatpush1.bf16.msra.mxu0 %v4077
    %4369 = vmatprep.mubr.bf16.mxu0 %v3698
    %4370 = vmatmul.mubr.bf16.gmra.mrb[0].mxu0 %v3697
    %v4371 = vpop.f32.mrb[0].mxu0
    %v4372 = vadd.f32 %v4331, %v4371
    %v4373 = vpop.f32.mrb[0].mxu0
    %v4374 = vadd.f32 %v4333, %v4373
    %v4375 = vpop.f32.mrb[0].mxu0
    %v4376 = vpop.f32.mrb[0].mxu0
    %4377 = vdwg.mxu0
    %4378 = vmatprep.subr.bf16.mxu0 %v4086
    %4379 = vmatpush1.bf16.msra.mxu0 %v4085
    %4380 = vmatprep.subr.bf16.mxu0 %v4094
    %4381 = vmatpush1.bf16.msra.mxu0 %v4093
    %4382 = vmatprep.subr.bf16.mxu0 %v4102
    %4383 = vmatpush1.bf16.msra.mxu0 %v4101
    %4384 = vmatprep.subr.bf16.mxu0 %v4110
    %4385 = vmatpush1.bf16.msra.mxu0 %v4109
    %4386 = vmatprep.subr.bf16.mxu0 %v4118
    %4387 = vmatpush1.bf16.msra.mxu0 %v4117
    %4388 = vmatprep.subr.bf16.mxu0 %v4126
    %4389 = vmatpush1.bf16.msra.mxu0 %v4125
    %4390 = vmatprep.subr.bf16.mxu0 %v4134
    %4391 = vmatpush1.bf16.msra.mxu0 %v4133
    %4392 = vmatprep.subr.bf16.mxu0 %v4142
    %4393 = vmatpush1.bf16.msra.mxu0 %v4141
    %4394 = vmatprep.subr.bf16.mxu0 %v4150
    %4395 = vmatpush1.bf16.msra.mxu0 %v4149
    %4396 = vmatprep.subr.bf16.mxu0 %v4158
    %4397 = vmatpush1.bf16.msra.mxu0 %v4157
    %4398 = vmatprep.subr.bf16.mxu0 %v4166
    %4399 = vmatpush1.bf16.msra.mxu0 %v4165
    %4400 = vmatprep.subr.bf16.mxu0 %v4174
    %4401 = vmatpush1.bf16.msra.mxu0 %v4173
    %4402 = vmatprep.subr.bf16.mxu0 %v4182
    %4403 = vmatpush1.bf16.msra.mxu0 %v4181
    %4404 = vmatprep.subr.bf16.mxu0 %v4190
    %4405 = vmatpush1.bf16.msra.mxu0 %v4189
    %4406 = vmatprep.subr.bf16.mxu0 %v4198
    %4407 = vmatpush1.bf16.msra.mxu0 %v4197
    %4408 = vmatprep.subr.bf16.mxu0 %v4206
    %4409 = vmatpush1.bf16.msra.mxu0 %v4205
    %4410 = vmatprep.mubr.bf16.mxu0 %v3700
    %4411 = vmatmul.mubr.bf16.gmra.mrb[0].mxu0 %v3699
    %v4412 = vpop.f32.mrb[0].mxu0
    %v4413 = vadd.f32 %v4372, %v4412
    %v4414 = vpop.f32.mrb[0].mxu0
    %v4415 = vadd.f32 %v4374, %v4414
    %v4416 = vpop.f32.mrb[0].mxu0
    %v4417 = vpop.f32.mrb[0].mxu0
    %4418 = vdwg.mxu0
    %4419 = vmatprep.subr.bf16.mxu0 %v3704
    %4420 = vmatpush1.bf16.msra.mxu0 %v3703
    %4421 = vmatprep.subr.bf16.mxu0 %v3712
    %4422 = vmatpush1.bf16.msra.mxu0 %v3711
    %4423 = vmatprep.subr.bf16.mxu0 %v3720
    %4424 = vmatpush1.bf16.msra.mxu0 %v3719
    %4425 = vmatprep.subr.bf16.mxu0 %v3728
    %4426 = vmatpush1.bf16.msra.mxu0 %v3727
    %4427 = vmatprep.subr.bf16.mxu0 %v3736
    %4428 = vmatpush1.bf16.msra.mxu0 %v3735
    %4429 = vmatprep.subr.bf16.mxu0 %v3744
    %4430 = vmatpush1.bf16.msra.mxu0 %v3743
    %4431 = vmatprep.subr.bf16.mxu0 %v3752
    %4432 = vmatpush1.bf16.msra.mxu0 %v3751
    %4433 = vmatprep.subr.bf16.mxu0 %v3760
    %4434 = vmatpush1.bf16.msra.mxu0 %v3759
    %4435 = vmatprep.subr.bf16.mxu0 %v3768
    %4436 = vmatpush1.bf16.msra.mxu0 %v3767
    %4437 = vmatprep.subr.bf16.mxu0 %v3776
    %4438 = vmatpush1.bf16.msra.mxu0 %v3775
    %4439 = vmatprep.subr.bf16.mxu0 %v3784
    %4440 = vmatpush1.bf16.msra.mxu0 %v3783
    %4441 = vmatprep.subr.bf16.mxu0 %v3792
    %4442 = vmatpush1.bf16.msra.mxu0 %v3791
    %4443 = vmatprep.subr.bf16.mxu0 %v3800
    %4444 = vmatpush1.bf16.msra.mxu0 %v3799
    %4445 = vmatprep.subr.bf16.mxu0 %v3808
    %4446 = vmatpush1.bf16.msra.mxu0 %v3807
    %4447 = vmatprep.subr.bf16.mxu0 %v3816
    %4448 = vmatpush1.bf16.msra.mxu0 %v3815
    %4449 = vmatprep.subr.bf16.mxu0 %v3824
    %4450 = vmatpush1.bf16.msra.mxu0 %v3823
    %4451 = vmatprep.mubr.bf16.mxu0 %v3694
    %4452 = vmatmul.mubr.bf16.gmra.mrb[0].mxu0 %v3693
    %v4453 = vpop.f32.mrb[0].mxu0
    %v4454 = vadd.f32 %v4226, %v4453
    %v4455 = vpop.f32.mrb[0].mxu0
    %v4456 = vadd.f32 %v4230, %v4455
    %v4457 = vpop.f32.mrb[0].mxu0
    %v4458 = vpop.f32.mrb[0].mxu0
    %4459 = vdwg.mxu0
    %4460 = vmatprep.subr.bf16.mxu0 %v3832
    %4461 = vmatpush1.bf16.msra.mxu0 %v3831
    %4462 = vmatprep.subr.bf16.mxu0 %v3840
    %4463 = vmatpush1.bf16.msra.mxu0 %v3839
    %4464 = vmatprep.subr.bf16.mxu0 %v3848
    %4465 = vmatpush1.bf16.msra.mxu0 %v3847
    %4466 = vmatprep.subr.bf16.mxu0 %v3856
    %4467 = vmatpush1.bf16.msra.mxu0 %v3855
    %4468 = vmatprep.subr.bf16.mxu0 %v3864
    %4469 = vmatpush1.bf16.msra.mxu0 %v3863
    %4470 = vmatprep.subr.bf16.mxu0 %v3872
    %4471 = vmatpush1.bf16.msra.mxu0 %v3871
    %4472 = vmatprep.subr.bf16.mxu0 %v3880
    %4473 = vmatpush1.bf16.msra.mxu0 %v3879
    %4474 = vmatprep.subr.bf16.mxu0 %v3888
    %4475 = vmatpush1.bf16.msra.mxu0 %v3887
    %4476 = vmatprep.subr.bf16.mxu0 %v3896
    %4477 = vmatpush1.bf16.msra.mxu0 %v3895
    %4478 = vmatprep.subr.bf16.mxu0 %v3904
    %4479 = vmatpush1.bf16.msra.mxu0 %v3903
    %4480 = vmatprep.subr.bf16.mxu0 %v3912
    %4481 = vmatpush1.bf16.msra.mxu0 %v3911
    %4482 = vmatprep.subr.bf16.mxu0 %v3920
    %4483 = vmatpush1.bf16.msra.mxu0 %v3919
    %4484 = vmatprep.subr.bf16.mxu0 %v3928
    %4485 = vmatpush1.bf16.msra.mxu0 %v3927
    %4486 = vmatprep.subr.bf16.mxu0 %v3936
    %4487 = vmatpush1.bf16.msra.mxu0 %v3935
    %4488 = vmatprep.subr.bf16.mxu0 %v3944
    %4489 = vmatpush1.bf16.msra.mxu0 %v3943
    %4490 = vmatprep.subr.bf16.mxu0 %v3952
    %4491 = vmatpush1.bf16.msra.mxu0 %v3951
    %4492 = vmatprep.mubr.bf16.mxu0 %v3696
    %4493 = vmatmul.mubr.bf16.gmra.mrb[0].mxu0 %v3695
    %v4494 = vpop.f32.mrb[0].mxu0
    %v4495 = vadd.f32 %v4454, %v4494
    %v4496 = vpop.f32.mrb[0].mxu0
    %v4497 = vadd.f32 %v4456, %v4496
    %v4498 = vpop.f32.mrb[0].mxu0
    %v4499 = vpop.f32.mrb[0].mxu0
    %4500 = vdwg.mxu0
    %4501 = vmatprep.subr.bf16.mxu0 %v3960
    %4502 = vmatpush1.bf16.msra.mxu0 %v3959
    %4503 = vmatprep.subr.bf16.mxu0 %v3968
    %4504 = vmatpush1.bf16.msra.mxu0 %v3967
    %4505 = vmatprep.subr.bf16.mxu0 %v3976
    %4506 = vmatpush1.bf16.msra.mxu0 %v3975
    %4507 = vmatprep.subr.bf16.mxu0 %v3984
    %4508 = vmatpush1.bf16.msra.mxu0 %v3983
    %4509 = vmatprep.subr.bf16.mxu0 %v3992
    %4510 = vmatpush1.bf16.msra.mxu0 %v3991
    %4511 = vmatprep.subr.bf16.mxu0 %v4000
    %4512 = vmatpush1.bf16.msra.mxu0 %v3999
    %4513 = vmatprep.subr.bf16.mxu0 %v4008
    %4514 = vmatpush1.bf16.msra.mxu0 %v4007
    %4515 = vmatprep.subr.bf16.mxu0 %v4016
    %4516 = vmatpush1.bf16.msra.mxu0 %v4015
    %4517 = vmatprep.subr.bf16.mxu0 %v4024
    %4518 = vmatpush1.bf16.msra.mxu0 %v4023
    %4519 = vmatprep.subr.bf16.mxu0 %v4032
    %4520 = vmatpush1.bf16.msra.mxu0 %v4031
    %4521 = vmatprep.subr.bf16.mxu0 %v4040
    %4522 = vmatpush1.bf16.msra.mxu0 %v4039
    %4523 = vmatprep.subr.bf16.mxu0 %v4048
    %4524 = vmatpush1.bf16.msra.mxu0 %v4047
    %4525 = vmatprep.subr.bf16.mxu0 %v4056
    %4526 = vmatpush1.bf16.msra.mxu0 %v4055
    %4527 = vmatprep.subr.bf16.mxu0 %v4064
    %4528 = vmatpush1.bf16.msra.mxu0 %v4063
    %4529 = vmatprep.subr.bf16.mxu0 %v4072
    %4530 = vmatpush1.bf16.msra.mxu0 %v4071
    %4531 = vmatprep.subr.bf16.mxu0 %v4080
    %4532 = vmatpush1.bf16.msra.mxu0 %v4079
    %4533 = vmatprep.mubr.bf16.mxu0 %v3698
    %4534 = vmatmul.mubr.bf16.gmra.mrb[0].mxu0 %v3697
    %v4535 = vpop.f32.mrb[0].mxu0
    %v4536 = vadd.f32 %v4495, %v4535
    %v4537 = vpop.f32.mrb[0].mxu0
    %v4538 = vadd.f32 %v4497, %v4537
    %v4539 = vpop.f32.mrb[0].mxu0
    %v4540 = vpop.f32.mrb[0].mxu0
    %4541 = vdwg.mxu0
    %4542 = vmatprep.subr.bf16.mxu0 %v4088
    %4543 = vmatpush1.bf16.msra.mxu0 %v4087
    %4544 = vmatprep.subr.bf16.mxu0 %v4096
    %4545 = vmatpush1.bf16.msra.mxu0 %v4095
    %4546 = vmatprep.subr.bf16.mxu0 %v4104
    %4547 = vmatpush1.bf16.msra.mxu0 %v4103
    %4548 = vmatprep.subr.bf16.mxu0 %v4112
    %4549 = vmatpush1.bf16.msra.mxu0 %v4111
    %4550 = vmatprep.subr.bf16.mxu0 %v4120
    %4551 = vmatpush1.bf16.msra.mxu0 %v4119
    %4552 = vmatprep.subr.bf16.mxu0 %v4128
    %4553 = vmatpush1.bf16.msra.mxu0 %v4127
    %4554 = vmatprep.subr.bf16.mxu0 %v4136
    %4555 = vmatpush1.bf16.msra.mxu0 %v4135
    %4556 = vmatprep.subr.bf16.mxu0 %v4144
    %4557 = vmatpush1.bf16.msra.mxu0 %v4143
    %4558 = vmatprep.subr.bf16.mxu0 %v4152
    %4559 = vmatpush1.bf16.msra.mxu0 %v4151
    %4560 = vmatprep.subr.bf16.mxu0 %v4160
    %4561 = vmatpush1.bf16.msra.mxu0 %v4159
    %4562 = vmatprep.subr.bf16.mxu0 %v4168
    %4563 = vmatpush1.bf16.msra.mxu0 %v4167
    %4564 = vmatprep.subr.bf16.mxu0 %v4176
    %4565 = vmatpush1.bf16.msra.mxu0 %v4175
    %4566 = vmatprep.subr.bf16.mxu0 %v4184
    %4567 = vmatpush1.bf16.msra.mxu0 %v4183
    %4568 = vmatprep.subr.bf16.mxu0 %v4192
    %4569 = vmatpush1.bf16.msra.mxu0 %v4191
    %4570 = vmatprep.subr.bf16.mxu0 %v4200
    %4571 = vmatpush1.bf16.msra.mxu0 %v4199
    %4572 = vmatprep.subr.bf16.mxu0 %v4208
    %4573 = vmatpush1.bf16.msra.mxu0 %v4207
    %4574 = vmatprep.mubr.bf16.mxu0 %v3700
    %4575 = vmatmul.mubr.bf16.gmra.mrb[0].mxu0 %v3699
    %v4576 = vpop.f32.mrb[0].mxu0
    %v4577 = vadd.f32 %v4536, %v4576
    %v4578 = vpop.f32.mrb[0].mxu0
    %v4579 = vadd.f32 %v4538, %v4578
    %v4580 = vpop.f32.mrb[0].mxu0
    %v4581 = vpop.f32.mrb[0].mxu0
    %4582 = vdwg.mxu0
    %4583 = vmatprep.subr.bf16.mxu0 %v3706
    %4584 = vmatpush1.bf16.msra.mxu0 %v3705
    %4585 = vmatprep.subr.bf16.mxu0 %v3714
    %4586 = vmatpush1.bf16.msra.mxu0 %v3713
    %4587 = vmatprep.subr.bf16.mxu0 %v3722
    %4588 = vmatpush1.bf16.msra.mxu0 %v3721
    %4589 = vmatprep.subr.bf16.mxu0 %v3730
    %4590 = vmatpush1.bf16.msra.mxu0 %v3729
    %4591 = vmatprep.subr.bf16.mxu0 %v3738
    %4592 = vmatpush1.bf16.msra.mxu0 %v3737
    %4593 = vmatprep.subr.bf16.mxu0 %v3746
    %4594 = vmatpush1.bf16.msra.mxu0 %v3745
    %4595 = vmatprep.subr.bf16.mxu0 %v3754
    %4596 = vmatpush1.bf16.msra.mxu0 %v3753
    %4597 = vmatprep.subr.bf16.mxu0 %v3762
    %4598 = vmatpush1.bf16.msra.mxu0 %v3761
    %4599 = vmatprep.subr.bf16.mxu0 %v3770
    %4600 = vmatpush1.bf16.msra.mxu0 %v3769
    %4601 = vmatprep.subr.bf16.mxu0 %v3778
    %4602 = vmatpush1.bf16.msra.mxu0 %v3777
    %4603 = vmatprep.subr.bf16.mxu0 %v3786
    %4604 = vmatpush1.bf16.msra.mxu0 %v3785
    %4605 = vmatprep.subr.bf16.mxu0 %v3794
    %4606 = vmatpush1.bf16.msra.mxu0 %v3793
    %4607 = vmatprep.subr.bf16.mxu0 %v3802
    %4608 = vmatpush1.bf16.msra.mxu0 %v3801
    %4609 = vmatprep.subr.bf16.mxu0 %v3810
    %4610 = vmatpush1.bf16.msra.mxu0 %v3809
    %4611 = vmatprep.subr.bf16.mxu0 %v3818
    %4612 = vmatpush1.bf16.msra.mxu0 %v3817
    %4613 = vmatprep.subr.bf16.mxu0 %v3826
    %4614 = vmatpush1.bf16.msra.mxu0 %v3825
    %4615 = vmatprep.mubr.bf16.mxu0 %v3694
    %4616 = vmatmul.mubr.bf16.gmra.mrb[0].mxu0 %v3693
    %v4617 = vpop.f32.mrb[0].mxu0
    %v4618 = vadd.f32 %v4234, %v4617
    %v4619 = vpop.f32.mrb[0].mxu0
    %v4620 = vadd.f32 %v4238, %v4619
    %v4621 = vpop.f32.mrb[0].mxu0
    %v4622 = vpop.f32.mrb[0].mxu0
    %4623 = vdwg.mxu0
    %4624 = vmatprep.subr.bf16.mxu0 %v3834
    %4625 = vmatpush1.bf16.msra.mxu0 %v3833
    %4626 = vmatprep.subr.bf16.mxu0 %v3842
    %4627 = vmatpush1.bf16.msra.mxu0 %v3841
    %4628 = vmatprep.subr.bf16.mxu0 %v3850
    %4629 = vmatpush1.bf16.msra.mxu0 %v3849
    %4630 = vmatprep.subr.bf16.mxu0 %v3858
    %4631 = vmatpush1.bf16.msra.mxu0 %v3857
    %4632 = vmatprep.subr.bf16.mxu0 %v3866
    %4633 = vmatpush1.bf16.msra.mxu0 %v3865
    %4634 = vmatprep.subr.bf16.mxu0 %v3874
    %4635 = vmatpush1.bf16.msra.mxu0 %v3873
    %4636 = vmatprep.subr.bf16.mxu0 %v3882
    %4637 = vmatpush1.bf16.msra.mxu0 %v3881
    %4638 = vmatprep.subr.bf16.mxu0 %v3890
    %4639 = vmatpush1.bf16.msra.mxu0 %v3889
    %4640 = vmatprep.subr.bf16.mxu0 %v3898
    %4641 = vmatpush1.bf16.msra.mxu0 %v3897
    %4642 = vmatprep.subr.bf16.mxu0 %v3906
    %4643 = vmatpush1.bf16.msra.mxu0 %v3905
    %4644 = vmatprep.subr.bf16.mxu0 %v3914
    %4645 = vmatpush1.bf16.msra.mxu0 %v3913
    %4646 = vmatprep.subr.bf16.mxu0 %v3922
    %4647 = vmatpush1.bf16.msra.mxu0 %v3921
    %4648 = vmatprep.subr.bf16.mxu0 %v3930
    %4649 = vmatpush1.bf16.msra.mxu0 %v3929
    %4650 = vmatprep.subr.bf16.mxu0 %v3938
    %4651 = vmatpush1.bf16.msra.mxu0 %v3937
    %4652 = vmatprep.subr.bf16.mxu0 %v3946
    %4653 = vmatpush1.bf16.msra.mxu0 %v3945
    %4654 = vmatprep.subr.bf16.mxu0 %v3954
    %4655 = vmatpush1.bf16.msra.mxu0 %v3953
    %4656 = vmatprep.mubr.bf16.mxu0 %v3696
    %4657 = vmatmul.mubr.bf16.gmra.mrb[0].mxu0 %v3695
    %v4658 = vpop.f32.mrb[0].mxu0
    %v4659 = vadd.f32 %v4618, %v4658
    %v4660 = vpop.f32.mrb[0].mxu0
    %v4661 = vadd.f32 %v4620, %v4660
    %v4662 = vpop.f32.mrb[0].mxu0
    %v4663 = vpop.f32.mrb[0].mxu0
    %4664 = vdwg.mxu0
    %4665 = vmatprep.subr.bf16.mxu0 %v3962
    %4666 = vmatpush1.bf16.msra.mxu0 %v3961
    %4667 = vmatprep.subr.bf16.mxu0 %v3970
    %4668 = vmatpush1.bf16.msra.mxu0 %v3969
    %4669 = vmatprep.subr.bf16.mxu0 %v3978
    %4670 = vmatpush1.bf16.msra.mxu0 %v3977
    %4671 = vmatprep.subr.bf16.mxu0 %v3986
    %4672 = vmatpush1.bf16.msra.mxu0 %v3985
    %4673 = vmatprep.subr.bf16.mxu0 %v3994
    %4674 = vmatpush1.bf16.msra.mxu0 %v3993
    %4675 = vmatprep.subr.bf16.mxu0 %v4002
    %4676 = vmatpush1.bf16.msra.mxu0 %v4001
    %4677 = vmatprep.subr.bf16.mxu0 %v4010
    %4678 = vmatpush1.bf16.msra.mxu0 %v4009
    %4679 = vmatprep.subr.bf16.mxu0 %v4018
    %4680 = vmatpush1.bf16.msra.mxu0 %v4017
    %4681 = vmatprep.subr.bf16.mxu0 %v4026
    %4682 = vmatpush1.bf16.msra.mxu0 %v4025
    %4683 = vmatprep.subr.bf16.mxu0 %v4034
    %4684 = vmatpush1.bf16.msra.mxu0 %v4033
    %4685 = vmatprep.subr.bf16.mxu0 %v4042
    %4686 = vmatpush1.bf16.msra.mxu0 %v4041
    %4687 = vmatprep.subr.bf16.mxu0 %v4050
    %4688 = vmatpush1.bf16.msra.mxu0 %v4049
    %4689 = vmatprep.subr.bf16.mxu0 %v4058
    %4690 = vmatpush1.bf16.msra.mxu0 %v4057
    %4691 = vmatprep.subr.bf16.mxu0 %v4066
    %4692 = vmatpush1.bf16.msra.mxu0 %v4065
    %4693 = vmatprep.subr.bf16.mxu0 %v4074
    %4694 = vmatpush1.bf16.msra.mxu0 %v4073
    %4695 = vmatprep.subr.bf16.mxu0 %v4082
    %4696 = vmatpush1.bf16.msra.mxu0 %v4081
    %4697 = vmatprep.mubr.bf16.mxu0 %v3698
    %4698 = vmatmul.mubr.bf16.gmra.mrb[0].mxu0 %v3697
    %v4699 = vpop.f32.mrb[0].mxu0
    %v4700 = vadd.f32 %v4659, %v4699
    %v4701 = vpop.f32.mrb[0].mxu0
    %v4702 = vadd.f32 %v4661, %v4701
    %v4703 = vpop.f32.mrb[0].mxu0
    %v4704 = vpop.f32.mrb[0].mxu0
    %4705 = vdwg.mxu0
    %4706 = vmatprep.subr.bf16.mxu0 %v4090
    %4707 = vmatpush1.bf16.msra.mxu0 %v4089
    %4708 = vmatprep.subr.bf16.mxu0 %v4098
    %4709 = vmatpush1.bf16.msra.mxu0 %v4097
    %4710 = vmatprep.subr.bf16.mxu0 %v4106
    %4711 = vmatpush1.bf16.msra.mxu0 %v4105
    %4712 = vmatprep.subr.bf16.mxu0 %v4114
    %4713 = vmatpush1.bf16.msra.mxu0 %v4113
    %4714 = vmatprep.subr.bf16.mxu0 %v4122
    %4715 = vmatpush1.bf16.msra.mxu0 %v4121
    %4716 = vmatprep.subr.bf16.mxu0 %v4130
    %4717 = vmatpush1.bf16.msra.mxu0 %v4129
    %4718 = vmatprep.subr.bf16.mxu0 %v4138
    %4719 = vmatpush1.bf16.msra.mxu0 %v4137
    %4720 = vmatprep.subr.bf16.mxu0 %v4146
    %4721 = vmatpush1.bf16.msra.mxu0 %v4145
    %4722 = vmatprep.subr.bf16.mxu0 %v4154
    %4723 = vmatpush1.bf16.msra.mxu0 %v4153
    %4724 = vmatprep.subr.bf16.mxu0 %v4162
    %4725 = vmatpush1.bf16.msra.mxu0 %v4161
    %4726 = vmatprep.subr.bf16.mxu0 %v4170
    %4727 = vmatpush1.bf16.msra.mxu0 %v4169
    %4728 = vmatprep.subr.bf16.mxu0 %v4178
    %4729 = vmatpush1.bf16.msra.mxu0 %v4177
    %4730 = vmatprep.subr.bf16.mxu0 %v4186
    %4731 = vmatpush1.bf16.msra.mxu0 %v4185
    %4732 = vmatprep.subr.bf16.mxu0 %v4194
    %4733 = vmatpush1.bf16.msra.mxu0 %v4193
    %4734 = vmatprep.subr.bf16.mxu0 %v4202
    %4735 = vmatpush1.bf16.msra.mxu0 %v4201
    %4736 = vmatprep.subr.bf16.mxu0 %v4210
    %4737 = vmatpush1.bf16.msra.mxu0 %v4209
    %4738 = vmatprep.mubr.bf16.mxu0 %v3700
    %4739 = vmatmul.mubr.bf16.gmra.mrb[0].mxu0 %v3699
    %v4740 = vpop.f32.mrb[0].mxu0
    %v4741 = vadd.f32 %v4700, %v4740
    %v4742 = vpop.f32.mrb[0].mxu0
    %v4743 = vadd.f32 %v4702, %v4742
    %v4744 = vpop.f32.mrb[0].mxu0
    %v4745 = vpop.f32.mrb[0].mxu0
    %4746 = vdwg.mxu0
    %4747 = vmatprep.subr.bf16.mxu0 %v3708
    %4748 = vmatpush1.bf16.msra.mxu0 %v3707
    %4749 = vmatprep.subr.bf16.mxu0 %v3716
    %4750 = vmatpush1.bf16.msra.mxu0 %v3715
    %4751 = vmatprep.subr.bf16.mxu0 %v3724
    %4752 = vmatpush1.bf16.msra.mxu0 %v3723
    %4753 = vmatprep.subr.bf16.mxu0 %v3732
    %4754 = vmatpush1.bf16.msra.mxu0 %v3731
    %4755 = vmatprep.subr.bf16.mxu0 %v3740
    %4756 = vmatpush1.bf16.msra.mxu0 %v3739
    %4757 = vmatprep.subr.bf16.mxu0 %v3748
    %4758 = vmatpush1.bf16.msra.mxu0 %v3747
    %4759 = vmatprep.subr.bf16.mxu0 %v3756
    %4760 = vmatpush1.bf16.msra.mxu0 %v3755
    %4761 = vmatprep.subr.bf16.mxu0 %v3764
    %4762 = vmatpush1.bf16.msra.mxu0 %v3763
    %4763 = vmatprep.subr.bf16.mxu0 %v3772
    %4764 = vmatpush1.bf16.msra.mxu0 %v3771
    %4765 = vmatprep.subr.bf16.mxu0 %v3780
    %4766 = vmatpush1.bf16.msra.mxu0 %v3779
    %4767 = vmatprep.subr.bf16.mxu0 %v3788
    %4768 = vmatpush1.bf16.msra.mxu0 %v3787
    %4769 = vmatprep.subr.bf16.mxu0 %v3796
    %4770 = vmatpush1.bf16.msra.mxu0 %v3795
    %4771 = vmatprep.subr.bf16.mxu0 %v3804
    %4772 = vmatpush1.bf16.msra.mxu0 %v3803
    %4773 = vmatprep.subr.bf16.mxu0 %v3812
    %4774 = vmatpush1.bf16.msra.mxu0 %v3811
    %4775 = vmatprep.subr.bf16.mxu0 %v3820
    %4776 = vmatpush1.bf16.msra.mxu0 %v3819
    %4777 = vmatprep.subr.bf16.mxu0 %v3828
    %4778 = vmatpush1.bf16.msra.mxu0 %v3827
    %4779 = vmatprep.mubr.bf16.mxu0 %v3694
    %4780 = vmatmul.mubr.bf16.gmra.mrb[0].mxu0 %v3693
    %v4781 = vpop.f32.mrb[0].mxu0
    %v4782 = vadd.f32 %v4242, %v4781
    %v4783 = vpop.f32.mrb[0].mxu0
    %v4784 = vadd.f32 %v4246, %v4783
    %v4785 = vpop.f32.mrb[0].mxu0
    %v4786 = vpop.f32.mrb[0].mxu0
    %4787 = vdwg.mxu0
    %4788 = vmatprep.subr.bf16.mxu0 %v3836
    %4789 = vmatpush1.bf16.msra.mxu0 %v3835
    %4790 = vmatprep.subr.bf16.mxu0 %v3844
    %4791 = vmatpush1.bf16.msra.mxu0 %v3843
    %4792 = vmatprep.subr.bf16.mxu0 %v3852
    %4793 = vmatpush1.bf16.msra.mxu0 %v3851
    %4794 = vmatprep.subr.bf16.mxu0 %v3860
    %4795 = vmatpush1.bf16.msra.mxu0 %v3859
    %4796 = vmatprep.subr.bf16.mxu0 %v3868
    %4797 = vmatpush1.bf16.msra.mxu0 %v3867
    %4798 = vmatprep.subr.bf16.mxu0 %v3876
    %4799 = vmatpush1.bf16.msra.mxu0 %v3875
    %4800 = vmatprep.subr.bf16.mxu0 %v3884
    %4801 = vmatpush1.bf16.msra.mxu0 %v3883
    %4802 = vmatprep.subr.bf16.mxu0 %v3892
    %4803 = vmatpush1.bf16.msra.mxu0 %v3891
    %4804 = vmatprep.subr.bf16.mxu0 %v3900
    %4805 = vmatpush1.bf16.msra.mxu0 %v3899
    %4806 = vmatprep.subr.bf16.mxu0 %v3908
    %4807 = vmatpush1.bf16.msra.mxu0 %v3907
    %4808 = vmatprep.subr.bf16.mxu0 %v3916
    %4809 = vmatpush1.bf16.msra.mxu0 %v3915
    %4810 = vmatprep.subr.bf16.mxu0 %v3924
    %4811 = vmatpush1.bf16.msra.mxu0 %v3923
    %4812 = vmatprep.subr.bf16.mxu0 %v3932
    %4813 = vmatpush1.bf16.msra.mxu0 %v3931
    %4814 = vmatprep.subr.bf16.mxu0 %v3940
    %4815 = vmatpush1.bf16.msra.mxu0 %v3939
    %4816 = vmatprep.subr.bf16.mxu0 %v3948
    %4817 = vmatpush1.bf16.msra.mxu0 %v3947
    %4818 = vmatprep.subr.bf16.mxu0 %v3956
    %4819 = vmatpush1.bf16.msra.mxu0 %v3955
    %4820 = vmatprep.mubr.bf16.mxu0 %v3696
    %4821 = vmatmul.mubr.bf16.gmra.mrb[0].mxu0 %v3695
    %v4822 = vpop.f32.mrb[0].mxu0
    %v4823 = vadd.f32 %v4782, %v4822
    %v4824 = vpop.f32.mrb[0].mxu0
    %v4825 = vadd.f32 %v4784, %v4824
    %v4826 = vpop.f32.mrb[0].mxu0
    %v4827 = vpop.f32.mrb[0].mxu0
    %4828 = vdwg.mxu0
    %4829 = vmatprep.subr.bf16.mxu0 %v3964
    %4830 = vmatpush1.bf16.msra.mxu0 %v3963
    %4831 = vmatprep.subr.bf16.mxu0 %v3972
    %4832 = vmatpush1.bf16.msra.mxu0 %v3971
    %4833 = vmatprep.subr.bf16.mxu0 %v3980
    %4834 = vmatpush1.bf16.msra.mxu0 %v3979
    %4835 = vmatprep.subr.bf16.mxu0 %v3988
    %4836 = vmatpush1.bf16.msra.mxu0 %v3987
    %4837 = vmatprep.subr.bf16.mxu0 %v3996
    %4838 = vmatpush1.bf16.msra.mxu0 %v3995
    %4839 = vmatprep.subr.bf16.mxu0 %v4004
    %4840 = vmatpush1.bf16.msra.mxu0 %v4003
    %4841 = vmatprep.subr.bf16.mxu0 %v4012
    %4842 = vmatpush1.bf16.msra.mxu0 %v4011
    %4843 = vmatprep.subr.bf16.mxu0 %v4020
    %4844 = vmatpush1.bf16.msra.mxu0 %v4019
    %4845 = vmatprep.subr.bf16.mxu0 %v4028
    %4846 = vmatpush1.bf16.msra.mxu0 %v4027
    %4847 = vmatprep.subr.bf16.mxu0 %v4036
    %4848 = vmatpush1.bf16.msra.mxu0 %v4035
    %4849 = vmatprep.subr.bf16.mxu0 %v4044
    %4850 = vmatpush1.bf16.msra.mxu0 %v4043
    %4851 = vmatprep.subr.bf16.mxu0 %v4052
    %4852 = vmatpush1.bf16.msra.mxu0 %v4051
    %4853 = vmatprep.subr.bf16.mxu0 %v4060
    %4854 = vmatpush1.bf16.msra.mxu0 %v4059
    %4855 = vmatprep.subr.bf16.mxu0 %v4068
    %4856 = vmatpush1.bf16.msra.mxu0 %v4067
    %4857 = vmatprep.subr.bf16.mxu0 %v4076
    %4858 = vmatpush1.bf16.msra.mxu0 %v4075
    %4859 = vmatprep.subr.bf16.mxu0 %v4084
    %4860 = vmatpush1.bf16.msra.mxu0 %v4083
    %4861 = vmatprep.mubr.bf16.mxu0 %v3698
    %4862 = vmatmul.mubr.bf16.gmra.mrb[0].mxu0 %v3697
    %v4863 = vpop.f32.mrb[0].mxu0
    %v4864 = vadd.f32 %v4823, %v4863
    %v4865 = vpop.f32.mrb[0].mxu0
    %v4866 = vadd.f32 %v4825, %v4865
    %v4867 = vpop.f32.mrb[0].mxu0
    %v4868 = vpop.f32.mrb[0].mxu0
    %4869 = vdwg.mxu0
    %4870 = vmatprep.subr.bf16.mxu0 %v4092
    %4871 = vmatpush1.bf16.msra.mxu0 %v4091
    %4872 = vmatprep.subr.bf16.mxu0 %v4100
    %4873 = vmatpush1.bf16.msra.mxu0 %v4099
    %4874 = vmatprep.subr.bf16.mxu0 %v4108
    %4875 = vmatpush1.bf16.msra.mxu0 %v4107
    %4876 = vmatprep.subr.bf16.mxu0 %v4116
    %4877 = vmatpush1.bf16.msra.mxu0 %v4115
    %4878 = vmatprep.subr.bf16.mxu0 %v4124
    %4879 = vmatpush1.bf16.msra.mxu0 %v4123
    %4880 = vmatprep.subr.bf16.mxu0 %v4132
    %4881 = vmatpush1.bf16.msra.mxu0 %v4131
    %4882 = vmatprep.subr.bf16.mxu0 %v4140
    %4883 = vmatpush1.bf16.msra.mxu0 %v4139
    %4884 = vmatprep.subr.bf16.mxu0 %v4148
    %4885 = vmatpush1.bf16.msra.mxu0 %v4147
    %4886 = vmatprep.subr.bf16.mxu0 %v4156
    %4887 = vmatpush1.bf16.msra.mxu0 %v4155
    %4888 = vmatprep.subr.bf16.mxu0 %v4164
    %4889 = vmatpush1.bf16.msra.mxu0 %v4163
    %4890 = vmatprep.subr.bf16.mxu0 %v4172
    %4891 = vmatpush1.bf16.msra.mxu0 %v4171
    %4892 = vmatprep.subr.bf16.mxu0 %v4180
    %4893 = vmatpush1.bf16.msra.mxu0 %v4179
    %4894 = vmatprep.subr.bf16.mxu0 %v4188
    %4895 = vmatpush1.bf16.msra.mxu0 %v4187
    %4896 = vmatprep.subr.bf16.mxu0 %v4196
    %4897 = vmatpush1.bf16.msra.mxu0 %v4195
    %4898 = vmatprep.subr.bf16.mxu0 %v4204
    %4899 = vmatpush1.bf16.msra.mxu0 %v4203
    %4900 = vmatprep.subr.bf16.mxu0 %v4212
    %4901 = vmatpush1.bf16.msra.mxu0 %v4211
    %4902 = vmatprep.mubr.bf16.mxu0 %v3700
    %4903 = vmatmul.mubr.bf16.gmra.mrb[0].mxu0 %v3699
    %v4904 = vpop.f32.mrb[0].mxu0
    %v4905 = vadd.f32 %v4864, %v4904
    %v4906 = vpop.f32.mrb[0].mxu0
    %v4907 = vadd.f32 %v4866, %v4906
    %v4908 = vpop.f32.mrb[0].mxu0
    %v4909 = vpop.f32.mrb[0].mxu0
    %4910 = vdwg.mxu0
    %v4911 = vmax.f32 %v4413, 0.0
    %v4912 = vmax.f32 %v4415, 0.0
    %v4913 = vmax.f32 %v4577, 0.0
    %v4914 = vmax.f32 %v4579, 0.0
    %v4915 = vmax.f32 %v4741, 0.0
    %v4916 = vmax.f32 %v4743, 0.0
    %v4917 = vmax.f32 %v4905, 0.0
    %v4918 = vmax.f32 %v4907, 0.0
    %v4927 = vcombine.low %v4911, %v4912
    %v4928 = vcombine.low %v4913, %v4914
    %v4930 = vunpack.c.l.s4 1983009808
    %v4931 = vunpack.c.0.s8 %v4930
    %v4932 = vlaneseq
    %v4933 = vshrl.u32 %v4932, 7
    %v4934 = vsub.s32 %v4931, %v4933
    %v4935 = vrot.slane %v4927, %v4934
    %v4937 = vunpack.c.l.s4 1983009808
    %v4938 = vunpack.c.0.s8 %v4937
    %v4939 = vlaneseq
    %v4940 = vshrl.u32 %v4939, 7
    %v4941 = vsub.s32 %v4938, %v4940
    %v4942 = vrot.slane %v4928, %v4941
    %v4943 = vcombine.low %v4935, %v4942
    %v4944 = vcombine.low %v4915, %v4916
    %v4945 = vcombine.low %v4917, %v4918
    %v4947 = vunpack.c.l.s4 1983009808
    %v4948 = vunpack.c.0.s8 %v4947
    %v4949 = vlaneseq
    %v4950 = vshrl.u32 %v4949, 7
    %v4951 = vsub.s32 %v4948, %v4950
    %v4952 = vrot.slane %v4944, %v4951
    %v4954 = vunpack.c.l.s4 1983009808
    %v4955 = vunpack.c.0.s8 %v4954
    %v4956 = vlaneseq
    %v4957 = vshrl.u32 %v4956, 7
    %v4958 = vsub.s32 %v4955, %v4957
    %v4959 = vrot.slane %v4945, %v4958
    %v4960 = vcombine.low %v4952, %v4959
    %4963 = vst [vmem:[#allocation31] sm:$0xff] %v4943
    %4964 = vst [vmem:[#allocation31 + $0x8] sm:$0xff] %v4960
    // Predicated region
    $region142: #{descryptor_encoder_forward.1} parent=1 // pred_check
      _
    $region143: #{descryptor_encoder_forward.1} parent=1 // pred_check_branch
      %4966 = sbr.rel (0) target = $region145
    $region144: #{descryptor_encoder_forward.1} parent=1 // pred_region
      %s4968 = ssub.s32 256, 256
      %4969 = vsyncadd [#allocation7], %s4968
      %s4971 = sshll.u32 [#allocation31], 4
      %s4972 = int_to_ptr.vmem [resolvable:$true] %s4971
      %4974 = dma.vmem_to_hbm [thread:$0]  %s4972, 256, %s21, [#allocation7]
    $region145: #{descryptor_encoder_forward.1} parent=1 // pred_fallthru
      _
    // Predicated region
    $region146: #{descryptor_encoder_forward.1} parent=1 // pred_check
      _
    $region147: #{descryptor_encoder_forward.1} parent=1 // pred_check_branch
      %4976 = sbr.rel (0) target = $region149
    $region148: #{descryptor_encoder_forward.1} parent=1 // pred_region
      %4977 = dma.done [#allocation7], 256
    $region149: #{descryptor_encoder_forward.1} parent=1 // pred_fallthru
      _
    %4978 = vsyncpa [#allocation6], 1
    %4979 = vsyncpa [#allocation9], 1
    %4980 = vsyncpa [#allocation12], 1
    %4981 = vsyncpa [#allocation15], 1
    %4982 = vsyncpa [#allocation18], 1
    %4983 = vsyncpa [#allocation21], 1
    %4984 = vsyncpa [#allocation24], 1
    %4985 = vsyncpa [#allocation27], 1
    %4986 = vsyncpa [#allocation30], 1
    %4987 = vsyncpa [#allocation7], 1
  %4988 = vsyncmov [#allocation4]
  %s4989 = vpop.sfrf %4988
  %p4990 = scmp.eq.s32.totalorder %s4989, 0
  %p4991 = pneg %p4990
  %4993 = shalt.err (%p4991)
  %s4994 = scalar_lea.sflag [#allocation4], 1
  %4995 = vsyncmov %s4994
  %s4996 = vpop.sfrf %4995
  %p4997 = scmp.eq.s32.totalorder %s4996, 0
  %p4998 = pneg %p4997
  %5000 = shalt.err (%p4998)

</llo_original>
